<compile_context>
chip_gen: v7x
topology: tpu7x:2x2x1
jax: 0.10.0
libtpu: 0.0.40
codegen_flags: <defaults>
</compile_context>

<pallas_src>
import functools
import jax
import jax.numpy as jnp
from jax.experimental import pallas as pl
from jax.experimental.pallas import tpu as pltpu

# ----------------------------- model config (small, consistent with the module) -------------
D_MODEL = 32
N_HEADS = 4
HEAD_DIM = D_MODEL // N_HEADS
DIM_FF = 64
NUM_LAYERS = 2
VOCAB = 50
MAX_LEN = 32
PAD_ID = 0
TOKEN_TYPE_VOCAB = 2
LN_EPS = 1e-12
NEG_INF = -1e9


# ----------------------------- in-kernel helpers (traced inside the Pallas body) ------------
def _layer_norm(x, g, b, eps=LN_EPS):
    mean = jnp.mean(x, axis=-1, keepdims=True)
    var = jnp.mean((x - mean) * (x - mean), axis=-1, keepdims=True)
    return (x - mean) * jax.lax.rsqrt(var + eps) * g + b


def _gelu_exact(x):
    # torch.nn.functional.gelu default = exact erf gelu
    return 0.5 * x * (1.0 + jax.lax.erf(x * (1.0 / jnp.sqrt(2.0).astype(jnp.float32))))


def _softmax_rows(sc):
    sc = sc - jnp.max(sc, axis=-1, keepdims=True)
    p = jnp.exp(sc)
    # approx reciprocal -> EUP vrcp slot (otherwise idle here); max-subtraction keeps it stable
    return p * pl.reciprocal(jnp.sum(p, axis=-1, keepdims=True), approx=True)


def _mha_core(q, k, v, wo, bo, mask_add):
    """Multi-head attention with the head concat folded into the output projection."""
    n_rows = q.shape[0]
    scale = 1.0 / float(HEAD_DIM) ** 0.5
    out = jnp.zeros((n_rows, D_MODEL), jnp.float32) + bo
    for h in range(N_HEADS):                       # static unroll (tiny head_dim)
        sl = slice(h * HEAD_DIM, (h + 1) * HEAD_DIM)
        sc = jnp.dot(q[:, sl], k[:, sl].T, preferred_element_type=jnp.float32) * scale
        if mask_add is not None:
            sc = sc + mask_add
        p = _softmax_rows(sc)
        ctx = jnp.dot(p, v[:, sl], preferred_element_type=jnp.float32)
        # fold the concat: ctx_h @ Wo[head rows] accumulates straight into the output
        out = out + jnp.dot(ctx, wo[sl, :], preferred_element_type=jnp.float32)
    return out


# ----------------------------- fused decoder-stack kernel -----------------------------------
def decoder_stack_kernel(h_ref, ek_ref, ev_ref,
                         w_sqkv_ref, b_sqkv_ref, w_so_ref, b_so_ref,
                         w_cq_ref, b_cq_ref, w_ck_ref, b_ck_ref,
                         w_cv_ref, b_cv_ref, w_co_ref, b_co_ref,
                         w1_ref, b1_ref, w2_ref, b2_ref, ln_ref,
                         o_ref, *, batch_block, seq, enc_seq):
    bb, S, Se, D = batch_block, seq, enc_seq, D_MODEL

    # Flatten (bb, S, D) -> (bb*S, D): every projection / FFN matmul sees all rows at once.
    # (Leading-dim-only reshape; with bb == 1 it is just squeezing the unit batch dim.)
    h = h_ref[...].reshape(bb * S, D)
    ek = ek_ref[...].reshape(bb * Se, D)
    ev = ev_ref[...].reshape(bb * Se, D)

    # Causal additive mask — batch- and layer-invariant, built once per grid step.
    rows = jax.lax.broadcasted_iota(jnp.int32, (S, S), 0)
    cols = jax.lax.broadcasted_iota(jnp.int32, (S, S), 1)
    causal_add = jnp.where(cols <= rows, 0.0, NEG_INF).astype(jnp.float32)

    for l in range(NUM_LAYERS):                    # fused layer stack, static unroll
        ln_l = ln_ref[l]                           # (6, D): [g1,b1,g2,b2,g3,b3]

        # --- masked self-attention: fused QKV projection (one matmul), residual, post-LN
        qkv = jnp.dot(h, w_sqkv_ref[l], preferred_element_type=jnp.float32) + b_sqkv_ref[l]
        q, k, v = qkv[:, :D], qkv[:, D:2 * D], qkv[:, 2 * D:]
        attn_rows = []
        for b in range(bb):                        # static unroll over batch rows in block
            rs = slice(b * S, (b + 1) * S)
            attn_rows.append(
                _mha_core(q[rs], k[rs], v[rs], w_so_ref[l], b_so_ref[l], causal_add))
        attn = attn_rows[0] if bb == 1 else jnp.concatenate(attn_rows, axis=0)
        h = _layer_norm(h + attn, ln_l[0], ln_l[1])

        # --- cross-attention over encoder hidden state (no mask), residual, post-LN
        #     key/value come from (possibly distinct) encoder tensors -> two projections.
        qc = jnp.dot(h, w_cq_ref[l], preferred_element_type=jnp.float32) + b_cq_ref[l]
        kc = jnp.dot(ek, w_ck_ref[l], preferred_element_type=jnp.float32) + b_ck_ref[l]
        vc = jnp.dot(ev, w_cv_ref[l], preferred_element_type=jnp.float32) + b_cv_ref[l]
        cross_rows = []
        for b in range(bb):
            rs = slice(b * S, (b + 1) * S)
            es = slice(b * Se, (b + 1) * Se)
            cross_rows.append(
                _mha_core(qc[rs], kc[es], vc[es], w_co_ref[l], b_co_ref[l], None))
        cross = cross_rows[0] if bb == 1 else jnp.concatenate(cross_rows, axis=0)
        h = _layer_norm(h + cross, ln_l[2], ln_l[3])

        # --- feed-forward (exact gelu), residual, post-LN
        ff = jnp.dot(h, w1_ref[l], preferred_element_type=jnp.float32) + b1_ref[l]
        ff = _gelu_exact(ff)
        ff = jnp.dot(ff, w2_ref[l], preferred_element_type=jnp.float32) + b2_ref[l]
        h = _layer_norm(h + ff, ln_l[4], ln_l[5])

    o_ref[...] = h.reshape(bb, S, D).astype(o_ref.dtype)


def decoder_stack(hidden, enc_k, enc_v, params, *, batch_block=1):
    B, S, D = hidden.shape
    Se = enc_k.shape[1]
    assert B % batch_block == 0

    def const(arr):
        shp = arr.shape
        return pl.BlockSpec(shp, lambda i: (0,) * len(shp))

    kernel = functools.partial(decoder_stack_kernel,
                               batch_block=batch_block, seq=S, enc_seq=Se)

    weight_args = (params["w_sqkv"], params["b_sqkv"], params["w_so"], params["b_so"],
                   params["w_cq"], params["b_cq"], params["w_ck"], params["b_ck"],
                   params["w_cv"], params["b_cv"], params["w_co"], params["b_co"],
                   params["w1"], params["b1"], params["w2"], params["b2"], params["ln"])

    return pl.pallas_call(
        kernel,
        out_shape=jax.ShapeDtypeStruct((B, S, D), hidden.dtype),
        grid=(B // batch_block,),
        in_specs=[
            pl.BlockSpec((batch_block, S, D), lambda i: (i, 0, 0)),    # hidden
            pl.BlockSpec((batch_block, Se, D), lambda i: (i, 0, 0)),   # encoder 'key'
            pl.BlockSpec((batch_block, Se, D), lambda i: (i, 0, 0)),   # encoder 'value'
        ] + [const(a) for a in weight_args],                           # layer-stacked weights
        out_specs=pl.BlockSpec((batch_block, S, D), lambda i: (i, 0, 0)),
        compiler_params=pltpu.CompilerParams(dimension_semantics=("parallel",)),
    )(hidden, enc_k, enc_v, *weight_args)


# ----------------------------- glue: embedding + parameter init -----------------------------
def embed(input_ids, emb):
    # TODO(synk): embedding gather stays in XLA (single op); could be fused via
    # scalar-prefetched input_ids if kernel-launch count ever matters further.
    S = input_ids.shape[-1]
    word = emb["word"][input_ids]                               # (B, S, D); pad row is zeroed
    pos = emb["pos"][jnp.arange(S)][None, :, :]                 # learned positional embedding
    ttype = emb["ttype"][jnp.zeros_like(input_ids)]             # token_type_ids default 0
    return word + pos + ttype                                   # no embedding LN (default False)


def init_params(key):
    ke, kl = jax.random.split(key)
    ke1, ke2, ke3 = jax.random.split(ke, 3)
    word = 0.02 * jax.random.normal(ke1, (VOCAB, D_MODEL), jnp.float32)
    word = word.at[PAD_ID].set(0.0)            # nn.Embedding(padding_idx=pad_token_id)
    pos = 0.02 * jax.random.normal(ke2, (MAX_LEN, D_MODEL), jnp.float32)
    ttype = 0.02 * jax.random.normal(ke3, (TOKEN_TYPE_VOCAB, D_MODEL), jnp.float32)

    L, D, F = NUM_LAYERS, D_MODEL, DIM_FF
    keys = jax.random.split(kl, 8)

    def w(k, shape):
        return 0.02 * jax.random.normal(k, shape, jnp.float32)

    ln_one_layer = jnp.stack([jnp.ones(D), jnp.zeros(D)] * 3).astype(jnp.float32)   # (6, D)
    decoder = dict(
        w_sqkv=w(keys[0], (L, D, 3 * D)), b_sqkv=jnp.zeros((L, 1, 3 * D), jnp.float32),
        w_so=w(keys[1], (L, D, D)),       b_so=jnp.zeros((L, 1, D), jnp.float32),
        w_cq=w(keys[2], (L, D, D)),       b_cq=jnp.zeros((L, 1, D), jnp.float32),
        w_ck=w(keys[3], (L, D, D)),       b_ck=jnp.zeros((L, 1, D), jnp.float32),
        w_cv=w(keys[4], (L, D, D)),       b_cv=jnp.zeros((L, 1, D), jnp.float32),
        w_co=w(keys[5], (L, D, D)),       b_co=jnp.zeros((L, 1, D), jnp.float32),
        w1=w(keys[6], (L, D, F)),         b1=jnp.zeros((L, 1, F), jnp.float32),
        w2=w(keys[7], (L, F, D)),         b2=jnp.zeros((L, 1, D), jnp.float32),
        ln=jnp.tile(ln_one_layer[None], (L, 1, 1)),
    )
    return dict(embedding=dict(word=word, pos=pos, ttype=ttype), decoder=decoder)


@functools.partial(jax.jit, static_argnames=("batch_block",))
def transformer_decoder_forward(input_ids, encoder_key, encoder_value, params, batch_block=1):
    hidden = embed(input_ids, params["embedding"])
    # batch_block=1 keeps the batch axis parallel (both v7x TensorCores busy);
    # pass batch_block=B on single-TC v5e/v6e to collapse the grid into one step.
    return decoder_stack(hidden, encoder_key, encoder_value, params["decoder"],
                         batch_block=batch_block)


if __name__ == "__main__":
    key = jax.random.PRNGKey(0)
    kp, kid, kenc = jax.random.split(key, 3)
    params = init_params(kp)

    B, S, Se = 2, 8, 16
    input_ids = jax.random.randint(kid, (B, S), 0, VOCAB)
    enc = 0.5 * jax.random.normal(kenc, (B, Se, D_MODEL), jnp.float32)
    encoder_hidden_state = {"key": enc, "value": enc}

    out = transformer_decoder_forward(
        input_ids, encoder_hidden_state["key"], encoder_hidden_state["value"], params)
    out = jax.block_until_ready(out)
    assert out.shape == (B, S, D_MODEL) and out.dtype == jnp.float32
    assert bool(jnp.all(jnp.isfinite(out)))
    print("KERNEL_OK")
</pallas_src>

<mosaic_0001>
module attributes {stable_mosaic.version = 11 : i64} {
  func.func @decoder_stack_kernel(%arg0: i32, %arg1: memref<1x8x32xf32, #tpu.memory_space<vmem>>, %arg2: memref<1x16x32xf32, #tpu.memory_space<vmem>>, %arg3: memref<1x16x32xf32, #tpu.memory_space<vmem>>, %arg4: memref<2x32x96xf32, #tpu.memory_space<vmem>>, %arg5: memref<2x1x96xf32, #tpu.memory_space<vmem>>, %arg6: memref<2x32x32xf32, #tpu.memory_space<vmem>>, %arg7: memref<2x1x32xf32, #tpu.memory_space<vmem>>, %arg8: memref<2x32x32xf32, #tpu.memory_space<vmem>>, %arg9: memref<2x1x32xf32, #tpu.memory_space<vmem>>, %arg10: memref<2x32x32xf32, #tpu.memory_space<vmem>>, %arg11: memref<2x1x32xf32, #tpu.memory_space<vmem>>, %arg12: memref<2x32x32xf32, #tpu.memory_space<vmem>>, %arg13: memref<2x1x32xf32, #tpu.memory_space<vmem>>, %arg14: memref<2x32x32xf32, #tpu.memory_space<vmem>>, %arg15: memref<2x1x32xf32, #tpu.memory_space<vmem>>, %arg16: memref<2x32x64xf32, #tpu.memory_space<vmem>>, %arg17: memref<2x1x64xf32, #tpu.memory_space<vmem>>, %arg18: memref<2x64x32xf32, #tpu.memory_space<vmem>>, %arg19: memref<2x1x32xf32, #tpu.memory_space<vmem>>, %arg20: memref<2x6x32xf32, #tpu.memory_space<vmem>>, %arg21: memref<1x8x32xf32, #tpu.memory_space<vmem>>) attributes {dimension_semantics = [#tpu.dimension_semantics<parallel>], iteration_bounds = array<i64: 2>, scalar_prefetch = 0 : i64, scratch_operands = 0 : i64, tpu.core_type = #tpu.core_type<tc>, window_params = [{transform_indices = @transform_0, window_bounds = array<i64: 1, 8, 32>}, {transform_indices = @transform_1, window_bounds = array<i64: 1, 16, 32>}, {transform_indices = @transform_2, window_bounds = array<i64: 1, 16, 32>}, {pipeline_mode = #tpu.pipeline_mode<synchronous>, transform_indices = @transform_3, window_bounds = array<i64: 2, 32, 96>}, {pipeline_mode = #tpu.pipeline_mode<synchronous>, transform_indices = @transform_4, window_bounds = array<i64: 2, 1, 96>}, {pipeline_mode = #tpu.pipeline_mode<synchronous>, transform_indices = @transform_5, window_bounds = array<i64: 2, 32, 32>}, {pipeline_mode = #tpu.pipeline_mode<synchronous>, transform_indices = @transform_6, window_bounds = array<i64: 2, 1, 32>}, {pipeline_mode = #tpu.pipeline_mode<synchronous>, transform_indices = @transform_7, window_bounds = array<i64: 2, 32, 32>}, {pipeline_mode = #tpu.pipeline_mode<synchronous>, transform_indices = @transform_8, window_bounds = array<i64: 2, 1, 32>}, {pipeline_mode = #tpu.pipeline_mode<synchronous>, transform_indices = @transform_9, window_bounds = array<i64: 2, 32, 32>}, {pipeline_mode = #tpu.pipeline_mode<synchronous>, transform_indices = @transform_10, window_bounds = array<i64: 2, 1, 32>}, {pipeline_mode = #tpu.pipeline_mode<synchronous>, transform_indices = @transform_11, window_bounds = array<i64: 2, 32, 32>}, {pipeline_mode = #tpu.pipeline_mode<synchronous>, transform_indices = @transform_12, window_bounds = array<i64: 2, 1, 32>}, {pipeline_mode = #tpu.pipeline_mode<synchronous>, transform_indices = @transform_13, window_bounds = array<i64: 2, 32, 32>}, {pipeline_mode = #tpu.pipeline_mode<synchronous>, transform_indices = @transform_14, window_bounds = array<i64: 2, 1, 32>}, {pipeline_mode = #tpu.pipeline_mode<synchronous>, transform_indices = @transform_15, window_bounds = array<i64: 2, 32, 64>}, {pipeline_mode = #tpu.pipeline_mode<synchronous>, transform_indices = @transform_16, window_bounds = array<i64: 2, 1, 64>}, {pipeline_mode = #tpu.pipeline_mode<synchronous>, transform_indices = @transform_17, window_bounds = array<i64: 2, 64, 32>}, {pipeline_mode = #tpu.pipeline_mode<synchronous>, transform_indices = @transform_18, window_bounds = array<i64: 2, 1, 32>}, {pipeline_mode = #tpu.pipeline_mode<synchronous>, transform_indices = @transform_19, window_bounds = array<i64: 2, 6, 32>}, {transform_indices = @transform_20, window_bounds = array<i64: 1, 8, 32>}]} {
    %c0 = arith.constant 0 : index
    %c0_0 = arith.constant 0 : index
    %c0_1 = arith.constant 0 : index
    %0 = vector.load %arg1[%c0, %c0_0, %c0_1] : memref<1x8x32xf32, #tpu.memory_space<vmem>>, vector<1x8x32xf32>
    %1 = vector.shape_cast %0 : vector<1x8x32xf32> to vector<8x32xf32>
    %c0_2 = arith.constant 0 : index
    %c0_3 = arith.constant 0 : index
    %c0_4 = arith.constant 0 : index
    %2 = vector.load %arg2[%c0_2, %c0_3, %c0_4] : memref<1x16x32xf32, #tpu.memory_space<vmem>>, vector<1x16x32xf32>
    %3 = vector.shape_cast %2 : vector<1x16x32xf32> to vector<16x32xf32>
    %c0_5 = arith.constant 0 : index
    %c0_6 = arith.constant 0 : index
    %c0_7 = arith.constant 0 : index
    %4 = vector.load %arg3[%c0_5, %c0_6, %c0_7] : memref<1x16x32xf32, #tpu.memory_space<vmem>>, vector<1x16x32xf32>
    %5 = vector.shape_cast %4 : vector<1x16x32xf32> to vector<16x32xf32>
    %6 = tpu.iota {dimensions = array<i32: 0>} : vector<8x8xi32>
    %7 = tpu.iota {dimensions = array<i32: 1>} : vector<8x8xi32>
    %8 = arith.cmpi sle, %7, %6 : vector<8x8xi32>
    %cst = arith.constant 0.000000e+00 : f32
    %cst_8 = arith.constant -1.000000e+09 : f32
    %9 = vector.broadcast %cst : f32 to vector<8x8xf32>
    %10 = vector.broadcast %cst_8 : f32 to vector<8x8xf32>
    %11 = arith.select %8, %9, %10 : vector<8x8xi1>, vector<8x8xf32>
    %c0_9 = arith.constant 0 : index
    %c0_10 = arith.constant 0 : index
    %c0_11 = arith.constant 0 : index
    %12 = vector.load %arg20[%c0_9, %c0_10, %c0_11] : memref<2x6x32xf32, #tpu.memory_space<vmem>>, vector<1x6x32xf32>
    %13 = vector.shape_cast %12 : vector<1x6x32xf32> to vector<6x32xf32>
    %c0_12 = arith.constant 0 : index
    %c0_13 = arith.constant 0 : index
    %c0_14 = arith.constant 0 : index
    %14 = vector.load %arg4[%c0_12, %c0_13, %c0_14] : memref<2x32x96xf32, #tpu.memory_space<vmem>>, vector<1x32x96xf32>
    %15 = vector.shape_cast %14 : vector<1x32x96xf32> to vector<32x96xf32>
    %cst_15 = arith.constant dense<0.000000e+00> : vector<8x96xf32>
    %16 = tpu.matmul %1, %15, %cst_15 {dimension_numbers = #tpu.dot_dimension_numbers<[1], [0], [0], [1], [0, 0, 1, 1], [], []>} : vector<8x32xf32>, vector<32x96xf32>, vector<8x96xf32> -> vector<8x96xf32>
    %c0_16 = arith.constant 0 : index
    %c0_17 = arith.constant 0 : index
    %c0_18 = arith.constant 0 : index
    %17 = vector.load %arg5[%c0_16, %c0_17, %c0_18] : memref<2x1x96xf32, #tpu.memory_space<vmem>>, vector<1x1x96xf32>
    %18 = vector.shape_cast %17 : vector<1x1x96xf32> to vector<1x96xf32>
    %19 = vector.broadcast %18 : vector<1x96xf32> to vector<8x96xf32>
    %20 = arith.addf %16, %19 : vector<8x96xf32>
    %21 = vector.extract_strided_slice %20 {offsets = [0, 0], sizes = [8, 32], strides = [1, 1]} : vector<8x96xf32> to vector<8x32xf32>
    %22 = vector.extract_strided_slice %20 {offsets = [0, 32], sizes = [8, 32], strides = [1, 1]} : vector<8x96xf32> to vector<8x32xf32>
    %23 = vector.extract_strided_slice %20 {offsets = [0, 64], sizes = [8, 32], strides = [1, 1]} : vector<8x96xf32> to vector<8x32xf32>
    %c0_19 = arith.constant 0 : index
    %c0_20 = arith.constant 0 : index
    %c0_21 = arith.constant 0 : index
    %24 = vector.load %arg6[%c0_19, %c0_20, %c0_21] : memref<2x32x32xf32, #tpu.memory_space<vmem>>, vector<1x32x32xf32>
    %25 = vector.shape_cast %24 : vector<1x32x32xf32> to vector<32x32xf32>
    %c0_22 = arith.constant 0 : index
    %c0_23 = arith.constant 0 : index
    %c0_24 = arith.constant 0 : index
    %26 = vector.load %arg7[%c0_22, %c0_23, %c0_24] : memref<2x1x32xf32, #tpu.memory_space<vmem>>, vector<1x1x32xf32>
    %27 = vector.shape_cast %26 : vector<1x1x32xf32> to vector<1x32xf32>
    %cst_25 = arith.constant 0.000000e+00 : f32
    %28 = vector.broadcast %cst_25 : f32 to vector<8x32xf32>
    %29 = vector.broadcast %27 : vector<1x32xf32> to vector<8x32xf32>
    %30 = arith.addf %28, %29 : vector<8x32xf32>
    %31 = vector.extract_strided_slice %21 {offsets = [0, 0], sizes = [8, 8], strides = [1, 1]} : vector<8x32xf32> to vector<8x8xf32>
    %32 = vector.extract_strided_slice %22 {offsets = [0, 0], sizes = [8, 8], strides = [1, 1]} : vector<8x32xf32> to vector<8x8xf32>
    %33 = tpu.transpose %32, [1, 0] : vector<8x8xf32> -> vector<8x8xf32>
    %cst_26 = arith.constant dense<0.000000e+00> : vector<8x8xf32>
    %34 = tpu.matmul %31, %33, %cst_26 {dimension_numbers = #tpu.dot_dimension_numbers<[1], [0], [0], [1], [0, 0, 1, 1], [], []>} : vector<8x8xf32>, vector<8x8xf32>, vector<8x8xf32> -> vector<8x8xf32>
    %cst_27 = arith.constant 0.353553385 : f32
    %35 = vector.broadcast %cst_27 : f32 to vector<8x8xf32>
    %36 = arith.mulf %34, %35 : vector<8x8xf32>
    %37 = arith.addf %36, %11 : vector<8x8xf32>
    %cst_28 = arith.constant dense<0xFF800000> : vector<8xf32>
    %38 = vector.multi_reduction <maximumf>, %37, %cst_28 [1] : vector<8x8xf32> to vector<8xf32>
    %39 = vector.shape_cast %38 : vector<8xf32> to vector<8x1xf32>
    %40 = vector.broadcast %39 : vector<8x1xf32> to vector<8x8xf32>
    %41 = arith.subf %37, %40 : vector<8x8xf32>
    %42 = math.exp %41 : vector<8x8xf32>
    %cst_29 = arith.constant dense<0.000000e+00> : vector<8xf32>
    %43 = vector.multi_reduction <add>, %42, %cst_29 [1] : vector<8x8xf32> to vector<8xf32>
    %44 = vector.shape_cast %43 : vector<8xf32> to vector<8x1xf32>
    %45 = tpu.reciprocal %44 {approx = true} : vector<8x1xf32> -> vector<8x1xf32>
    %46 = vector.broadcast %45 : vector<8x1xf32> to vector<8x8xf32>
    %47 = arith.mulf %42, %46 : vector<8x8xf32>
    %48 = vector.extract_strided_slice %23 {offsets = [0, 0], sizes = [8, 8], strides = [1, 1]} : vector<8x32xf32> to vector<8x8xf32>
    %cst_30 = arith.constant dense<0.000000e+00> : vector<8x8xf32>
    %49 = tpu.matmul %47, %48, %cst_30 {dimension_numbers = #tpu.dot_dimension_numbers<[1], [0], [0], [1], [0, 0, 1, 1], [], []>} : vector<8x8xf32>, vector<8x8xf32>, vector<8x8xf32> -> vector<8x8xf32>
    %50 = vector.extract_strided_slice %25 {offsets = [0, 0], sizes = [8, 32], strides = [1, 1]} : vector<32x32xf32> to vector<8x32xf32>
    %cst_31 = arith.constant dense<0.000000e+00> : vector<8x32xf32>
    %51 = tpu.matmul %49, %50, %cst_31 {dimension_numbers = #tpu.dot_dimension_numbers<[1], [0], [0], [1], [0, 0, 1, 1], [], []>} : vector<8x8xf32>, vector<8x32xf32>, vector<8x32xf32> -> vector<8x32xf32>
    %52 = arith.addf %30, %51 : vector<8x32xf32>
    %53 = vector.extract_strided_slice %21 {offsets = [0, 8], sizes = [8, 8], strides = [1, 1]} : vector<8x32xf32> to vector<8x8xf32>
    %54 = vector.extract_strided_slice %22 {offsets = [0, 8], sizes = [8, 8], strides = [1, 1]} : vector<8x32xf32> to vector<8x8xf32>
    %55 = tpu.transpose %54, [1, 0] : vector<8x8xf32> -> vector<8x8xf32>
    %cst_32 = arith.constant dense<0.000000e+00> : vector<8x8xf32>
    %56 = tpu.matmul %53, %55, %cst_32 {dimension_numbers = #tpu.dot_dimension_numbers<[1], [0], [0], [1], [0, 0, 1, 1], [], []>} : vector<8x8xf32>, vector<8x8xf32>, vector<8x8xf32> -> vector<8x8xf32>
    %cst_33 = arith.constant 0.353553385 : f32
    %57 = vector.broadcast %cst_33 : f32 to vector<8x8xf32>
    %58 = arith.mulf %56, %57 : vector<8x8xf32>
    %59 = arith.addf %58, %11 : vector<8x8xf32>
    %cst_34 = arith.constant dense<0xFF800000> : vector<8xf32>
    %60 = vector.multi_reduction <maximumf>, %59, %cst_34 [1] : vector<8x8xf32> to vector<8xf32>
    %61 = vector.shape_cast %60 : vector<8xf32> to vector<8x1xf32>
    %62 = vector.broadcast %61 : vector<8x1xf32> to vector<8x8xf32>
    %63 = arith.subf %59, %62 : vector<8x8xf32>
    %64 = math.exp %63 : vector<8x8xf32>
    %cst_35 = arith.constant dense<0.000000e+00> : vector<8xf32>
    %65 = vector.multi_reduction <add>, %64, %cst_35 [1] : vector<8x8xf32> to vector<8xf32>
    %66 = vector.shape_cast %65 : vector<8xf32> to vector<8x1xf32>
    %67 = tpu.reciprocal %66 {approx = true} : vector<8x1xf32> -> vector<8x1xf32>
    %68 = vector.broadcast %67 : vector<8x1xf32> to vector<8x8xf32>
    %69 = arith.mulf %64, %68 : vector<8x8xf32>
    %70 = vector.extract_strided_slice %23 {offsets = [0, 8], sizes = [8, 8], strides = [1, 1]} : vector<8x32xf32> to vector<8x8xf32>
    %cst_36 = arith.constant dense<0.000000e+00> : vector<8x8xf32>
    %71 = tpu.matmul %69, %70, %cst_36 {dimension_numbers = #tpu.dot_dimension_numbers<[1], [0], [0], [1], [0, 0, 1, 1], [], []>} : vector<8x8xf32>, vector<8x8xf32>, vector<8x8xf32> -> vector<8x8xf32>
    %72 = vector.extract_strided_slice %25 {offsets = [8, 0], sizes = [8, 32], strides = [1, 1]} : vector<32x32xf32> to vector<8x32xf32>
    %cst_37 = arith.constant dense<0.000000e+00> : vector<8x32xf32>
    %73 = tpu.matmul %71, %72, %cst_37 {dimension_numbers = #tpu.dot_dimension_numbers<[1], [0], [0], [1], [0, 0, 1, 1], [], []>} : vector<8x8xf32>, vector<8x32xf32>, vector<8x32xf32> -> vector<8x32xf32>
    %74 = arith.addf %52, %73 : vector<8x32xf32>
    %75 = vector.extract_strided_slice %21 {offsets = [0, 16], sizes = [8, 8], strides = [1, 1]} : vector<8x32xf32> to vector<8x8xf32>
    %76 = vector.extract_strided_slice %22 {offsets = [0, 16], sizes = [8, 8], strides = [1, 1]} : vector<8x32xf32> to vector<8x8xf32>
    %77 = tpu.transpose %76, [1, 0] : vector<8x8xf32> -> vector<8x8xf32>
    %cst_38 = arith.constant dense<0.000000e+00> : vector<8x8xf32>
    %78 = tpu.matmul %75, %77, %cst_38 {dimension_numbers = #tpu.dot_dimension_numbers<[1], [0], [0], [1], [0, 0, 1, 1], [], []>} : vector<8x8xf32>, vector<8x8xf32>, vector<8x8xf32> -> vector<8x8xf32>
    %cst_39 = arith.constant 0.353553385 : f32
    %79 = vector.broadcast %cst_39 : f32 to vector<8x8xf32>
    %80 = arith.mulf %78, %79 : vector<8x8xf32>
    %81 = arith.addf %80, %11 : vector<8x8xf32>
    %cst_40 = arith.constant dense<0xFF800000> : vector<8xf32>
    %82 = vector.multi_reduction <maximumf>, %81, %cst_40 [1] : vector<8x8xf32> to vector<8xf32>
    %83 = vector.shape_cast %82 : vector<8xf32> to vector<8x1xf32>
    %84 = vector.broadcast %83 : vector<8x1xf32> to vector<8x8xf32>
    %85 = arith.subf %81, %84 : vector<8x8xf32>
    %86 = math.exp %85 : vector<8x8xf32>
    %cst_41 = arith.constant dense<0.000000e+00> : vector<8xf32>
    %87 = vector.multi_reduction <add>, %86, %cst_41 [1] : vector<8x8xf32> to vector<8xf32>
    %88 = vector.shape_cast %87 : vector<8xf32> to vector<8x1xf32>
    %89 = tpu.reciprocal %88 {approx = true} : vector<8x1xf32> -> vector<8x1xf32>
    %90 = vector.broadcast %89 : vector<8x1xf32> to vector<8x8xf32>
    %91 = arith.mulf %86, %90 : vector<8x8xf32>
    %92 = vector.extract_strided_slice %23 {offsets = [0, 16], sizes = [8, 8], strides = [1, 1]} : vector<8x32xf32> to vector<8x8xf32>
    %cst_42 = arith.constant dense<0.000000e+00> : vector<8x8xf32>
    %93 = tpu.matmul %91, %92, %cst_42 {dimension_numbers = #tpu.dot_dimension_numbers<[1], [0], [0], [1], [0, 0, 1, 1], [], []>} : vector<8x8xf32>, vector<8x8xf32>, vector<8x8xf32> -> vector<8x8xf32>
    %94 = vector.extract_strided_slice %25 {offsets = [16, 0], sizes = [8, 32], strides = [1, 1]} : vector<32x32xf32> to vector<8x32xf32>
    %cst_43 = arith.constant dense<0.000000e+00> : vector<8x32xf32>
    %95 = tpu.matmul %93, %94, %cst_43 {dimension_numbers = #tpu.dot_dimension_numbers<[1], [0], [0], [1], [0, 0, 1, 1], [], []>} : vector<8x8xf32>, vector<8x32xf32>, vector<8x32xf32> -> vector<8x32xf32>
    %96 = arith.addf %74, %95 : vector<8x32xf32>
    %97 = vector.extract_strided_slice %21 {offsets = [0, 24], sizes = [8, 8], strides = [1, 1]} : vector<8x32xf32> to vector<8x8xf32>
    %98 = vector.extract_strided_slice %22 {offsets = [0, 24], sizes = [8, 8], strides = [1, 1]} : vector<8x32xf32> to vector<8x8xf32>
    %99 = tpu.transpose %98, [1, 0] : vector<8x8xf32> -> vector<8x8xf32>
    %cst_44 = arith.constant dense<0.000000e+00> : vector<8x8xf32>
    %100 = tpu.matmul %97, %99, %cst_44 {dimension_numbers = #tpu.dot_dimension_numbers<[1], [0], [0], [1], [0, 0, 1, 1], [], []>} : vector<8x8xf32>, vector<8x8xf32>, vector<8x8xf32> -> vector<8x8xf32>
    %cst_45 = arith.constant 0.353553385 : f32
    %101 = vector.broadcast %cst_45 : f32 to vector<8x8xf32>
    %102 = arith.mulf %100, %101 : vector<8x8xf32>
    %103 = arith.addf %102, %11 : vector<8x8xf32>
    %cst_46 = arith.constant dense<0xFF800000> : vector<8xf32>
    %104 = vector.multi_reduction <maximumf>, %103, %cst_46 [1] : vector<8x8xf32> to vector<8xf32>
    %105 = vector.shape_cast %104 : vector<8xf32> to vector<8x1xf32>
    %106 = vector.broadcast %105 : vector<8x1xf32> to vector<8x8xf32>
    %107 = arith.subf %103, %106 : vector<8x8xf32>
    %108 = math.exp %107 : vector<8x8xf32>
    %cst_47 = arith.constant dense<0.000000e+00> : vector<8xf32>
    %109 = vector.multi_reduction <add>, %108, %cst_47 [1] : vector<8x8xf32> to vector<8xf32>
    %110 = vector.shape_cast %109 : vector<8xf32> to vector<8x1xf32>
    %111 = tpu.reciprocal %110 {approx = true} : vector<8x1xf32> -> vector<8x1xf32>
    %112 = vector.broadcast %111 : vector<8x1xf32> to vector<8x8xf32>
    %113 = arith.mulf %108, %112 : vector<8x8xf32>
    %114 = vector.extract_strided_slice %23 {offsets = [0, 24], sizes = [8, 8], strides = [1, 1]} : vector<8x32xf32> to vector<8x8xf32>
    %cst_48 = arith.constant dense<0.000000e+00> : vector<8x8xf32>
    %115 = tpu.matmul %113, %114, %cst_48 {dimension_numbers = #tpu.dot_dimension_numbers<[1], [0], [0], [1], [0, 0, 1, 1], [], []>} : vector<8x8xf32>, vector<8x8xf32>, vector<8x8xf32> -> vector<8x8xf32>
    %116 = vector.extract_strided_slice %25 {offsets = [24, 0], sizes = [8, 32], strides = [1, 1]} : vector<32x32xf32> to vector<8x32xf32>
    %cst_49 = arith.constant dense<0.000000e+00> : vector<8x32xf32>
    %117 = tpu.matmul %115, %116, %cst_49 {dimension_numbers = #tpu.dot_dimension_numbers<[1], [0], [0], [1], [0, 0, 1, 1], [], []>} : vector<8x8xf32>, vector<8x32xf32>, vector<8x32xf32> -> vector<8x32xf32>
    %118 = arith.addf %96, %117 : vector<8x32xf32>
    %119 = arith.addf %1, %118 : vector<8x32xf32>
    %120 = vector.extract_strided_slice %13 {offsets = [0, 0], sizes = [1, 32], strides = [1, 1]} : vector<6x32xf32> to vector<1x32xf32>
    %121 = vector.shape_cast %120 : vector<1x32xf32> to vector<32xf32>
    %122 = vector.extract_strided_slice %13 {offsets = [1, 0], sizes = [1, 32], strides = [1, 1]} : vector<6x32xf32> to vector<1x32xf32>
    %123 = vector.shape_cast %122 : vector<1x32xf32> to vector<32xf32>
    %cst_50 = arith.constant dense<0.000000e+00> : vector<8xf32>
    %124 = vector.multi_reduction <add>, %119, %cst_50 [1] : vector<8x32xf32> to vector<8xf32>
    %125 = vector.shape_cast %124 : vector<8xf32> to vector<8x1xf32>
    %cst_51 = arith.constant 3.200000e+01 : f32
    %126 = vector.broadcast %cst_51 : f32 to vector<8x1xf32>
    %127 = arith.divf %125, %126 : vector<8x1xf32>
    %128 = vector.broadcast %127 : vector<8x1xf32> to vector<8x32xf32>
    %129 = arith.subf %119, %128 : vector<8x32xf32>
    %130 = vector.broadcast %127 : vector<8x1xf32> to vector<8x32xf32>
    %131 = arith.subf %119, %130 : vector<8x32xf32>
    %132 = arith.mulf %129, %131 : vector<8x32xf32>
    %cst_52 = arith.constant dense<0.000000e+00> : vector<8xf32>
    %133 = vector.multi_reduction <add>, %132, %cst_52 [1] : vector<8x32xf32> to vector<8xf32>
    %134 = vector.shape_cast %133 : vector<8xf32> to vector<8x1xf32>
    %cst_53 = arith.constant 3.200000e+01 : f32
    %135 = vector.broadcast %cst_53 : f32 to vector<8x1xf32>
    %136 = arith.divf %134, %135 : vector<8x1xf32>
    %137 = vector.broadcast %127 : vector<8x1xf32> to vector<8x32xf32>
    %138 = arith.subf %119, %137 : vector<8x32xf32>
    %cst_54 = arith.constant 9.99999996E-13 : f32
    %139 = vector.broadcast %cst_54 : f32 to vector<8x1xf32>
    %140 = arith.addf %136, %139 : vector<8x1xf32>
    %141 = math.rsqrt %140 : vector<8x1xf32>
    %142 = vector.broadcast %141 : vector<8x1xf32> to vector<8x32xf32>
    %143 = arith.mulf %138, %142 : vector<8x32xf32>
    %144 = vector.shape_cast %121 : vector<32xf32> to vector<1x32xf32>
    %145 = vector.broadcast %144 : vector<1x32xf32> to vector<8x32xf32>
    %146 = arith.mulf %143, %145 : vector<8x32xf32>
    %147 = vector.shape_cast %123 : vector<32xf32> to vector<1x32xf32>
    %148 = vector.broadcast %147 : vector<1x32xf32> to vector<8x32xf32>
    %149 = arith.addf %146, %148 : vector<8x32xf32>
    %c0_55 = arith.constant 0 : index
    %c0_56 = arith.constant 0 : index
    %c0_57 = arith.constant 0 : index
    %150 = vector.load %arg8[%c0_55, %c0_56, %c0_57] : memref<2x32x32xf32, #tpu.memory_space<vmem>>, vector<1x32x32xf32>
    %151 = vector.shape_cast %150 : vector<1x32x32xf32> to vector<32x32xf32>
    %cst_58 = arith.constant dense<0.000000e+00> : vector<8x32xf32>
    %152 = tpu.matmul %149, %151, %cst_58 {dimension_numbers = #tpu.dot_dimension_numbers<[1], [0], [0], [1], [0, 0, 1, 1], [], []>} : vector<8x32xf32>, vector<32x32xf32>, vector<8x32xf32> -> vector<8x32xf32>
    %c0_59 = arith.constant 0 : index
    %c0_60 = arith.constant 0 : index
    %c0_61 = arith.constant 0 : index
    %153 = vector.load %arg9[%c0_59, %c0_60, %c0_61] : memref<2x1x32xf32, #tpu.memory_space<vmem>>, vector<1x1x32xf32>
    %154 = vector.shape_cast %153 : vector<1x1x32xf32> to vector<1x32xf32>
    %155 = vector.broadcast %154 : vector<1x32xf32> to vector<8x32xf32>
    %156 = arith.addf %152, %155 : vector<8x32xf32>
    %c0_62 = arith.constant 0 : index
    %c0_63 = arith.constant 0 : index
    %c0_64 = arith.constant 0 : index
    %157 = vector.load %arg10[%c0_62, %c0_63, %c0_64] : memref<2x32x32xf32, #tpu.memory_space<vmem>>, vector<1x32x32xf32>
    %158 = vector.shape_cast %157 : vector<1x32x32xf32> to vector<32x32xf32>
    %cst_65 = arith.constant dense<0.000000e+00> : vector<16x32xf32>
    %159 = tpu.matmul %3, %158, %cst_65 {dimension_numbers = #tpu.dot_dimension_numbers<[1], [0], [0], [1], [0, 0, 1, 1], [], []>} : vector<16x32xf32>, vector<32x32xf32>, vector<16x32xf32> -> vector<16x32xf32>
    %c0_66 = arith.constant 0 : index
    %c0_67 = arith.constant 0 : index
    %c0_68 = arith.constant 0 : index
    %160 = vector.load %arg11[%c0_66, %c0_67, %c0_68] : memref<2x1x32xf32, #tpu.memory_space<vmem>>, vector<1x1x32xf32>
    %161 = vector.shape_cast %160 : vector<1x1x32xf32> to vector<1x32xf32>
    %162 = vector.broadcast %161 : vector<1x32xf32> to vector<16x32xf32>
    %163 = arith.addf %159, %162 : vector<16x32xf32>
    %c0_69 = arith.constant 0 : index
    %c0_70 = arith.constant 0 : index
    %c0_71 = arith.constant 0 : index
    %164 = vector.load %arg12[%c0_69, %c0_70, %c0_71] : memref<2x32x32xf32, #tpu.memory_space<vmem>>, vector<1x32x32xf32>
    %165 = vector.shape_cast %164 : vector<1x32x32xf32> to vector<32x32xf32>
    %cst_72 = arith.constant dense<0.000000e+00> : vector<16x32xf32>
    %166 = tpu.matmul %5, %165, %cst_72 {dimension_numbers = #tpu.dot_dimension_numbers<[1], [0], [0], [1], [0, 0, 1, 1], [], []>} : vector<16x32xf32>, vector<32x32xf32>, vector<16x32xf32> -> vector<16x32xf32>
    %c0_73 = arith.constant 0 : index
    %c0_74 = arith.constant 0 : index
    %c0_75 = arith.constant 0 : index
    %167 = vector.load %arg13[%c0_73, %c0_74, %c0_75] : memref<2x1x32xf32, #tpu.memory_space<vmem>>, vector<1x1x32xf32>
    %168 = vector.shape_cast %167 : vector<1x1x32xf32> to vector<1x32xf32>
    %169 = vector.broadcast %168 : vector<1x32xf32> to vector<16x32xf32>
    %170 = arith.addf %166, %169 : vector<16x32xf32>
    %c0_76 = arith.constant 0 : index
    %c0_77 = arith.constant 0 : index
    %c0_78 = arith.constant 0 : index
    %171 = vector.load %arg14[%c0_76, %c0_77, %c0_78] : memref<2x32x32xf32, #tpu.memory_space<vmem>>, vector<1x32x32xf32>
    %172 = vector.shape_cast %171 : vector<1x32x32xf32> to vector<32x32xf32>
    %c0_79 = arith.constant 0 : index
    %c0_80 = arith.constant 0 : index
    %c0_81 = arith.constant 0 : index
    %173 = vector.load %arg15[%c0_79, %c0_80, %c0_81] : memref<2x1x32xf32, #tpu.memory_space<vmem>>, vector<1x1x32xf32>
    %174 = vector.shape_cast %173 : vector<1x1x32xf32> to vector<1x32xf32>
    %cst_82 = arith.constant 0.000000e+00 : f32
    %175 = vector.broadcast %cst_82 : f32 to vector<8x32xf32>
    %176 = vector.broadcast %174 : vector<1x32xf32> to vector<8x32xf32>
    %177 = arith.addf %175, %176 : vector<8x32xf32>
    %178 = vector.extract_strided_slice %156 {offsets = [0, 0], sizes = [8, 8], strides = [1, 1]} : vector<8x32xf32> to vector<8x8xf32>
    %179 = vector.extract_strided_slice %163 {offsets = [0, 0], sizes = [16, 8], strides = [1, 1]} : vector<16x32xf32> to vector<16x8xf32>
    %180 = tpu.transpose %179, [1, 0] : vector<16x8xf32> -> vector<8x16xf32>
    %cst_83 = arith.constant dense<0.000000e+00> : vector<8x16xf32>
    %181 = tpu.matmul %178, %180, %cst_83 {dimension_numbers = #tpu.dot_dimension_numbers<[1], [0], [0], [1], [0, 0, 1, 1], [], []>} : vector<8x8xf32>, vector<8x16xf32>, vector<8x16xf32> -> vector<8x16xf32>
    %cst_84 = arith.constant 0.353553385 : f32
    %182 = vector.broadcast %cst_84 : f32 to vector<8x16xf32>
    %183 = arith.mulf %181, %182 : vector<8x16xf32>
    %cst_85 = arith.constant dense<0xFF800000> : vector<8xf32>
    %184 = vector.multi_reduction <maximumf>, %183, %cst_85 [1] : vector<8x16xf32> to vector<8xf32>
    %185 = vector.shape_cast %184 : vector<8xf32> to vector<8x1xf32>
    %186 = vector.broadcast %185 : vector<8x1xf32> to vector<8x16xf32>
    %187 = arith.subf %183, %186 : vector<8x16xf32>
    %188 = math.exp %187 : vector<8x16xf32>
    %cst_86 = arith.constant dense<0.000000e+00> : vector<8xf32>
    %189 = vector.multi_reduction <add>, %188, %cst_86 [1] : vector<8x16xf32> to vector<8xf32>
    %190 = vector.shape_cast %189 : vector<8xf32> to vector<8x1xf32>
    %191 = tpu.reciprocal %190 {approx = true} : vector<8x1xf32> -> vector<8x1xf32>
    %192 = vector.broadcast %191 : vector<8x1xf32> to vector<8x16xf32>
    %193 = arith.mulf %188, %192 : vector<8x16xf32>
    %194 = vector.extract_strided_slice %170 {offsets = [0, 0], sizes = [16, 8], strides = [1, 1]} : vector<16x32xf32> to vector<16x8xf32>
    %cst_87 = arith.constant dense<0.000000e+00> : vector<8x8xf32>
    %195 = tpu.matmul %193, %194, %cst_87 {dimension_numbers = #tpu.dot_dimension_numbers<[1], [0], [0], [1], [0, 0, 1, 1], [], []>} : vector<8x16xf32>, vector<16x8xf32>, vector<8x8xf32> -> vector<8x8xf32>
    %196 = vector.extract_strided_slice %172 {offsets = [0, 0], sizes = [8, 32], strides = [1, 1]} : vector<32x32xf32> to vector<8x32xf32>
    %cst_88 = arith.constant dense<0.000000e+00> : vector<8x32xf32>
    %197 = tpu.matmul %195, %196, %cst_88 {dimension_numbers = #tpu.dot_dimension_numbers<[1], [0], [0], [1], [0, 0, 1, 1], [], []>} : vector<8x8xf32>, vector<8x32xf32>, vector<8x32xf32> -> vector<8x32xf32>
    %198 = arith.addf %177, %197 : vector<8x32xf32>
    %199 = vector.extract_strided_slice %156 {offsets = [0, 8], sizes = [8, 8], strides = [1, 1]} : vector<8x32xf32> to vector<8x8xf32>
    %200 = vector.extract_strided_slice %163 {offsets = [0, 8], sizes = [16, 8], strides = [1, 1]} : vector<16x32xf32> to vector<16x8xf32>
    %201 = tpu.transpose %200, [1, 0] : vector<16x8xf32> -> vector<8x16xf32>
    %cst_89 = arith.constant dense<0.000000e+00> : vector<8x16xf32>
    %202 = tpu.matmul %199, %201, %cst_89 {dimension_numbers = #tpu.dot_dimension_numbers<[1], [0], [0], [1], [0, 0, 1, 1], [], []>} : vector<8x8xf32>, vector<8x16xf32>, vector<8x16xf32> -> vector<8x16xf32>
    %cst_90 = arith.constant 0.353553385 : f32
    %203 = vector.broadcast %cst_90 : f32 to vector<8x16xf32>
    %204 = arith.mulf %202, %203 : vector<8x16xf32>
    %cst_91 = arith.constant dense<0xFF800000> : vector<8xf32>
    %205 = vector.multi_reduction <maximumf>, %204, %cst_91 [1] : vector<8x16xf32> to vector<8xf32>
    %206 = vector.shape_cast %205 : vector<8xf32> to vector<8x1xf32>
    %207 = vector.broadcast %206 : vector<8x1xf32> to vector<8x16xf32>
    %208 = arith.subf %204, %207 : vector<8x16xf32>
    %209 = math.exp %208 : vector<8x16xf32>
    %cst_92 = arith.constant dense<0.000000e+00> : vector<8xf32>
    %210 = vector.multi_reduction <add>, %209, %cst_92 [1] : vector<8x16xf32> to vector<8xf32>
    %211 = vector.shape_cast %210 : vector<8xf32> to vector<8x1xf32>
    %212 = tpu.reciprocal %211 {approx = true} : vector<8x1xf32> -> vector<8x1xf32>
    %213 = vector.broadcast %212 : vector<8x1xf32> to vector<8x16xf32>
    %214 = arith.mulf %209, %213 : vector<8x16xf32>
    %215 = vector.extract_strided_slice %170 {offsets = [0, 8], sizes = [16, 8], strides = [1, 1]} : vector<16x32xf32> to vector<16x8xf32>
    %cst_93 = arith.constant dense<0.000000e+00> : vector<8x8xf32>
    %216 = tpu.matmul %214, %215, %cst_93 {dimension_numbers = #tpu.dot_dimension_numbers<[1], [0], [0], [1], [0, 0, 1, 1], [], []>} : vector<8x16xf32>, vector<16x8xf32>, vector<8x8xf32> -> vector<8x8xf32>
    %217 = vector.extract_strided_slice %172 {offsets = [8, 0], sizes = [8, 32], strides = [1, 1]} : vector<32x32xf32> to vector<8x32xf32>
    %cst_94 = arith.constant dense<0.000000e+00> : vector<8x32xf32>
    %218 = tpu.matmul %216, %217, %cst_94 {dimension_numbers = #tpu.dot_dimension_numbers<[1], [0], [0], [1], [0, 0, 1, 1], [], []>} : vector<8x8xf32>, vector<8x32xf32>, vector<8x32xf32> -> vector<8x32xf32>
    %219 = arith.addf %198, %218 : vector<8x32xf32>
    %220 = vector.extract_strided_slice %156 {offsets = [0, 16], sizes = [8, 8], strides = [1, 1]} : vector<8x32xf32> to vector<8x8xf32>
    %221 = vector.extract_strided_slice %163 {offsets = [0, 16], sizes = [16, 8], strides = [1, 1]} : vector<16x32xf32> to vector<16x8xf32>
    %222 = tpu.transpose %221, [1, 0] : vector<16x8xf32> -> vector<8x16xf32>
    %cst_95 = arith.constant dense<0.000000e+00> : vector<8x16xf32>
    %223 = tpu.matmul %220, %222, %cst_95 {dimension_numbers = #tpu.dot_dimension_numbers<[1], [0], [0], [1], [0, 0, 1, 1], [], []>} : vector<8x8xf32>, vector<8x16xf32>, vector<8x16xf32> -> vector<8x16xf32>
    %cst_96 = arith.constant 0.353553385 : f32
    %224 = vector.broadcast %cst_96 : f32 to vector<8x16xf32>
    %225 = arith.mulf %223, %224 : vector<8x16xf32>
    %cst_97 = arith.constant dense<0xFF800000> : vector<8xf32>
    %226 = vector.multi_reduction <maximumf>, %225, %cst_97 [1] : vector<8x16xf32> to vector<8xf32>
    %227 = vector.shape_cast %226 : vector<8xf32> to vector<8x1xf32>
    %228 = vector.broadcast %227 : vector<8x1xf32> to vector<8x16xf32>
    %229 = arith.subf %225, %228 : vector<8x16xf32>
    %230 = math.exp %229 : vector<8x16xf32>
    %cst_98 = arith.constant dense<0.000000e+00> : vector<8xf32>
    %231 = vector.multi_reduction <add>, %230, %cst_98 [1] : vector<8x16xf32> to vector<8xf32>
    %232 = vector.shape_cast %231 : vector<8xf32> to vector<8x1xf32>
    %233 = tpu.reciprocal %232 {approx = true} : vector<8x1xf32> -> vector<8x1xf32>
    %234 = vector.broadcast %233 : vector<8x1xf32> to vector<8x16xf32>
    %235 = arith.mulf %230, %234 : vector<8x16xf32>
    %236 = vector.extract_strided_slice %170 {offsets = [0, 16], sizes = [16, 8], strides = [1, 1]} : vector<16x32xf32> to vector<16x8xf32>
    %cst_99 = arith.constant dense<0.000000e+00> : vector<8x8xf32>
    %237 = tpu.matmul %235, %236, %cst_99 {dimension_numbers = #tpu.dot_dimension_numbers<[1], [0], [0], [1], [0, 0, 1, 1], [], []>} : vector<8x16xf32>, vector<16x8xf32>, vector<8x8xf32> -> vector<8x8xf32>
    %238 = vector.extract_strided_slice %172 {offsets = [16, 0], sizes = [8, 32], strides = [1, 1]} : vector<32x32xf32> to vector<8x32xf32>
    %cst_100 = arith.constant dense<0.000000e+00> : vector<8x32xf32>
    %239 = tpu.matmul %237, %238, %cst_100 {dimension_numbers = #tpu.dot_dimension_numbers<[1], [0], [0], [1], [0, 0, 1, 1], [], []>} : vector<8x8xf32>, vector<8x32xf32>, vector<8x32xf32> -> vector<8x32xf32>
    %240 = arith.addf %219, %239 : vector<8x32xf32>
    %241 = vector.extract_strided_slice %156 {offsets = [0, 24], sizes = [8, 8], strides = [1, 1]} : vector<8x32xf32> to vector<8x8xf32>
    %242 = vector.extract_strided_slice %163 {offsets = [0, 24], sizes = [16, 8], strides = [1, 1]} : vector<16x32xf32> to vector<16x8xf32>
    %243 = tpu.transpose %242, [1, 0] : vector<16x8xf32> -> vector<8x16xf32>
    %cst_101 = arith.constant dense<0.000000e+00> : vector<8x16xf32>
    %244 = tpu.matmul %241, %243, %cst_101 {dimension_numbers = #tpu.dot_dimension_numbers<[1], [0], [0], [1], [0, 0, 1, 1], [], []>} : vector<8x8xf32>, vector<8x16xf32>, vector<8x16xf32> -> vector<8x16xf32>
    %cst_102 = arith.constant 0.353553385 : f32
    %245 = vector.broadcast %cst_102 : f32 to vector<8x16xf32>
    %246 = arith.mulf %244, %245 : vector<8x16xf32>
    %cst_103 = arith.constant dense<0xFF800000> : vector<8xf32>
    %247 = vector.multi_reduction <maximumf>, %246, %cst_103 [1] : vector<8x16xf32> to vector<8xf32>
    %248 = vector.shape_cast %247 : vector<8xf32> to vector<8x1xf32>
    %249 = vector.broadcast %248 : vector<8x1xf32> to vector<8x16xf32>
    %250 = arith.subf %246, %249 : vector<8x16xf32>
    %251 = math.exp %250 : vector<8x16xf32>
    %cst_104 = arith.constant dense<0.000000e+00> : vector<8xf32>
    %252 = vector.multi_reduction <add>, %251, %cst_104 [1] : vector<8x16xf32> to vector<8xf32>
    %253 = vector.shape_cast %252 : vector<8xf32> to vector<8x1xf32>
    %254 = tpu.reciprocal %253 {approx = true} : vector<8x1xf32> -> vector<8x1xf32>
    %255 = vector.broadcast %254 : vector<8x1xf32> to vector<8x16xf32>
    %256 = arith.mulf %251, %255 : vector<8x16xf32>
    %257 = vector.extract_strided_slice %170 {offsets = [0, 24], sizes = [16, 8], strides = [1, 1]} : vector<16x32xf32> to vector<16x8xf32>
    %cst_105 = arith.constant dense<0.000000e+00> : vector<8x8xf32>
    %258 = tpu.matmul %256, %257, %cst_105 {dimension_numbers = #tpu.dot_dimension_numbers<[1], [0], [0], [1], [0, 0, 1, 1], [], []>} : vector<8x16xf32>, vector<16x8xf32>, vector<8x8xf32> -> vector<8x8xf32>
    %259 = vector.extract_strided_slice %172 {offsets = [24, 0], sizes = [8, 32], strides = [1, 1]} : vector<32x32xf32> to vector<8x32xf32>
    %cst_106 = arith.constant dense<0.000000e+00> : vector<8x32xf32>
    %260 = tpu.matmul %258, %259, %cst_106 {dimension_numbers = #tpu.dot_dimension_numbers<[1], [0], [0], [1], [0, 0, 1, 1], [], []>} : vector<8x8xf32>, vector<8x32xf32>, vector<8x32xf32> -> vector<8x32xf32>
    %261 = arith.addf %240, %260 : vector<8x32xf32>
    %262 = arith.addf %149, %261 : vector<8x32xf32>
    %263 = vector.extract_strided_slice %13 {offsets = [2, 0], sizes = [1, 32], strides = [1, 1]} : vector<6x32xf32> to vector<1x32xf32>
    %264 = vector.shape_cast %263 : vector<1x32xf32> to vector<32xf32>
    %265 = vector.extract_strided_slice %13 {offsets = [3, 0], sizes = [1, 32], strides = [1, 1]} : vector<6x32xf32> to vector<1x32xf32>
    %266 = vector.shape_cast %265 : vector<1x32xf32> to vector<32xf32>
    %cst_107 = arith.constant dense<0.000000e+00> : vector<8xf32>
    %267 = vector.multi_reduction <add>, %262, %cst_107 [1] : vector<8x32xf32> to vector<8xf32>
    %268 = vector.shape_cast %267 : vector<8xf32> to vector<8x1xf32>
    %cst_108 = arith.constant 3.200000e+01 : f32
    %269 = vector.broadcast %cst_108 : f32 to vector<8x1xf32>
    %270 = arith.divf %268, %269 : vector<8x1xf32>
    %271 = vector.broadcast %270 : vector<8x1xf32> to vector<8x32xf32>
    %272 = arith.subf %262, %271 : vector<8x32xf32>
    %273 = vector.broadcast %270 : vector<8x1xf32> to vector<8x32xf32>
    %274 = arith.subf %262, %273 : vector<8x32xf32>
    %275 = arith.mulf %272, %274 : vector<8x32xf32>
    %cst_109 = arith.constant dense<0.000000e+00> : vector<8xf32>
    %276 = vector.multi_reduction <add>, %275, %cst_109 [1] : vector<8x32xf32> to vector<8xf32>
    %277 = vector.shape_cast %276 : vector<8xf32> to vector<8x1xf32>
    %cst_110 = arith.constant 3.200000e+01 : f32
    %278 = vector.broadcast %cst_110 : f32 to vector<8x1xf32>
    %279 = arith.divf %277, %278 : vector<8x1xf32>
    %280 = vector.broadcast %270 : vector<8x1xf32> to vector<8x32xf32>
    %281 = arith.subf %262, %280 : vector<8x32xf32>
    %cst_111 = arith.constant 9.99999996E-13 : f32
    %282 = vector.broadcast %cst_111 : f32 to vector<8x1xf32>
    %283 = arith.addf %279, %282 : vector<8x1xf32>
    %284 = math.rsqrt %283 : vector<8x1xf32>
    %285 = vector.broadcast %284 : vector<8x1xf32> to vector<8x32xf32>
    %286 = arith.mulf %281, %285 : vector<8x32xf32>
    %287 = vector.shape_cast %264 : vector<32xf32> to vector<1x32xf32>
    %288 = vector.broadcast %287 : vector<1x32xf32> to vector<8x32xf32>
    %289 = arith.mulf %286, %288 : vector<8x32xf32>
    %290 = vector.shape_cast %266 : vector<32xf32> to vector<1x32xf32>
    %291 = vector.broadcast %290 : vector<1x32xf32> to vector<8x32xf32>
    %292 = arith.addf %289, %291 : vector<8x32xf32>
    %c0_112 = arith.constant 0 : index
    %c0_113 = arith.constant 0 : index
    %c0_114 = arith.constant 0 : index
    %293 = vector.load %arg16[%c0_112, %c0_113, %c0_114] : memref<2x32x64xf32, #tpu.memory_space<vmem>>, vector<1x32x64xf32>
    %294 = vector.shape_cast %293 : vector<1x32x64xf32> to vector<32x64xf32>
    %cst_115 = arith.constant dense<0.000000e+00> : vector<8x64xf32>
    %295 = tpu.matmul %292, %294, %cst_115 {dimension_numbers = #tpu.dot_dimension_numbers<[1], [0], [0], [1], [0, 0, 1, 1], [], []>} : vector<8x32xf32>, vector<32x64xf32>, vector<8x64xf32> -> vector<8x64xf32>
    %c0_116 = arith.constant 0 : index
    %c0_117 = arith.constant 0 : index
    %c0_118 = arith.constant 0 : index
    %296 = vector.load %arg17[%c0_116, %c0_117, %c0_118] : memref<2x1x64xf32, #tpu.memory_space<vmem>>, vector<1x1x64xf32>
    %297 = vector.shape_cast %296 : vector<1x1x64xf32> to vector<1x64xf32>
    %298 = vector.broadcast %297 : vector<1x64xf32> to vector<8x64xf32>
    %299 = arith.addf %295, %298 : vector<8x64xf32>
    %cst_119 = arith.constant 5.000000e-01 : f32
    %300 = vector.broadcast %cst_119 : f32 to vector<8x64xf32>
    %301 = arith.mulf %300, %299 : vector<8x64xf32>
    %cst_120 = arith.constant 2.000000e+00 : f32
    %302 = math.sqrt %cst_120 : f32
    %cst_121 = arith.constant 1.000000e+00 : f32
    %303 = arith.divf %cst_121, %302 : f32
    %304 = vector.broadcast %303 : f32 to vector<8x64xf32>
    %305 = arith.mulf %299, %304 : vector<8x64xf32>
    %306 = math.erf %305 : vector<8x64xf32>
    %cst_122 = arith.constant 1.000000e+00 : f32
    %307 = vector.broadcast %cst_122 : f32 to vector<8x64xf32>
    %308 = arith.addf %307, %306 : vector<8x64xf32>
    %309 = arith.mulf %301, %308 : vector<8x64xf32>
    %c0_123 = arith.constant 0 : index
    %c0_124 = arith.constant 0 : index
    %c0_125 = arith.constant 0 : index
    %310 = vector.load %arg18[%c0_123, %c0_124, %c0_125] : memref<2x64x32xf32, #tpu.memory_space<vmem>>, vector<1x64x32xf32>
    %311 = vector.shape_cast %310 : vector<1x64x32xf32> to vector<64x32xf32>
    %cst_126 = arith.constant dense<0.000000e+00> : vector<8x32xf32>
    %312 = tpu.matmul %309, %311, %cst_126 {dimension_numbers = #tpu.dot_dimension_numbers<[1], [0], [0], [1], [0, 0, 1, 1], [], []>} : vector<8x64xf32>, vector<64x32xf32>, vector<8x32xf32> -> vector<8x32xf32>
    %c0_127 = arith.constant 0 : index
    %c0_128 = arith.constant 0 : index
    %c0_129 = arith.constant 0 : index
    %313 = vector.load %arg19[%c0_127, %c0_128, %c0_129] : memref<2x1x32xf32, #tpu.memory_space<vmem>>, vector<1x1x32xf32>
    %314 = vector.shape_cast %313 : vector<1x1x32xf32> to vector<1x32xf32>
    %315 = vector.broadcast %314 : vector<1x32xf32> to vector<8x32xf32>
    %316 = arith.addf %312, %315 : vector<8x32xf32>
    %317 = arith.addf %292, %316 : vector<8x32xf32>
    %318 = vector.extract_strided_slice %13 {offsets = [4, 0], sizes = [1, 32], strides = [1, 1]} : vector<6x32xf32> to vector<1x32xf32>
    %319 = vector.shape_cast %318 : vector<1x32xf32> to vector<32xf32>
    %320 = vector.extract_strided_slice %13 {offsets = [5, 0], sizes = [1, 32], strides = [1, 1]} : vector<6x32xf32> to vector<1x32xf32>
    %321 = vector.shape_cast %320 : vector<1x32xf32> to vector<32xf32>
    %cst_130 = arith.constant dense<0.000000e+00> : vector<8xf32>
    %322 = vector.multi_reduction <add>, %317, %cst_130 [1] : vector<8x32xf32> to vector<8xf32>
    %323 = vector.shape_cast %322 : vector<8xf32> to vector<8x1xf32>
    %cst_131 = arith.constant 3.200000e+01 : f32
    %324 = vector.broadcast %cst_131 : f32 to vector<8x1xf32>
    %325 = arith.divf %323, %324 : vector<8x1xf32>
    %326 = vector.broadcast %325 : vector<8x1xf32> to vector<8x32xf32>
    %327 = arith.subf %317, %326 : vector<8x32xf32>
    %328 = vector.broadcast %325 : vector<8x1xf32> to vector<8x32xf32>
    %329 = arith.subf %317, %328 : vector<8x32xf32>
    %330 = arith.mulf %327, %329 : vector<8x32xf32>
    %cst_132 = arith.constant dense<0.000000e+00> : vector<8xf32>
    %331 = vector.multi_reduction <add>, %330, %cst_132 [1] : vector<8x32xf32> to vector<8xf32>
    %332 = vector.shape_cast %331 : vector<8xf32> to vector<8x1xf32>
    %cst_133 = arith.constant 3.200000e+01 : f32
    %333 = vector.broadcast %cst_133 : f32 to vector<8x1xf32>
    %334 = arith.divf %332, %333 : vector<8x1xf32>
    %335 = vector.broadcast %325 : vector<8x1xf32> to vector<8x32xf32>
    %336 = arith.subf %317, %335 : vector<8x32xf32>
    %cst_134 = arith.constant 9.99999996E-13 : f32
    %337 = vector.broadcast %cst_134 : f32 to vector<8x1xf32>
    %338 = arith.addf %334, %337 : vector<8x1xf32>
    %339 = math.rsqrt %338 : vector<8x1xf32>
    %340 = vector.broadcast %339 : vector<8x1xf32> to vector<8x32xf32>
    %341 = arith.mulf %336, %340 : vector<8x32xf32>
    %342 = vector.shape_cast %319 : vector<32xf32> to vector<1x32xf32>
    %343 = vector.broadcast %342 : vector<1x32xf32> to vector<8x32xf32>
    %344 = arith.mulf %341, %343 : vector<8x32xf32>
    %345 = vector.shape_cast %321 : vector<32xf32> to vector<1x32xf32>
    %346 = vector.broadcast %345 : vector<1x32xf32> to vector<8x32xf32>
    %347 = arith.addf %344, %346 : vector<8x32xf32>
    %c1 = arith.constant 1 : index
    %c0_135 = arith.constant 0 : index
    %c0_136 = arith.constant 0 : index
    %348 = vector.load %arg20[%c1, %c0_135, %c0_136] : memref<2x6x32xf32, #tpu.memory_space<vmem>>, vector<1x6x32xf32>
    %349 = vector.shape_cast %348 : vector<1x6x32xf32> to vector<6x32xf32>
    %c1_137 = arith.constant 1 : index
    %c0_138 = arith.constant 0 : index
    %c0_139 = arith.constant 0 : index
    %350 = vector.load %arg4[%c1_137, %c0_138, %c0_139] : memref<2x32x96xf32, #tpu.memory_space<vmem>>, vector<1x32x96xf32>
    %351 = vector.shape_cast %350 : vector<1x32x96xf32> to vector<32x96xf32>
    %cst_140 = arith.constant dense<0.000000e+00> : vector<8x96xf32>
    %352 = tpu.matmul %347, %351, %cst_140 {dimension_numbers = #tpu.dot_dimension_numbers<[1], [0], [0], [1], [0, 0, 1, 1], [], []>} : vector<8x32xf32>, vector<32x96xf32>, vector<8x96xf32> -> vector<8x96xf32>
    %c1_141 = arith.constant 1 : index
    %c0_142 = arith.constant 0 : index
    %c0_143 = arith.constant 0 : index
    %353 = vector.load %arg5[%c1_141, %c0_142, %c0_143] : memref<2x1x96xf32, #tpu.memory_space<vmem>>, vector<1x1x96xf32>
    %354 = vector.shape_cast %353 : vector<1x1x96xf32> to vector<1x96xf32>
    %355 = vector.broadcast %354 : vector<1x96xf32> to vector<8x96xf32>
    %356 = arith.addf %352, %355 : vector<8x96xf32>
    %357 = vector.extract_strided_slice %356 {offsets = [0, 0], sizes = [8, 32], strides = [1, 1]} : vector<8x96xf32> to vector<8x32xf32>
    %358 = vector.extract_strided_slice %356 {offsets = [0, 32], sizes = [8, 32], strides = [1, 1]} : vector<8x96xf32> to vector<8x32xf32>
    %359 = vector.extract_strided_slice %356 {offsets = [0, 64], sizes = [8, 32], strides = [1, 1]} : vector<8x96xf32> to vector<8x32xf32>
    %c1_144 = arith.constant 1 : index
    %c0_145 = arith.constant 0 : index
    %c0_146 = arith.constant 0 : index
    %360 = vector.load %arg6[%c1_144, %c0_145, %c0_146] : memref<2x32x32xf32, #tpu.memory_space<vmem>>, vector<1x32x32xf32>
    %361 = vector.shape_cast %360 : vector<1x32x32xf32> to vector<32x32xf32>
    %c1_147 = arith.constant 1 : index
    %c0_148 = arith.constant 0 : index
    %c0_149 = arith.constant 0 : index
    %362 = vector.load %arg7[%c1_147, %c0_148, %c0_149] : memref<2x1x32xf32, #tpu.memory_space<vmem>>, vector<1x1x32xf32>
    %363 = vector.shape_cast %362 : vector<1x1x32xf32> to vector<1x32xf32>
    %cst_150 = arith.constant 0.000000e+00 : f32
    %364 = vector.broadcast %cst_150 : f32 to vector<8x32xf32>
    %365 = vector.broadcast %363 : vector<1x32xf32> to vector<8x32xf32>
    %366 = arith.addf %364, %365 : vector<8x32xf32>
    %367 = vector.extract_strided_slice %357 {offsets = [0, 0], sizes = [8, 8], strides = [1, 1]} : vector<8x32xf32> to vector<8x8xf32>
    %368 = vector.extract_strided_slice %358 {offsets = [0, 0], sizes = [8, 8], strides = [1, 1]} : vector<8x32xf32> to vector<8x8xf32>
    %369 = tpu.transpose %368, [1, 0] : vector<8x8xf32> -> vector<8x8xf32>
    %cst_151 = arith.constant dense<0.000000e+00> : vector<8x8xf32>
    %370 = tpu.matmul %367, %369, %cst_151 {dimension_numbers = #tpu.dot_dimension_numbers<[1], [0], [0], [1], [0, 0, 1, 1], [], []>} : vector<8x8xf32>, vector<8x8xf32>, vector<8x8xf32> -> vector<8x8xf32>
    %cst_152 = arith.constant 0.353553385 : f32
    %371 = vector.broadcast %cst_152 : f32 to vector<8x8xf32>
    %372 = arith.mulf %370, %371 : vector<8x8xf32>
    %373 = arith.addf %372, %11 : vector<8x8xf32>
    %cst_153 = arith.constant dense<0xFF800000> : vector<8xf32>
    %374 = vector.multi_reduction <maximumf>, %373, %cst_153 [1] : vector<8x8xf32> to vector<8xf32>
    %375 = vector.shape_cast %374 : vector<8xf32> to vector<8x1xf32>
    %376 = vector.broadcast %375 : vector<8x1xf32> to vector<8x8xf32>
    %377 = arith.subf %373, %376 : vector<8x8xf32>
    %378 = math.exp %377 : vector<8x8xf32>
    %cst_154 = arith.constant dense<0.000000e+00> : vector<8xf32>
    %379 = vector.multi_reduction <add>, %378, %cst_154 [1] : vector<8x8xf32> to vector<8xf32>
    %380 = vector.shape_cast %379 : vector<8xf32> to vector<8x1xf32>
    %381 = tpu.reciprocal %380 {approx = true} : vector<8x1xf32> -> vector<8x1xf32>
    %382 = vector.broadcast %381 : vector<8x1xf32> to vector<8x8xf32>
    %383 = arith.mulf %378, %382 : vector<8x8xf32>
    %384 = vector.extract_strided_slice %359 {offsets = [0, 0], sizes = [8, 8], strides = [1, 1]} : vector<8x32xf32> to vector<8x8xf32>
    %cst_155 = arith.constant dense<0.000000e+00> : vector<8x8xf32>
    %385 = tpu.matmul %383, %384, %cst_155 {dimension_numbers = #tpu.dot_dimension_numbers<[1], [0], [0], [1], [0, 0, 1, 1], [], []>} : vector<8x8xf32>, vector<8x8xf32>, vector<8x8xf32> -> vector<8x8xf32>
    %386 = vector.extract_strided_slice %361 {offsets = [0, 0], sizes = [8, 32], strides = [1, 1]} : vector<32x32xf32> to vector<8x32xf32>
    %cst_156 = arith.constant dense<0.000000e+00> : vector<8x32xf32>
    %387 = tpu.matmul %385, %386, %cst_156 {dimension_numbers = #tpu.dot_dimension_numbers<[1], [0], [0], [1], [0, 0, 1, 1], [], []>} : vector<8x8xf32>, vector<8x32xf32>, vector<8x32xf32> -> vector<8x32xf32>
    %388 = arith.addf %366, %387 : vector<8x32xf32>
    %389 = vector.extract_strided_slice %357 {offsets = [0, 8], sizes = [8, 8], strides = [1, 1]} : vector<8x32xf32> to vector<8x8xf32>
    %390 = vector.extract_strided_slice %358 {offsets = [0, 8], sizes = [8, 8], strides = [1, 1]} : vector<8x32xf32> to vector<8x8xf32>
    %391 = tpu.transpose %390, [1, 0] : vector<8x8xf32> -> vector<8x8xf32>
    %cst_157 = arith.constant dense<0.000000e+00> : vector<8x8xf32>
    %392 = tpu.matmul %389, %391, %cst_157 {dimension_numbers = #tpu.dot_dimension_numbers<[1], [0], [0], [1], [0, 0, 1, 1], [], []>} : vector<8x8xf32>, vector<8x8xf32>, vector<8x8xf32> -> vector<8x8xf32>
    %cst_158 = arith.constant 0.353553385 : f32
    %393 = vector.broadcast %cst_158 : f32 to vector<8x8xf32>
    %394 = arith.mulf %392, %393 : vector<8x8xf32>
    %395 = arith.addf %394, %11 : vector<8x8xf32>
    %cst_159 = arith.constant dense<0xFF800000> : vector<8xf32>
    %396 = vector.multi_reduction <maximumf>, %395, %cst_159 [1] : vector<8x8xf32> to vector<8xf32>
    %397 = vector.shape_cast %396 : vector<8xf32> to vector<8x1xf32>
    %398 = vector.broadcast %397 : vector<8x1xf32> to vector<8x8xf32>
    %399 = arith.subf %395, %398 : vector<8x8xf32>
    %400 = math.exp %399 : vector<8x8xf32>
    %cst_160 = arith.constant dense<0.000000e+00> : vector<8xf32>
    %401 = vector.multi_reduction <add>, %400, %cst_160 [1] : vector<8x8xf32> to vector<8xf32>
    %402 = vector.shape_cast %401 : vector<8xf32> to vector<8x1xf32>
    %403 = tpu.reciprocal %402 {approx = true} : vector<8x1xf32> -> vector<8x1xf32>
    %404 = vector.broadcast %403 : vector<8x1xf32> to vector<8x8xf32>
    %405 = arith.mulf %400, %404 : vector<8x8xf32>
    %406 = vector.extract_strided_slice %359 {offsets = [0, 8], sizes = [8, 8], strides = [1, 1]} : vector<8x32xf32> to vector<8x8xf32>
    %cst_161 = arith.constant dense<0.000000e+00> : vector<8x8xf32>
    %407 = tpu.matmul %405, %406, %cst_161 {dimension_numbers = #tpu.dot_dimension_numbers<[1], [0], [0], [1], [0, 0, 1, 1], [], []>} : vector<8x8xf32>, vector<8x8xf32>, vector<8x8xf32> -> vector<8x8xf32>
    %408 = vector.extract_strided_slice %361 {offsets = [8, 0], sizes = [8, 32], strides = [1, 1]} : vector<32x32xf32> to vector<8x32xf32>
    %cst_162 = arith.constant dense<0.000000e+00> : vector<8x32xf32>
    %409 = tpu.matmul %407, %408, %cst_162 {dimension_numbers = #tpu.dot_dimension_numbers<[1], [0], [0], [1], [0, 0, 1, 1], [], []>} : vector<8x8xf32>, vector<8x32xf32>, vector<8x32xf32> -> vector<8x32xf32>
    %410 = arith.addf %388, %409 : vector<8x32xf32>
    %411 = vector.extract_strided_slice %357 {offsets = [0, 16], sizes = [8, 8], strides = [1, 1]} : vector<8x32xf32> to vector<8x8xf32>
    %412 = vector.extract_strided_slice %358 {offsets = [0, 16], sizes = [8, 8], strides = [1, 1]} : vector<8x32xf32> to vector<8x8xf32>
    %413 = tpu.transpose %412, [1, 0] : vector<8x8xf32> -> vector<8x8xf32>
    %cst_163 = arith.constant dense<0.000000e+00> : vector<8x8xf32>
    %414 = tpu.matmul %411, %413, %cst_163 {dimension_numbers = #tpu.dot_dimension_numbers<[1], [0], [0], [1], [0, 0, 1, 1], [], []>} : vector<8x8xf32>, vector<8x8xf32>, vector<8x8xf32> -> vector<8x8xf32>
    %cst_164 = arith.constant 0.353553385 : f32
    %415 = vector.broadcast %cst_164 : f32 to vector<8x8xf32>
    %416 = arith.mulf %414, %415 : vector<8x8xf32>
    %417 = arith.addf %416, %11 : vector<8x8xf32>
    %cst_165 = arith.constant dense<0xFF800000> : vector<8xf32>
    %418 = vector.multi_reduction <maximumf>, %417, %cst_165 [1] : vector<8x8xf32> to vector<8xf32>
    %419 = vector.shape_cast %418 : vector<8xf32> to vector<8x1xf32>
    %420 = vector.broadcast %419 : vector<8x1xf32> to vector<8x8xf32>
    %421 = arith.subf %417, %420 : vector<8x8xf32>
    %422 = math.exp %421 : vector<8x8xf32>
    %cst_166 = arith.constant dense<0.000000e+00> : vector<8xf32>
    %423 = vector.multi_reduction <add>, %422, %cst_166 [1] : vector<8x8xf32> to vector<8xf32>
    %424 = vector.shape_cast %423 : vector<8xf32> to vector<8x1xf32>
    %425 = tpu.reciprocal %424 {approx = true} : vector<8x1xf32> -> vector<8x1xf32>
    %426 = vector.broadcast %425 : vector<8x1xf32> to vector<8x8xf32>
    %427 = arith.mulf %422, %426 : vector<8x8xf32>
    %428 = vector.extract_strided_slice %359 {offsets = [0, 16], sizes = [8, 8], strides = [1, 1]} : vector<8x32xf32> to vector<8x8xf32>
    %cst_167 = arith.constant dense<0.000000e+00> : vector<8x8xf32>
    %429 = tpu.matmul %427, %428, %cst_167 {dimension_numbers = #tpu.dot_dimension_numbers<[1], [0], [0], [1], [0, 0, 1, 1], [], []>} : vector<8x8xf32>, vector<8x8xf32>, vector<8x8xf32> -> vector<8x8xf32>
    %430 = vector.extract_strided_slice %361 {offsets = [16, 0], sizes = [8, 32], strides = [1, 1]} : vector<32x32xf32> to vector<8x32xf32>
    %cst_168 = arith.constant dense<0.000000e+00> : vector<8x32xf32>
    %431 = tpu.matmul %429, %430, %cst_168 {dimension_numbers = #tpu.dot_dimension_numbers<[1], [0], [0], [1], [0, 0, 1, 1], [], []>} : vector<8x8xf32>, vector<8x32xf32>, vector<8x32xf32> -> vector<8x32xf32>
    %432 = arith.addf %410, %431 : vector<8x32xf32>
    %433 = vector.extract_strided_slice %357 {offsets = [0, 24], sizes = [8, 8], strides = [1, 1]} : vector<8x32xf32> to vector<8x8xf32>
    %434 = vector.extract_strided_slice %358 {offsets = [0, 24], sizes = [8, 8], strides = [1, 1]} : vector<8x32xf32> to vector<8x8xf32>
    %435 = tpu.transpose %434, [1, 0] : vector<8x8xf32> -> vector<8x8xf32>
    %cst_169 = arith.constant dense<0.000000e+00> : vector<8x8xf32>
    %436 = tpu.matmul %433, %435, %cst_169 {dimension_numbers = #tpu.dot_dimension_numbers<[1], [0], [0], [1], [0, 0, 1, 1], [], []>} : vector<8x8xf32>, vector<8x8xf32>, vector<8x8xf32> -> vector<8x8xf32>
    %cst_170 = arith.constant 0.353553385 : f32
    %437 = vector.broadcast %cst_170 : f32 to vector<8x8xf32>
    %438 = arith.mulf %436, %437 : vector<8x8xf32>
    %439 = arith.addf %438, %11 : vector<8x8xf32>
    %cst_171 = arith.constant dense<0xFF800000> : vector<8xf32>
    %440 = vector.multi_reduction <maximumf>, %439, %cst_171 [1] : vector<8x8xf32> to vector<8xf32>
    %441 = vector.shape_cast %440 : vector<8xf32> to vector<8x1xf32>
    %442 = vector.broadcast %441 : vector<8x1xf32> to vector<8x8xf32>
    %443 = arith.subf %439, %442 : vector<8x8xf32>
    %444 = math.exp %443 : vector<8x8xf32>
    %cst_172 = arith.constant dense<0.000000e+00> : vector<8xf32>
    %445 = vector.multi_reduction <add>, %444, %cst_172 [1] : vector<8x8xf32> to vector<8xf32>
    %446 = vector.shape_cast %445 : vector<8xf32> to vector<8x1xf32>
    %447 = tpu.reciprocal %446 {approx = true} : vector<8x1xf32> -> vector<8x1xf32>
    %448 = vector.broadcast %447 : vector<8x1xf32> to vector<8x8xf32>
    %449 = arith.mulf %444, %448 : vector<8x8xf32>
    %450 = vector.extract_strided_slice %359 {offsets = [0, 24], sizes = [8, 8], strides = [1, 1]} : vector<8x32xf32> to vector<8x8xf32>
    %cst_173 = arith.constant dense<0.000000e+00> : vector<8x8xf32>
    %451 = tpu.matmul %449, %450, %cst_173 {dimension_numbers = #tpu.dot_dimension_numbers<[1], [0], [0], [1], [0, 0, 1, 1], [], []>} : vector<8x8xf32>, vector<8x8xf32>, vector<8x8xf32> -> vector<8x8xf32>
    %452 = vector.extract_strided_slice %361 {offsets = [24, 0], sizes = [8, 32], strides = [1, 1]} : vector<32x32xf32> to vector<8x32xf32>
    %cst_174 = arith.constant dense<0.000000e+00> : vector<8x32xf32>
    %453 = tpu.matmul %451, %452, %cst_174 {dimension_numbers = #tpu.dot_dimension_numbers<[1], [0], [0], [1], [0, 0, 1, 1], [], []>} : vector<8x8xf32>, vector<8x32xf32>, vector<8x32xf32> -> vector<8x32xf32>
    %454 = arith.addf %432, %453 : vector<8x32xf32>
    %455 = arith.addf %347, %454 : vector<8x32xf32>
    %456 = vector.extract_strided_slice %349 {offsets = [0, 0], sizes = [1, 32], strides = [1, 1]} : vector<6x32xf32> to vector<1x32xf32>
    %457 = vector.shape_cast %456 : vector<1x32xf32> to vector<32xf32>
    %458 = vector.extract_strided_slice %349 {offsets = [1, 0], sizes = [1, 32], strides = [1, 1]} : vector<6x32xf32> to vector<1x32xf32>
    %459 = vector.shape_cast %458 : vector<1x32xf32> to vector<32xf32>
    %cst_175 = arith.constant dense<0.000000e+00> : vector<8xf32>
    %460 = vector.multi_reduction <add>, %455, %cst_175 [1] : vector<8x32xf32> to vector<8xf32>
    %461 = vector.shape_cast %460 : vector<8xf32> to vector<8x1xf32>
    %cst_176 = arith.constant 3.200000e+01 : f32
    %462 = vector.broadcast %cst_176 : f32 to vector<8x1xf32>
    %463 = arith.divf %461, %462 : vector<8x1xf32>
    %464 = vector.broadcast %463 : vector<8x1xf32> to vector<8x32xf32>
    %465 = arith.subf %455, %464 : vector<8x32xf32>
    %466 = vector.broadcast %463 : vector<8x1xf32> to vector<8x32xf32>
    %467 = arith.subf %455, %466 : vector<8x32xf32>
    %468 = arith.mulf %465, %467 : vector<8x32xf32>
    %cst_177 = arith.constant dense<0.000000e+00> : vector<8xf32>
    %469 = vector.multi_reduction <add>, %468, %cst_177 [1] : vector<8x32xf32> to vector<8xf32>
    %470 = vector.shape_cast %469 : vector<8xf32> to vector<8x1xf32>
    %cst_178 = arith.constant 3.200000e+01 : f32
    %471 = vector.broadcast %cst_178 : f32 to vector<8x1xf32>
    %472 = arith.divf %470, %471 : vector<8x1xf32>
    %473 = vector.broadcast %463 : vector<8x1xf32> to vector<8x32xf32>
    %474 = arith.subf %455, %473 : vector<8x32xf32>
    %cst_179 = arith.constant 9.99999996E-13 : f32
    %475 = vector.broadcast %cst_179 : f32 to vector<8x1xf32>
    %476 = arith.addf %472, %475 : vector<8x1xf32>
    %477 = math.rsqrt %476 : vector<8x1xf32>
    %478 = vector.broadcast %477 : vector<8x1xf32> to vector<8x32xf32>
    %479 = arith.mulf %474, %478 : vector<8x32xf32>
    %480 = vector.shape_cast %457 : vector<32xf32> to vector<1x32xf32>
    %481 = vector.broadcast %480 : vector<1x32xf32> to vector<8x32xf32>
    %482 = arith.mulf %479, %481 : vector<8x32xf32>
    %483 = vector.shape_cast %459 : vector<32xf32> to vector<1x32xf32>
    %484 = vector.broadcast %483 : vector<1x32xf32> to vector<8x32xf32>
    %485 = arith.addf %482, %484 : vector<8x32xf32>
    %c1_180 = arith.constant 1 : index
    %c0_181 = arith.constant 0 : index
    %c0_182 = arith.constant 0 : index
    %486 = vector.load %arg8[%c1_180, %c0_181, %c0_182] : memref<2x32x32xf32, #tpu.memory_space<vmem>>, vector<1x32x32xf32>
    %487 = vector.shape_cast %486 : vector<1x32x32xf32> to vector<32x32xf32>
    %cst_183 = arith.constant dense<0.000000e+00> : vector<8x32xf32>
    %488 = tpu.matmul %485, %487, %cst_183 {dimension_numbers = #tpu.dot_dimension_numbers<[1], [0], [0], [1], [0, 0, 1, 1], [], []>} : vector<8x32xf32>, vector<32x32xf32>, vector<8x32xf32> -> vector<8x32xf32>
    %c1_184 = arith.constant 1 : index
    %c0_185 = arith.constant 0 : index
    %c0_186 = arith.constant 0 : index
    %489 = vector.load %arg9[%c1_184, %c0_185, %c0_186] : memref<2x1x32xf32, #tpu.memory_space<vmem>>, vector<1x1x32xf32>
    %490 = vector.shape_cast %489 : vector<1x1x32xf32> to vector<1x32xf32>
    %491 = vector.broadcast %490 : vector<1x32xf32> to vector<8x32xf32>
    %492 = arith.addf %488, %491 : vector<8x32xf32>
    %c1_187 = arith.constant 1 : index
    %c0_188 = arith.constant 0 : index
    %c0_189 = arith.constant 0 : index
    %493 = vector.load %arg10[%c1_187, %c0_188, %c0_189] : memref<2x32x32xf32, #tpu.memory_space<vmem>>, vector<1x32x32xf32>
    %494 = vector.shape_cast %493 : vector<1x32x32xf32> to vector<32x32xf32>
    %cst_190 = arith.constant dense<0.000000e+00> : vector<16x32xf32>
    %495 = tpu.matmul %3, %494, %cst_190 {dimension_numbers = #tpu.dot_dimension_numbers<[1], [0], [0], [1], [0, 0, 1, 1], [], []>} : vector<16x32xf32>, vector<32x32xf32>, vector<16x32xf32> -> vector<16x32xf32>
    %c1_191 = arith.constant 1 : index
    %c0_192 = arith.constant 0 : index
    %c0_193 = arith.constant 0 : index
    %496 = vector.load %arg11[%c1_191, %c0_192, %c0_193] : memref<2x1x32xf32, #tpu.memory_space<vmem>>, vector<1x1x32xf32>
    %497 = vector.shape_cast %496 : vector<1x1x32xf32> to vector<1x32xf32>
    %498 = vector.broadcast %497 : vector<1x32xf32> to vector<16x32xf32>
    %499 = arith.addf %495, %498 : vector<16x32xf32>
    %c1_194 = arith.constant 1 : index
    %c0_195 = arith.constant 0 : index
    %c0_196 = arith.constant 0 : index
    %500 = vector.load %arg12[%c1_194, %c0_195, %c0_196] : memref<2x32x32xf32, #tpu.memory_space<vmem>>, vector<1x32x32xf32>
    %501 = vector.shape_cast %500 : vector<1x32x32xf32> to vector<32x32xf32>
    %cst_197 = arith.constant dense<0.000000e+00> : vector<16x32xf32>
    %502 = tpu.matmul %5, %501, %cst_197 {dimension_numbers = #tpu.dot_dimension_numbers<[1], [0], [0], [1], [0, 0, 1, 1], [], []>} : vector<16x32xf32>, vector<32x32xf32>, vector<16x32xf32> -> vector<16x32xf32>
    %c1_198 = arith.constant 1 : index
    %c0_199 = arith.constant 0 : index
    %c0_200 = arith.constant 0 : index
    %503 = vector.load %arg13[%c1_198, %c0_199, %c0_200] : memref<2x1x32xf32, #tpu.memory_space<vmem>>, vector<1x1x32xf32>
    %504 = vector.shape_cast %503 : vector<1x1x32xf32> to vector<1x32xf32>
    %505 = vector.broadcast %504 : vector<1x32xf32> to vector<16x32xf32>
    %506 = arith.addf %502, %505 : vector<16x32xf32>
    %c1_201 = arith.constant 1 : index
    %c0_202 = arith.constant 0 : index
    %c0_203 = arith.constant 0 : index
    %507 = vector.load %arg14[%c1_201, %c0_202, %c0_203] : memref<2x32x32xf32, #tpu.memory_space<vmem>>, vector<1x32x32xf32>
    %508 = vector.shape_cast %507 : vector<1x32x32xf32> to vector<32x32xf32>
    %c1_204 = arith.constant 1 : index
    %c0_205 = arith.constant 0 : index
    %c0_206 = arith.constant 0 : index
    %509 = vector.load %arg15[%c1_204, %c0_205, %c0_206] : memref<2x1x32xf32, #tpu.memory_space<vmem>>, vector<1x1x32xf32>
    %510 = vector.shape_cast %509 : vector<1x1x32xf32> to vector<1x32xf32>
    %cst_207 = arith.constant 0.000000e+00 : f32
    %511 = vector.broadcast %cst_207 : f32 to vector<8x32xf32>
    %512 = vector.broadcast %510 : vector<1x32xf32> to vector<8x32xf32>
    %513 = arith.addf %511, %512 : vector<8x32xf32>
    %514 = vector.extract_strided_slice %492 {offsets = [0, 0], sizes = [8, 8], strides = [1, 1]} : vector<8x32xf32> to vector<8x8xf32>
    %515 = vector.extract_strided_slice %499 {offsets = [0, 0], sizes = [16, 8], strides = [1, 1]} : vector<16x32xf32> to vector<16x8xf32>
    %516 = tpu.transpose %515, [1, 0] : vector<16x8xf32> -> vector<8x16xf32>
    %cst_208 = arith.constant dense<0.000000e+00> : vector<8x16xf32>
    %517 = tpu.matmul %514, %516, %cst_208 {dimension_numbers = #tpu.dot_dimension_numbers<[1], [0], [0], [1], [0, 0, 1, 1], [], []>} : vector<8x8xf32>, vector<8x16xf32>, vector<8x16xf32> -> vector<8x16xf32>
    %cst_209 = arith.constant 0.353553385 : f32
    %518 = vector.broadcast %cst_209 : f32 to vector<8x16xf32>
    %519 = arith.mulf %517, %518 : vector<8x16xf32>
    %cst_210 = arith.constant dense<0xFF800000> : vector<8xf32>
    %520 = vector.multi_reduction <maximumf>, %519, %cst_210 [1] : vector<8x16xf32> to vector<8xf32>
    %521 = vector.shape_cast %520 : vector<8xf32> to vector<8x1xf32>
    %522 = vector.broadcast %521 : vector<8x1xf32> to vector<8x16xf32>
    %523 = arith.subf %519, %522 : vector<8x16xf32>
    %524 = math.exp %523 : vector<8x16xf32>
    %cst_211 = arith.constant dense<0.000000e+00> : vector<8xf32>
    %525 = vector.multi_reduction <add>, %524, %cst_211 [1] : vector<8x16xf32> to vector<8xf32>
    %526 = vector.shape_cast %525 : vector<8xf32> to vector<8x1xf32>
    %527 = tpu.reciprocal %526 {approx = true} : vector<8x1xf32> -> vector<8x1xf32>
    %528 = vector.broadcast %527 : vector<8x1xf32> to vector<8x16xf32>
    %529 = arith.mulf %524, %528 : vector<8x16xf32>
    %530 = vector.extract_strided_slice %506 {offsets = [0, 0], sizes = [16, 8], strides = [1, 1]} : vector<16x32xf32> to vector<16x8xf32>
    %cst_212 = arith.constant dense<0.000000e+00> : vector<8x8xf32>
    %531 = tpu.matmul %529, %530, %cst_212 {dimension_numbers = #tpu.dot_dimension_numbers<[1], [0], [0], [1], [0, 0, 1, 1], [], []>} : vector<8x16xf32>, vector<16x8xf32>, vector<8x8xf32> -> vector<8x8xf32>
    %532 = vector.extract_strided_slice %508 {offsets = [0, 0], sizes = [8, 32], strides = [1, 1]} : vector<32x32xf32> to vector<8x32xf32>
    %cst_213 = arith.constant dense<0.000000e+00> : vector<8x32xf32>
    %533 = tpu.matmul %531, %532, %cst_213 {dimension_numbers = #tpu.dot_dimension_numbers<[1], [0], [0], [1], [0, 0, 1, 1], [], []>} : vector<8x8xf32>, vector<8x32xf32>, vector<8x32xf32> -> vector<8x32xf32>
    %534 = arith.addf %513, %533 : vector<8x32xf32>
    %535 = vector.extract_strided_slice %492 {offsets = [0, 8], sizes = [8, 8], strides = [1, 1]} : vector<8x32xf32> to vector<8x8xf32>
    %536 = vector.extract_strided_slice %499 {offsets = [0, 8], sizes = [16, 8], strides = [1, 1]} : vector<16x32xf32> to vector<16x8xf32>
    %537 = tpu.transpose %536, [1, 0] : vector<16x8xf32> -> vector<8x16xf32>
    %cst_214 = arith.constant dense<0.000000e+00> : vector<8x16xf32>
    %538 = tpu.matmul %535, %537, %cst_214 {dimension_numbers = #tpu.dot_dimension_numbers<[1], [0], [0], [1], [0, 0, 1, 1], [], []>} : vector<8x8xf32>, vector<8x16xf32>, vector<8x16xf32> -> vector<8x16xf32>
    %cst_215 = arith.constant 0.353553385 : f32
    %539 = vector.broadcast %cst_215 : f32 to vector<8x16xf32>
    %540 = arith.mulf %538, %539 : vector<8x16xf32>
    %cst_216 = arith.constant dense<0xFF800000> : vector<8xf32>
    %541 = vector.multi_reduction <maximumf>, %540, %cst_216 [1] : vector<8x16xf32> to vector<8xf32>
    %542 = vector.shape_cast %541 : vector<8xf32> to vector<8x1xf32>
    %543 = vector.broadcast %542 : vector<8x1xf32> to vector<8x16xf32>
    %544 = arith.subf %540, %543 : vector<8x16xf32>
    %545 = math.exp %544 : vector<8x16xf32>
    %cst_217 = arith.constant dense<0.000000e+00> : vector<8xf32>
    %546 = vector.multi_reduction <add>, %545, %cst_217 [1] : vector<8x16xf32> to vector<8xf32>
    %547 = vector.shape_cast %546 : vector<8xf32> to vector<8x1xf32>
    %548 = tpu.reciprocal %547 {approx = true} : vector<8x1xf32> -> vector<8x1xf32>
    %549 = vector.broadcast %548 : vector<8x1xf32> to vector<8x16xf32>
    %550 = arith.mulf %545, %549 : vector<8x16xf32>
    %551 = vector.extract_strided_slice %506 {offsets = [0, 8], sizes = [16, 8], strides = [1, 1]} : vector<16x32xf32> to vector<16x8xf32>
    %cst_218 = arith.constant dense<0.000000e+00> : vector<8x8xf32>
    %552 = tpu.matmul %550, %551, %cst_218 {dimension_numbers = #tpu.dot_dimension_numbers<[1], [0], [0], [1], [0, 0, 1, 1], [], []>} : vector<8x16xf32>, vector<16x8xf32>, vector<8x8xf32> -> vector<8x8xf32>
    %553 = vector.extract_strided_slice %508 {offsets = [8, 0], sizes = [8, 32], strides = [1, 1]} : vector<32x32xf32> to vector<8x32xf32>
    %cst_219 = arith.constant dense<0.000000e+00> : vector<8x32xf32>
    %554 = tpu.matmul %552, %553, %cst_219 {dimension_numbers = #tpu.dot_dimension_numbers<[1], [0], [0], [1], [0, 0, 1, 1], [], []>} : vector<8x8xf32>, vector<8x32xf32>, vector<8x32xf32> -> vector<8x32xf32>
    %555 = arith.addf %534, %554 : vector<8x32xf32>
    %556 = vector.extract_strided_slice %492 {offsets = [0, 16], sizes = [8, 8], strides = [1, 1]} : vector<8x32xf32> to vector<8x8xf32>
    %557 = vector.extract_strided_slice %499 {offsets = [0, 16], sizes = [16, 8], strides = [1, 1]} : vector<16x32xf32> to vector<16x8xf32>
    %558 = tpu.transpose %557, [1, 0] : vector<16x8xf32> -> vector<8x16xf32>
    %cst_220 = arith.constant dense<0.000000e+00> : vector<8x16xf32>
    %559 = tpu.matmul %556, %558, %cst_220 {dimension_numbers = #tpu.dot_dimension_numbers<[1], [0], [0], [1], [0, 0, 1, 1], [], []>} : vector<8x8xf32>, vector<8x16xf32>, vector<8x16xf32> -> vector<8x16xf32>
    %cst_221 = arith.constant 0.353553385 : f32
    %560 = vector.broadcast %cst_221 : f32 to vector<8x16xf32>
    %561 = arith.mulf %559, %560 : vector<8x16xf32>
    %cst_222 = arith.constant dense<0xFF800000> : vector<8xf32>
    %562 = vector.multi_reduction <maximumf>, %561, %cst_222 [1] : vector<8x16xf32> to vector<8xf32>
    %563 = vector.shape_cast %562 : vector<8xf32> to vector<8x1xf32>
    %564 = vector.broadcast %563 : vector<8x1xf32> to vector<8x16xf32>
    %565 = arith.subf %561, %564 : vector<8x16xf32>
    %566 = math.exp %565 : vector<8x16xf32>
    %cst_223 = arith.constant dense<0.000000e+00> : vector<8xf32>
    %567 = vector.multi_reduction <add>, %566, %cst_223 [1] : vector<8x16xf32> to vector<8xf32>
    %568 = vector.shape_cast %567 : vector<8xf32> to vector<8x1xf32>
    %569 = tpu.reciprocal %568 {approx = true} : vector<8x1xf32> -> vector<8x1xf32>
    %570 = vector.broadcast %569 : vector<8x1xf32> to vector<8x16xf32>
    %571 = arith.mulf %566, %570 : vector<8x16xf32>
    %572 = vector.extract_strided_slice %506 {offsets = [0, 16], sizes = [16, 8], strides = [1, 1]} : vector<16x32xf32> to vector<16x8xf32>
    %cst_224 = arith.constant dense<0.000000e+00> : vector<8x8xf32>
    %573 = tpu.matmul %571, %572, %cst_224 {dimension_numbers = #tpu.dot_dimension_numbers<[1], [0], [0], [1], [0, 0, 1, 1], [], []>} : vector<8x16xf32>, vector<16x8xf32>, vector<8x8xf32> -> vector<8x8xf32>
    %574 = vector.extract_strided_slice %508 {offsets = [16, 0], sizes = [8, 32], strides = [1, 1]} : vector<32x32xf32> to vector<8x32xf32>
    %cst_225 = arith.constant dense<0.000000e+00> : vector<8x32xf32>
    %575 = tpu.matmul %573, %574, %cst_225 {dimension_numbers = #tpu.dot_dimension_numbers<[1], [0], [0], [1], [0, 0, 1, 1], [], []>} : vector<8x8xf32>, vector<8x32xf32>, vector<8x32xf32> -> vector<8x32xf32>
    %576 = arith.addf %555, %575 : vector<8x32xf32>
    %577 = vector.extract_strided_slice %492 {offsets = [0, 24], sizes = [8, 8], strides = [1, 1]} : vector<8x32xf32> to vector<8x8xf32>
    %578 = vector.extract_strided_slice %499 {offsets = [0, 24], sizes = [16, 8], strides = [1, 1]} : vector<16x32xf32> to vector<16x8xf32>
    %579 = tpu.transpose %578, [1, 0] : vector<16x8xf32> -> vector<8x16xf32>
    %cst_226 = arith.constant dense<0.000000e+00> : vector<8x16xf32>
    %580 = tpu.matmul %577, %579, %cst_226 {dimension_numbers = #tpu.dot_dimension_numbers<[1], [0], [0], [1], [0, 0, 1, 1], [], []>} : vector<8x8xf32>, vector<8x16xf32>, vector<8x16xf32> -> vector<8x16xf32>
    %cst_227 = arith.constant 0.353553385 : f32
    %581 = vector.broadcast %cst_227 : f32 to vector<8x16xf32>
    %582 = arith.mulf %580, %581 : vector<8x16xf32>
    %cst_228 = arith.constant dense<0xFF800000> : vector<8xf32>
    %583 = vector.multi_reduction <maximumf>, %582, %cst_228 [1] : vector<8x16xf32> to vector<8xf32>
    %584 = vector.shape_cast %583 : vector<8xf32> to vector<8x1xf32>
    %585 = vector.broadcast %584 : vector<8x1xf32> to vector<8x16xf32>
    %586 = arith.subf %582, %585 : vector<8x16xf32>
    %587 = math.exp %586 : vector<8x16xf32>
    %cst_229 = arith.constant dense<0.000000e+00> : vector<8xf32>
    %588 = vector.multi_reduction <add>, %587, %cst_229 [1] : vector<8x16xf32> to vector<8xf32>
    %589 = vector.shape_cast %588 : vector<8xf32> to vector<8x1xf32>
    %590 = tpu.reciprocal %589 {approx = true} : vector<8x1xf32> -> vector<8x1xf32>
    %591 = vector.broadcast %590 : vector<8x1xf32> to vector<8x16xf32>
    %592 = arith.mulf %587, %591 : vector<8x16xf32>
    %593 = vector.extract_strided_slice %506 {offsets = [0, 24], sizes = [16, 8], strides = [1, 1]} : vector<16x32xf32> to vector<16x8xf32>
    %cst_230 = arith.constant dense<0.000000e+00> : vector<8x8xf32>
    %594 = tpu.matmul %592, %593, %cst_230 {dimension_numbers = #tpu.dot_dimension_numbers<[1], [0], [0], [1], [0, 0, 1, 1], [], []>} : vector<8x16xf32>, vector<16x8xf32>, vector<8x8xf32> -> vector<8x8xf32>
    %595 = vector.extract_strided_slice %508 {offsets = [24, 0], sizes = [8, 32], strides = [1, 1]} : vector<32x32xf32> to vector<8x32xf32>
    %cst_231 = arith.constant dense<0.000000e+00> : vector<8x32xf32>
    %596 = tpu.matmul %594, %595, %cst_231 {dimension_numbers = #tpu.dot_dimension_numbers<[1], [0], [0], [1], [0, 0, 1, 1], [], []>} : vector<8x8xf32>, vector<8x32xf32>, vector<8x32xf32> -> vector<8x32xf32>
    %597 = arith.addf %576, %596 : vector<8x32xf32>
    %598 = arith.addf %485, %597 : vector<8x32xf32>
    %599 = vector.extract_strided_slice %349 {offsets = [2, 0], sizes = [1, 32], strides = [1, 1]} : vector<6x32xf32> to vector<1x32xf32>
    %600 = vector.shape_cast %599 : vector<1x32xf32> to vector<32xf32>
    %601 = vector.extract_strided_slice %349 {offsets = [3, 0], sizes = [1, 32], strides = [1, 1]} : vector<6x32xf32> to vector<1x32xf32>
    %602 = vector.shape_cast %601 : vector<1x32xf32> to vector<32xf32>
    %cst_232 = arith.constant dense<0.000000e+00> : vector<8xf32>
    %603 = vector.multi_reduction <add>, %598, %cst_232 [1] : vector<8x32xf32> to vector<8xf32>
    %604 = vector.shape_cast %603 : vector<8xf32> to vector<8x1xf32>
    %cst_233 = arith.constant 3.200000e+01 : f32
    %605 = vector.broadcast %cst_233 : f32 to vector<8x1xf32>
    %606 = arith.divf %604, %605 : vector<8x1xf32>
    %607 = vector.broadcast %606 : vector<8x1xf32> to vector<8x32xf32>
    %608 = arith.subf %598, %607 : vector<8x32xf32>
    %609 = vector.broadcast %606 : vector<8x1xf32> to vector<8x32xf32>
    %610 = arith.subf %598, %609 : vector<8x32xf32>
    %611 = arith.mulf %608, %610 : vector<8x32xf32>
    %cst_234 = arith.constant dense<0.000000e+00> : vector<8xf32>
    %612 = vector.multi_reduction <add>, %611, %cst_234 [1] : vector<8x32xf32> to vector<8xf32>
    %613 = vector.shape_cast %612 : vector<8xf32> to vector<8x1xf32>
    %cst_235 = arith.constant 3.200000e+01 : f32
    %614 = vector.broadcast %cst_235 : f32 to vector<8x1xf32>
    %615 = arith.divf %613, %614 : vector<8x1xf32>
    %616 = vector.broadcast %606 : vector<8x1xf32> to vector<8x32xf32>
    %617 = arith.subf %598, %616 : vector<8x32xf32>
    %cst_236 = arith.constant 9.99999996E-13 : f32
    %618 = vector.broadcast %cst_236 : f32 to vector<8x1xf32>
    %619 = arith.addf %615, %618 : vector<8x1xf32>
    %620 = math.rsqrt %619 : vector<8x1xf32>
    %621 = vector.broadcast %620 : vector<8x1xf32> to vector<8x32xf32>
    %622 = arith.mulf %617, %621 : vector<8x32xf32>
    %623 = vector.shape_cast %600 : vector<32xf32> to vector<1x32xf32>
    %624 = vector.broadcast %623 : vector<1x32xf32> to vector<8x32xf32>
    %625 = arith.mulf %622, %624 : vector<8x32xf32>
    %626 = vector.shape_cast %602 : vector<32xf32> to vector<1x32xf32>
    %627 = vector.broadcast %626 : vector<1x32xf32> to vector<8x32xf32>
    %628 = arith.addf %625, %627 : vector<8x32xf32>
    %c1_237 = arith.constant 1 : index
    %c0_238 = arith.constant 0 : index
    %c0_239 = arith.constant 0 : index
    %629 = vector.load %arg16[%c1_237, %c0_238, %c0_239] : memref<2x32x64xf32, #tpu.memory_space<vmem>>, vector<1x32x64xf32>
    %630 = vector.shape_cast %629 : vector<1x32x64xf32> to vector<32x64xf32>
    %cst_240 = arith.constant dense<0.000000e+00> : vector<8x64xf32>
    %631 = tpu.matmul %628, %630, %cst_240 {dimension_numbers = #tpu.dot_dimension_numbers<[1], [0], [0], [1], [0, 0, 1, 1], [], []>} : vector<8x32xf32>, vector<32x64xf32>, vector<8x64xf32> -> vector<8x64xf32>
    %c1_241 = arith.constant 1 : index
    %c0_242 = arith.constant 0 : index
    %c0_243 = arith.constant 0 : index
    %632 = vector.load %arg17[%c1_241, %c0_242, %c0_243] : memref<2x1x64xf32, #tpu.memory_space<vmem>>, vector<1x1x64xf32>
    %633 = vector.shape_cast %632 : vector<1x1x64xf32> to vector<1x64xf32>
    %634 = vector.broadcast %633 : vector<1x64xf32> to vector<8x64xf32>
    %635 = arith.addf %631, %634 : vector<8x64xf32>
    %cst_244 = arith.constant 5.000000e-01 : f32
    %636 = vector.broadcast %cst_244 : f32 to vector<8x64xf32>
    %637 = arith.mulf %636, %635 : vector<8x64xf32>
    %cst_245 = arith.constant 2.000000e+00 : f32
    %638 = math.sqrt %cst_245 : f32
    %cst_246 = arith.constant 1.000000e+00 : f32
    %639 = arith.divf %cst_246, %638 : f32
    %640 = vector.broadcast %639 : f32 to vector<8x64xf32>
    %641 = arith.mulf %635, %640 : vector<8x64xf32>
    %642 = math.erf %641 : vector<8x64xf32>
    %cst_247 = arith.constant 1.000000e+00 : f32
    %643 = vector.broadcast %cst_247 : f32 to vector<8x64xf32>
    %644 = arith.addf %643, %642 : vector<8x64xf32>
    %645 = arith.mulf %637, %644 : vector<8x64xf32>
    %c1_248 = arith.constant 1 : index
    %c0_249 = arith.constant 0 : index
    %c0_250 = arith.constant 0 : index
    %646 = vector.load %arg18[%c1_248, %c0_249, %c0_250] : memref<2x64x32xf32, #tpu.memory_space<vmem>>, vector<1x64x32xf32>
    %647 = vector.shape_cast %646 : vector<1x64x32xf32> to vector<64x32xf32>
    %cst_251 = arith.constant dense<0.000000e+00> : vector<8x32xf32>
    %648 = tpu.matmul %645, %647, %cst_251 {dimension_numbers = #tpu.dot_dimension_numbers<[1], [0], [0], [1], [0, 0, 1, 1], [], []>} : vector<8x64xf32>, vector<64x32xf32>, vector<8x32xf32> -> vector<8x32xf32>
    %c1_252 = arith.constant 1 : index
    %c0_253 = arith.constant 0 : index
    %c0_254 = arith.constant 0 : index
    %649 = vector.load %arg19[%c1_252, %c0_253, %c0_254] : memref<2x1x32xf32, #tpu.memory_space<vmem>>, vector<1x1x32xf32>
    %650 = vector.shape_cast %649 : vector<1x1x32xf32> to vector<1x32xf32>
    %651 = vector.broadcast %650 : vector<1x32xf32> to vector<8x32xf32>
    %652 = arith.addf %648, %651 : vector<8x32xf32>
    %653 = arith.addf %628, %652 : vector<8x32xf32>
    %654 = vector.extract_strided_slice %349 {offsets = [4, 0], sizes = [1, 32], strides = [1, 1]} : vector<6x32xf32> to vector<1x32xf32>
    %655 = vector.shape_cast %654 : vector<1x32xf32> to vector<32xf32>
    %656 = vector.extract_strided_slice %349 {offsets = [5, 0], sizes = [1, 32], strides = [1, 1]} : vector<6x32xf32> to vector<1x32xf32>
    %657 = vector.shape_cast %656 : vector<1x32xf32> to vector<32xf32>
    %cst_255 = arith.constant dense<0.000000e+00> : vector<8xf32>
    %658 = vector.multi_reduction <add>, %653, %cst_255 [1] : vector<8x32xf32> to vector<8xf32>
    %659 = vector.shape_cast %658 : vector<8xf32> to vector<8x1xf32>
    %cst_256 = arith.constant 3.200000e+01 : f32
    %660 = vector.broadcast %cst_256 : f32 to vector<8x1xf32>
    %661 = arith.divf %659, %660 : vector<8x1xf32>
    %662 = vector.broadcast %661 : vector<8x1xf32> to vector<8x32xf32>
    %663 = arith.subf %653, %662 : vector<8x32xf32>
    %664 = vector.broadcast %661 : vector<8x1xf32> to vector<8x32xf32>
    %665 = arith.subf %653, %664 : vector<8x32xf32>
    %666 = arith.mulf %663, %665 : vector<8x32xf32>
    %cst_257 = arith.constant dense<0.000000e+00> : vector<8xf32>
    %667 = vector.multi_reduction <add>, %666, %cst_257 [1] : vector<8x32xf32> to vector<8xf32>
    %668 = vector.shape_cast %667 : vector<8xf32> to vector<8x1xf32>
    %cst_258 = arith.constant 3.200000e+01 : f32
    %669 = vector.broadcast %cst_258 : f32 to vector<8x1xf32>
    %670 = arith.divf %668, %669 : vector<8x1xf32>
    %671 = vector.broadcast %661 : vector<8x1xf32> to vector<8x32xf32>
    %672 = arith.subf %653, %671 : vector<8x32xf32>
    %cst_259 = arith.constant 9.99999996E-13 : f32
    %673 = vector.broadcast %cst_259 : f32 to vector<8x1xf32>
    %674 = arith.addf %670, %673 : vector<8x1xf32>
    %675 = math.rsqrt %674 : vector<8x1xf32>
    %676 = vector.broadcast %675 : vector<8x1xf32> to vector<8x32xf32>
    %677 = arith.mulf %672, %676 : vector<8x32xf32>
    %678 = vector.shape_cast %655 : vector<32xf32> to vector<1x32xf32>
    %679 = vector.broadcast %678 : vector<1x32xf32> to vector<8x32xf32>
    %680 = arith.mulf %677, %679 : vector<8x32xf32>
    %681 = vector.shape_cast %657 : vector<32xf32> to vector<1x32xf32>
    %682 = vector.broadcast %681 : vector<1x32xf32> to vector<8x32xf32>
    %683 = arith.addf %680, %682 : vector<8x32xf32>
    %684 = vector.shape_cast %683 : vector<8x32xf32> to vector<1x8x32xf32>
    %c0_260 = arith.constant 0 : index
    %c0_261 = arith.constant 0 : index
    %c0_262 = arith.constant 0 : index
    %685 = vector.load %arg21[%c0_260, %c0_261, %c0_262] : memref<1x8x32xf32, #tpu.memory_space<vmem>>, vector<1x8x32xf32>
    tpu.vector_store %arg21[%c0_260, %c0_261, %c0_262], %684 {strides = array<i32>} : memref<1x8x32xf32, #tpu.memory_space<vmem>>, vector<1x8x32xf32>,
    return
  }
  func.func @transform_0(%arg0: i32) -> (i32, i32, i32) {
    %c0_i32 = arith.constant 0 : i32
    %c0_i32_0 = arith.constant 0 : i32
    %c0_i32_1 = arith.constant 0 : i32
    return %arg0, %c0_i32, %c0_i32_0 : i32, i32, i32
  }
  func.func @transform_1(%arg0: i32) -> (i32, i32, i32) {
    %c0_i32 = arith.constant 0 : i32
    %c0_i32_0 = arith.constant 0 : i32
    %c0_i32_1 = arith.constant 0 : i32
    return %arg0, %c0_i32, %c0_i32_0 : i32, i32, i32
  }
  func.func @transform_2(%arg0: i32) -> (i32, i32, i32) {
    %c0_i32 = arith.constant 0 : i32
    %c0_i32_0 = arith.constant 0 : i32
    %c0_i32_1 = arith.constant 0 : i32
    return %arg0, %c0_i32, %c0_i32_0 : i32, i32, i32
  }
  func.func @transform_3(%arg0: i32) -> (i32, i32, i32) {
    %c0_i32 = arith.constant 0 : i32
    %c0_i32_0 = arith.constant 0 : i32
    %c0_i32_1 = arith.constant 0 : i32
    %c0_i32_2 = arith.constant 0 : i32
    return %c0_i32, %c0_i32_0, %c0_i32_1 : i32, i32, i32
  }
  func.func @transform_4(%arg0: i32) -> (i32, i32, i32) {
    %c0_i32 = arith.constant 0 : i32
    %c0_i32_0 = arith.constant 0 : i32
    %c0_i32_1 = arith.constant 0 : i32
    %c0_i32_2 = arith.constant 0 : i32
    return %c0_i32, %c0_i32_0, %c0_i32_1 : i32, i32, i32
  }
  func.func @transform_5(%arg0: i32) -> (i32, i32, i32) {
    %c0_i32 = arith.constant 0 : i32
    %c0_i32_0 = arith.constant 0 : i32
    %c0_i32_1 = arith.constant 0 : i32
    %c0_i32_2 = arith.constant 0 : i32
    return %c0_i32, %c0_i32_0, %c0_i32_1 : i32, i32, i32
  }
  func.func @transform_6(%arg0: i32) -> (i32, i32, i32) {
    %c0_i32 = arith.constant 0 : i32
    %c0_i32_0 = arith.constant 0 : i32
    %c0_i32_1 = arith.constant 0 : i32
    %c0_i32_2 = arith.constant 0 : i32
    return %c0_i32, %c0_i32_0, %c0_i32_1 : i32, i32, i32
  }
  func.func @transform_7(%arg0: i32) -> (i32, i32, i32) {
    %c0_i32 = arith.constant 0 : i32
    %c0_i32_0 = arith.constant 0 : i32
    %c0_i32_1 = arith.constant 0 : i32
    %c0_i32_2 = arith.constant 0 : i32
    return %c0_i32, %c0_i32_0, %c0_i32_1 : i32, i32, i32
  }
  func.func @transform_8(%arg0: i32) -> (i32, i32, i32) {
    %c0_i32 = arith.constant 0 : i32
    %c0_i32_0 = arith.constant 0 : i32
    %c0_i32_1 = arith.constant 0 : i32
    %c0_i32_2 = arith.constant 0 : i32
    return %c0_i32, %c0_i32_0, %c0_i32_1 : i32, i32, i32
  }
  func.func @transform_9(%arg0: i32) -> (i32, i32, i32) {
    %c0_i32 = arith.constant 0 : i32
    %c0_i32_0 = arith.constant 0 : i32
    %c0_i32_1 = arith.constant 0 : i32
    %c0_i32_2 = arith.constant 0 : i32
    return %c0_i32, %c0_i32_0, %c0_i32_1 : i32, i32, i32
  }
  func.func @transform_10(%arg0: i32) -> (i32, i32, i32) {
    %c0_i32 = arith.constant 0 : i32
    %c0_i32_0 = arith.constant 0 : i32
    %c0_i32_1 = arith.constant 0 : i32
    %c0_i32_2 = arith.constant 0 : i32
    return %c0_i32, %c0_i32_0, %c0_i32_1 : i32, i32, i32
  }
  func.func @transform_11(%arg0: i32) -> (i32, i32, i32) {
    %c0_i32 = arith.constant 0 : i32
    %c0_i32_0 = arith.constant 0 : i32
    %c0_i32_1 = arith.constant 0 : i32
    %c0_i32_2 = arith.constant 0 : i32
    return %c0_i32, %c0_i32_0, %c0_i32_1 : i32, i32, i32
  }
  func.func @transform_12(%arg0: i32) -> (i32, i32, i32) {
    %c0_i32 = arith.constant 0 : i32
    %c0_i32_0 = arith.constant 0 : i32
    %c0_i32_1 = arith.constant 0 : i32
    %c0_i32_2 = arith.constant 0 : i32
    return %c0_i32, %c0_i32_0, %c0_i32_1 : i32, i32, i32
  }
  func.func @transform_13(%arg0: i32) -> (i32, i32, i32) {
    %c0_i32 = arith.constant 0 : i32
    %c0_i32_0 = arith.constant 0 : i32
    %c0_i32_1 = arith.constant 0 : i32
    %c0_i32_2 = arith.constant 0 : i32
    return %c0_i32, %c0_i32_0, %c0_i32_1 : i32, i32, i32
  }
  func.func @transform_14(%arg0: i32) -> (i32, i32, i32) {
    %c0_i32 = arith.constant 0 : i32
    %c0_i32_0 = arith.constant 0 : i32
    %c0_i32_1 = arith.constant 0 : i32
    %c0_i32_2 = arith.constant 0 : i32
    return %c0_i32, %c0_i32_0, %c0_i32_1 : i32, i32, i32
  }
  func.func @transform_15(%arg0: i32) -> (i32, i32, i32) {
    %c0_i32 = arith.constant 0 : i32
    %c0_i32_0 = arith.constant 0 : i32
    %c0_i32_1 = arith.constant 0 : i32
    %c0_i32_2 = arith.constant 0 : i32
    return %c0_i32, %c0_i32_0, %c0_i32_1 : i32, i32, i32
  }
  func.func @transform_16(%arg0: i32) -> (i32, i32, i32) {
    %c0_i32 = arith.constant 0 : i32
    %c0_i32_0 = arith.constant 0 : i32
    %c0_i32_1 = arith.constant 0 : i32
    %c0_i32_2 = arith.constant 0 : i32
    return %c0_i32, %c0_i32_0, %c0_i32_1 : i32, i32, i32
  }
  func.func @transform_17(%arg0: i32) -> (i32, i32, i32) {
    %c0_i32 = arith.constant 0 : i32
    %c0_i32_0 = arith.constant 0 : i32
    %c0_i32_1 = arith.constant 0 : i32
    %c0_i32_2 = arith.constant 0 : i32
    return %c0_i32, %c0_i32_0, %c0_i32_1 : i32, i32, i32
  }
  func.func @transform_18(%arg0: i32) -> (i32, i32, i32) {
    %c0_i32 = arith.constant 0 : i32
    %c0_i32_0 = arith.constant 0 : i32
    %c0_i32_1 = arith.constant 0 : i32
    %c0_i32_2 = arith.constant 0 : i32
    return %c0_i32, %c0_i32_0, %c0_i32_1 : i32, i32, i32
  }
  func.func @transform_19(%arg0: i32) -> (i32, i32, i32) {
    %c0_i32 = arith.constant 0 : i32
    %c0_i32_0 = arith.constant 0 : i32
    %c0_i32_1 = arith.constant 0 : i32
    %c0_i32_2 = arith.constant 0 : i32
    return %c0_i32, %c0_i32_0, %c0_i32_1 : i32, i32, i32
  }
  func.func @transform_20(%arg0: i32) -> (i32, i32, i32) {
    %c0_i32 = arith.constant 0 : i32
    %c0_i32_0 = arith.constant 0 : i32
    %c0_i32_1 = arith.constant 0 : i32
    return %arg0, %c0_i32, %c0_i32_0 : i32, i32, i32
  }
}

</mosaic_0001>

<llo_original>
// kernel: transformer_decoder_forward.1
$region0: #{transformer_decoder_forward.1}
  #allocation0 [shape = 'u32[]', space=smem, size = 0x4, offset = 0x4, fixed_abs, tag = 'smem constant byte address 0x4 - core index']
  #allocation1 [shape = 'u32[144,128]{1,0:T(1,128)}', space=vmem, size = 0x12000, scoped, tag = 'internal scratch']
  %s0 = inlined_call_operand.vmem [shape: f32[2,8,32], index: 0, kind: input, shape index: {}]
  %s1 = inlined_call_operand.vmem [shape: f32[2,16,32], index: 1, kind: input, shape index: {}]
  %s2 = inlined_call_operand.vmem [shape: f32[2,16,32], index: 2, kind: input, shape index: {}]
  %s3 = inlined_call_operand.vmem [shape: f32[2,32,96], index: 3, kind: input, shape index: {}]
  %s4 = inlined_call_operand.vmem [shape: f32[2,1,96], index: 4, kind: input, shape index: {}]
  %s5 = inlined_call_operand.vmem [shape: f32[2,32,32], index: 5, kind: input, shape index: {}]
  %s6 = inlined_call_operand.vmem [shape: f32[2,1,32], index: 6, kind: input, shape index: {}]
  %s7 = inlined_call_operand.vmem [shape: f32[2,32,32], index: 7, kind: input, shape index: {}]
  %s8 = inlined_call_operand.vmem [shape: f32[2,1,32], index: 8, kind: input, shape index: {}]
  %s9 = inlined_call_operand.vmem [shape: f32[2,32,32], index: 9, kind: input, shape index: {}]
  %s10 = inlined_call_operand.vmem [shape: f32[2,1,32], index: 10, kind: input, shape index: {}]
  %s11 = inlined_call_operand.vmem [shape: f32[2,32,32], index: 11, kind: input, shape index: {}]
  %s12 = inlined_call_operand.vmem [shape: f32[2,1,32], index: 12, kind: input, shape index: {}]
  %s13 = inlined_call_operand.vmem [shape: f32[2,32,32], index: 13, kind: input, shape index: {}]
  %s14 = inlined_call_operand.vmem [shape: f32[2,1,32], index: 14, kind: input, shape index: {}]
  %s15 = inlined_call_operand.vmem [shape: f32[2,32,64], index: 15, kind: input, shape index: {}]
  %s16 = inlined_call_operand.vmem [shape: f32[2,1,64], index: 16, kind: input, shape index: {}]
  %s17 = inlined_call_operand.vmem [shape: f32[2,64,32], index: 17, kind: input, shape index: {}]
  %s18 = inlined_call_operand.vmem [shape: f32[2,1,32], index: 18, kind: input, shape index: {}]
  %s19 = inlined_call_operand.vmem [shape: f32[2,6,32], index: 19, kind: input, shape index: {}]
  %s20 = inlined_call_operand.hbm [shape: f32[2,8,32], index: 20, kind: output, shape index: {}]
  %s21 = sld [smem:[#allocation0]]
  $region113: #{transformer_decoder_forward.1} parent=0
    _
  %s23 = ssub.s32 1, %s21
  %s24 = scalar_select 0, %s23, %s21
  $region1: #{transformer_decoder_forward.1} parent=0
    #allocation2 [shape = 'u8[8192]{0}', space=vmem, size = 0x2000, scoped, tag = 'output window, operand 0']
    #allocation3 [shape = 's32[2]{0}', space=sflag, size = 0x8, scoped, tag = 'scoped memory for transformer_decoder_forward.1']
    %25 = vsyncpa [#allocation3], 0
    %s26 = scalar_lea.sflag [#allocation3], 1
    %27 = vsyncpa %s26, 0
    loop: start=0, step=1, limit=4
    $region2: #{transformer_decoder_forward.1} parent=1 // loop_pre_header
      _
    $region3: #{transformer_decoder_forward.1} parent=1 // loop_header
      %s29 = sphi 0, %s33
      %p30 = scmp.ge.s32.totalorder %s29, 4
      %s39 = sphi 0, %s41
      %s42 = sphi 0, %s39
      %s43 = sphi 0, %s42
      %s59 = sphi 0, %s43
      %s65 = sphi 0, %s67
      %s68 = sphi 0, %s65
      %s69 = sphi 0, %s68
      %s85 = sphi 0, %s69
      %s91 = sphi 0, %s93
      %s94 = sphi 0, %s91
      %s95 = sphi 0, %s94
      %s111 = sphi 0, %s95
      %s115 = sphi 0, %s115
      %s117 = sphi 0, %s115
      %s118 = sphi 0, %s117
      %s132 = sphi 0, %s118
      %s136 = sphi 0, %s136
      %s138 = sphi 0, %s136
      %s139 = sphi 0, %s138
      %s153 = sphi 0, %s139
      %s157 = sphi 0, %s157
      %s159 = sphi 0, %s157
      %s160 = sphi 0, %s159
      %s174 = sphi 0, %s160
      %s178 = sphi 0, %s178
      %s180 = sphi 0, %s178
      %s181 = sphi 0, %s180
      %s195 = sphi 0, %s181
      %s199 = sphi 0, %s199
      %s201 = sphi 0, %s199
      %s202 = sphi 0, %s201
      %s216 = sphi 0, %s202
      %s220 = sphi 0, %s220
      %s222 = sphi 0, %s220
      %s223 = sphi 0, %s222
      %s237 = sphi 0, %s223
      %s241 = sphi 0, %s241
      %s243 = sphi 0, %s241
      %s244 = sphi 0, %s243
      %s258 = sphi 0, %s244
      %s262 = sphi 0, %s262
      %s264 = sphi 0, %s262
      %s265 = sphi 0, %s264
      %s279 = sphi 0, %s265
      %s283 = sphi 0, %s283
      %s285 = sphi 0, %s283
      %s286 = sphi 0, %s285
      %s300 = sphi 0, %s286
      %s304 = sphi 0, %s304
      %s306 = sphi 0, %s304
      %s307 = sphi 0, %s306
      %s321 = sphi 0, %s307
      %s325 = sphi 0, %s325
      %s327 = sphi 0, %s325
      %s328 = sphi 0, %s327
      %s342 = sphi 0, %s328
      %s346 = sphi 0, %s346
      %s348 = sphi 0, %s346
      %s349 = sphi 0, %s348
      %s363 = sphi 0, %s349
      %s367 = sphi 0, %s367
      %s369 = sphi 0, %s367
      %s370 = sphi 0, %s369
      %s384 = sphi 0, %s370
      %s388 = sphi 0, %s388
      %s390 = sphi 0, %s388
      %s391 = sphi 0, %s390
      %s405 = sphi 0, %s391
      %s409 = sphi 0, %s409
      %s411 = sphi 0, %s409
      %s412 = sphi 0, %s411
      %s426 = sphi 0, %s412
      %s430 = sphi 0, %s430
      %s432 = sphi 0, %s430
      %s433 = sphi 0, %s432
      %s447 = sphi 0, %s433
      %s451 = sphi 0, %s451
      %s453 = sphi 0, %s451
      %s454 = sphi 0, %s453
      %s468 = sphi 0, %s454
      %s474 = sphi 0, %s476
      %s477 = sphi 0, %s474
      %s478 = sphi 0, %s477
      %s494 = sphi 0, %s478
    $region4: #{transformer_decoder_forward.1} parent=1 // loop_header_branch
      %32 = sbr.rel (%p30) target = $region8
    $region5: #{transformer_decoder_forward.1} parent=1 // loop_body
      %s34 = ssub.s32 %s29, 1
      %s35 = ssub.s32 %s29, 2
      %s36 = sadd.s32 %s29, 1
      %s37 = ssub.s32 %s29, %s36
      %p38 = scmp.eq.s32.totalorder %s37, 0
      %s40 = sadd.s32 %s39, 1
      %s41 = scalar_select %p38, %s39, %s40
      %p44 = pneg %p38
      %p45 = scmp.eq.s32.totalorder %s29, 1
      %p46 = por %p44, %p45
      %p47 = scmp.ne.s32.totalorder %s39, %s42
      %p48 = scmp.eq.s32.totalorder %s29, 0
      %p49 = por %p47, %p48
      %p50 = scmp.ne.s32.totalorder %s39, %s42
      %p51 = scmp.eq.s32.totalorder %s34, 1
      %p52 = por %p50, %p51
      %p53 = scmp.ne.s32.totalorder %s42, %s43
      %p54 = scmp.eq.s32.totalorder %s34, 0
      %p55 = por %p53, %p54
      %p56 = scmp.ne.s32.totalorder %s42, %s43
      %p57 = scmp.eq.s32.totalorder %s35, 1
      %p58 = por %p56, %p57
      %p60 = scmp.ne.s32.totalorder %s43, %s59
      %p61 = scmp.eq.s32.totalorder %s35, 0
      %p62 = por %p60, %p61
      %s63 = ssub.s32 %s29, %s36
      %p64 = scmp.eq.s32.totalorder %s63, 0
      %s66 = sadd.s32 %s65, 1
      %s67 = scalar_select %p64, %s65, %s66
      %p70 = pneg %p64
      %p71 = scmp.eq.s32.totalorder %s29, 1
      %p72 = por %p70, %p71
      %p73 = scmp.ne.s32.totalorder %s65, %s68
      %p74 = scmp.eq.s32.totalorder %s29, 0
      %p75 = por %p73, %p74
      %p76 = scmp.ne.s32.totalorder %s65, %s68
      %p77 = scmp.eq.s32.totalorder %s34, 1
      %p78 = por %p76, %p77
      %p79 = scmp.ne.s32.totalorder %s68, %s69
      %p80 = scmp.eq.s32.totalorder %s34, 0
      %p81 = por %p79, %p80
      %p82 = scmp.ne.s32.totalorder %s68, %s69
      %p83 = scmp.eq.s32.totalorder %s35, 1
      %p84 = por %p82, %p83
      %p86 = scmp.ne.s32.totalorder %s69, %s85
      %p87 = scmp.eq.s32.totalorder %s35, 0
      %p88 = por %p86, %p87
      %s89 = ssub.s32 %s29, %s36
      %p90 = scmp.eq.s32.totalorder %s89, 0
      %s92 = sadd.s32 %s91, 1
      %s93 = scalar_select %p90, %s91, %s92
      %p96 = pneg %p90
      %p97 = scmp.eq.s32.totalorder %s29, 1
      %p98 = por %p96, %p97
      %p99 = scmp.ne.s32.totalorder %s91, %s94
      %p100 = scmp.eq.s32.totalorder %s29, 0
      %p101 = por %p99, %p100
      %p102 = scmp.ne.s32.totalorder %s91, %s94
      %p103 = scmp.eq.s32.totalorder %s34, 1
      %p104 = por %p102, %p103
      %p105 = scmp.ne.s32.totalorder %s94, %s95
      %p106 = scmp.eq.s32.totalorder %s34, 0
      %p107 = por %p105, %p106
      %p108 = scmp.ne.s32.totalorder %s94, %s95
      %p109 = scmp.eq.s32.totalorder %s35, 1
      %p110 = por %p108, %p109
      %p112 = scmp.ne.s32.totalorder %s95, %s111
      %p113 = scmp.eq.s32.totalorder %s35, 0
      %p114 = por %p112, %p113
      %s116 = sadd.s32 %s115, 1
      %p119 = scmp.eq.s32.totalorder %s29, 1
      %p120 = scmp.ne.s32.totalorder %s115, %s117
      %p121 = scmp.eq.s32.totalorder %s29, 0
      %p122 = por %p120, %p121
      %p123 = scmp.ne.s32.totalorder %s115, %s117
      %p124 = scmp.eq.s32.totalorder %s34, 1
      %p125 = por %p123, %p124
      %p126 = scmp.ne.s32.totalorder %s117, %s118
      %p127 = scmp.eq.s32.totalorder %s34, 0
      %p128 = por %p126, %p127
      %p129 = scmp.ne.s32.totalorder %s117, %s118
      %p130 = scmp.eq.s32.totalorder %s35, 1
      %p131 = por %p129, %p130
      %p133 = scmp.ne.s32.totalorder %s118, %s132
      %p134 = scmp.eq.s32.totalorder %s35, 0
      %p135 = por %p133, %p134
      %s137 = sadd.s32 %s136, 1
      %p140 = scmp.eq.s32.totalorder %s29, 1
      %p141 = scmp.ne.s32.totalorder %s136, %s138
      %p142 = scmp.eq.s32.totalorder %s29, 0
      %p143 = por %p141, %p142
      %p144 = scmp.ne.s32.totalorder %s136, %s138
      %p145 = scmp.eq.s32.totalorder %s34, 1
      %p146 = por %p144, %p145
      %p147 = scmp.ne.s32.totalorder %s138, %s139
      %p148 = scmp.eq.s32.totalorder %s34, 0
      %p149 = por %p147, %p148
      %p150 = scmp.ne.s32.totalorder %s138, %s139
      %p151 = scmp.eq.s32.totalorder %s35, 1
      %p152 = por %p150, %p151
      %p154 = scmp.ne.s32.totalorder %s139, %s153
      %p155 = scmp.eq.s32.totalorder %s35, 0
      %p156 = por %p154, %p155
      %s158 = sadd.s32 %s157, 1
      %p161 = scmp.eq.s32.totalorder %s29, 1
      %p162 = scmp.ne.s32.totalorder %s157, %s159
      %p163 = scmp.eq.s32.totalorder %s29, 0
      %p164 = por %p162, %p163
      %p165 = scmp.ne.s32.totalorder %s157, %s159
      %p166 = scmp.eq.s32.totalorder %s34, 1
      %p167 = por %p165, %p166
      %p168 = scmp.ne.s32.totalorder %s159, %s160
      %p169 = scmp.eq.s32.totalorder %s34, 0
      %p170 = por %p168, %p169
      %p171 = scmp.ne.s32.totalorder %s159, %s160
      %p172 = scmp.eq.s32.totalorder %s35, 1
      %p173 = por %p171, %p172
      %p175 = scmp.ne.s32.totalorder %s160, %s174
      %p176 = scmp.eq.s32.totalorder %s35, 0
      %p177 = por %p175, %p176
      %s179 = sadd.s32 %s178, 1
      %p182 = scmp.eq.s32.totalorder %s29, 1
      %p183 = scmp.ne.s32.totalorder %s178, %s180
      %p184 = scmp.eq.s32.totalorder %s29, 0
      %p185 = por %p183, %p184
      %p186 = scmp.ne.s32.totalorder %s178, %s180
      %p187 = scmp.eq.s32.totalorder %s34, 1
      %p188 = por %p186, %p187
      %p189 = scmp.ne.s32.totalorder %s180, %s181
      %p190 = scmp.eq.s32.totalorder %s34, 0
      %p191 = por %p189, %p190
      %p192 = scmp.ne.s32.totalorder %s180, %s181
      %p193 = scmp.eq.s32.totalorder %s35, 1
      %p194 = por %p192, %p193
      %p196 = scmp.ne.s32.totalorder %s181, %s195
      %p197 = scmp.eq.s32.totalorder %s35, 0
      %p198 = por %p196, %p197
      %s200 = sadd.s32 %s199, 1
      %p203 = scmp.eq.s32.totalorder %s29, 1
      %p204 = scmp.ne.s32.totalorder %s199, %s201
      %p205 = scmp.eq.s32.totalorder %s29, 0
      %p206 = por %p204, %p205
      %p207 = scmp.ne.s32.totalorder %s199, %s201
      %p208 = scmp.eq.s32.totalorder %s34, 1
      %p209 = por %p207, %p208
      %p210 = scmp.ne.s32.totalorder %s201, %s202
      %p211 = scmp.eq.s32.totalorder %s34, 0
      %p212 = por %p210, %p211
      %p213 = scmp.ne.s32.totalorder %s201, %s202
      %p214 = scmp.eq.s32.totalorder %s35, 1
      %p215 = por %p213, %p214
      %p217 = scmp.ne.s32.totalorder %s202, %s216
      %p218 = scmp.eq.s32.totalorder %s35, 0
      %p219 = por %p217, %p218
      %s221 = sadd.s32 %s220, 1
      %p224 = scmp.eq.s32.totalorder %s29, 1
      %p225 = scmp.ne.s32.totalorder %s220, %s222
      %p226 = scmp.eq.s32.totalorder %s29, 0
      %p227 = por %p225, %p226
      %p228 = scmp.ne.s32.totalorder %s220, %s222
      %p229 = scmp.eq.s32.totalorder %s34, 1
      %p230 = por %p228, %p229
      %p231 = scmp.ne.s32.totalorder %s222, %s223
      %p232 = scmp.eq.s32.totalorder %s34, 0
      %p233 = por %p231, %p232
      %p234 = scmp.ne.s32.totalorder %s222, %s223
      %p235 = scmp.eq.s32.totalorder %s35, 1
      %p236 = por %p234, %p235
      %p238 = scmp.ne.s32.totalorder %s223, %s237
      %p239 = scmp.eq.s32.totalorder %s35, 0
      %p240 = por %p238, %p239
      %s242 = sadd.s32 %s241, 1
      %p245 = scmp.eq.s32.totalorder %s29, 1
      %p246 = scmp.ne.s32.totalorder %s241, %s243
      %p247 = scmp.eq.s32.totalorder %s29, 0
      %p248 = por %p246, %p247
      %p249 = scmp.ne.s32.totalorder %s241, %s243
      %p250 = scmp.eq.s32.totalorder %s34, 1
      %p251 = por %p249, %p250
      %p252 = scmp.ne.s32.totalorder %s243, %s244
      %p253 = scmp.eq.s32.totalorder %s34, 0
      %p254 = por %p252, %p253
      %p255 = scmp.ne.s32.totalorder %s243, %s244
      %p256 = scmp.eq.s32.totalorder %s35, 1
      %p257 = por %p255, %p256
      %p259 = scmp.ne.s32.totalorder %s244, %s258
      %p260 = scmp.eq.s32.totalorder %s35, 0
      %p261 = por %p259, %p260
      %s263 = sadd.s32 %s262, 1
      %p266 = scmp.eq.s32.totalorder %s29, 1
      %p267 = scmp.ne.s32.totalorder %s262, %s264
      %p268 = scmp.eq.s32.totalorder %s29, 0
      %p269 = por %p267, %p268
      %p270 = scmp.ne.s32.totalorder %s262, %s264
      %p271 = scmp.eq.s32.totalorder %s34, 1
      %p272 = por %p270, %p271
      %p273 = scmp.ne.s32.totalorder %s264, %s265
      %p274 = scmp.eq.s32.totalorder %s34, 0
      %p275 = por %p273, %p274
      %p276 = scmp.ne.s32.totalorder %s264, %s265
      %p277 = scmp.eq.s32.totalorder %s35, 1
      %p278 = por %p276, %p277
      %p280 = scmp.ne.s32.totalorder %s265, %s279
      %p281 = scmp.eq.s32.totalorder %s35, 0
      %p282 = por %p280, %p281
      %s284 = sadd.s32 %s283, 1
      %p287 = scmp.eq.s32.totalorder %s29, 1
      %p288 = scmp.ne.s32.totalorder %s283, %s285
      %p289 = scmp.eq.s32.totalorder %s29, 0
      %p290 = por %p288, %p289
      %p291 = scmp.ne.s32.totalorder %s283, %s285
      %p292 = scmp.eq.s32.totalorder %s34, 1
      %p293 = por %p291, %p292
      %p294 = scmp.ne.s32.totalorder %s285, %s286
      %p295 = scmp.eq.s32.totalorder %s34, 0
      %p296 = por %p294, %p295
      %p297 = scmp.ne.s32.totalorder %s285, %s286
      %p298 = scmp.eq.s32.totalorder %s35, 1
      %p299 = por %p297, %p298
      %p301 = scmp.ne.s32.totalorder %s286, %s300
      %p302 = scmp.eq.s32.totalorder %s35, 0
      %p303 = por %p301, %p302
      %s305 = sadd.s32 %s304, 1
      %p308 = scmp.eq.s32.totalorder %s29, 1
      %p309 = scmp.ne.s32.totalorder %s304, %s306
      %p310 = scmp.eq.s32.totalorder %s29, 0
      %p311 = por %p309, %p310
      %p312 = scmp.ne.s32.totalorder %s304, %s306
      %p313 = scmp.eq.s32.totalorder %s34, 1
      %p314 = por %p312, %p313
      %p315 = scmp.ne.s32.totalorder %s306, %s307
      %p316 = scmp.eq.s32.totalorder %s34, 0
      %p317 = por %p315, %p316
      %p318 = scmp.ne.s32.totalorder %s306, %s307
      %p319 = scmp.eq.s32.totalorder %s35, 1
      %p320 = por %p318, %p319
      %p322 = scmp.ne.s32.totalorder %s307, %s321
      %p323 = scmp.eq.s32.totalorder %s35, 0
      %p324 = por %p322, %p323
      %s326 = sadd.s32 %s325, 1
      %p329 = scmp.eq.s32.totalorder %s29, 1
      %p330 = scmp.ne.s32.totalorder %s325, %s327
      %p331 = scmp.eq.s32.totalorder %s29, 0
      %p332 = por %p330, %p331
      %p333 = scmp.ne.s32.totalorder %s325, %s327
      %p334 = scmp.eq.s32.totalorder %s34, 1
      %p335 = por %p333, %p334
      %p336 = scmp.ne.s32.totalorder %s327, %s328
      %p337 = scmp.eq.s32.totalorder %s34, 0
      %p338 = por %p336, %p337
      %p339 = scmp.ne.s32.totalorder %s327, %s328
      %p340 = scmp.eq.s32.totalorder %s35, 1
      %p341 = por %p339, %p340
      %p343 = scmp.ne.s32.totalorder %s328, %s342
      %p344 = scmp.eq.s32.totalorder %s35, 0
      %p345 = por %p343, %p344
      %s347 = sadd.s32 %s346, 1
      %p350 = scmp.eq.s32.totalorder %s29, 1
      %p351 = scmp.ne.s32.totalorder %s346, %s348
      %p352 = scmp.eq.s32.totalorder %s29, 0
      %p353 = por %p351, %p352
      %p354 = scmp.ne.s32.totalorder %s346, %s348
      %p355 = scmp.eq.s32.totalorder %s34, 1
      %p356 = por %p354, %p355
      %p357 = scmp.ne.s32.totalorder %s348, %s349
      %p358 = scmp.eq.s32.totalorder %s34, 0
      %p359 = por %p357, %p358
      %p360 = scmp.ne.s32.totalorder %s348, %s349
      %p361 = scmp.eq.s32.totalorder %s35, 1
      %p362 = por %p360, %p361
      %p364 = scmp.ne.s32.totalorder %s349, %s363
      %p365 = scmp.eq.s32.totalorder %s35, 0
      %p366 = por %p364, %p365
      %s368 = sadd.s32 %s367, 1
      %p371 = scmp.eq.s32.totalorder %s29, 1
      %p372 = scmp.ne.s32.totalorder %s367, %s369
      %p373 = scmp.eq.s32.totalorder %s29, 0
      %p374 = por %p372, %p373
      %p375 = scmp.ne.s32.totalorder %s367, %s369
      %p376 = scmp.eq.s32.totalorder %s34, 1
      %p377 = por %p375, %p376
      %p378 = scmp.ne.s32.totalorder %s369, %s370
      %p379 = scmp.eq.s32.totalorder %s34, 0
      %p380 = por %p378, %p379
      %p381 = scmp.ne.s32.totalorder %s369, %s370
      %p382 = scmp.eq.s32.totalorder %s35, 1
      %p383 = por %p381, %p382
      %p385 = scmp.ne.s32.totalorder %s370, %s384
      %p386 = scmp.eq.s32.totalorder %s35, 0
      %p387 = por %p385, %p386
      %s389 = sadd.s32 %s388, 1
      %p392 = scmp.eq.s32.totalorder %s29, 1
      %p393 = scmp.ne.s32.totalorder %s388, %s390
      %p394 = scmp.eq.s32.totalorder %s29, 0
      %p395 = por %p393, %p394
      %p396 = scmp.ne.s32.totalorder %s388, %s390
      %p397 = scmp.eq.s32.totalorder %s34, 1
      %p398 = por %p396, %p397
      %p399 = scmp.ne.s32.totalorder %s390, %s391
      %p400 = scmp.eq.s32.totalorder %s34, 0
      %p401 = por %p399, %p400
      %p402 = scmp.ne.s32.totalorder %s390, %s391
      %p403 = scmp.eq.s32.totalorder %s35, 1
      %p404 = por %p402, %p403
      %p406 = scmp.ne.s32.totalorder %s391, %s405
      %p407 = scmp.eq.s32.totalorder %s35, 0
      %p408 = por %p406, %p407
      %s410 = sadd.s32 %s409, 1
      %p413 = scmp.eq.s32.totalorder %s29, 1
      %p414 = scmp.ne.s32.totalorder %s409, %s411
      %p415 = scmp.eq.s32.totalorder %s29, 0
      %p416 = por %p414, %p415
      %p417 = scmp.ne.s32.totalorder %s409, %s411
      %p418 = scmp.eq.s32.totalorder %s34, 1
      %p419 = por %p417, %p418
      %p420 = scmp.ne.s32.totalorder %s411, %s412
      %p421 = scmp.eq.s32.totalorder %s34, 0
      %p422 = por %p420, %p421
      %p423 = scmp.ne.s32.totalorder %s411, %s412
      %p424 = scmp.eq.s32.totalorder %s35, 1
      %p425 = por %p423, %p424
      %p427 = scmp.ne.s32.totalorder %s412, %s426
      %p428 = scmp.eq.s32.totalorder %s35, 0
      %p429 = por %p427, %p428
      %s431 = sadd.s32 %s430, 1
      %p434 = scmp.eq.s32.totalorder %s29, 1
      %p435 = scmp.ne.s32.totalorder %s430, %s432
      %p436 = scmp.eq.s32.totalorder %s29, 0
      %p437 = por %p435, %p436
      %p438 = scmp.ne.s32.totalorder %s430, %s432
      %p439 = scmp.eq.s32.totalorder %s34, 1
      %p440 = por %p438, %p439
      %p441 = scmp.ne.s32.totalorder %s432, %s433
      %p442 = scmp.eq.s32.totalorder %s34, 0
      %p443 = por %p441, %p442
      %p444 = scmp.ne.s32.totalorder %s432, %s433
      %p445 = scmp.eq.s32.totalorder %s35, 1
      %p446 = por %p444, %p445
      %p448 = scmp.ne.s32.totalorder %s433, %s447
      %p449 = scmp.eq.s32.totalorder %s35, 0
      %p450 = por %p448, %p449
      %s452 = sadd.s32 %s451, 1
      %p455 = scmp.eq.s32.totalorder %s29, 1
      %p456 = scmp.ne.s32.totalorder %s451, %s453
      %p457 = scmp.eq.s32.totalorder %s29, 0
      %p458 = por %p456, %p457
      %p459 = scmp.ne.s32.totalorder %s451, %s453
      %p460 = scmp.eq.s32.totalorder %s34, 1
      %p461 = por %p459, %p460
      %p462 = scmp.ne.s32.totalorder %s453, %s454
      %p463 = scmp.eq.s32.totalorder %s34, 0
      %p464 = por %p462, %p463
      %p465 = scmp.ne.s32.totalorder %s453, %s454
      %p466 = scmp.eq.s32.totalorder %s35, 1
      %p467 = por %p465, %p466
      %p469 = scmp.ne.s32.totalorder %s454, %s468
      %p470 = scmp.eq.s32.totalorder %s35, 0
      %p471 = por %p469, %p470
      %s472 = ssub.s32 %s29, %s36
      %p473 = scmp.eq.s32.totalorder %s472, 0
      %s475 = sadd.s32 %s474, 1
      %s476 = scalar_select %p473, %s474, %s475
      %p479 = pneg %p473
      %p480 = scmp.eq.s32.totalorder %s29, 1
      %p481 = por %p479, %p480
      %p482 = scmp.ne.s32.totalorder %s474, %s477
      %p483 = scmp.eq.s32.totalorder %s29, 0
      %p484 = por %p482, %p483
      %p485 = scmp.ne.s32.totalorder %s474, %s477
      %p486 = scmp.eq.s32.totalorder %s34, 1
      %p487 = por %p485, %p486
      %p488 = scmp.ne.s32.totalorder %s477, %s478
      %p489 = scmp.eq.s32.totalorder %s34, 0
      %p490 = por %p488, %p489
      %p491 = scmp.ne.s32.totalorder %s477, %s478
      %p492 = scmp.eq.s32.totalorder %s35, 1
      %p493 = por %p491, %p492
      %p495 = scmp.ne.s32.totalorder %s478, %s494
      %p496 = scmp.eq.s32.totalorder %s35, 0
      %p497 = por %p495, %p496
      %p498 = scmp.le.s32.totalorder 1, %s29
      %p499 = scmp.lt.s32.totalorder %s29, 3
      %p500 = pnand %p498, %p499
      %p501 = pneg %p500
      // Predicated region
      $region9: #{transformer_decoder_forward.1} parent=5 // pred_check
        _
      $region10: #{transformer_decoder_forward.1} parent=5 // pred_check_branch
        %503 = sbr.rel (%p500) target = $region12
      $region11: #{transformer_decoder_forward.1} parent=5 // pred_region
        %s504 = ssub.s32 %s29, 1
        // Predicated region
        $region13: #{transformer_decoder_forward.1} parent=11 // pred_check
          %p505 = pneg %p128
        $region14: #{transformer_decoder_forward.1} parent=11 // pred_check_branch
          %507 = sbr.rel (%p505) target = $region16
        $region15: #{transformer_decoder_forward.1} parent=11 // pred_region
          _
        $region16: #{transformer_decoder_forward.1} parent=11 // pred_fallthru
          _
        // Predicated region
        $region17: #{transformer_decoder_forward.1} parent=11 // pred_check
          %p508 = pneg %p149
        $region18: #{transformer_decoder_forward.1} parent=11 // pred_check_branch
          %510 = sbr.rel (%p508) target = $region20
        $region19: #{transformer_decoder_forward.1} parent=11 // pred_region
          _
        $region20: #{transformer_decoder_forward.1} parent=11 // pred_fallthru
          _
        // Predicated region
        $region21: #{transformer_decoder_forward.1} parent=11 // pred_check
          %p511 = pneg %p170
        $region22: #{transformer_decoder_forward.1} parent=11 // pred_check_branch
          %513 = sbr.rel (%p511) target = $region24
        $region23: #{transformer_decoder_forward.1} parent=11 // pred_region
          _
        $region24: #{transformer_decoder_forward.1} parent=11 // pred_fallthru
          _
        // Predicated region
        $region25: #{transformer_decoder_forward.1} parent=11 // pred_check
          %p514 = pneg %p191
        $region26: #{transformer_decoder_forward.1} parent=11 // pred_check_branch
          %516 = sbr.rel (%p514) target = $region28
        $region27: #{transformer_decoder_forward.1} parent=11 // pred_region
          _
        $region28: #{transformer_decoder_forward.1} parent=11 // pred_fallthru
          _
        // Predicated region
        $region29: #{transformer_decoder_forward.1} parent=11 // pred_check
          %p517 = pneg %p212
        $region30: #{transformer_decoder_forward.1} parent=11 // pred_check_branch
          %519 = sbr.rel (%p517) target = $region32
        $region31: #{transformer_decoder_forward.1} parent=11 // pred_region
          _
        $region32: #{transformer_decoder_forward.1} parent=11 // pred_fallthru
          _
        // Predicated region
        $region33: #{transformer_decoder_forward.1} parent=11 // pred_check
          %p520 = pneg %p233
        $region34: #{transformer_decoder_forward.1} parent=11 // pred_check_branch
          %522 = sbr.rel (%p520) target = $region36
        $region35: #{transformer_decoder_forward.1} parent=11 // pred_region
          _
        $region36: #{transformer_decoder_forward.1} parent=11 // pred_fallthru
          _
        // Predicated region
        $region37: #{transformer_decoder_forward.1} parent=11 // pred_check
          %p523 = pneg %p254
        $region38: #{transformer_decoder_forward.1} parent=11 // pred_check_branch
          %525 = sbr.rel (%p523) target = $region40
        $region39: #{transformer_decoder_forward.1} parent=11 // pred_region
          _
        $region40: #{transformer_decoder_forward.1} parent=11 // pred_fallthru
          _
        // Predicated region
        $region41: #{transformer_decoder_forward.1} parent=11 // pred_check
          %p526 = pneg %p275
        $region42: #{transformer_decoder_forward.1} parent=11 // pred_check_branch
          %528 = sbr.rel (%p526) target = $region44
        $region43: #{transformer_decoder_forward.1} parent=11 // pred_region
          _
        $region44: #{transformer_decoder_forward.1} parent=11 // pred_fallthru
          _
        // Predicated region
        $region45: #{transformer_decoder_forward.1} parent=11 // pred_check
          %p529 = pneg %p296
        $region46: #{transformer_decoder_forward.1} parent=11 // pred_check_branch
          %531 = sbr.rel (%p529) target = $region48
        $region47: #{transformer_decoder_forward.1} parent=11 // pred_region
          _
        $region48: #{transformer_decoder_forward.1} parent=11 // pred_fallthru
          _
        // Predicated region
        $region49: #{transformer_decoder_forward.1} parent=11 // pred_check
          %p532 = pneg %p317
        $region50: #{transformer_decoder_forward.1} parent=11 // pred_check_branch
          %534 = sbr.rel (%p532) target = $region52
        $region51: #{transformer_decoder_forward.1} parent=11 // pred_region
          _
        $region52: #{transformer_decoder_forward.1} parent=11 // pred_fallthru
          _
        // Predicated region
        $region53: #{transformer_decoder_forward.1} parent=11 // pred_check
          %p535 = pneg %p338
        $region54: #{transformer_decoder_forward.1} parent=11 // pred_check_branch
          %537 = sbr.rel (%p535) target = $region56
        $region55: #{transformer_decoder_forward.1} parent=11 // pred_region
          _
        $region56: #{transformer_decoder_forward.1} parent=11 // pred_fallthru
          _
        // Predicated region
        $region57: #{transformer_decoder_forward.1} parent=11 // pred_check
          %p538 = pneg %p359
        $region58: #{transformer_decoder_forward.1} parent=11 // pred_check_branch
          %540 = sbr.rel (%p538) target = $region60
        $region59: #{transformer_decoder_forward.1} parent=11 // pred_region
          _
        $region60: #{transformer_decoder_forward.1} parent=11 // pred_fallthru
          _
        // Predicated region
        $region61: #{transformer_decoder_forward.1} parent=11 // pred_check
          %p541 = pneg %p380
        $region62: #{transformer_decoder_forward.1} parent=11 // pred_check_branch
          %543 = sbr.rel (%p541) target = $region64
        $region63: #{transformer_decoder_forward.1} parent=11 // pred_region
          _
        $region64: #{transformer_decoder_forward.1} parent=11 // pred_fallthru
          _
        // Predicated region
        $region65: #{transformer_decoder_forward.1} parent=11 // pred_check
          %p544 = pneg %p401
        $region66: #{transformer_decoder_forward.1} parent=11 // pred_check_branch
          %546 = sbr.rel (%p544) target = $region68
        $region67: #{transformer_decoder_forward.1} parent=11 // pred_region
          _
        $region68: #{transformer_decoder_forward.1} parent=11 // pred_fallthru
          _
        // Predicated region
        $region69: #{transformer_decoder_forward.1} parent=11 // pred_check
          %p547 = pneg %p422
        $region70: #{transformer_decoder_forward.1} parent=11 // pred_check_branch
          %549 = sbr.rel (%p547) target = $region72
        $region71: #{transformer_decoder_forward.1} parent=11 // pred_region
          _
        $region72: #{transformer_decoder_forward.1} parent=11 // pred_fallthru
          _
        // Predicated region
        $region73: #{transformer_decoder_forward.1} parent=11 // pred_check
          %p550 = pneg %p443
        $region74: #{transformer_decoder_forward.1} parent=11 // pred_check_branch
          %552 = sbr.rel (%p550) target = $region76
        $region75: #{transformer_decoder_forward.1} parent=11 // pred_region
          _
        $region76: #{transformer_decoder_forward.1} parent=11 // pred_fallthru
          _
        // Predicated region
        $region77: #{transformer_decoder_forward.1} parent=11 // pred_check
          %p553 = pneg %p464
        $region78: #{transformer_decoder_forward.1} parent=11 // pred_check_branch
          %555 = sbr.rel (%p553) target = $region80
        $region79: #{transformer_decoder_forward.1} parent=11 // pred_region
          _
        $region80: #{transformer_decoder_forward.1} parent=11 // pred_fallthru
          _
      $region12: #{transformer_decoder_forward.1} parent=5 // pred_fallthru
        _
      %p556 = scmp.lt.s32.totalorder %s29, 2
      // Predicated region
      $region81: #{transformer_decoder_forward.1} parent=5 // pred_check
        %p557 = pneg %p556
      $region82: #{transformer_decoder_forward.1} parent=5 // pred_check_branch
        %559 = sbr.rel (%p557) target = $region84
      $region83: #{transformer_decoder_forward.1} parent=5 // pred_region
        // Predicated region
        $region85: #{transformer_decoder_forward.1} parent=83 // pred_check
          %p560 = pneg %p49
        $region86: #{transformer_decoder_forward.1} parent=83 // pred_check_branch
          %562 = sbr.rel (%p560) target = $region88
        $region87: #{transformer_decoder_forward.1} parent=83 // pred_region
          %p563 = scmp.lt.s32.totalorder %s29, 1
          %s564 = scalar_select %p563, %s29, 1
          %s565 = smul.addr %s564, 8
          %s566 = scalar_lea.vmem %s0, %s565
        $region88: #{transformer_decoder_forward.1} parent=83 // pred_fallthru
          _
        // Predicated region
        $region89: #{transformer_decoder_forward.1} parent=83 // pred_check
          %p567 = pneg %p75
        $region90: #{transformer_decoder_forward.1} parent=83 // pred_check_branch
          %569 = sbr.rel (%p567) target = $region92
        $region91: #{transformer_decoder_forward.1} parent=83 // pred_region
          %p570 = scmp.lt.s32.totalorder %s29, 1
          %s571 = scalar_select %p570, %s29, 1
          %s572 = smul.addr %s571, 2
          %s573 = smul.addr %s572, 8
          %s574 = scalar_lea.vmem %s1, %s573
        $region92: #{transformer_decoder_forward.1} parent=83 // pred_fallthru
          _
        // Predicated region
        $region93: #{transformer_decoder_forward.1} parent=83 // pred_check
          %p575 = pneg %p101
        $region94: #{transformer_decoder_forward.1} parent=83 // pred_check_branch
          %577 = sbr.rel (%p575) target = $region96
        $region95: #{transformer_decoder_forward.1} parent=83 // pred_region
          %p578 = scmp.lt.s32.totalorder %s29, 1
          %s579 = scalar_select %p578, %s29, 1
          %s580 = smul.addr %s579, 2
          %s581 = smul.addr %s580, 8
          %s582 = scalar_lea.vmem %s2, %s581
        $region96: #{transformer_decoder_forward.1} parent=83 // pred_fallthru
          _
      $region84: #{transformer_decoder_forward.1} parent=5 // pred_fallthru
        _
      %p583 = scmp.le.s32.totalorder 1, %s29
      %p584 = scmp.lt.s32.totalorder %s29, 3
      %p585 = pnand %p583, %p584
      %p586 = pneg %p585
      // Predicated region
      $region97: #{transformer_decoder_forward.1} parent=5 // pred_check
        _
      $region98: #{transformer_decoder_forward.1} parent=5 // pred_check_branch
        %588 = sbr.rel (%p585) target = $region100
      $region99: #{transformer_decoder_forward.1} parent=5 // pred_region
        %s589 = ssub.s32 %s29, 1
        %p590 = scmp.lt.s32.totalorder %s34, 1
        %s591 = scalar_select %p590, %s34, 1
        %s592 = smul.addr %s591, 8
        %s593 = scalar_lea.vmem %s0, %s592
        %p594 = pneg %p55
        %p595 = pneg %p52
        %p596 = scmp.lt.s32.totalorder %s34, 1
        %s597 = scalar_select %p596, %s34, 1
        %s598 = smul.addr %s597, 2
        %s599 = smul.addr %s598, 8
        %s600 = scalar_lea.vmem %s1, %s599
        %p601 = pneg %p81
        %p602 = pneg %p78
        %p603 = scmp.lt.s32.totalorder %s34, 1
        %s604 = scalar_select %p603, %s34, 1
        %s605 = smul.addr %s604, 2
        %s606 = smul.addr %s605, 8
        %s607 = scalar_lea.vmem %s2, %s606
        %p608 = pneg %p107
        %p609 = pneg %p104
        %p610 = pneg %p128
        %p611 = pneg %p125
        %p612 = pneg %p149
        %p613 = pneg %p146
        %p614 = pneg %p170
        %p615 = pneg %p167
        %p616 = pneg %p191
        %p617 = pneg %p188
        %p618 = pneg %p212
        %p619 = pneg %p209
        %p620 = pneg %p233
        %p621 = pneg %p230
        %p622 = pneg %p254
        %p623 = pneg %p251
        %p624 = pneg %p275
        %p625 = pneg %p272
        %p626 = pneg %p296
        %p627 = pneg %p293
        %p628 = pneg %p317
        %p629 = pneg %p314
        %p630 = pneg %p338
        %p631 = pneg %p335
        %p632 = pneg %p359
        %p633 = pneg %p356
        %p634 = pneg %p380
        %p635 = pneg %p377
        %p636 = pneg %p401
        %p637 = pneg %p398
        %p638 = pneg %p422
        %p639 = pneg %p419
        %p640 = pneg %p443
        %p641 = pneg %p440
        %p642 = pneg %p464
        %p643 = pneg %p461
        %p644 = pneg %p490
        %p645 = pneg %p487
        %s646 = sand.u32 %s477, 1
        %s647 = scalar_lea.sflag [#allocation3], %s646
        %s648 = sand.u32 %s477, 1
        %s649 = smul.addr %s648, 8
        %s650 = scalar_lea.vmem [#allocation2], %s649
        %p651 = scmp.lt.s32.totalorder %s34, 1
        %s652 = scalar_select %p651, %s34, 1
        %s653 = smul.addr %s652, 8
        %s654 = scalar_lea.vmem %s0, %s653
        %p655 = scmp.lt.s32.totalorder %s34, 1
        %s656 = scalar_select %p655, %s34, 1
        %s657 = smul.addr %s656, 2
        %s658 = smul.addr %s657, 8
        %s659 = scalar_lea.vmem %s1, %s658
        %p660 = scmp.lt.s32.totalorder %s34, 1
        %s661 = scalar_select %p660, %s34, 1
        %s662 = smul.addr %s661, 2
        %s663 = smul.addr %s662, 8
        %s664 = scalar_lea.vmem %s2, %s663
        %v665 = vld [vmem:[%s654] sm:$0xff]
        %v666 = vld [vmem:[%s659] sm:$0xff]
        %v667 = vld [vmem:[%s659 + $0x8] sm:$0xff]
        %v668 = vld [vmem:[%s664] sm:$0xff]
        %v669 = vld [vmem:[%s664 + $0x8] sm:$0xff]
        %v670 = vlaneseq
        %v671 = vshrl.u32 %v670, 7
        %v672 = vlaneseq
        %v673 = vand.u32 %v672, 127
        %vm674 = vcmp.le.s32.totalorder %v673, %v671
        %v675 = vsel %vm674, 0.0, -1e+09
        %v676 = vld [vmem:[%s19] sm:$0x3f]
        %v677 = vld [vmem:[%s3] sm:$0xff]
        %v678 = vld [vmem:[%s3 + $0x8] sm:$0xff]
        %v679 = vld [vmem:[%s3 + $0x10] sm:$0xff]
        %v680 = vld [vmem:[%s3 + $0x18] sm:$0xff]
        %v681 = vld [vmem:[%s4] sm:$0x1]
        %v683 = vlaneseq
        %v684 = vshrl.u32 %v683, 7
        %v685 = vsub.s32 0, %v684
        %v686 = vrot.slane %v681, %v685
        %vm688 = vcmask 261120
        %v690 = vsel %vm688, %v665, 0
        %692 = vmatprep.subr.mxu0 0.0
        %693 = vmatpush1.msra.mxu0 %v677
        %694 = vmatprep.subr.mxu0 0.0
        %695 = vmatpush1.msra.mxu0 %v678
        %696 = vmatprep.subr.mxu0 0.0
        %697 = vmatpush1.msra.mxu0 %v679
        %698 = vmatprep.subr.mxu0 0.0
        %699 = vmatpush1.msra.mxu0 %v680
        %700 = vmatprep.subr.mxu0 0.0
        %701 = vmatpush1.msra.mxu0 0.0
        %702 = vmatprep.subr.mxu0 0.0
        %703 = vmatpush1.msra.mxu0 0.0
        %704 = vmatprep.subr.mxu0 0.0
        %705 = vmatpush1.msra.mxu0 0.0
        %706 = vmatprep.subr.mxu0 0.0
        %707 = vmatpush1.msra.mxu0 0.0
        %708 = vmatprep.subr.mxu0 0.0
        %709 = vmatpush1.msra.mxu0 0.0
        %710 = vmatprep.subr.mxu0 0.0
        %711 = vmatpush1.msra.mxu0 0.0
        %712 = vmatprep.subr.mxu0 0.0
        %713 = vmatpush1.msra.mxu0 0.0
        %714 = vmatprep.subr.mxu0 0.0
        %715 = vmatpush1.msra.mxu0 0.0
        %716 = vmatprep.subr.mxu0 0.0
        %717 = vmatpush1.msra.mxu0 0.0
        %718 = vmatprep.subr.mxu0 0.0
        %719 = vmatpush1.msra.mxu0 0.0
        %720 = vmatprep.subr.mxu0 0.0
        %721 = vmatpush1.msra.mxu0 0.0
        %722 = vmatprep.subr.mxu0 0.0
        %723 = vmatpush1.msra.mxu0 0.0
        %724 = vmatprep.subr.mxu0 0.0
        %725 = vmatpush1.msra.mxu0 0.0
        %726 = vmatprep.subr.mxu0 0.0
        %727 = vmatpush1.msra.mxu0 0.0
        %728 = vmatprep.subr.mxu0 0.0
        %729 = vmatpush1.msra.mxu0 0.0
        %730 = vmatprep.subr.mxu0 0.0
        %731 = vmatpush1.msra.mxu0 0.0
        %732 = vmatprep.subr.mxu0 0.0
        %733 = vmatpush1.msra.mxu0 0.0
        %734 = vmatprep.subr.mxu0 0.0
        %735 = vmatpush1.msra.mxu0 0.0
        %736 = vmatprep.subr.mxu0 0.0
        %737 = vmatpush1.msra.mxu0 0.0
        %738 = vmatprep.subr.mxu0 0.0
        %739 = vmatpush1.msra.mxu0 0.0
        %740 = vmatprep.subr.mxu0 0.0
        %741 = vmatpush1.msra.mxu0 0.0
        %742 = vmatprep.subr.mxu0 0.0
        %743 = vmatpush1.msra.mxu0 0.0
        %744 = vmatprep.subr.mxu0 0.0
        %745 = vmatpush1.msra.mxu0 0.0
        %746 = vmatprep.subr.mxu0 0.0
        %747 = vmatpush1.msra.mxu0 0.0
        %748 = vmatprep.subr.mxu0 0.0
        %749 = vmatpush1.msra.mxu0 0.0
        %750 = vmatprep.subr.mxu0 0.0
        %751 = vmatpush1.msra.mxu0 0.0
        %752 = vmatprep.subr.mxu0 0.0
        %753 = vmatpush1.msra.mxu0 0.0
        %754 = vmatprep.subr.mxu0 0.0
        %755 = vmatpush1.msra.mxu0 0.0
        %756 = vmatprep.mubr.f32.mxu0 0.0
        %757 = vmatmul.mubr.f32.gmra.mrb[0].mxu0 %v690
        %v758 = vpop.f32.mrb[0].mxu0
        %v759 = vadd.f32 %v686, %v758
        %v760 = vpop.f32.mrb[0].mxu0
        %761 = vdwg.mxu0
        %v762 = vld [vmem:[%s5] sm:$0xff]
        %v763 = vld [vmem:[%s5 + $0x8] sm:$0xff]
        %v764 = vld [vmem:[%s5 + $0x10] sm:$0xff]
        %v765 = vld [vmem:[%s5 + $0x18] sm:$0xff]
        %v766 = vld [vmem:[%s6] sm:$0x1]
        %v768 = vlaneseq
        %v769 = vshrl.u32 %v768, 7
        %v770 = vsub.s32 0, %v769
        %v771 = vrot.slane %v766, %v770
        %v773 = vadd.f32 %v771, 0.0
        %775 = vrot.lane.b32.xlu0 %v759, 96
        %v776 = vpop.permute.xlu0 %775
        %vm777 = vcmask 64512
        %v778 = vsel %vm777, %v759, 0
        %v780 = vsel %vm777, %v776, 0
        %782 = vmatprep.subr.mxu0 0.0
        %783 = vmatpush1.xpose.msra.mxu0 %v780
        %784 = vmatprep.subr.mxu0 0.0
        %785 = vmatpush1.xpose.msra.mxu0 0.0
        %786 = vmatprep.subr.mxu0 0.0
        %787 = vmatpush1.xpose.msra.mxu0 0.0
        %788 = vmatprep.subr.mxu0 0.0
        %789 = vmatpush1.xpose.msra.mxu0 0.0
        %790 = vmatprep.subr.mxu0 0.0
        %791 = vmatpush1.xpose.msra.mxu0 0.0
        %792 = vmatprep.subr.mxu0 0.0
        %793 = vmatpush1.xpose.msra.mxu0 0.0
        %794 = vmatprep.subr.mxu0 0.0
        %795 = vmatpush1.xpose.msra.mxu0 0.0
        %796 = vmatprep.subr.mxu0 0.0
        %797 = vmatpush1.xpose.msra.mxu0 0.0
        %798 = vmatprep.subr.mxu0 0.0
        %799 = vmatpush1.xpose.msra.mxu0 0.0
        %800 = vmatprep.subr.mxu0 0.0
        %801 = vmatpush1.xpose.msra.mxu0 0.0
        %802 = vmatprep.subr.mxu0 0.0
        %803 = vmatpush1.xpose.msra.mxu0 0.0
        %804 = vmatprep.subr.mxu0 0.0
        %805 = vmatpush1.xpose.msra.mxu0 0.0
        %806 = vmatprep.subr.mxu0 0.0
        %807 = vmatpush1.xpose.msra.mxu0 0.0
        %808 = vmatprep.subr.mxu0 0.0
        %809 = vmatpush1.xpose.msra.mxu0 0.0
        %810 = vmatprep.subr.mxu0 0.0
        %811 = vmatpush1.xpose.msra.mxu0 0.0
        %812 = vmatprep.subr.mxu0 0.0
        %813 = vmatpush1.xpose.msra.mxu0 0.0
        %814 = vmatprep.subr.mxu0 0.0
        %815 = vmatpush1.xpose.msra.mxu0 0.0
        %816 = vmatprep.subr.mxu0 0.0
        %817 = vmatpush1.xpose.msra.mxu0 0.0
        %818 = vmatprep.subr.mxu0 0.0
        %819 = vmatpush1.xpose.msra.mxu0 0.0
        %820 = vmatprep.subr.mxu0 0.0
        %821 = vmatpush1.xpose.msra.mxu0 0.0
        %822 = vmatprep.subr.mxu0 0.0
        %823 = vmatpush1.xpose.msra.mxu0 0.0
        %824 = vmatprep.subr.mxu0 0.0
        %825 = vmatpush1.xpose.msra.mxu0 0.0
        %826 = vmatprep.subr.mxu0 0.0
        %827 = vmatpush1.xpose.msra.mxu0 0.0
        %828 = vmatprep.subr.mxu0 0.0
        %829 = vmatpush1.xpose.msra.mxu0 0.0
        %830 = vmatprep.subr.mxu0 0.0
        %831 = vmatpush1.xpose.msra.mxu0 0.0
        %832 = vmatprep.subr.mxu0 0.0
        %833 = vmatpush1.xpose.msra.mxu0 0.0
        %834 = vmatprep.subr.mxu0 0.0
        %835 = vmatpush1.xpose.msra.mxu0 0.0
        %836 = vmatprep.subr.mxu0 0.0
        %837 = vmatpush1.xpose.msra.mxu0 0.0
        %838 = vmatprep.subr.mxu0 0.0
        %839 = vmatpush1.xpose.msra.mxu0 0.0
        %840 = vmatprep.subr.mxu0 0.0
        %841 = vmatpush1.xpose.msra.mxu0 0.0
        %842 = vmatprep.subr.mxu0 0.0
        %843 = vmatpush1.xpose.msra.mxu0 0.0
        %844 = vmatprep.subr.mxu0 0.0
        %845 = vmatpush1.xpose.msra.mxu0 0.0
        %846 = vmatprep.mubr.f32.mxu0 0.0
        %847 = vmatmul.mubr.f32.gmra.mrb[0].mxu0 %v778
        %v848 = vpop.f32.mrb[0].mxu0
        %v849 = vadd.f32 0.0, %v848
        %v850 = vpop.f32.mrb[0].mxu0
        %851 = vdwg.mxu0
        %v852 = vmul.f32 %v849, 0.35355338
        %v853 = vadd.f32 %v852, %v675
        %v854 = vsel %vm777, %v853, -inf
        %855 = vmax.xlane.f32.xlu0 %v854
        %v856 = vpop.xlane.xlu0 %855
        %v857 = vsub.f32 %v853, %v856
        %v858 = vmul.f32 %v857, 1.442695
        %v859 = vpow.pop %v858
        %v860 = vsel %vm777, %v859, 0.0
        %861 = vadd.xlane.f32.xlu0 %v860
        %v862 = vpop.xlane.xlu0 %861
        %v863 = vrcp.pop %v862
        %v864 = vmul.f32 %v859, %v863
        %865 = vrot.lane.b32.xlu0 %v759, 64
        %v866 = vpop.permute.xlu0 %865
        %v869 = vsel %vm777, %v864, 0
        %871 = vmatprep.subr.mxu0 0.0
        %872 = vmatpush1.msra.mxu0 %v866
        %873 = vmatprep.subr.mxu0 0.0
        %874 = vmatpush1.msra.mxu0 0.0
        %875 = vmatprep.subr.mxu0 0.0
        %876 = vmatpush1.msra.mxu0 0.0
        %877 = vmatprep.subr.mxu0 0.0
        %878 = vmatpush1.msra.mxu0 0.0
        %879 = vmatprep.subr.mxu0 0.0
        %880 = vmatpush1.msra.mxu0 0.0
        %881 = vmatprep.subr.mxu0 0.0
        %882 = vmatpush1.msra.mxu0 0.0
        %883 = vmatprep.subr.mxu0 0.0
        %884 = vmatpush1.msra.mxu0 0.0
        %885 = vmatprep.subr.mxu0 0.0
        %886 = vmatpush1.msra.mxu0 0.0
        %887 = vmatprep.subr.mxu0 0.0
        %888 = vmatpush1.msra.mxu0 0.0
        %889 = vmatprep.subr.mxu0 0.0
        %890 = vmatpush1.msra.mxu0 0.0
        %891 = vmatprep.subr.mxu0 0.0
        %892 = vmatpush1.msra.mxu0 0.0
        %893 = vmatprep.subr.mxu0 0.0
        %894 = vmatpush1.msra.mxu0 0.0
        %895 = vmatprep.subr.mxu0 0.0
        %896 = vmatpush1.msra.mxu0 0.0
        %897 = vmatprep.subr.mxu0 0.0
        %898 = vmatpush1.msra.mxu0 0.0
        %899 = vmatprep.subr.mxu0 0.0
        %900 = vmatpush1.msra.mxu0 0.0
        %901 = vmatprep.subr.mxu0 0.0
        %902 = vmatpush1.msra.mxu0 0.0
        %903 = vmatprep.subr.mxu0 0.0
        %904 = vmatpush1.msra.mxu0 0.0
        %905 = vmatprep.subr.mxu0 0.0
        %906 = vmatpush1.msra.mxu0 0.0
        %907 = vmatprep.subr.mxu0 0.0
        %908 = vmatpush1.msra.mxu0 0.0
        %909 = vmatprep.subr.mxu0 0.0
        %910 = vmatpush1.msra.mxu0 0.0
        %911 = vmatprep.subr.mxu0 0.0
        %912 = vmatpush1.msra.mxu0 0.0
        %913 = vmatprep.subr.mxu0 0.0
        %914 = vmatpush1.msra.mxu0 0.0
        %915 = vmatprep.subr.mxu0 0.0
        %916 = vmatpush1.msra.mxu0 0.0
        %917 = vmatprep.subr.mxu0 0.0
        %918 = vmatpush1.msra.mxu0 0.0
        %919 = vmatprep.subr.mxu0 0.0
        %920 = vmatpush1.msra.mxu0 0.0
        %921 = vmatprep.subr.mxu0 0.0
        %922 = vmatpush1.msra.mxu0 0.0
        %923 = vmatprep.subr.mxu0 0.0
        %924 = vmatpush1.msra.mxu0 0.0
        %925 = vmatprep.subr.mxu0 0.0
        %926 = vmatpush1.msra.mxu0 0.0
        %927 = vmatprep.subr.mxu0 0.0
        %928 = vmatpush1.msra.mxu0 0.0
        %929 = vmatprep.subr.mxu0 0.0
        %930 = vmatpush1.msra.mxu0 0.0
        %931 = vmatprep.subr.mxu0 0.0
        %932 = vmatpush1.msra.mxu0 0.0
        %933 = vmatprep.subr.mxu0 0.0
        %934 = vmatpush1.msra.mxu0 0.0
        %935 = vmatprep.mubr.f32.mxu0 0.0
        %936 = vmatmul.mubr.f32.gmra.mrb[0].mxu0 %v869
        %v937 = vpop.f32.mrb[0].mxu0
        %v938 = vadd.f32 0.0, %v937
        %v939 = vpop.f32.mrb[0].mxu0
        %940 = vdwg.mxu0
        %v942 = vsel %vm777, %v938, 0
        %944 = vmatprep.subr.mxu0 0.0
        %945 = vmatpush1.msra.mxu0 %v762
        %946 = vmatprep.subr.mxu0 0.0
        %947 = vmatpush1.msra.mxu0 0.0
        %948 = vmatprep.subr.mxu0 0.0
        %949 = vmatpush1.msra.mxu0 0.0
        %950 = vmatprep.subr.mxu0 0.0
        %951 = vmatpush1.msra.mxu0 0.0
        %952 = vmatprep.subr.mxu0 0.0
        %953 = vmatpush1.msra.mxu0 0.0
        %954 = vmatprep.subr.mxu0 0.0
        %955 = vmatpush1.msra.mxu0 0.0
        %956 = vmatprep.subr.mxu0 0.0
        %957 = vmatpush1.msra.mxu0 0.0
        %958 = vmatprep.subr.mxu0 0.0
        %959 = vmatpush1.msra.mxu0 0.0
        %960 = vmatprep.subr.mxu0 0.0
        %961 = vmatpush1.msra.mxu0 0.0
        %962 = vmatprep.subr.mxu0 0.0
        %963 = vmatpush1.msra.mxu0 0.0
        %964 = vmatprep.subr.mxu0 0.0
        %965 = vmatpush1.msra.mxu0 0.0
        %966 = vmatprep.subr.mxu0 0.0
        %967 = vmatpush1.msra.mxu0 0.0
        %968 = vmatprep.subr.mxu0 0.0
        %969 = vmatpush1.msra.mxu0 0.0
        %970 = vmatprep.subr.mxu0 0.0
        %971 = vmatpush1.msra.mxu0 0.0
        %972 = vmatprep.subr.mxu0 0.0
        %973 = vmatpush1.msra.mxu0 0.0
        %974 = vmatprep.subr.mxu0 0.0
        %975 = vmatpush1.msra.mxu0 0.0
        %976 = vmatprep.subr.mxu0 0.0
        %977 = vmatpush1.msra.mxu0 0.0
        %978 = vmatprep.subr.mxu0 0.0
        %979 = vmatpush1.msra.mxu0 0.0
        %980 = vmatprep.subr.mxu0 0.0
        %981 = vmatpush1.msra.mxu0 0.0
        %982 = vmatprep.subr.mxu0 0.0
        %983 = vmatpush1.msra.mxu0 0.0
        %984 = vmatprep.subr.mxu0 0.0
        %985 = vmatpush1.msra.mxu0 0.0
        %986 = vmatprep.subr.mxu0 0.0
        %987 = vmatpush1.msra.mxu0 0.0
        %988 = vmatprep.subr.mxu0 0.0
        %989 = vmatpush1.msra.mxu0 0.0
        %990 = vmatprep.subr.mxu0 0.0
        %991 = vmatpush1.msra.mxu0 0.0
        %992 = vmatprep.subr.mxu0 0.0
        %993 = vmatpush1.msra.mxu0 0.0
        %994 = vmatprep.subr.mxu0 0.0
        %995 = vmatpush1.msra.mxu0 0.0
        %996 = vmatprep.subr.mxu0 0.0
        %997 = vmatpush1.msra.mxu0 0.0
        %998 = vmatprep.subr.mxu0 0.0
        %999 = vmatpush1.msra.mxu0 0.0
        %1000 = vmatprep.subr.mxu0 0.0
        %1001 = vmatpush1.msra.mxu0 0.0
        %1002 = vmatprep.subr.mxu0 0.0
        %1003 = vmatpush1.msra.mxu0 0.0
        %1004 = vmatprep.subr.mxu0 0.0
        %1005 = vmatpush1.msra.mxu0 0.0
        %1006 = vmatprep.subr.mxu0 0.0
        %1007 = vmatpush1.msra.mxu0 0.0
        %1008 = vmatprep.mubr.f32.mxu0 0.0
        %1009 = vmatmul.mubr.f32.gmra.mrb[0].mxu0 %v942
        %v1010 = vpop.f32.mrb[0].mxu0
        %v1011 = vadd.f32 0.0, %v1010
        %v1012 = vpop.f32.mrb[0].mxu0
        %1013 = vdwg.mxu0
        %v1014 = vadd.f32 %v773, %v1011
        %1015 = vrot.lane.b32.xlu0 %v759, 120
        %v1016 = vpop.permute.xlu0 %1015
        %1017 = vrot.lane.b32.xlu0 %v759, 88
        %v1018 = vpop.permute.xlu0 %1017
        %v1019 = vsel %vm777, %v1016, 0
        %v1021 = vsel %vm777, %v1018, 0
        %1023 = vmatprep.subr.mxu0 0.0
        %1024 = vmatpush1.xpose.msra.mxu0 %v1021
        %1025 = vmatprep.subr.mxu0 0.0
        %1026 = vmatpush1.xpose.msra.mxu0 0.0
        %1027 = vmatprep.subr.mxu0 0.0
        %1028 = vmatpush1.xpose.msra.mxu0 0.0
        %1029 = vmatprep.subr.mxu0 0.0
        %1030 = vmatpush1.xpose.msra.mxu0 0.0
        %1031 = vmatprep.subr.mxu0 0.0
        %1032 = vmatpush1.xpose.msra.mxu0 0.0
        %1033 = vmatprep.subr.mxu0 0.0
        %1034 = vmatpush1.xpose.msra.mxu0 0.0
        %1035 = vmatprep.subr.mxu0 0.0
        %1036 = vmatpush1.xpose.msra.mxu0 0.0
        %1037 = vmatprep.subr.mxu0 0.0
        %1038 = vmatpush1.xpose.msra.mxu0 0.0
        %1039 = vmatprep.subr.mxu0 0.0
        %1040 = vmatpush1.xpose.msra.mxu0 0.0
        %1041 = vmatprep.subr.mxu0 0.0
        %1042 = vmatpush1.xpose.msra.mxu0 0.0
        %1043 = vmatprep.subr.mxu0 0.0
        %1044 = vmatpush1.xpose.msra.mxu0 0.0
        %1045 = vmatprep.subr.mxu0 0.0
        %1046 = vmatpush1.xpose.msra.mxu0 0.0
        %1047 = vmatprep.subr.mxu0 0.0
        %1048 = vmatpush1.xpose.msra.mxu0 0.0
        %1049 = vmatprep.subr.mxu0 0.0
        %1050 = vmatpush1.xpose.msra.mxu0 0.0
        %1051 = vmatprep.subr.mxu0 0.0
        %1052 = vmatpush1.xpose.msra.mxu0 0.0
        %1053 = vmatprep.subr.mxu0 0.0
        %1054 = vmatpush1.xpose.msra.mxu0 0.0
        %1055 = vmatprep.subr.mxu0 0.0
        %1056 = vmatpush1.xpose.msra.mxu0 0.0
        %1057 = vmatprep.subr.mxu0 0.0
        %1058 = vmatpush1.xpose.msra.mxu0 0.0
        %1059 = vmatprep.subr.mxu0 0.0
        %1060 = vmatpush1.xpose.msra.mxu0 0.0
        %1061 = vmatprep.subr.mxu0 0.0
        %1062 = vmatpush1.xpose.msra.mxu0 0.0
        %1063 = vmatprep.subr.mxu0 0.0
        %1064 = vmatpush1.xpose.msra.mxu0 0.0
        %1065 = vmatprep.subr.mxu0 0.0
        %1066 = vmatpush1.xpose.msra.mxu0 0.0
        %1067 = vmatprep.subr.mxu0 0.0
        %1068 = vmatpush1.xpose.msra.mxu0 0.0
        %1069 = vmatprep.subr.mxu0 0.0
        %1070 = vmatpush1.xpose.msra.mxu0 0.0
        %1071 = vmatprep.subr.mxu0 0.0
        %1072 = vmatpush1.xpose.msra.mxu0 0.0
        %1073 = vmatprep.subr.mxu0 0.0
        %1074 = vmatpush1.xpose.msra.mxu0 0.0
        %1075 = vmatprep.subr.mxu0 0.0
        %1076 = vmatpush1.xpose.msra.mxu0 0.0
        %1077 = vmatprep.subr.mxu0 0.0
        %1078 = vmatpush1.xpose.msra.mxu0 0.0
        %1079 = vmatprep.subr.mxu0 0.0
        %1080 = vmatpush1.xpose.msra.mxu0 0.0
        %1081 = vmatprep.subr.mxu0 0.0
        %1082 = vmatpush1.xpose.msra.mxu0 0.0
        %1083 = vmatprep.subr.mxu0 0.0
        %1084 = vmatpush1.xpose.msra.mxu0 0.0
        %1085 = vmatprep.subr.mxu0 0.0
        %1086 = vmatpush1.xpose.msra.mxu0 0.0
        %1087 = vmatprep.mubr.f32.mxu0 0.0
        %1088 = vmatmul.mubr.f32.gmra.mrb[0].mxu0 %v1019
        %v1089 = vpop.f32.mrb[0].mxu0
        %v1090 = vadd.f32 0.0, %v1089
        %v1091 = vpop.f32.mrb[0].mxu0
        %1092 = vdwg.mxu0
        %v1093 = vmul.f32 %v1090, 0.35355338
        %v1094 = vadd.f32 %v1093, %v675
        %v1095 = vsel %vm777, %v1094, -inf
        %1096 = vmax.xlane.f32.xlu0 %v1095
        %v1097 = vpop.xlane.xlu0 %1096
        %v1098 = vsub.f32 %v1094, %v1097
        %v1099 = vmul.f32 %v1098, 1.442695
        %v1100 = vpow.pop %v1099
        %v1101 = vsel %vm777, %v1100, 0.0
        %1102 = vadd.xlane.f32.xlu0 %v1101
        %v1103 = vpop.xlane.xlu0 %1102
        %v1104 = vrcp.pop %v1103
        %v1105 = vmul.f32 %v1100, %v1104
        %1106 = vrot.lane.b32.xlu0 %v759, 56
        %v1107 = vpop.permute.xlu0 %1106
        %v1110 = vsel %vm777, %v1105, 0
        %1112 = vmatprep.subr.mxu0 0.0
        %1113 = vmatpush1.msra.mxu0 %v1107
        %1114 = vmatprep.subr.mxu0 0.0
        %1115 = vmatpush1.msra.mxu0 0.0
        %1116 = vmatprep.subr.mxu0 0.0
        %1117 = vmatpush1.msra.mxu0 0.0
        %1118 = vmatprep.subr.mxu0 0.0
        %1119 = vmatpush1.msra.mxu0 0.0
        %1120 = vmatprep.subr.mxu0 0.0
        %1121 = vmatpush1.msra.mxu0 0.0
        %1122 = vmatprep.subr.mxu0 0.0
        %1123 = vmatpush1.msra.mxu0 0.0
        %1124 = vmatprep.subr.mxu0 0.0
        %1125 = vmatpush1.msra.mxu0 0.0
        %1126 = vmatprep.subr.mxu0 0.0
        %1127 = vmatpush1.msra.mxu0 0.0
        %1128 = vmatprep.subr.mxu0 0.0
        %1129 = vmatpush1.msra.mxu0 0.0
        %1130 = vmatprep.subr.mxu0 0.0
        %1131 = vmatpush1.msra.mxu0 0.0
        %1132 = vmatprep.subr.mxu0 0.0
        %1133 = vmatpush1.msra.mxu0 0.0
        %1134 = vmatprep.subr.mxu0 0.0
        %1135 = vmatpush1.msra.mxu0 0.0
        %1136 = vmatprep.subr.mxu0 0.0
        %1137 = vmatpush1.msra.mxu0 0.0
        %1138 = vmatprep.subr.mxu0 0.0
        %1139 = vmatpush1.msra.mxu0 0.0
        %1140 = vmatprep.subr.mxu0 0.0
        %1141 = vmatpush1.msra.mxu0 0.0
        %1142 = vmatprep.subr.mxu0 0.0
        %1143 = vmatpush1.msra.mxu0 0.0
        %1144 = vmatprep.subr.mxu0 0.0
        %1145 = vmatpush1.msra.mxu0 0.0
        %1146 = vmatprep.subr.mxu0 0.0
        %1147 = vmatpush1.msra.mxu0 0.0
        %1148 = vmatprep.subr.mxu0 0.0
        %1149 = vmatpush1.msra.mxu0 0.0
        %1150 = vmatprep.subr.mxu0 0.0
        %1151 = vmatpush1.msra.mxu0 0.0
        %1152 = vmatprep.subr.mxu0 0.0
        %1153 = vmatpush1.msra.mxu0 0.0
        %1154 = vmatprep.subr.mxu0 0.0
        %1155 = vmatpush1.msra.mxu0 0.0
        %1156 = vmatprep.subr.mxu0 0.0
        %1157 = vmatpush1.msra.mxu0 0.0
        %1158 = vmatprep.subr.mxu0 0.0
        %1159 = vmatpush1.msra.mxu0 0.0
        %1160 = vmatprep.subr.mxu0 0.0
        %1161 = vmatpush1.msra.mxu0 0.0
        %1162 = vmatprep.subr.mxu0 0.0
        %1163 = vmatpush1.msra.mxu0 0.0
        %1164 = vmatprep.subr.mxu0 0.0
        %1165 = vmatpush1.msra.mxu0 0.0
        %1166 = vmatprep.subr.mxu0 0.0
        %1167 = vmatpush1.msra.mxu0 0.0
        %1168 = vmatprep.subr.mxu0 0.0
        %1169 = vmatpush1.msra.mxu0 0.0
        %1170 = vmatprep.subr.mxu0 0.0
        %1171 = vmatpush1.msra.mxu0 0.0
        %1172 = vmatprep.subr.mxu0 0.0
        %1173 = vmatpush1.msra.mxu0 0.0
        %1174 = vmatprep.subr.mxu0 0.0
        %1175 = vmatpush1.msra.mxu0 0.0
        %1176 = vmatprep.mubr.f32.mxu0 0.0
        %1177 = vmatmul.mubr.f32.gmra.mrb[0].mxu0 %v1110
        %v1178 = vpop.f32.mrb[0].mxu0
        %v1179 = vadd.f32 0.0, %v1178
        %v1180 = vpop.f32.mrb[0].mxu0
        %1181 = vdwg.mxu0
        %v1183 = vsel %vm777, %v1179, 0
        %1185 = vmatprep.subr.mxu0 0.0
        %1186 = vmatpush1.msra.mxu0 %v763
        %1187 = vmatprep.subr.mxu0 0.0
        %1188 = vmatpush1.msra.mxu0 0.0
        %1189 = vmatprep.subr.mxu0 0.0
        %1190 = vmatpush1.msra.mxu0 0.0
        %1191 = vmatprep.subr.mxu0 0.0
        %1192 = vmatpush1.msra.mxu0 0.0
        %1193 = vmatprep.subr.mxu0 0.0
        %1194 = vmatpush1.msra.mxu0 0.0
        %1195 = vmatprep.subr.mxu0 0.0
        %1196 = vmatpush1.msra.mxu0 0.0
        %1197 = vmatprep.subr.mxu0 0.0
        %1198 = vmatpush1.msra.mxu0 0.0
        %1199 = vmatprep.subr.mxu0 0.0
        %1200 = vmatpush1.msra.mxu0 0.0
        %1201 = vmatprep.subr.mxu0 0.0
        %1202 = vmatpush1.msra.mxu0 0.0
        %1203 = vmatprep.subr.mxu0 0.0
        %1204 = vmatpush1.msra.mxu0 0.0
        %1205 = vmatprep.subr.mxu0 0.0
        %1206 = vmatpush1.msra.mxu0 0.0
        %1207 = vmatprep.subr.mxu0 0.0
        %1208 = vmatpush1.msra.mxu0 0.0
        %1209 = vmatprep.subr.mxu0 0.0
        %1210 = vmatpush1.msra.mxu0 0.0
        %1211 = vmatprep.subr.mxu0 0.0
        %1212 = vmatpush1.msra.mxu0 0.0
        %1213 = vmatprep.subr.mxu0 0.0
        %1214 = vmatpush1.msra.mxu0 0.0
        %1215 = vmatprep.subr.mxu0 0.0
        %1216 = vmatpush1.msra.mxu0 0.0
        %1217 = vmatprep.subr.mxu0 0.0
        %1218 = vmatpush1.msra.mxu0 0.0
        %1219 = vmatprep.subr.mxu0 0.0
        %1220 = vmatpush1.msra.mxu0 0.0
        %1221 = vmatprep.subr.mxu0 0.0
        %1222 = vmatpush1.msra.mxu0 0.0
        %1223 = vmatprep.subr.mxu0 0.0
        %1224 = vmatpush1.msra.mxu0 0.0
        %1225 = vmatprep.subr.mxu0 0.0
        %1226 = vmatpush1.msra.mxu0 0.0
        %1227 = vmatprep.subr.mxu0 0.0
        %1228 = vmatpush1.msra.mxu0 0.0
        %1229 = vmatprep.subr.mxu0 0.0
        %1230 = vmatpush1.msra.mxu0 0.0
        %1231 = vmatprep.subr.mxu0 0.0
        %1232 = vmatpush1.msra.mxu0 0.0
        %1233 = vmatprep.subr.mxu0 0.0
        %1234 = vmatpush1.msra.mxu0 0.0
        %1235 = vmatprep.subr.mxu0 0.0
        %1236 = vmatpush1.msra.mxu0 0.0
        %1237 = vmatprep.subr.mxu0 0.0
        %1238 = vmatpush1.msra.mxu0 0.0
        %1239 = vmatprep.subr.mxu0 0.0
        %1240 = vmatpush1.msra.mxu0 0.0
        %1241 = vmatprep.subr.mxu0 0.0
        %1242 = vmatpush1.msra.mxu0 0.0
        %1243 = vmatprep.subr.mxu0 0.0
        %1244 = vmatpush1.msra.mxu0 0.0
        %1245 = vmatprep.subr.mxu0 0.0
        %1246 = vmatpush1.msra.mxu0 0.0
        %1247 = vmatprep.subr.mxu0 0.0
        %1248 = vmatpush1.msra.mxu0 0.0
        %1249 = vmatprep.mubr.f32.mxu0 0.0
        %1250 = vmatmul.mubr.f32.gmra.mrb[0].mxu0 %v1183
        %v1251 = vpop.f32.mrb[0].mxu0
        %v1252 = vadd.f32 0.0, %v1251
        %v1253 = vpop.f32.mrb[0].mxu0
        %1254 = vdwg.mxu0
        %v1255 = vadd.f32 %v1014, %v1252
        %1256 = vrot.lane.b32.xlu0 %v759, 112
        %v1257 = vpop.permute.xlu0 %1256
        %1258 = vrot.lane.b32.xlu0 %v759, 80
        %v1259 = vpop.permute.xlu0 %1258
        %v1260 = vsel %vm777, %v1257, 0
        %v1262 = vsel %vm777, %v1259, 0
        %1264 = vmatprep.subr.mxu0 0.0
        %1265 = vmatpush1.xpose.msra.mxu0 %v1262
        %1266 = vmatprep.subr.mxu0 0.0
        %1267 = vmatpush1.xpose.msra.mxu0 0.0
        %1268 = vmatprep.subr.mxu0 0.0
        %1269 = vmatpush1.xpose.msra.mxu0 0.0
        %1270 = vmatprep.subr.mxu0 0.0
        %1271 = vmatpush1.xpose.msra.mxu0 0.0
        %1272 = vmatprep.subr.mxu0 0.0
        %1273 = vmatpush1.xpose.msra.mxu0 0.0
        %1274 = vmatprep.subr.mxu0 0.0
        %1275 = vmatpush1.xpose.msra.mxu0 0.0
        %1276 = vmatprep.subr.mxu0 0.0
        %1277 = vmatpush1.xpose.msra.mxu0 0.0
        %1278 = vmatprep.subr.mxu0 0.0
        %1279 = vmatpush1.xpose.msra.mxu0 0.0
        %1280 = vmatprep.subr.mxu0 0.0
        %1281 = vmatpush1.xpose.msra.mxu0 0.0
        %1282 = vmatprep.subr.mxu0 0.0
        %1283 = vmatpush1.xpose.msra.mxu0 0.0
        %1284 = vmatprep.subr.mxu0 0.0
        %1285 = vmatpush1.xpose.msra.mxu0 0.0
        %1286 = vmatprep.subr.mxu0 0.0
        %1287 = vmatpush1.xpose.msra.mxu0 0.0
        %1288 = vmatprep.subr.mxu0 0.0
        %1289 = vmatpush1.xpose.msra.mxu0 0.0
        %1290 = vmatprep.subr.mxu0 0.0
        %1291 = vmatpush1.xpose.msra.mxu0 0.0
        %1292 = vmatprep.subr.mxu0 0.0
        %1293 = vmatpush1.xpose.msra.mxu0 0.0
        %1294 = vmatprep.subr.mxu0 0.0
        %1295 = vmatpush1.xpose.msra.mxu0 0.0
        %1296 = vmatprep.subr.mxu0 0.0
        %1297 = vmatpush1.xpose.msra.mxu0 0.0
        %1298 = vmatprep.subr.mxu0 0.0
        %1299 = vmatpush1.xpose.msra.mxu0 0.0
        %1300 = vmatprep.subr.mxu0 0.0
        %1301 = vmatpush1.xpose.msra.mxu0 0.0
        %1302 = vmatprep.subr.mxu0 0.0
        %1303 = vmatpush1.xpose.msra.mxu0 0.0
        %1304 = vmatprep.subr.mxu0 0.0
        %1305 = vmatpush1.xpose.msra.mxu0 0.0
        %1306 = vmatprep.subr.mxu0 0.0
        %1307 = vmatpush1.xpose.msra.mxu0 0.0
        %1308 = vmatprep.subr.mxu0 0.0
        %1309 = vmatpush1.xpose.msra.mxu0 0.0
        %1310 = vmatprep.subr.mxu0 0.0
        %1311 = vmatpush1.xpose.msra.mxu0 0.0
        %1312 = vmatprep.subr.mxu0 0.0
        %1313 = vmatpush1.xpose.msra.mxu0 0.0
        %1314 = vmatprep.subr.mxu0 0.0
        %1315 = vmatpush1.xpose.msra.mxu0 0.0
        %1316 = vmatprep.subr.mxu0 0.0
        %1317 = vmatpush1.xpose.msra.mxu0 0.0
        %1318 = vmatprep.subr.mxu0 0.0
        %1319 = vmatpush1.xpose.msra.mxu0 0.0
        %1320 = vmatprep.subr.mxu0 0.0
        %1321 = vmatpush1.xpose.msra.mxu0 0.0
        %1322 = vmatprep.subr.mxu0 0.0
        %1323 = vmatpush1.xpose.msra.mxu0 0.0
        %1324 = vmatprep.subr.mxu0 0.0
        %1325 = vmatpush1.xpose.msra.mxu0 0.0
        %1326 = vmatprep.subr.mxu0 0.0
        %1327 = vmatpush1.xpose.msra.mxu0 0.0
        %1328 = vmatprep.mubr.f32.mxu0 0.0
        %1329 = vmatmul.mubr.f32.gmra.mrb[0].mxu0 %v1260
        %v1330 = vpop.f32.mrb[0].mxu0
        %v1331 = vadd.f32 0.0, %v1330
        %v1332 = vpop.f32.mrb[0].mxu0
        %1333 = vdwg.mxu0
        %v1334 = vmul.f32 %v1331, 0.35355338
        %v1335 = vadd.f32 %v1334, %v675
        %v1336 = vsel %vm777, %v1335, -inf
        %1337 = vmax.xlane.f32.xlu0 %v1336
        %v1338 = vpop.xlane.xlu0 %1337
        %v1339 = vsub.f32 %v1335, %v1338
        %v1340 = vmul.f32 %v1339, 1.442695
        %v1341 = vpow.pop %v1340
        %v1342 = vsel %vm777, %v1341, 0.0
        %1343 = vadd.xlane.f32.xlu0 %v1342
        %v1344 = vpop.xlane.xlu0 %1343
        %v1345 = vrcp.pop %v1344
        %v1346 = vmul.f32 %v1341, %v1345
        %1347 = vrot.lane.b32.xlu0 %v759, 48
        %v1348 = vpop.permute.xlu0 %1347
        %v1351 = vsel %vm777, %v1346, 0
        %1353 = vmatprep.subr.mxu0 0.0
        %1354 = vmatpush1.msra.mxu0 %v1348
        %1355 = vmatprep.subr.mxu0 0.0
        %1356 = vmatpush1.msra.mxu0 0.0
        %1357 = vmatprep.subr.mxu0 0.0
        %1358 = vmatpush1.msra.mxu0 0.0
        %1359 = vmatprep.subr.mxu0 0.0
        %1360 = vmatpush1.msra.mxu0 0.0
        %1361 = vmatprep.subr.mxu0 0.0
        %1362 = vmatpush1.msra.mxu0 0.0
        %1363 = vmatprep.subr.mxu0 0.0
        %1364 = vmatpush1.msra.mxu0 0.0
        %1365 = vmatprep.subr.mxu0 0.0
        %1366 = vmatpush1.msra.mxu0 0.0
        %1367 = vmatprep.subr.mxu0 0.0
        %1368 = vmatpush1.msra.mxu0 0.0
        %1369 = vmatprep.subr.mxu0 0.0
        %1370 = vmatpush1.msra.mxu0 0.0
        %1371 = vmatprep.subr.mxu0 0.0
        %1372 = vmatpush1.msra.mxu0 0.0
        %1373 = vmatprep.subr.mxu0 0.0
        %1374 = vmatpush1.msra.mxu0 0.0
        %1375 = vmatprep.subr.mxu0 0.0
        %1376 = vmatpush1.msra.mxu0 0.0
        %1377 = vmatprep.subr.mxu0 0.0
        %1378 = vmatpush1.msra.mxu0 0.0
        %1379 = vmatprep.subr.mxu0 0.0
        %1380 = vmatpush1.msra.mxu0 0.0
        %1381 = vmatprep.subr.mxu0 0.0
        %1382 = vmatpush1.msra.mxu0 0.0
        %1383 = vmatprep.subr.mxu0 0.0
        %1384 = vmatpush1.msra.mxu0 0.0
        %1385 = vmatprep.subr.mxu0 0.0
        %1386 = vmatpush1.msra.mxu0 0.0
        %1387 = vmatprep.subr.mxu0 0.0
        %1388 = vmatpush1.msra.mxu0 0.0
        %1389 = vmatprep.subr.mxu0 0.0
        %1390 = vmatpush1.msra.mxu0 0.0
        %1391 = vmatprep.subr.mxu0 0.0
        %1392 = vmatpush1.msra.mxu0 0.0
        %1393 = vmatprep.subr.mxu0 0.0
        %1394 = vmatpush1.msra.mxu0 0.0
        %1395 = vmatprep.subr.mxu0 0.0
        %1396 = vmatpush1.msra.mxu0 0.0
        %1397 = vmatprep.subr.mxu0 0.0
        %1398 = vmatpush1.msra.mxu0 0.0
        %1399 = vmatprep.subr.mxu0 0.0
        %1400 = vmatpush1.msra.mxu0 0.0
        %1401 = vmatprep.subr.mxu0 0.0
        %1402 = vmatpush1.msra.mxu0 0.0
        %1403 = vmatprep.subr.mxu0 0.0
        %1404 = vmatpush1.msra.mxu0 0.0
        %1405 = vmatprep.subr.mxu0 0.0
        %1406 = vmatpush1.msra.mxu0 0.0
        %1407 = vmatprep.subr.mxu0 0.0
        %1408 = vmatpush1.msra.mxu0 0.0
        %1409 = vmatprep.subr.mxu0 0.0
        %1410 = vmatpush1.msra.mxu0 0.0
        %1411 = vmatprep.subr.mxu0 0.0
        %1412 = vmatpush1.msra.mxu0 0.0
        %1413 = vmatprep.subr.mxu0 0.0
        %1414 = vmatpush1.msra.mxu0 0.0
        %1415 = vmatprep.subr.mxu0 0.0
        %1416 = vmatpush1.msra.mxu0 0.0
        %1417 = vmatprep.mubr.f32.mxu0 0.0
        %1418 = vmatmul.mubr.f32.gmra.mrb[0].mxu0 %v1351
        %v1419 = vpop.f32.mrb[0].mxu0
        %v1420 = vadd.f32 0.0, %v1419
        %v1421 = vpop.f32.mrb[0].mxu0
        %1422 = vdwg.mxu0
        %v1424 = vsel %vm777, %v1420, 0
        %1426 = vmatprep.subr.mxu0 0.0
        %1427 = vmatpush1.msra.mxu0 %v764
        %1428 = vmatprep.subr.mxu0 0.0
        %1429 = vmatpush1.msra.mxu0 0.0
        %1430 = vmatprep.subr.mxu0 0.0
        %1431 = vmatpush1.msra.mxu0 0.0
        %1432 = vmatprep.subr.mxu0 0.0
        %1433 = vmatpush1.msra.mxu0 0.0
        %1434 = vmatprep.subr.mxu0 0.0
        %1435 = vmatpush1.msra.mxu0 0.0
        %1436 = vmatprep.subr.mxu0 0.0
        %1437 = vmatpush1.msra.mxu0 0.0
        %1438 = vmatprep.subr.mxu0 0.0
        %1439 = vmatpush1.msra.mxu0 0.0
        %1440 = vmatprep.subr.mxu0 0.0
        %1441 = vmatpush1.msra.mxu0 0.0
        %1442 = vmatprep.subr.mxu0 0.0
        %1443 = vmatpush1.msra.mxu0 0.0
        %1444 = vmatprep.subr.mxu0 0.0
        %1445 = vmatpush1.msra.mxu0 0.0
        %1446 = vmatprep.subr.mxu0 0.0
        %1447 = vmatpush1.msra.mxu0 0.0
        %1448 = vmatprep.subr.mxu0 0.0
        %1449 = vmatpush1.msra.mxu0 0.0
        %1450 = vmatprep.subr.mxu0 0.0
        %1451 = vmatpush1.msra.mxu0 0.0
        %1452 = vmatprep.subr.mxu0 0.0
        %1453 = vmatpush1.msra.mxu0 0.0
        %1454 = vmatprep.subr.mxu0 0.0
        %1455 = vmatpush1.msra.mxu0 0.0
        %1456 = vmatprep.subr.mxu0 0.0
        %1457 = vmatpush1.msra.mxu0 0.0
        %1458 = vmatprep.subr.mxu0 0.0
        %1459 = vmatpush1.msra.mxu0 0.0
        %1460 = vmatprep.subr.mxu0 0.0
        %1461 = vmatpush1.msra.mxu0 0.0
        %1462 = vmatprep.subr.mxu0 0.0
        %1463 = vmatpush1.msra.mxu0 0.0
        %1464 = vmatprep.subr.mxu0 0.0
        %1465 = vmatpush1.msra.mxu0 0.0
        %1466 = vmatprep.subr.mxu0 0.0
        %1467 = vmatpush1.msra.mxu0 0.0
        %1468 = vmatprep.subr.mxu0 0.0
        %1469 = vmatpush1.msra.mxu0 0.0
        %1470 = vmatprep.subr.mxu0 0.0
        %1471 = vmatpush1.msra.mxu0 0.0
        %1472 = vmatprep.subr.mxu0 0.0
        %1473 = vmatpush1.msra.mxu0 0.0
        %1474 = vmatprep.subr.mxu0 0.0
        %1475 = vmatpush1.msra.mxu0 0.0
        %1476 = vmatprep.subr.mxu0 0.0
        %1477 = vmatpush1.msra.mxu0 0.0
        %1478 = vmatprep.subr.mxu0 0.0
        %1479 = vmatpush1.msra.mxu0 0.0
        %1480 = vmatprep.subr.mxu0 0.0
        %1481 = vmatpush1.msra.mxu0 0.0
        %1482 = vmatprep.subr.mxu0 0.0
        %1483 = vmatpush1.msra.mxu0 0.0
        %1484 = vmatprep.subr.mxu0 0.0
        %1485 = vmatpush1.msra.mxu0 0.0
        %1486 = vmatprep.subr.mxu0 0.0
        %1487 = vmatpush1.msra.mxu0 0.0
        %1488 = vmatprep.subr.mxu0 0.0
        %1489 = vmatpush1.msra.mxu0 0.0
        %1490 = vmatprep.mubr.f32.mxu0 0.0
        %1491 = vmatmul.mubr.f32.gmra.mrb[0].mxu0 %v1424
        %v1492 = vpop.f32.mrb[0].mxu0
        %v1493 = vadd.f32 0.0, %v1492
        %v1494 = vpop.f32.mrb[0].mxu0
        %1495 = vdwg.mxu0
        %v1496 = vadd.f32 %v1255, %v1493
        %1497 = vrot.lane.b32.xlu0 %v759, 104
        %v1498 = vpop.permute.xlu0 %1497
        %1499 = vrot.lane.b32.xlu0 %v759, 72
        %v1500 = vpop.permute.xlu0 %1499
        %v1501 = vsel %vm777, %v1498, 0
        %v1503 = vsel %vm777, %v1500, 0
        %1505 = vmatprep.subr.mxu0 0.0
        %1506 = vmatpush1.xpose.msra.mxu0 %v1503
        %1507 = vmatprep.subr.mxu0 0.0
        %1508 = vmatpush1.xpose.msra.mxu0 0.0
        %1509 = vmatprep.subr.mxu0 0.0
        %1510 = vmatpush1.xpose.msra.mxu0 0.0
        %1511 = vmatprep.subr.mxu0 0.0
        %1512 = vmatpush1.xpose.msra.mxu0 0.0
        %1513 = vmatprep.subr.mxu0 0.0
        %1514 = vmatpush1.xpose.msra.mxu0 0.0
        %1515 = vmatprep.subr.mxu0 0.0
        %1516 = vmatpush1.xpose.msra.mxu0 0.0
        %1517 = vmatprep.subr.mxu0 0.0
        %1518 = vmatpush1.xpose.msra.mxu0 0.0
        %1519 = vmatprep.subr.mxu0 0.0
        %1520 = vmatpush1.xpose.msra.mxu0 0.0
        %1521 = vmatprep.subr.mxu0 0.0
        %1522 = vmatpush1.xpose.msra.mxu0 0.0
        %1523 = vmatprep.subr.mxu0 0.0
        %1524 = vmatpush1.xpose.msra.mxu0 0.0
        %1525 = vmatprep.subr.mxu0 0.0
        %1526 = vmatpush1.xpose.msra.mxu0 0.0
        %1527 = vmatprep.subr.mxu0 0.0
        %1528 = vmatpush1.xpose.msra.mxu0 0.0
        %1529 = vmatprep.subr.mxu0 0.0
        %1530 = vmatpush1.xpose.msra.mxu0 0.0
        %1531 = vmatprep.subr.mxu0 0.0
        %1532 = vmatpush1.xpose.msra.mxu0 0.0
        %1533 = vmatprep.subr.mxu0 0.0
        %1534 = vmatpush1.xpose.msra.mxu0 0.0
        %1535 = vmatprep.subr.mxu0 0.0
        %1536 = vmatpush1.xpose.msra.mxu0 0.0
        %1537 = vmatprep.subr.mxu0 0.0
        %1538 = vmatpush1.xpose.msra.mxu0 0.0
        %1539 = vmatprep.subr.mxu0 0.0
        %1540 = vmatpush1.xpose.msra.mxu0 0.0
        %1541 = vmatprep.subr.mxu0 0.0
        %1542 = vmatpush1.xpose.msra.mxu0 0.0
        %1543 = vmatprep.subr.mxu0 0.0
        %1544 = vmatpush1.xpose.msra.mxu0 0.0
        %1545 = vmatprep.subr.mxu0 0.0
        %1546 = vmatpush1.xpose.msra.mxu0 0.0
        %1547 = vmatprep.subr.mxu0 0.0
        %1548 = vmatpush1.xpose.msra.mxu0 0.0
        %1549 = vmatprep.subr.mxu0 0.0
        %1550 = vmatpush1.xpose.msra.mxu0 0.0
        %1551 = vmatprep.subr.mxu0 0.0
        %1552 = vmatpush1.xpose.msra.mxu0 0.0
        %1553 = vmatprep.subr.mxu0 0.0
        %1554 = vmatpush1.xpose.msra.mxu0 0.0
        %1555 = vmatprep.subr.mxu0 0.0
        %1556 = vmatpush1.xpose.msra.mxu0 0.0
        %1557 = vmatprep.subr.mxu0 0.0
        %1558 = vmatpush1.xpose.msra.mxu0 0.0
        %1559 = vmatprep.subr.mxu0 0.0
        %1560 = vmatpush1.xpose.msra.mxu0 0.0
        %1561 = vmatprep.subr.mxu0 0.0
        %1562 = vmatpush1.xpose.msra.mxu0 0.0
        %1563 = vmatprep.subr.mxu0 0.0
        %1564 = vmatpush1.xpose.msra.mxu0 0.0
        %1565 = vmatprep.subr.mxu0 0.0
        %1566 = vmatpush1.xpose.msra.mxu0 0.0
        %1567 = vmatprep.subr.mxu0 0.0
        %1568 = vmatpush1.xpose.msra.mxu0 0.0
        %1569 = vmatprep.mubr.f32.mxu0 0.0
        %1570 = vmatmul.mubr.f32.gmra.mrb[0].mxu0 %v1501
        %v1571 = vpop.f32.mrb[0].mxu0
        %v1572 = vadd.f32 0.0, %v1571
        %v1573 = vpop.f32.mrb[0].mxu0
        %1574 = vdwg.mxu0
        %v1575 = vmul.f32 %v1572, 0.35355338
        %v1576 = vadd.f32 %v1575, %v675
        %v1577 = vsel %vm777, %v1576, -inf
        %1578 = vmax.xlane.f32.xlu0 %v1577
        %v1579 = vpop.xlane.xlu0 %1578
        %v1580 = vsub.f32 %v1576, %v1579
        %v1581 = vmul.f32 %v1580, 1.442695
        %v1582 = vpow.pop %v1581
        %v1583 = vsel %vm777, %v1582, 0.0
        %1584 = vadd.xlane.f32.xlu0 %v1583
        %v1585 = vpop.xlane.xlu0 %1584
        %v1586 = vrcp.pop %v1585
        %v1587 = vmul.f32 %v1582, %v1586
        %1588 = vrot.lane.b32.xlu0 %v759, 40
        %v1589 = vpop.permute.xlu0 %1588
        %v1592 = vsel %vm777, %v1587, 0
        %1594 = vmatprep.subr.mxu0 0.0
        %1595 = vmatpush1.msra.mxu0 %v1589
        %1596 = vmatprep.subr.mxu0 0.0
        %1597 = vmatpush1.msra.mxu0 0.0
        %1598 = vmatprep.subr.mxu0 0.0
        %1599 = vmatpush1.msra.mxu0 0.0
        %1600 = vmatprep.subr.mxu0 0.0
        %1601 = vmatpush1.msra.mxu0 0.0
        %1602 = vmatprep.subr.mxu0 0.0
        %1603 = vmatpush1.msra.mxu0 0.0
        %1604 = vmatprep.subr.mxu0 0.0
        %1605 = vmatpush1.msra.mxu0 0.0
        %1606 = vmatprep.subr.mxu0 0.0
        %1607 = vmatpush1.msra.mxu0 0.0
        %1608 = vmatprep.subr.mxu0 0.0
        %1609 = vmatpush1.msra.mxu0 0.0
        %1610 = vmatprep.subr.mxu0 0.0
        %1611 = vmatpush1.msra.mxu0 0.0
        %1612 = vmatprep.subr.mxu0 0.0
        %1613 = vmatpush1.msra.mxu0 0.0
        %1614 = vmatprep.subr.mxu0 0.0
        %1615 = vmatpush1.msra.mxu0 0.0
        %1616 = vmatprep.subr.mxu0 0.0
        %1617 = vmatpush1.msra.mxu0 0.0
        %1618 = vmatprep.subr.mxu0 0.0
        %1619 = vmatpush1.msra.mxu0 0.0
        %1620 = vmatprep.subr.mxu0 0.0
        %1621 = vmatpush1.msra.mxu0 0.0
        %1622 = vmatprep.subr.mxu0 0.0
        %1623 = vmatpush1.msra.mxu0 0.0
        %1624 = vmatprep.subr.mxu0 0.0
        %1625 = vmatpush1.msra.mxu0 0.0
        %1626 = vmatprep.subr.mxu0 0.0
        %1627 = vmatpush1.msra.mxu0 0.0
        %1628 = vmatprep.subr.mxu0 0.0
        %1629 = vmatpush1.msra.mxu0 0.0
        %1630 = vmatprep.subr.mxu0 0.0
        %1631 = vmatpush1.msra.mxu0 0.0
        %1632 = vmatprep.subr.mxu0 0.0
        %1633 = vmatpush1.msra.mxu0 0.0
        %1634 = vmatprep.subr.mxu0 0.0
        %1635 = vmatpush1.msra.mxu0 0.0
        %1636 = vmatprep.subr.mxu0 0.0
        %1637 = vmatpush1.msra.mxu0 0.0
        %1638 = vmatprep.subr.mxu0 0.0
        %1639 = vmatpush1.msra.mxu0 0.0
        %1640 = vmatprep.subr.mxu0 0.0
        %1641 = vmatpush1.msra.mxu0 0.0
        %1642 = vmatprep.subr.mxu0 0.0
        %1643 = vmatpush1.msra.mxu0 0.0
        %1644 = vmatprep.subr.mxu0 0.0
        %1645 = vmatpush1.msra.mxu0 0.0
        %1646 = vmatprep.subr.mxu0 0.0
        %1647 = vmatpush1.msra.mxu0 0.0
        %1648 = vmatprep.subr.mxu0 0.0
        %1649 = vmatpush1.msra.mxu0 0.0
        %1650 = vmatprep.subr.mxu0 0.0
        %1651 = vmatpush1.msra.mxu0 0.0
        %1652 = vmatprep.subr.mxu0 0.0
        %1653 = vmatpush1.msra.mxu0 0.0
        %1654 = vmatprep.subr.mxu0 0.0
        %1655 = vmatpush1.msra.mxu0 0.0
        %1656 = vmatprep.subr.mxu0 0.0
        %1657 = vmatpush1.msra.mxu0 0.0
        %1658 = vmatprep.mubr.f32.mxu0 0.0
        %1659 = vmatmul.mubr.f32.gmra.mrb[0].mxu0 %v1592
        %v1660 = vpop.f32.mrb[0].mxu0
        %v1661 = vadd.f32 0.0, %v1660
        %v1662 = vpop.f32.mrb[0].mxu0
        %1663 = vdwg.mxu0
        %v1665 = vsel %vm777, %v1661, 0
        %1667 = vmatprep.subr.mxu0 0.0
        %1668 = vmatpush1.msra.mxu0 %v765
        %1669 = vmatprep.subr.mxu0 0.0
        %1670 = vmatpush1.msra.mxu0 0.0
        %1671 = vmatprep.subr.mxu0 0.0
        %1672 = vmatpush1.msra.mxu0 0.0
        %1673 = vmatprep.subr.mxu0 0.0
        %1674 = vmatpush1.msra.mxu0 0.0
        %1675 = vmatprep.subr.mxu0 0.0
        %1676 = vmatpush1.msra.mxu0 0.0
        %1677 = vmatprep.subr.mxu0 0.0
        %1678 = vmatpush1.msra.mxu0 0.0
        %1679 = vmatprep.subr.mxu0 0.0
        %1680 = vmatpush1.msra.mxu0 0.0
        %1681 = vmatprep.subr.mxu0 0.0
        %1682 = vmatpush1.msra.mxu0 0.0
        %1683 = vmatprep.subr.mxu0 0.0
        %1684 = vmatpush1.msra.mxu0 0.0
        %1685 = vmatprep.subr.mxu0 0.0
        %1686 = vmatpush1.msra.mxu0 0.0
        %1687 = vmatprep.subr.mxu0 0.0
        %1688 = vmatpush1.msra.mxu0 0.0
        %1689 = vmatprep.subr.mxu0 0.0
        %1690 = vmatpush1.msra.mxu0 0.0
        %1691 = vmatprep.subr.mxu0 0.0
        %1692 = vmatpush1.msra.mxu0 0.0
        %1693 = vmatprep.subr.mxu0 0.0
        %1694 = vmatpush1.msra.mxu0 0.0
        %1695 = vmatprep.subr.mxu0 0.0
        %1696 = vmatpush1.msra.mxu0 0.0
        %1697 = vmatprep.subr.mxu0 0.0
        %1698 = vmatpush1.msra.mxu0 0.0
        %1699 = vmatprep.subr.mxu0 0.0
        %1700 = vmatpush1.msra.mxu0 0.0
        %1701 = vmatprep.subr.mxu0 0.0
        %1702 = vmatpush1.msra.mxu0 0.0
        %1703 = vmatprep.subr.mxu0 0.0
        %1704 = vmatpush1.msra.mxu0 0.0
        %1705 = vmatprep.subr.mxu0 0.0
        %1706 = vmatpush1.msra.mxu0 0.0
        %1707 = vmatprep.subr.mxu0 0.0
        %1708 = vmatpush1.msra.mxu0 0.0
        %1709 = vmatprep.subr.mxu0 0.0
        %1710 = vmatpush1.msra.mxu0 0.0
        %1711 = vmatprep.subr.mxu0 0.0
        %1712 = vmatpush1.msra.mxu0 0.0
        %1713 = vmatprep.subr.mxu0 0.0
        %1714 = vmatpush1.msra.mxu0 0.0
        %1715 = vmatprep.subr.mxu0 0.0
        %1716 = vmatpush1.msra.mxu0 0.0
        %1717 = vmatprep.subr.mxu0 0.0
        %1718 = vmatpush1.msra.mxu0 0.0
        %1719 = vmatprep.subr.mxu0 0.0
        %1720 = vmatpush1.msra.mxu0 0.0
        %1721 = vmatprep.subr.mxu0 0.0
        %1722 = vmatpush1.msra.mxu0 0.0
        %1723 = vmatprep.subr.mxu0 0.0
        %1724 = vmatpush1.msra.mxu0 0.0
        %1725 = vmatprep.subr.mxu0 0.0
        %1726 = vmatpush1.msra.mxu0 0.0
        %1727 = vmatprep.subr.mxu0 0.0
        %1728 = vmatpush1.msra.mxu0 0.0
        %1729 = vmatprep.subr.mxu0 0.0
        %1730 = vmatpush1.msra.mxu0 0.0
        %1731 = vmatprep.mubr.f32.mxu0 0.0
        %1732 = vmatmul.mubr.f32.gmra.mrb[0].mxu0 %v1665
        %v1733 = vpop.f32.mrb[0].mxu0
        %v1734 = vadd.f32 0.0, %v1733
        %v1735 = vpop.f32.mrb[0].mxu0
        %1736 = vdwg.mxu0
        %v1737 = vadd.f32 %v1496, %v1734
        %v1738 = vadd.f32 %v665, %v1737
        %v1739 = vsel %vm688, %v1738, 0.0
        %1740 = vadd.xlane.f32.xlu0 %v1739
        %v1741 = vpop.xlane.xlu0 %1740
        %v1742 = vrcp.pop 32.0
        %v1743 = vmul.f32 %v1741, %v1742
        %v1744 = vsub.f32 %v1738, %v1743
        %v1745 = vmul.f32 %v1744, %v1744
        %v1746 = vsel %vm688, %v1745, 0.0
        %1747 = vadd.xlane.f32.xlu0 %v1746
        %v1748 = vpop.xlane.xlu0 %1747
        %v1749 = vmul.f32 %v1748, %v1742
        %v1750 = vadd.f32 %v1749, 1e-12
        %v1751 = vrsqrt.pop %v1750
        %v1752 = vmul.f32 %v1744, %v1751
        %v1753 = vlaneseq
        %v1754 = vshrl.u32 %v1753, 7
        %v1755 = vsub.s32 0, %v1754
        %v1756 = vrot.slane %v676, %v1755
        %v1757 = vmul.f32 %v1752, %v1756
        %v1758 = vlaneseq
        %v1759 = vshrl.u32 %v1758, 7
        %v1760 = vsub.s32 1, %v1759
        %v1761 = vrot.slane %v676, %v1760
        %v1762 = vadd.f32 %v1757, %v1761
        %v1763 = vld [vmem:[%s7] sm:$0xff]
        %v1764 = vld [vmem:[%s7 + $0x8] sm:$0xff]
        %v1765 = vld [vmem:[%s7 + $0x10] sm:$0xff]
        %v1766 = vld [vmem:[%s7 + $0x18] sm:$0xff]
        %v1767 = vld [vmem:[%s8] sm:$0x1]
        %v1769 = vlaneseq
        %v1770 = vshrl.u32 %v1769, 7
        %v1771 = vsub.s32 0, %v1770
        %v1772 = vrot.slane %v1767, %v1771
        %v1775 = vsel %vm688, %v1762, 0
        %1777 = vmatprep.subr.mxu0 0.0
        %1778 = vmatpush1.msra.mxu0 %v1763
        %1779 = vmatprep.subr.mxu0 0.0
        %1780 = vmatpush1.msra.mxu0 %v1764
        %1781 = vmatprep.subr.mxu0 0.0
        %1782 = vmatpush1.msra.mxu0 %v1765
        %1783 = vmatprep.subr.mxu0 0.0
        %1784 = vmatpush1.msra.mxu0 %v1766
        %1785 = vmatprep.subr.mxu0 0.0
        %1786 = vmatpush1.msra.mxu0 0.0
        %1787 = vmatprep.subr.mxu0 0.0
        %1788 = vmatpush1.msra.mxu0 0.0
        %1789 = vmatprep.subr.mxu0 0.0
        %1790 = vmatpush1.msra.mxu0 0.0
        %1791 = vmatprep.subr.mxu0 0.0
        %1792 = vmatpush1.msra.mxu0 0.0
        %1793 = vmatprep.subr.mxu0 0.0
        %1794 = vmatpush1.msra.mxu0 0.0
        %1795 = vmatprep.subr.mxu0 0.0
        %1796 = vmatpush1.msra.mxu0 0.0
        %1797 = vmatprep.subr.mxu0 0.0
        %1798 = vmatpush1.msra.mxu0 0.0
        %1799 = vmatprep.subr.mxu0 0.0
        %1800 = vmatpush1.msra.mxu0 0.0
        %1801 = vmatprep.subr.mxu0 0.0
        %1802 = vmatpush1.msra.mxu0 0.0
        %1803 = vmatprep.subr.mxu0 0.0
        %1804 = vmatpush1.msra.mxu0 0.0
        %1805 = vmatprep.subr.mxu0 0.0
        %1806 = vmatpush1.msra.mxu0 0.0
        %1807 = vmatprep.subr.mxu0 0.0
        %1808 = vmatpush1.msra.mxu0 0.0
        %1809 = vmatprep.subr.mxu0 0.0
        %1810 = vmatpush1.msra.mxu0 0.0
        %1811 = vmatprep.subr.mxu0 0.0
        %1812 = vmatpush1.msra.mxu0 0.0
        %1813 = vmatprep.subr.mxu0 0.0
        %1814 = vmatpush1.msra.mxu0 0.0
        %1815 = vmatprep.subr.mxu0 0.0
        %1816 = vmatpush1.msra.mxu0 0.0
        %1817 = vmatprep.subr.mxu0 0.0
        %1818 = vmatpush1.msra.mxu0 0.0
        %1819 = vmatprep.subr.mxu0 0.0
        %1820 = vmatpush1.msra.mxu0 0.0
        %1821 = vmatprep.subr.mxu0 0.0
        %1822 = vmatpush1.msra.mxu0 0.0
        %1823 = vmatprep.subr.mxu0 0.0
        %1824 = vmatpush1.msra.mxu0 0.0
        %1825 = vmatprep.subr.mxu0 0.0
        %1826 = vmatpush1.msra.mxu0 0.0
        %1827 = vmatprep.subr.mxu0 0.0
        %1828 = vmatpush1.msra.mxu0 0.0
        %1829 = vmatprep.subr.mxu0 0.0
        %1830 = vmatpush1.msra.mxu0 0.0
        %1831 = vmatprep.subr.mxu0 0.0
        %1832 = vmatpush1.msra.mxu0 0.0
        %1833 = vmatprep.subr.mxu0 0.0
        %1834 = vmatpush1.msra.mxu0 0.0
        %1835 = vmatprep.subr.mxu0 0.0
        %1836 = vmatpush1.msra.mxu0 0.0
        %1837 = vmatprep.subr.mxu0 0.0
        %1838 = vmatpush1.msra.mxu0 0.0
        %1839 = vmatprep.subr.mxu0 0.0
        %1840 = vmatpush1.msra.mxu0 0.0
        %1841 = vmatprep.mubr.f32.mxu0 0.0
        %1842 = vmatmul.mubr.f32.gmra.mrb[0].mxu0 %v1775
        %v1843 = vpop.f32.mrb[0].mxu0
        %v1844 = vadd.f32 %v1772, %v1843
        %v1845 = vpop.f32.mrb[0].mxu0
        %1846 = vdwg.mxu0
        %v1847 = vld [vmem:[%s9] sm:$0xff]
        %v1848 = vld [vmem:[%s9 + $0x8] sm:$0xff]
        %v1849 = vld [vmem:[%s9 + $0x10] sm:$0xff]
        %v1850 = vld [vmem:[%s9 + $0x18] sm:$0xff]
        %v1851 = vld [vmem:[%s10] sm:$0x1]
        %v1853 = vlaneseq
        %v1854 = vshrl.u32 %v1853, 7
        %v1855 = vsub.s32 0, %v1854
        %v1856 = vrot.slane %v1851, %v1855
        %v1859 = vsel %vm688, %v666, 0
        %v1862 = vsel %vm688, %v667, 0
        %1864 = vmatprep.subr.mxu0 0.0
        %1865 = vmatpush1.msra.mxu0 %v1847
        %1866 = vmatprep.subr.mxu0 0.0
        %1867 = vmatpush1.msra.mxu0 %v1848
        %1868 = vmatprep.subr.mxu0 0.0
        %1869 = vmatpush1.msra.mxu0 %v1849
        %1870 = vmatprep.subr.mxu0 0.0
        %1871 = vmatpush1.msra.mxu0 %v1850
        %1872 = vmatprep.subr.mxu0 0.0
        %1873 = vmatpush1.msra.mxu0 0.0
        %1874 = vmatprep.subr.mxu0 0.0
        %1875 = vmatpush1.msra.mxu0 0.0
        %1876 = vmatprep.subr.mxu0 0.0
        %1877 = vmatpush1.msra.mxu0 0.0
        %1878 = vmatprep.subr.mxu0 0.0
        %1879 = vmatpush1.msra.mxu0 0.0
        %1880 = vmatprep.subr.mxu0 0.0
        %1881 = vmatpush1.msra.mxu0 0.0
        %1882 = vmatprep.subr.mxu0 0.0
        %1883 = vmatpush1.msra.mxu0 0.0
        %1884 = vmatprep.subr.mxu0 0.0
        %1885 = vmatpush1.msra.mxu0 0.0
        %1886 = vmatprep.subr.mxu0 0.0
        %1887 = vmatpush1.msra.mxu0 0.0
        %1888 = vmatprep.subr.mxu0 0.0
        %1889 = vmatpush1.msra.mxu0 0.0
        %1890 = vmatprep.subr.mxu0 0.0
        %1891 = vmatpush1.msra.mxu0 0.0
        %1892 = vmatprep.subr.mxu0 0.0
        %1893 = vmatpush1.msra.mxu0 0.0
        %1894 = vmatprep.subr.mxu0 0.0
        %1895 = vmatpush1.msra.mxu0 0.0
        %1896 = vmatprep.subr.mxu0 0.0
        %1897 = vmatpush1.msra.mxu0 0.0
        %1898 = vmatprep.subr.mxu0 0.0
        %1899 = vmatpush1.msra.mxu0 0.0
        %1900 = vmatprep.subr.mxu0 0.0
        %1901 = vmatpush1.msra.mxu0 0.0
        %1902 = vmatprep.subr.mxu0 0.0
        %1903 = vmatpush1.msra.mxu0 0.0
        %1904 = vmatprep.subr.mxu0 0.0
        %1905 = vmatpush1.msra.mxu0 0.0
        %1906 = vmatprep.subr.mxu0 0.0
        %1907 = vmatpush1.msra.mxu0 0.0
        %1908 = vmatprep.subr.mxu0 0.0
        %1909 = vmatpush1.msra.mxu0 0.0
        %1910 = vmatprep.subr.mxu0 0.0
        %1911 = vmatpush1.msra.mxu0 0.0
        %1912 = vmatprep.subr.mxu0 0.0
        %1913 = vmatpush1.msra.mxu0 0.0
        %1914 = vmatprep.subr.mxu0 0.0
        %1915 = vmatpush1.msra.mxu0 0.0
        %1916 = vmatprep.subr.mxu0 0.0
        %1917 = vmatpush1.msra.mxu0 0.0
        %1918 = vmatprep.subr.mxu0 0.0
        %1919 = vmatpush1.msra.mxu0 0.0
        %1920 = vmatprep.subr.mxu0 0.0
        %1921 = vmatpush1.msra.mxu0 0.0
        %1922 = vmatprep.subr.mxu0 0.0
        %1923 = vmatpush1.msra.mxu0 0.0
        %1924 = vmatprep.subr.mxu0 0.0
        %1925 = vmatpush1.msra.mxu0 0.0
        %1926 = vmatprep.subr.mxu0 0.0
        %1927 = vmatpush1.msra.mxu0 0.0
        %1928 = vmatprep.mubr.f32.mxu0 0.0
        %1929 = vmatmul.mubr.f32.gmra.mrb[0].mxu0 %v1859
        %v1930 = vpop.f32.mrb[0].mxu0
        %v1931 = vadd.f32 %v1856, %v1930
        %v1932 = vpop.f32.mrb[0].mxu0
        %1933 = vmatprep.mubr.f32.mxu0 0.0
        %1934 = vmatmul.mubr.f32.gmra.mrb[0].mxu0 %v1862
        %v1935 = vpop.f32.mrb[0].mxu0
        %v1936 = vadd.f32 %v1856, %v1935
        %v1937 = vpop.f32.mrb[0].mxu0
        %1938 = vdwg.mxu0
        %v1939 = vld [vmem:[%s11] sm:$0xff]
        %v1940 = vld [vmem:[%s11 + $0x8] sm:$0xff]
        %v1941 = vld [vmem:[%s11 + $0x10] sm:$0xff]
        %v1942 = vld [vmem:[%s11 + $0x18] sm:$0xff]
        %v1943 = vld [vmem:[%s12] sm:$0x1]
        %v1945 = vlaneseq
        %v1946 = vshrl.u32 %v1945, 7
        %v1947 = vsub.s32 0, %v1946
        %v1948 = vrot.slane %v1943, %v1947
        %v1951 = vsel %vm688, %v668, 0
        %v1954 = vsel %vm688, %v669, 0
        %1956 = vmatprep.subr.mxu0 0.0
        %1957 = vmatpush1.msra.mxu0 %v1939
        %1958 = vmatprep.subr.mxu0 0.0
        %1959 = vmatpush1.msra.mxu0 %v1940
        %1960 = vmatprep.subr.mxu0 0.0
        %1961 = vmatpush1.msra.mxu0 %v1941
        %1962 = vmatprep.subr.mxu0 0.0
        %1963 = vmatpush1.msra.mxu0 %v1942
        %1964 = vmatprep.subr.mxu0 0.0
        %1965 = vmatpush1.msra.mxu0 0.0
        %1966 = vmatprep.subr.mxu0 0.0
        %1967 = vmatpush1.msra.mxu0 0.0
        %1968 = vmatprep.subr.mxu0 0.0
        %1969 = vmatpush1.msra.mxu0 0.0
        %1970 = vmatprep.subr.mxu0 0.0
        %1971 = vmatpush1.msra.mxu0 0.0
        %1972 = vmatprep.subr.mxu0 0.0
        %1973 = vmatpush1.msra.mxu0 0.0
        %1974 = vmatprep.subr.mxu0 0.0
        %1975 = vmatpush1.msra.mxu0 0.0
        %1976 = vmatprep.subr.mxu0 0.0
        %1977 = vmatpush1.msra.mxu0 0.0
        %1978 = vmatprep.subr.mxu0 0.0
        %1979 = vmatpush1.msra.mxu0 0.0
        %1980 = vmatprep.subr.mxu0 0.0
        %1981 = vmatpush1.msra.mxu0 0.0
        %1982 = vmatprep.subr.mxu0 0.0
        %1983 = vmatpush1.msra.mxu0 0.0
        %1984 = vmatprep.subr.mxu0 0.0
        %1985 = vmatpush1.msra.mxu0 0.0
        %1986 = vmatprep.subr.mxu0 0.0
        %1987 = vmatpush1.msra.mxu0 0.0
        %1988 = vmatprep.subr.mxu0 0.0
        %1989 = vmatpush1.msra.mxu0 0.0
        %1990 = vmatprep.subr.mxu0 0.0
        %1991 = vmatpush1.msra.mxu0 0.0
        %1992 = vmatprep.subr.mxu0 0.0
        %1993 = vmatpush1.msra.mxu0 0.0
        %1994 = vmatprep.subr.mxu0 0.0
        %1995 = vmatpush1.msra.mxu0 0.0
        %1996 = vmatprep.subr.mxu0 0.0
        %1997 = vmatpush1.msra.mxu0 0.0
        %1998 = vmatprep.subr.mxu0 0.0
        %1999 = vmatpush1.msra.mxu0 0.0
        %2000 = vmatprep.subr.mxu0 0.0
        %2001 = vmatpush1.msra.mxu0 0.0
        %2002 = vmatprep.subr.mxu0 0.0
        %2003 = vmatpush1.msra.mxu0 0.0
        %2004 = vmatprep.subr.mxu0 0.0
        %2005 = vmatpush1.msra.mxu0 0.0
        %2006 = vmatprep.subr.mxu0 0.0
        %2007 = vmatpush1.msra.mxu0 0.0
        %2008 = vmatprep.subr.mxu0 0.0
        %2009 = vmatpush1.msra.mxu0 0.0
        %2010 = vmatprep.subr.mxu0 0.0
        %2011 = vmatpush1.msra.mxu0 0.0
        %2012 = vmatprep.subr.mxu0 0.0
        %2013 = vmatpush1.msra.mxu0 0.0
        %2014 = vmatprep.subr.mxu0 0.0
        %2015 = vmatpush1.msra.mxu0 0.0
        %2016 = vmatprep.subr.mxu0 0.0
        %2017 = vmatpush1.msra.mxu0 0.0
        %2018 = vmatprep.subr.mxu0 0.0
        %2019 = vmatpush1.msra.mxu0 0.0
        %2020 = vmatprep.mubr.f32.mxu0 0.0
        %2021 = vmatmul.mubr.f32.gmra.mrb[0].mxu0 %v1951
        %v2022 = vpop.f32.mrb[0].mxu0
        %v2023 = vadd.f32 %v1948, %v2022
        %v2024 = vpop.f32.mrb[0].mxu0
        %2025 = vmatprep.mubr.f32.mxu0 0.0
        %2026 = vmatmul.mubr.f32.gmra.mrb[0].mxu0 %v1954
        %v2027 = vpop.f32.mrb[0].mxu0
        %v2028 = vadd.f32 %v1948, %v2027
        %v2029 = vpop.f32.mrb[0].mxu0
        %2030 = vdwg.mxu0
        %v2031 = vld [vmem:[%s13] sm:$0xff]
        %v2032 = vld [vmem:[%s13 + $0x8] sm:$0xff]
        %v2033 = vld [vmem:[%s13 + $0x10] sm:$0xff]
        %v2034 = vld [vmem:[%s13 + $0x18] sm:$0xff]
        %v2035 = vld [vmem:[%s14] sm:$0x1]
        %v2037 = vlaneseq
        %v2038 = vshrl.u32 %v2037, 7
        %v2039 = vsub.s32 0, %v2038
        %v2040 = vrot.slane %v2035, %v2039
        %v2042 = vadd.f32 %v2040, 0.0
        %v2044 = vsel %vm777, %v1844, 0
        %v2047 = vsel %vm777, %v1931, 0
        %v2050 = vsel %vm777, %v1936, 0
        %2052 = vmatprep.subr.mxu0 0.0
        %2053 = vmatpush1.xpose.msra.mxu0 %v2047
        %2054 = vmatprep.subr.mxu0 0.0
        %2055 = vmatpush1.xpose.msra.mxu0 %v2050
        %2056 = vmatprep.subr.mxu0 0.0
        %2057 = vmatpush1.xpose.msra.mxu0 0.0
        %2058 = vmatprep.subr.mxu0 0.0
        %2059 = vmatpush1.xpose.msra.mxu0 0.0
        %2060 = vmatprep.subr.mxu0 0.0
        %2061 = vmatpush1.xpose.msra.mxu0 0.0
        %2062 = vmatprep.subr.mxu0 0.0
        %2063 = vmatpush1.xpose.msra.mxu0 0.0
        %2064 = vmatprep.subr.mxu0 0.0
        %2065 = vmatpush1.xpose.msra.mxu0 0.0
        %2066 = vmatprep.subr.mxu0 0.0
        %2067 = vmatpush1.xpose.msra.mxu0 0.0
        %2068 = vmatprep.subr.mxu0 0.0
        %2069 = vmatpush1.xpose.msra.mxu0 0.0
        %2070 = vmatprep.subr.mxu0 0.0
        %2071 = vmatpush1.xpose.msra.mxu0 0.0
        %2072 = vmatprep.subr.mxu0 0.0
        %2073 = vmatpush1.xpose.msra.mxu0 0.0
        %2074 = vmatprep.subr.mxu0 0.0
        %2075 = vmatpush1.xpose.msra.mxu0 0.0
        %2076 = vmatprep.subr.mxu0 0.0
        %2077 = vmatpush1.xpose.msra.mxu0 0.0
        %2078 = vmatprep.subr.mxu0 0.0
        %2079 = vmatpush1.xpose.msra.mxu0 0.0
        %2080 = vmatprep.subr.mxu0 0.0
        %2081 = vmatpush1.xpose.msra.mxu0 0.0
        %2082 = vmatprep.subr.mxu0 0.0
        %2083 = vmatpush1.xpose.msra.mxu0 0.0
        %2084 = vmatprep.subr.mxu0 0.0
        %2085 = vmatpush1.xpose.msra.mxu0 0.0
        %2086 = vmatprep.subr.mxu0 0.0
        %2087 = vmatpush1.xpose.msra.mxu0 0.0
        %2088 = vmatprep.subr.mxu0 0.0
        %2089 = vmatpush1.xpose.msra.mxu0 0.0
        %2090 = vmatprep.subr.mxu0 0.0
        %2091 = vmatpush1.xpose.msra.mxu0 0.0
        %2092 = vmatprep.subr.mxu0 0.0
        %2093 = vmatpush1.xpose.msra.mxu0 0.0
        %2094 = vmatprep.subr.mxu0 0.0
        %2095 = vmatpush1.xpose.msra.mxu0 0.0
        %2096 = vmatprep.subr.mxu0 0.0
        %2097 = vmatpush1.xpose.msra.mxu0 0.0
        %2098 = vmatprep.subr.mxu0 0.0
        %2099 = vmatpush1.xpose.msra.mxu0 0.0
        %2100 = vmatprep.subr.mxu0 0.0
        %2101 = vmatpush1.xpose.msra.mxu0 0.0
        %2102 = vmatprep.subr.mxu0 0.0
        %2103 = vmatpush1.xpose.msra.mxu0 0.0
        %2104 = vmatprep.subr.mxu0 0.0
        %2105 = vmatpush1.xpose.msra.mxu0 0.0
        %2106 = vmatprep.subr.mxu0 0.0
        %2107 = vmatpush1.xpose.msra.mxu0 0.0
        %2108 = vmatprep.subr.mxu0 0.0
        %2109 = vmatpush1.xpose.msra.mxu0 0.0
        %2110 = vmatprep.subr.mxu0 0.0
        %2111 = vmatpush1.xpose.msra.mxu0 0.0
        %2112 = vmatprep.subr.mxu0 0.0
        %2113 = vmatpush1.xpose.msra.mxu0 0.0
        %2114 = vmatprep.subr.mxu0 0.0
        %2115 = vmatpush1.xpose.msra.mxu0 0.0
        %2116 = vmatprep.mubr.f32.mxu0 0.0
        %2117 = vmatmul.mubr.f32.gmra.mrb[0].mxu0 %v2044
        %v2118 = vpop.f32.mrb[0].mxu0
        %v2119 = vadd.f32 0.0, %v2118
        %v2120 = vpop.f32.mrb[0].mxu0
        %2121 = vdwg.mxu0
        %v2122 = vmul.f32 %v2119, 0.35355338
        %vm2123 = vcmask 130048
        %v2124 = vsel %vm2123, %v2122, -inf
        %2125 = vmax.xlane.f32.xlu0 %v2124
        %v2126 = vpop.xlane.xlu0 %2125
        %v2127 = vsub.f32 %v2122, %v2126
        %v2128 = vmul.f32 %v2127, 1.442695
        %v2129 = vpow.pop %v2128
        %v2130 = vsel %vm2123, %v2129, 0.0
        %2131 = vadd.xlane.f32.xlu0 %v2130
        %v2132 = vpop.xlane.xlu0 %2131
        %v2133 = vrcp.pop %v2132
        %v2134 = vmul.f32 %v2129, %v2133
        %v2136 = vsel %vm2123, %v2134, 0
        %2138 = vmatprep.subr.mxu0 0.0
        %2139 = vmatpush1.msra.mxu0 %v2023
        %2140 = vmatprep.subr.mxu0 0.0
        %2141 = vmatpush1.msra.mxu0 %v2028
        %2142 = vmatprep.subr.mxu0 0.0
        %2143 = vmatpush1.msra.mxu0 0.0
        %2144 = vmatprep.subr.mxu0 0.0
        %2145 = vmatpush1.msra.mxu0 0.0
        %2146 = vmatprep.subr.mxu0 0.0
        %2147 = vmatpush1.msra.mxu0 0.0
        %2148 = vmatprep.subr.mxu0 0.0
        %2149 = vmatpush1.msra.mxu0 0.0
        %2150 = vmatprep.subr.mxu0 0.0
        %2151 = vmatpush1.msra.mxu0 0.0
        %2152 = vmatprep.subr.mxu0 0.0
        %2153 = vmatpush1.msra.mxu0 0.0
        %2154 = vmatprep.subr.mxu0 0.0
        %2155 = vmatpush1.msra.mxu0 0.0
        %2156 = vmatprep.subr.mxu0 0.0
        %2157 = vmatpush1.msra.mxu0 0.0
        %2158 = vmatprep.subr.mxu0 0.0
        %2159 = vmatpush1.msra.mxu0 0.0
        %2160 = vmatprep.subr.mxu0 0.0
        %2161 = vmatpush1.msra.mxu0 0.0
        %2162 = vmatprep.subr.mxu0 0.0
        %2163 = vmatpush1.msra.mxu0 0.0
        %2164 = vmatprep.subr.mxu0 0.0
        %2165 = vmatpush1.msra.mxu0 0.0
        %2166 = vmatprep.subr.mxu0 0.0
        %2167 = vmatpush1.msra.mxu0 0.0
        %2168 = vmatprep.subr.mxu0 0.0
        %2169 = vmatpush1.msra.mxu0 0.0
        %2170 = vmatprep.subr.mxu0 0.0
        %2171 = vmatpush1.msra.mxu0 0.0
        %2172 = vmatprep.subr.mxu0 0.0
        %2173 = vmatpush1.msra.mxu0 0.0
        %2174 = vmatprep.subr.mxu0 0.0
        %2175 = vmatpush1.msra.mxu0 0.0
        %2176 = vmatprep.subr.mxu0 0.0
        %2177 = vmatpush1.msra.mxu0 0.0
        %2178 = vmatprep.subr.mxu0 0.0
        %2179 = vmatpush1.msra.mxu0 0.0
        %2180 = vmatprep.subr.mxu0 0.0
        %2181 = vmatpush1.msra.mxu0 0.0
        %2182 = vmatprep.subr.mxu0 0.0
        %2183 = vmatpush1.msra.mxu0 0.0
        %2184 = vmatprep.subr.mxu0 0.0
        %2185 = vmatpush1.msra.mxu0 0.0
        %2186 = vmatprep.subr.mxu0 0.0
        %2187 = vmatpush1.msra.mxu0 0.0
        %2188 = vmatprep.subr.mxu0 0.0
        %2189 = vmatpush1.msra.mxu0 0.0
        %2190 = vmatprep.subr.mxu0 0.0
        %2191 = vmatpush1.msra.mxu0 0.0
        %2192 = vmatprep.subr.mxu0 0.0
        %2193 = vmatpush1.msra.mxu0 0.0
        %2194 = vmatprep.subr.mxu0 0.0
        %2195 = vmatpush1.msra.mxu0 0.0
        %2196 = vmatprep.subr.mxu0 0.0
        %2197 = vmatpush1.msra.mxu0 0.0
        %2198 = vmatprep.subr.mxu0 0.0
        %2199 = vmatpush1.msra.mxu0 0.0
        %2200 = vmatprep.subr.mxu0 0.0
        %2201 = vmatpush1.msra.mxu0 0.0
        %2202 = vmatprep.mubr.f32.mxu0 0.0
        %2203 = vmatmul.mubr.f32.gmra.mrb[0].mxu0 %v2136
        %v2204 = vpop.f32.mrb[0].mxu0
        %v2205 = vadd.f32 0.0, %v2204
        %v2206 = vpop.f32.mrb[0].mxu0
        %2207 = vdwg.mxu0
        %v2209 = vsel %vm777, %v2205, 0
        %2211 = vmatprep.subr.mxu0 0.0
        %2212 = vmatpush1.msra.mxu0 %v2031
        %2213 = vmatprep.subr.mxu0 0.0
        %2214 = vmatpush1.msra.mxu0 0.0
        %2215 = vmatprep.subr.mxu0 0.0
        %2216 = vmatpush1.msra.mxu0 0.0
        %2217 = vmatprep.subr.mxu0 0.0
        %2218 = vmatpush1.msra.mxu0 0.0
        %2219 = vmatprep.subr.mxu0 0.0
        %2220 = vmatpush1.msra.mxu0 0.0
        %2221 = vmatprep.subr.mxu0 0.0
        %2222 = vmatpush1.msra.mxu0 0.0
        %2223 = vmatprep.subr.mxu0 0.0
        %2224 = vmatpush1.msra.mxu0 0.0
        %2225 = vmatprep.subr.mxu0 0.0
        %2226 = vmatpush1.msra.mxu0 0.0
        %2227 = vmatprep.subr.mxu0 0.0
        %2228 = vmatpush1.msra.mxu0 0.0
        %2229 = vmatprep.subr.mxu0 0.0
        %2230 = vmatpush1.msra.mxu0 0.0
        %2231 = vmatprep.subr.mxu0 0.0
        %2232 = vmatpush1.msra.mxu0 0.0
        %2233 = vmatprep.subr.mxu0 0.0
        %2234 = vmatpush1.msra.mxu0 0.0
        %2235 = vmatprep.subr.mxu0 0.0
        %2236 = vmatpush1.msra.mxu0 0.0
        %2237 = vmatprep.subr.mxu0 0.0
        %2238 = vmatpush1.msra.mxu0 0.0
        %2239 = vmatprep.subr.mxu0 0.0
        %2240 = vmatpush1.msra.mxu0 0.0
        %2241 = vmatprep.subr.mxu0 0.0
        %2242 = vmatpush1.msra.mxu0 0.0
        %2243 = vmatprep.subr.mxu0 0.0
        %2244 = vmatpush1.msra.mxu0 0.0
        %2245 = vmatprep.subr.mxu0 0.0
        %2246 = vmatpush1.msra.mxu0 0.0
        %2247 = vmatprep.subr.mxu0 0.0
        %2248 = vmatpush1.msra.mxu0 0.0
        %2249 = vmatprep.subr.mxu0 0.0
        %2250 = vmatpush1.msra.mxu0 0.0
        %2251 = vmatprep.subr.mxu0 0.0
        %2252 = vmatpush1.msra.mxu0 0.0
        %2253 = vmatprep.subr.mxu0 0.0
        %2254 = vmatpush1.msra.mxu0 0.0
        %2255 = vmatprep.subr.mxu0 0.0
        %2256 = vmatpush1.msra.mxu0 0.0
        %2257 = vmatprep.subr.mxu0 0.0
        %2258 = vmatpush1.msra.mxu0 0.0
        %2259 = vmatprep.subr.mxu0 0.0
        %2260 = vmatpush1.msra.mxu0 0.0
        %2261 = vmatprep.subr.mxu0 0.0
        %2262 = vmatpush1.msra.mxu0 0.0
        %2263 = vmatprep.subr.mxu0 0.0
        %2264 = vmatpush1.msra.mxu0 0.0
        %2265 = vmatprep.subr.mxu0 0.0
        %2266 = vmatpush1.msra.mxu0 0.0
        %2267 = vmatprep.subr.mxu0 0.0
        %2268 = vmatpush1.msra.mxu0 0.0
        %2269 = vmatprep.subr.mxu0 0.0
        %2270 = vmatpush1.msra.mxu0 0.0
        %2271 = vmatprep.subr.mxu0 0.0
        %2272 = vmatpush1.msra.mxu0 0.0
        %2273 = vmatprep.subr.mxu0 0.0
        %2274 = vmatpush1.msra.mxu0 0.0
        %2275 = vmatprep.mubr.f32.mxu0 0.0
        %2276 = vmatmul.mubr.f32.gmra.mrb[0].mxu0 %v2209
        %v2277 = vpop.f32.mrb[0].mxu0
        %v2278 = vadd.f32 0.0, %v2277
        %v2279 = vpop.f32.mrb[0].mxu0
        %2280 = vdwg.mxu0
        %v2281 = vadd.f32 %v2042, %v2278
        %2282 = vrot.lane.b32.xlu0 %v1844, 120
        %v2283 = vpop.permute.xlu0 %2282
        %2284 = vrot.lane.b32.xlu0 %v1931, 120
        %v2285 = vpop.permute.xlu0 %2284
        %2286 = vrot.lane.b32.xlu0 %v1936, 120
        %v2287 = vpop.permute.xlu0 %2286
        %v2288 = vsel %vm777, %v2283, 0
        %v2290 = vsel %vm777, %v2285, 0
        %v2292 = vsel %vm777, %v2287, 0
        %2294 = vmatprep.subr.mxu0 0.0
        %2295 = vmatpush1.xpose.msra.mxu0 %v2290
        %2296 = vmatprep.subr.mxu0 0.0
        %2297 = vmatpush1.xpose.msra.mxu0 %v2292
        %2298 = vmatprep.subr.mxu0 0.0
        %2299 = vmatpush1.xpose.msra.mxu0 0.0
        %2300 = vmatprep.subr.mxu0 0.0
        %2301 = vmatpush1.xpose.msra.mxu0 0.0
        %2302 = vmatprep.subr.mxu0 0.0
        %2303 = vmatpush1.xpose.msra.mxu0 0.0
        %2304 = vmatprep.subr.mxu0 0.0
        %2305 = vmatpush1.xpose.msra.mxu0 0.0
        %2306 = vmatprep.subr.mxu0 0.0
        %2307 = vmatpush1.xpose.msra.mxu0 0.0
        %2308 = vmatprep.subr.mxu0 0.0
        %2309 = vmatpush1.xpose.msra.mxu0 0.0
        %2310 = vmatprep.subr.mxu0 0.0
        %2311 = vmatpush1.xpose.msra.mxu0 0.0
        %2312 = vmatprep.subr.mxu0 0.0
        %2313 = vmatpush1.xpose.msra.mxu0 0.0
        %2314 = vmatprep.subr.mxu0 0.0
        %2315 = vmatpush1.xpose.msra.mxu0 0.0
        %2316 = vmatprep.subr.mxu0 0.0
        %2317 = vmatpush1.xpose.msra.mxu0 0.0
        %2318 = vmatprep.subr.mxu0 0.0
        %2319 = vmatpush1.xpose.msra.mxu0 0.0
        %2320 = vmatprep.subr.mxu0 0.0
        %2321 = vmatpush1.xpose.msra.mxu0 0.0
        %2322 = vmatprep.subr.mxu0 0.0
        %2323 = vmatpush1.xpose.msra.mxu0 0.0
        %2324 = vmatprep.subr.mxu0 0.0
        %2325 = vmatpush1.xpose.msra.mxu0 0.0
        %2326 = vmatprep.subr.mxu0 0.0
        %2327 = vmatpush1.xpose.msra.mxu0 0.0
        %2328 = vmatprep.subr.mxu0 0.0
        %2329 = vmatpush1.xpose.msra.mxu0 0.0
        %2330 = vmatprep.subr.mxu0 0.0
        %2331 = vmatpush1.xpose.msra.mxu0 0.0
        %2332 = vmatprep.subr.mxu0 0.0
        %2333 = vmatpush1.xpose.msra.mxu0 0.0
        %2334 = vmatprep.subr.mxu0 0.0
        %2335 = vmatpush1.xpose.msra.mxu0 0.0
        %2336 = vmatprep.subr.mxu0 0.0
        %2337 = vmatpush1.xpose.msra.mxu0 0.0
        %2338 = vmatprep.subr.mxu0 0.0
        %2339 = vmatpush1.xpose.msra.mxu0 0.0
        %2340 = vmatprep.subr.mxu0 0.0
        %2341 = vmatpush1.xpose.msra.mxu0 0.0
        %2342 = vmatprep.subr.mxu0 0.0
        %2343 = vmatpush1.xpose.msra.mxu0 0.0
        %2344 = vmatprep.subr.mxu0 0.0
        %2345 = vmatpush1.xpose.msra.mxu0 0.0
        %2346 = vmatprep.subr.mxu0 0.0
        %2347 = vmatpush1.xpose.msra.mxu0 0.0
        %2348 = vmatprep.subr.mxu0 0.0
        %2349 = vmatpush1.xpose.msra.mxu0 0.0
        %2350 = vmatprep.subr.mxu0 0.0
        %2351 = vmatpush1.xpose.msra.mxu0 0.0
        %2352 = vmatprep.subr.mxu0 0.0
        %2353 = vmatpush1.xpose.msra.mxu0 0.0
        %2354 = vmatprep.subr.mxu0 0.0
        %2355 = vmatpush1.xpose.msra.mxu0 0.0
        %2356 = vmatprep.subr.mxu0 0.0
        %2357 = vmatpush1.xpose.msra.mxu0 0.0
        %2358 = vmatprep.mubr.f32.mxu0 0.0
        %2359 = vmatmul.mubr.f32.gmra.mrb[0].mxu0 %v2288
        %v2360 = vpop.f32.mrb[0].mxu0
        %v2361 = vadd.f32 0.0, %v2360
        %v2362 = vpop.f32.mrb[0].mxu0
        %2363 = vdwg.mxu0
        %v2364 = vmul.f32 %v2361, 0.35355338
        %v2365 = vsel %vm2123, %v2364, -inf
        %2366 = vmax.xlane.f32.xlu0 %v2365
        %v2367 = vpop.xlane.xlu0 %2366
        %v2368 = vsub.f32 %v2364, %v2367
        %v2369 = vmul.f32 %v2368, 1.442695
        %v2370 = vpow.pop %v2369
        %v2371 = vsel %vm2123, %v2370, 0.0
        %2372 = vadd.xlane.f32.xlu0 %v2371
        %v2373 = vpop.xlane.xlu0 %2372
        %v2374 = vrcp.pop %v2373
        %v2375 = vmul.f32 %v2370, %v2374
        %2378 = vrot.lane.b32.xlu0 %v2023, 120
        %v2379 = vpop.permute.xlu0 %2378
        %2380 = vrot.lane.b32.xlu0 %v2028, 120
        %v2381 = vpop.permute.xlu0 %2380
        %v2385 = vsel %vm2123, %v2375, 0
        %2387 = vmatprep.subr.mxu0 0.0
        %2388 = vmatpush1.msra.mxu0 %v2379
        %2389 = vmatprep.subr.mxu0 0.0
        %2390 = vmatpush1.msra.mxu0 %v2381
        %2391 = vmatprep.subr.mxu0 0.0
        %2392 = vmatpush1.msra.mxu0 0.0
        %2393 = vmatprep.subr.mxu0 0.0
        %2394 = vmatpush1.msra.mxu0 0.0
        %2395 = vmatprep.subr.mxu0 0.0
        %2396 = vmatpush1.msra.mxu0 0.0
        %2397 = vmatprep.subr.mxu0 0.0
        %2398 = vmatpush1.msra.mxu0 0.0
        %2399 = vmatprep.subr.mxu0 0.0
        %2400 = vmatpush1.msra.mxu0 0.0
        %2401 = vmatprep.subr.mxu0 0.0
        %2402 = vmatpush1.msra.mxu0 0.0
        %2403 = vmatprep.subr.mxu0 0.0
        %2404 = vmatpush1.msra.mxu0 0.0
        %2405 = vmatprep.subr.mxu0 0.0
        %2406 = vmatpush1.msra.mxu0 0.0
        %2407 = vmatprep.subr.mxu0 0.0
        %2408 = vmatpush1.msra.mxu0 0.0
        %2409 = vmatprep.subr.mxu0 0.0
        %2410 = vmatpush1.msra.mxu0 0.0
        %2411 = vmatprep.subr.mxu0 0.0
        %2412 = vmatpush1.msra.mxu0 0.0
        %2413 = vmatprep.subr.mxu0 0.0
        %2414 = vmatpush1.msra.mxu0 0.0
        %2415 = vmatprep.subr.mxu0 0.0
        %2416 = vmatpush1.msra.mxu0 0.0
        %2417 = vmatprep.subr.mxu0 0.0
        %2418 = vmatpush1.msra.mxu0 0.0
        %2419 = vmatprep.subr.mxu0 0.0
        %2420 = vmatpush1.msra.mxu0 0.0
        %2421 = vmatprep.subr.mxu0 0.0
        %2422 = vmatpush1.msra.mxu0 0.0
        %2423 = vmatprep.subr.mxu0 0.0
        %2424 = vmatpush1.msra.mxu0 0.0
        %2425 = vmatprep.subr.mxu0 0.0
        %2426 = vmatpush1.msra.mxu0 0.0
        %2427 = vmatprep.subr.mxu0 0.0
        %2428 = vmatpush1.msra.mxu0 0.0
        %2429 = vmatprep.subr.mxu0 0.0
        %2430 = vmatpush1.msra.mxu0 0.0
        %2431 = vmatprep.subr.mxu0 0.0
        %2432 = vmatpush1.msra.mxu0 0.0
        %2433 = vmatprep.subr.mxu0 0.0
        %2434 = vmatpush1.msra.mxu0 0.0
        %2435 = vmatprep.subr.mxu0 0.0
        %2436 = vmatpush1.msra.mxu0 0.0
        %2437 = vmatprep.subr.mxu0 0.0
        %2438 = vmatpush1.msra.mxu0 0.0
        %2439 = vmatprep.subr.mxu0 0.0
        %2440 = vmatpush1.msra.mxu0 0.0
        %2441 = vmatprep.subr.mxu0 0.0
        %2442 = vmatpush1.msra.mxu0 0.0
        %2443 = vmatprep.subr.mxu0 0.0
        %2444 = vmatpush1.msra.mxu0 0.0
        %2445 = vmatprep.subr.mxu0 0.0
        %2446 = vmatpush1.msra.mxu0 0.0
        %2447 = vmatprep.subr.mxu0 0.0
        %2448 = vmatpush1.msra.mxu0 0.0
        %2449 = vmatprep.subr.mxu0 0.0
        %2450 = vmatpush1.msra.mxu0 0.0
        %2451 = vmatprep.mubr.f32.mxu0 0.0
        %2452 = vmatmul.mubr.f32.gmra.mrb[0].mxu0 %v2385
        %v2453 = vpop.f32.mrb[0].mxu0
        %v2454 = vadd.f32 0.0, %v2453
        %v2455 = vpop.f32.mrb[0].mxu0
        %2456 = vdwg.mxu0
        %v2458 = vsel %vm777, %v2454, 0
        %2460 = vmatprep.subr.mxu0 0.0
        %2461 = vmatpush1.msra.mxu0 %v2032
        %2462 = vmatprep.subr.mxu0 0.0
        %2463 = vmatpush1.msra.mxu0 0.0
        %2464 = vmatprep.subr.mxu0 0.0
        %2465 = vmatpush1.msra.mxu0 0.0
        %2466 = vmatprep.subr.mxu0 0.0
        %2467 = vmatpush1.msra.mxu0 0.0
        %2468 = vmatprep.subr.mxu0 0.0
        %2469 = vmatpush1.msra.mxu0 0.0
        %2470 = vmatprep.subr.mxu0 0.0
        %2471 = vmatpush1.msra.mxu0 0.0
        %2472 = vmatprep.subr.mxu0 0.0
        %2473 = vmatpush1.msra.mxu0 0.0
        %2474 = vmatprep.subr.mxu0 0.0
        %2475 = vmatpush1.msra.mxu0 0.0
        %2476 = vmatprep.subr.mxu0 0.0
        %2477 = vmatpush1.msra.mxu0 0.0
        %2478 = vmatprep.subr.mxu0 0.0
        %2479 = vmatpush1.msra.mxu0 0.0
        %2480 = vmatprep.subr.mxu0 0.0
        %2481 = vmatpush1.msra.mxu0 0.0
        %2482 = vmatprep.subr.mxu0 0.0
        %2483 = vmatpush1.msra.mxu0 0.0
        %2484 = vmatprep.subr.mxu0 0.0
        %2485 = vmatpush1.msra.mxu0 0.0
        %2486 = vmatprep.subr.mxu0 0.0
        %2487 = vmatpush1.msra.mxu0 0.0
        %2488 = vmatprep.subr.mxu0 0.0
        %2489 = vmatpush1.msra.mxu0 0.0
        %2490 = vmatprep.subr.mxu0 0.0
        %2491 = vmatpush1.msra.mxu0 0.0
        %2492 = vmatprep.subr.mxu0 0.0
        %2493 = vmatpush1.msra.mxu0 0.0
        %2494 = vmatprep.subr.mxu0 0.0
        %2495 = vmatpush1.msra.mxu0 0.0
        %2496 = vmatprep.subr.mxu0 0.0
        %2497 = vmatpush1.msra.mxu0 0.0
        %2498 = vmatprep.subr.mxu0 0.0
        %2499 = vmatpush1.msra.mxu0 0.0
        %2500 = vmatprep.subr.mxu0 0.0
        %2501 = vmatpush1.msra.mxu0 0.0
        %2502 = vmatprep.subr.mxu0 0.0
        %2503 = vmatpush1.msra.mxu0 0.0
        %2504 = vmatprep.subr.mxu0 0.0
        %2505 = vmatpush1.msra.mxu0 0.0
        %2506 = vmatprep.subr.mxu0 0.0
        %2507 = vmatpush1.msra.mxu0 0.0
        %2508 = vmatprep.subr.mxu0 0.0
        %2509 = vmatpush1.msra.mxu0 0.0
        %2510 = vmatprep.subr.mxu0 0.0
        %2511 = vmatpush1.msra.mxu0 0.0
        %2512 = vmatprep.subr.mxu0 0.0
        %2513 = vmatpush1.msra.mxu0 0.0
        %2514 = vmatprep.subr.mxu0 0.0
        %2515 = vmatpush1.msra.mxu0 0.0
        %2516 = vmatprep.subr.mxu0 0.0
        %2517 = vmatpush1.msra.mxu0 0.0
        %2518 = vmatprep.subr.mxu0 0.0
        %2519 = vmatpush1.msra.mxu0 0.0
        %2520 = vmatprep.subr.mxu0 0.0
        %2521 = vmatpush1.msra.mxu0 0.0
        %2522 = vmatprep.subr.mxu0 0.0
        %2523 = vmatpush1.msra.mxu0 0.0
        %2524 = vmatprep.mubr.f32.mxu0 0.0
        %2525 = vmatmul.mubr.f32.gmra.mrb[0].mxu0 %v2458
        %v2526 = vpop.f32.mrb[0].mxu0
        %v2527 = vadd.f32 0.0, %v2526
        %v2528 = vpop.f32.mrb[0].mxu0
        %2529 = vdwg.mxu0
        %v2530 = vadd.f32 %v2281, %v2527
        %2531 = vrot.lane.b32.xlu0 %v1844, 112
        %v2532 = vpop.permute.xlu0 %2531
        %2533 = vrot.lane.b32.xlu0 %v1931, 112
        %v2534 = vpop.permute.xlu0 %2533
        %2535 = vrot.lane.b32.xlu0 %v1936, 112
        %v2536 = vpop.permute.xlu0 %2535
        %v2537 = vsel %vm777, %v2532, 0
        %v2539 = vsel %vm777, %v2534, 0
        %v2541 = vsel %vm777, %v2536, 0
        %2543 = vmatprep.subr.mxu0 0.0
        %2544 = vmatpush1.xpose.msra.mxu0 %v2539
        %2545 = vmatprep.subr.mxu0 0.0
        %2546 = vmatpush1.xpose.msra.mxu0 %v2541
        %2547 = vmatprep.subr.mxu0 0.0
        %2548 = vmatpush1.xpose.msra.mxu0 0.0
        %2549 = vmatprep.subr.mxu0 0.0
        %2550 = vmatpush1.xpose.msra.mxu0 0.0
        %2551 = vmatprep.subr.mxu0 0.0
        %2552 = vmatpush1.xpose.msra.mxu0 0.0
        %2553 = vmatprep.subr.mxu0 0.0
        %2554 = vmatpush1.xpose.msra.mxu0 0.0
        %2555 = vmatprep.subr.mxu0 0.0
        %2556 = vmatpush1.xpose.msra.mxu0 0.0
        %2557 = vmatprep.subr.mxu0 0.0
        %2558 = vmatpush1.xpose.msra.mxu0 0.0
        %2559 = vmatprep.subr.mxu0 0.0
        %2560 = vmatpush1.xpose.msra.mxu0 0.0
        %2561 = vmatprep.subr.mxu0 0.0
        %2562 = vmatpush1.xpose.msra.mxu0 0.0
        %2563 = vmatprep.subr.mxu0 0.0
        %2564 = vmatpush1.xpose.msra.mxu0 0.0
        %2565 = vmatprep.subr.mxu0 0.0
        %2566 = vmatpush1.xpose.msra.mxu0 0.0
        %2567 = vmatprep.subr.mxu0 0.0
        %2568 = vmatpush1.xpose.msra.mxu0 0.0
        %2569 = vmatprep.subr.mxu0 0.0
        %2570 = vmatpush1.xpose.msra.mxu0 0.0
        %2571 = vmatprep.subr.mxu0 0.0
        %2572 = vmatpush1.xpose.msra.mxu0 0.0
        %2573 = vmatprep.subr.mxu0 0.0
        %2574 = vmatpush1.xpose.msra.mxu0 0.0
        %2575 = vmatprep.subr.mxu0 0.0
        %2576 = vmatpush1.xpose.msra.mxu0 0.0
        %2577 = vmatprep.subr.mxu0 0.0
        %2578 = vmatpush1.xpose.msra.mxu0 0.0
        %2579 = vmatprep.subr.mxu0 0.0
        %2580 = vmatpush1.xpose.msra.mxu0 0.0
        %2581 = vmatprep.subr.mxu0 0.0
        %2582 = vmatpush1.xpose.msra.mxu0 0.0
        %2583 = vmatprep.subr.mxu0 0.0
        %2584 = vmatpush1.xpose.msra.mxu0 0.0
        %2585 = vmatprep.subr.mxu0 0.0
        %2586 = vmatpush1.xpose.msra.mxu0 0.0
        %2587 = vmatprep.subr.mxu0 0.0
        %2588 = vmatpush1.xpose.msra.mxu0 0.0
        %2589 = vmatprep.subr.mxu0 0.0
        %2590 = vmatpush1.xpose.msra.mxu0 0.0
        %2591 = vmatprep.subr.mxu0 0.0
        %2592 = vmatpush1.xpose.msra.mxu0 0.0
        %2593 = vmatprep.subr.mxu0 0.0
        %2594 = vmatpush1.xpose.msra.mxu0 0.0
        %2595 = vmatprep.subr.mxu0 0.0
        %2596 = vmatpush1.xpose.msra.mxu0 0.0
        %2597 = vmatprep.subr.mxu0 0.0
        %2598 = vmatpush1.xpose.msra.mxu0 0.0
        %2599 = vmatprep.subr.mxu0 0.0
        %2600 = vmatpush1.xpose.msra.mxu0 0.0
        %2601 = vmatprep.subr.mxu0 0.0
        %2602 = vmatpush1.xpose.msra.mxu0 0.0
        %2603 = vmatprep.subr.mxu0 0.0
        %2604 = vmatpush1.xpose.msra.mxu0 0.0
        %2605 = vmatprep.subr.mxu0 0.0
        %2606 = vmatpush1.xpose.msra.mxu0 0.0
        %2607 = vmatprep.mubr.f32.mxu0 0.0
        %2608 = vmatmul.mubr.f32.gmra.mrb[0].mxu0 %v2537
        %v2609 = vpop.f32.mrb[0].mxu0
        %v2610 = vadd.f32 0.0, %v2609
        %v2611 = vpop.f32.mrb[0].mxu0
        %2612 = vdwg.mxu0
        %v2613 = vmul.f32 %v2610, 0.35355338
        %v2614 = vsel %vm2123, %v2613, -inf
        %2615 = vmax.xlane.f32.xlu0 %v2614
        %v2616 = vpop.xlane.xlu0 %2615
        %v2617 = vsub.f32 %v2613, %v2616
        %v2618 = vmul.f32 %v2617, 1.442695
        %v2619 = vpow.pop %v2618
        %v2620 = vsel %vm2123, %v2619, 0.0
        %2621 = vadd.xlane.f32.xlu0 %v2620
        %v2622 = vpop.xlane.xlu0 %2621
        %v2623 = vrcp.pop %v2622
        %v2624 = vmul.f32 %v2619, %v2623
        %2625 = vrot.lane.b32.xlu0 %v2023, 112
        %v2626 = vpop.permute.xlu0 %2625
        %2627 = vrot.lane.b32.xlu0 %v2028, 112
        %v2628 = vpop.permute.xlu0 %2627
        %v2632 = vsel %vm2123, %v2624, 0
        %2634 = vmatprep.subr.mxu0 0.0
        %2635 = vmatpush1.msra.mxu0 %v2626
        %2636 = vmatprep.subr.mxu0 0.0
        %2637 = vmatpush1.msra.mxu0 %v2628
        %2638 = vmatprep.subr.mxu0 0.0
        %2639 = vmatpush1.msra.mxu0 0.0
        %2640 = vmatprep.subr.mxu0 0.0
        %2641 = vmatpush1.msra.mxu0 0.0
        %2642 = vmatprep.subr.mxu0 0.0
        %2643 = vmatpush1.msra.mxu0 0.0
        %2644 = vmatprep.subr.mxu0 0.0
        %2645 = vmatpush1.msra.mxu0 0.0
        %2646 = vmatprep.subr.mxu0 0.0
        %2647 = vmatpush1.msra.mxu0 0.0
        %2648 = vmatprep.subr.mxu0 0.0
        %2649 = vmatpush1.msra.mxu0 0.0
        %2650 = vmatprep.subr.mxu0 0.0
        %2651 = vmatpush1.msra.mxu0 0.0
        %2652 = vmatprep.subr.mxu0 0.0
        %2653 = vmatpush1.msra.mxu0 0.0
        %2654 = vmatprep.subr.mxu0 0.0
        %2655 = vmatpush1.msra.mxu0 0.0
        %2656 = vmatprep.subr.mxu0 0.0
        %2657 = vmatpush1.msra.mxu0 0.0
        %2658 = vmatprep.subr.mxu0 0.0
        %2659 = vmatpush1.msra.mxu0 0.0
        %2660 = vmatprep.subr.mxu0 0.0
        %2661 = vmatpush1.msra.mxu0 0.0
        %2662 = vmatprep.subr.mxu0 0.0
        %2663 = vmatpush1.msra.mxu0 0.0
        %2664 = vmatprep.subr.mxu0 0.0
        %2665 = vmatpush1.msra.mxu0 0.0
        %2666 = vmatprep.subr.mxu0 0.0
        %2667 = vmatpush1.msra.mxu0 0.0
        %2668 = vmatprep.subr.mxu0 0.0
        %2669 = vmatpush1.msra.mxu0 0.0
        %2670 = vmatprep.subr.mxu0 0.0
        %2671 = vmatpush1.msra.mxu0 0.0
        %2672 = vmatprep.subr.mxu0 0.0
        %2673 = vmatpush1.msra.mxu0 0.0
        %2674 = vmatprep.subr.mxu0 0.0
        %2675 = vmatpush1.msra.mxu0 0.0
        %2676 = vmatprep.subr.mxu0 0.0
        %2677 = vmatpush1.msra.mxu0 0.0
        %2678 = vmatprep.subr.mxu0 0.0
        %2679 = vmatpush1.msra.mxu0 0.0
        %2680 = vmatprep.subr.mxu0 0.0
        %2681 = vmatpush1.msra.mxu0 0.0
        %2682 = vmatprep.subr.mxu0 0.0
        %2683 = vmatpush1.msra.mxu0 0.0
        %2684 = vmatprep.subr.mxu0 0.0
        %2685 = vmatpush1.msra.mxu0 0.0
        %2686 = vmatprep.subr.mxu0 0.0
        %2687 = vmatpush1.msra.mxu0 0.0
        %2688 = vmatprep.subr.mxu0 0.0
        %2689 = vmatpush1.msra.mxu0 0.0
        %2690 = vmatprep.subr.mxu0 0.0
        %2691 = vmatpush1.msra.mxu0 0.0
        %2692 = vmatprep.subr.mxu0 0.0
        %2693 = vmatpush1.msra.mxu0 0.0
        %2694 = vmatprep.subr.mxu0 0.0
        %2695 = vmatpush1.msra.mxu0 0.0
        %2696 = vmatprep.subr.mxu0 0.0
        %2697 = vmatpush1.msra.mxu0 0.0
        %2698 = vmatprep.mubr.f32.mxu0 0.0
        %2699 = vmatmul.mubr.f32.gmra.mrb[0].mxu0 %v2632
        %v2700 = vpop.f32.mrb[0].mxu0
        %v2701 = vadd.f32 0.0, %v2700
        %v2702 = vpop.f32.mrb[0].mxu0
        %2703 = vdwg.mxu0
        %v2705 = vsel %vm777, %v2701, 0
        %2707 = vmatprep.subr.mxu0 0.0
        %2708 = vmatpush1.msra.mxu0 %v2033
        %2709 = vmatprep.subr.mxu0 0.0
        %2710 = vmatpush1.msra.mxu0 0.0
        %2711 = vmatprep.subr.mxu0 0.0
        %2712 = vmatpush1.msra.mxu0 0.0
        %2713 = vmatprep.subr.mxu0 0.0
        %2714 = vmatpush1.msra.mxu0 0.0
        %2715 = vmatprep.subr.mxu0 0.0
        %2716 = vmatpush1.msra.mxu0 0.0
        %2717 = vmatprep.subr.mxu0 0.0
        %2718 = vmatpush1.msra.mxu0 0.0
        %2719 = vmatprep.subr.mxu0 0.0
        %2720 = vmatpush1.msra.mxu0 0.0
        %2721 = vmatprep.subr.mxu0 0.0
        %2722 = vmatpush1.msra.mxu0 0.0
        %2723 = vmatprep.subr.mxu0 0.0
        %2724 = vmatpush1.msra.mxu0 0.0
        %2725 = vmatprep.subr.mxu0 0.0
        %2726 = vmatpush1.msra.mxu0 0.0
        %2727 = vmatprep.subr.mxu0 0.0
        %2728 = vmatpush1.msra.mxu0 0.0
        %2729 = vmatprep.subr.mxu0 0.0
        %2730 = vmatpush1.msra.mxu0 0.0
        %2731 = vmatprep.subr.mxu0 0.0
        %2732 = vmatpush1.msra.mxu0 0.0
        %2733 = vmatprep.subr.mxu0 0.0
        %2734 = vmatpush1.msra.mxu0 0.0
        %2735 = vmatprep.subr.mxu0 0.0
        %2736 = vmatpush1.msra.mxu0 0.0
        %2737 = vmatprep.subr.mxu0 0.0
        %2738 = vmatpush1.msra.mxu0 0.0
        %2739 = vmatprep.subr.mxu0 0.0
        %2740 = vmatpush1.msra.mxu0 0.0
        %2741 = vmatprep.subr.mxu0 0.0
        %2742 = vmatpush1.msra.mxu0 0.0
        %2743 = vmatprep.subr.mxu0 0.0
        %2744 = vmatpush1.msra.mxu0 0.0
        %2745 = vmatprep.subr.mxu0 0.0
        %2746 = vmatpush1.msra.mxu0 0.0
        %2747 = vmatprep.subr.mxu0 0.0
        %2748 = vmatpush1.msra.mxu0 0.0
        %2749 = vmatprep.subr.mxu0 0.0
        %2750 = vmatpush1.msra.mxu0 0.0
        %2751 = vmatprep.subr.mxu0 0.0
        %2752 = vmatpush1.msra.mxu0 0.0
        %2753 = vmatprep.subr.mxu0 0.0
        %2754 = vmatpush1.msra.mxu0 0.0
        %2755 = vmatprep.subr.mxu0 0.0
        %2756 = vmatpush1.msra.mxu0 0.0
        %2757 = vmatprep.subr.mxu0 0.0
        %2758 = vmatpush1.msra.mxu0 0.0
        %2759 = vmatprep.subr.mxu0 0.0
        %2760 = vmatpush1.msra.mxu0 0.0
        %2761 = vmatprep.subr.mxu0 0.0
        %2762 = vmatpush1.msra.mxu0 0.0
        %2763 = vmatprep.subr.mxu0 0.0
        %2764 = vmatpush1.msra.mxu0 0.0
        %2765 = vmatprep.subr.mxu0 0.0
        %2766 = vmatpush1.msra.mxu0 0.0
        %2767 = vmatprep.subr.mxu0 0.0
        %2768 = vmatpush1.msra.mxu0 0.0
        %2769 = vmatprep.subr.mxu0 0.0
        %2770 = vmatpush1.msra.mxu0 0.0
        %2771 = vmatprep.mubr.f32.mxu0 0.0
        %2772 = vmatmul.mubr.f32.gmra.mrb[0].mxu0 %v2705
        %v2773 = vpop.f32.mrb[0].mxu0
        %v2774 = vadd.f32 0.0, %v2773
        %v2775 = vpop.f32.mrb[0].mxu0
        %2776 = vdwg.mxu0
        %v2777 = vadd.f32 %v2530, %v2774
        %2778 = vrot.lane.b32.xlu0 %v1844, 104
        %v2779 = vpop.permute.xlu0 %2778
        %2780 = vrot.lane.b32.xlu0 %v1931, 104
        %v2781 = vpop.permute.xlu0 %2780
        %2782 = vrot.lane.b32.xlu0 %v1936, 104
        %v2783 = vpop.permute.xlu0 %2782
        %v2784 = vsel %vm777, %v2779, 0
        %v2786 = vsel %vm777, %v2781, 0
        %v2788 = vsel %vm777, %v2783, 0
        %2790 = vmatprep.subr.mxu0 0.0
        %2791 = vmatpush1.xpose.msra.mxu0 %v2786
        %2792 = vmatprep.subr.mxu0 0.0
        %2793 = vmatpush1.xpose.msra.mxu0 %v2788
        %2794 = vmatprep.subr.mxu0 0.0
        %2795 = vmatpush1.xpose.msra.mxu0 0.0
        %2796 = vmatprep.subr.mxu0 0.0
        %2797 = vmatpush1.xpose.msra.mxu0 0.0
        %2798 = vmatprep.subr.mxu0 0.0
        %2799 = vmatpush1.xpose.msra.mxu0 0.0
        %2800 = vmatprep.subr.mxu0 0.0
        %2801 = vmatpush1.xpose.msra.mxu0 0.0
        %2802 = vmatprep.subr.mxu0 0.0
        %2803 = vmatpush1.xpose.msra.mxu0 0.0
        %2804 = vmatprep.subr.mxu0 0.0
        %2805 = vmatpush1.xpose.msra.mxu0 0.0
        %2806 = vmatprep.subr.mxu0 0.0
        %2807 = vmatpush1.xpose.msra.mxu0 0.0
        %2808 = vmatprep.subr.mxu0 0.0
        %2809 = vmatpush1.xpose.msra.mxu0 0.0
        %2810 = vmatprep.subr.mxu0 0.0
        %2811 = vmatpush1.xpose.msra.mxu0 0.0
        %2812 = vmatprep.subr.mxu0 0.0
        %2813 = vmatpush1.xpose.msra.mxu0 0.0
        %2814 = vmatprep.subr.mxu0 0.0
        %2815 = vmatpush1.xpose.msra.mxu0 0.0
        %2816 = vmatprep.subr.mxu0 0.0
        %2817 = vmatpush1.xpose.msra.mxu0 0.0
        %2818 = vmatprep.subr.mxu0 0.0
        %2819 = vmatpush1.xpose.msra.mxu0 0.0
        %2820 = vmatprep.subr.mxu0 0.0
        %2821 = vmatpush1.xpose.msra.mxu0 0.0
        %2822 = vmatprep.subr.mxu0 0.0
        %2823 = vmatpush1.xpose.msra.mxu0 0.0
        %2824 = vmatprep.subr.mxu0 0.0
        %2825 = vmatpush1.xpose.msra.mxu0 0.0
        %2826 = vmatprep.subr.mxu0 0.0
        %2827 = vmatpush1.xpose.msra.mxu0 0.0
        %2828 = vmatprep.subr.mxu0 0.0
        %2829 = vmatpush1.xpose.msra.mxu0 0.0
        %2830 = vmatprep.subr.mxu0 0.0
        %2831 = vmatpush1.xpose.msra.mxu0 0.0
        %2832 = vmatprep.subr.mxu0 0.0
        %2833 = vmatpush1.xpose.msra.mxu0 0.0
        %2834 = vmatprep.subr.mxu0 0.0
        %2835 = vmatpush1.xpose.msra.mxu0 0.0
        %2836 = vmatprep.subr.mxu0 0.0
        %2837 = vmatpush1.xpose.msra.mxu0 0.0
        %2838 = vmatprep.subr.mxu0 0.0
        %2839 = vmatpush1.xpose.msra.mxu0 0.0
        %2840 = vmatprep.subr.mxu0 0.0
        %2841 = vmatpush1.xpose.msra.mxu0 0.0
        %2842 = vmatprep.subr.mxu0 0.0
        %2843 = vmatpush1.xpose.msra.mxu0 0.0
        %2844 = vmatprep.subr.mxu0 0.0
        %2845 = vmatpush1.xpose.msra.mxu0 0.0
        %2846 = vmatprep.subr.mxu0 0.0
        %2847 = vmatpush1.xpose.msra.mxu0 0.0
        %2848 = vmatprep.subr.mxu0 0.0
        %2849 = vmatpush1.xpose.msra.mxu0 0.0
        %2850 = vmatprep.subr.mxu0 0.0
        %2851 = vmatpush1.xpose.msra.mxu0 0.0
        %2852 = vmatprep.subr.mxu0 0.0
        %2853 = vmatpush1.xpose.msra.mxu0 0.0
        %2854 = vmatprep.mubr.f32.mxu0 0.0
        %2855 = vmatmul.mubr.f32.gmra.mrb[0].mxu0 %v2784
        %v2856 = vpop.f32.mrb[0].mxu0
        %v2857 = vadd.f32 0.0, %v2856
        %v2858 = vpop.f32.mrb[0].mxu0
        %2859 = vdwg.mxu0
        %v2860 = vmul.f32 %v2857, 0.35355338
        %v2861 = vsel %vm2123, %v2860, -inf
        %2862 = vmax.xlane.f32.xlu0 %v2861
        %v2863 = vpop.xlane.xlu0 %2862
        %v2864 = vsub.f32 %v2860, %v2863
        %v2865 = vmul.f32 %v2864, 1.442695
        %v2866 = vpow.pop %v2865
        %v2867 = vsel %vm2123, %v2866, 0.0
        %2868 = vadd.xlane.f32.xlu0 %v2867
        %v2869 = vpop.xlane.xlu0 %2868
        %v2870 = vrcp.pop %v2869
        %v2871 = vmul.f32 %v2866, %v2870
        %2872 = vrot.lane.b32.xlu0 %v2023, 104
        %v2873 = vpop.permute.xlu0 %2872
        %2874 = vrot.lane.b32.xlu0 %v2028, 104
        %v2875 = vpop.permute.xlu0 %2874
        %v2879 = vsel %vm2123, %v2871, 0
        %2881 = vmatprep.subr.mxu0 0.0
        %2882 = vmatpush1.msra.mxu0 %v2873
        %2883 = vmatprep.subr.mxu0 0.0
        %2884 = vmatpush1.msra.mxu0 %v2875
        %2885 = vmatprep.subr.mxu0 0.0
        %2886 = vmatpush1.msra.mxu0 0.0
        %2887 = vmatprep.subr.mxu0 0.0
        %2888 = vmatpush1.msra.mxu0 0.0
        %2889 = vmatprep.subr.mxu0 0.0
        %2890 = vmatpush1.msra.mxu0 0.0
        %2891 = vmatprep.subr.mxu0 0.0
        %2892 = vmatpush1.msra.mxu0 0.0
        %2893 = vmatprep.subr.mxu0 0.0
        %2894 = vmatpush1.msra.mxu0 0.0
        %2895 = vmatprep.subr.mxu0 0.0
        %2896 = vmatpush1.msra.mxu0 0.0
        %2897 = vmatprep.subr.mxu0 0.0
        %2898 = vmatpush1.msra.mxu0 0.0
        %2899 = vmatprep.subr.mxu0 0.0
        %2900 = vmatpush1.msra.mxu0 0.0
        %2901 = vmatprep.subr.mxu0 0.0
        %2902 = vmatpush1.msra.mxu0 0.0
        %2903 = vmatprep.subr.mxu0 0.0
        %2904 = vmatpush1.msra.mxu0 0.0
        %2905 = vmatprep.subr.mxu0 0.0
        %2906 = vmatpush1.msra.mxu0 0.0
        %2907 = vmatprep.subr.mxu0 0.0
        %2908 = vmatpush1.msra.mxu0 0.0
        %2909 = vmatprep.subr.mxu0 0.0
        %2910 = vmatpush1.msra.mxu0 0.0
        %2911 = vmatprep.subr.mxu0 0.0
        %2912 = vmatpush1.msra.mxu0 0.0
        %2913 = vmatprep.subr.mxu0 0.0
        %2914 = vmatpush1.msra.mxu0 0.0
        %2915 = vmatprep.subr.mxu0 0.0
        %2916 = vmatpush1.msra.mxu0 0.0
        %2917 = vmatprep.subr.mxu0 0.0
        %2918 = vmatpush1.msra.mxu0 0.0
        %2919 = vmatprep.subr.mxu0 0.0
        %2920 = vmatpush1.msra.mxu0 0.0
        %2921 = vmatprep.subr.mxu0 0.0
        %2922 = vmatpush1.msra.mxu0 0.0
        %2923 = vmatprep.subr.mxu0 0.0
        %2924 = vmatpush1.msra.mxu0 0.0
        %2925 = vmatprep.subr.mxu0 0.0
        %2926 = vmatpush1.msra.mxu0 0.0
        %2927 = vmatprep.subr.mxu0 0.0
        %2928 = vmatpush1.msra.mxu0 0.0
        %2929 = vmatprep.subr.mxu0 0.0
        %2930 = vmatpush1.msra.mxu0 0.0
        %2931 = vmatprep.subr.mxu0 0.0
        %2932 = vmatpush1.msra.mxu0 0.0
        %2933 = vmatprep.subr.mxu0 0.0
        %2934 = vmatpush1.msra.mxu0 0.0
        %2935 = vmatprep.subr.mxu0 0.0
        %2936 = vmatpush1.msra.mxu0 0.0
        %2937 = vmatprep.subr.mxu0 0.0
        %2938 = vmatpush1.msra.mxu0 0.0
        %2939 = vmatprep.subr.mxu0 0.0
        %2940 = vmatpush1.msra.mxu0 0.0
        %2941 = vmatprep.subr.mxu0 0.0
        %2942 = vmatpush1.msra.mxu0 0.0
        %2943 = vmatprep.subr.mxu0 0.0
        %2944 = vmatpush1.msra.mxu0 0.0
        %2945 = vmatprep.mubr.f32.mxu0 0.0
        %2946 = vmatmul.mubr.f32.gmra.mrb[0].mxu0 %v2879
        %v2947 = vpop.f32.mrb[0].mxu0
        %v2948 = vadd.f32 0.0, %v2947
        %v2949 = vpop.f32.mrb[0].mxu0
        %2950 = vdwg.mxu0
        %v2952 = vsel %vm777, %v2948, 0
        %2954 = vmatprep.subr.mxu0 0.0
        %2955 = vmatpush1.msra.mxu0 %v2034
        %2956 = vmatprep.subr.mxu0 0.0
        %2957 = vmatpush1.msra.mxu0 0.0
        %2958 = vmatprep.subr.mxu0 0.0
        %2959 = vmatpush1.msra.mxu0 0.0
        %2960 = vmatprep.subr.mxu0 0.0
        %2961 = vmatpush1.msra.mxu0 0.0
        %2962 = vmatprep.subr.mxu0 0.0
        %2963 = vmatpush1.msra.mxu0 0.0
        %2964 = vmatprep.subr.mxu0 0.0
        %2965 = vmatpush1.msra.mxu0 0.0
        %2966 = vmatprep.subr.mxu0 0.0
        %2967 = vmatpush1.msra.mxu0 0.0
        %2968 = vmatprep.subr.mxu0 0.0
        %2969 = vmatpush1.msra.mxu0 0.0
        %2970 = vmatprep.subr.mxu0 0.0
        %2971 = vmatpush1.msra.mxu0 0.0
        %2972 = vmatprep.subr.mxu0 0.0
        %2973 = vmatpush1.msra.mxu0 0.0
        %2974 = vmatprep.subr.mxu0 0.0
        %2975 = vmatpush1.msra.mxu0 0.0
        %2976 = vmatprep.subr.mxu0 0.0
        %2977 = vmatpush1.msra.mxu0 0.0
        %2978 = vmatprep.subr.mxu0 0.0
        %2979 = vmatpush1.msra.mxu0 0.0
        %2980 = vmatprep.subr.mxu0 0.0
        %2981 = vmatpush1.msra.mxu0 0.0
        %2982 = vmatprep.subr.mxu0 0.0
        %2983 = vmatpush1.msra.mxu0 0.0
        %2984 = vmatprep.subr.mxu0 0.0
        %2985 = vmatpush1.msra.mxu0 0.0
        %2986 = vmatprep.subr.mxu0 0.0
        %2987 = vmatpush1.msra.mxu0 0.0
        %2988 = vmatprep.subr.mxu0 0.0
        %2989 = vmatpush1.msra.mxu0 0.0
        %2990 = vmatprep.subr.mxu0 0.0
        %2991 = vmatpush1.msra.mxu0 0.0
        %2992 = vmatprep.subr.mxu0 0.0
        %2993 = vmatpush1.msra.mxu0 0.0
        %2994 = vmatprep.subr.mxu0 0.0
        %2995 = vmatpush1.msra.mxu0 0.0
        %2996 = vmatprep.subr.mxu0 0.0
        %2997 = vmatpush1.msra.mxu0 0.0
        %2998 = vmatprep.subr.mxu0 0.0
        %2999 = vmatpush1.msra.mxu0 0.0
        %3000 = vmatprep.subr.mxu0 0.0
        %3001 = vmatpush1.msra.mxu0 0.0
        %3002 = vmatprep.subr.mxu0 0.0
        %3003 = vmatpush1.msra.mxu0 0.0
        %3004 = vmatprep.subr.mxu0 0.0
        %3005 = vmatpush1.msra.mxu0 0.0
        %3006 = vmatprep.subr.mxu0 0.0
        %3007 = vmatpush1.msra.mxu0 0.0
        %3008 = vmatprep.subr.mxu0 0.0
        %3009 = vmatpush1.msra.mxu0 0.0
        %3010 = vmatprep.subr.mxu0 0.0
        %3011 = vmatpush1.msra.mxu0 0.0
        %3012 = vmatprep.subr.mxu0 0.0
        %3013 = vmatpush1.msra.mxu0 0.0
        %3014 = vmatprep.subr.mxu0 0.0
        %3015 = vmatpush1.msra.mxu0 0.0
        %3016 = vmatprep.subr.mxu0 0.0
        %3017 = vmatpush1.msra.mxu0 0.0
        %3018 = vmatprep.mubr.f32.mxu0 0.0
        %3019 = vmatmul.mubr.f32.gmra.mrb[0].mxu0 %v2952
        %v3020 = vpop.f32.mrb[0].mxu0
        %v3021 = vadd.f32 0.0, %v3020
        %v3022 = vpop.f32.mrb[0].mxu0
        %3023 = vdwg.mxu0
        %v3024 = vadd.f32 %v2777, %v3021
        %v3025 = vadd.f32 %v1762, %v3024
        %v3026 = vsel %vm688, %v3025, 0.0
        %3027 = vadd.xlane.f32.xlu0 %v3026
        %v3028 = vpop.xlane.xlu0 %3027
        %v3029 = vmul.f32 %v3028, %v1742
        %v3030 = vsub.f32 %v3025, %v3029
        %v3031 = vmul.f32 %v3030, %v3030
        %v3032 = vsel %vm688, %v3031, 0.0
        %3033 = vadd.xlane.f32.xlu0 %v3032
        %v3034 = vpop.xlane.xlu0 %3033
        %v3035 = vmul.f32 %v3034, %v1742
        %v3036 = vadd.f32 %v3035, 1e-12
        %v3037 = vrsqrt.pop %v3036
        %v3038 = vmul.f32 %v3030, %v3037
        %v3039 = vlaneseq
        %v3040 = vshrl.u32 %v3039, 7
        %v3041 = vsub.s32 2, %v3040
        %v3042 = vrot.slane %v676, %v3041
        %v3043 = vmul.f32 %v3038, %v3042
        %v3044 = vlaneseq
        %v3045 = vshrl.u32 %v3044, 7
        %v3046 = vsub.s32 3, %v3045
        %v3047 = vrot.slane %v676, %v3046
        %v3048 = vadd.f32 %v3043, %v3047
        %v3049 = vld [vmem:[%s15] sm:$0xff]
        %v3050 = vld [vmem:[%s15 + $0x8] sm:$0xff]
        %v3051 = vld [vmem:[%s15 + $0x10] sm:$0xff]
        %v3052 = vld [vmem:[%s15 + $0x18] sm:$0xff]
        %v3053 = vld [vmem:[%s16] sm:$0x1]
        %v3055 = vlaneseq
        %v3056 = vshrl.u32 %v3055, 7
        %v3057 = vsub.s32 0, %v3056
        %v3058 = vrot.slane %v3053, %v3057
        %v3061 = vsel %vm688, %v3048, 0
        %3063 = vmatprep.subr.mxu0 0.0
        %3064 = vmatpush1.msra.mxu0 %v3049
        %3065 = vmatprep.subr.mxu0 0.0
        %3066 = vmatpush1.msra.mxu0 %v3050
        %3067 = vmatprep.subr.mxu0 0.0
        %3068 = vmatpush1.msra.mxu0 %v3051
        %3069 = vmatprep.subr.mxu0 0.0
        %3070 = vmatpush1.msra.mxu0 %v3052
        %3071 = vmatprep.subr.mxu0 0.0
        %3072 = vmatpush1.msra.mxu0 0.0
        %3073 = vmatprep.subr.mxu0 0.0
        %3074 = vmatpush1.msra.mxu0 0.0
        %3075 = vmatprep.subr.mxu0 0.0
        %3076 = vmatpush1.msra.mxu0 0.0
        %3077 = vmatprep.subr.mxu0 0.0
        %3078 = vmatpush1.msra.mxu0 0.0
        %3079 = vmatprep.subr.mxu0 0.0
        %3080 = vmatpush1.msra.mxu0 0.0
        %3081 = vmatprep.subr.mxu0 0.0
        %3082 = vmatpush1.msra.mxu0 0.0
        %3083 = vmatprep.subr.mxu0 0.0
        %3084 = vmatpush1.msra.mxu0 0.0
        %3085 = vmatprep.subr.mxu0 0.0
        %3086 = vmatpush1.msra.mxu0 0.0
        %3087 = vmatprep.subr.mxu0 0.0
        %3088 = vmatpush1.msra.mxu0 0.0
        %3089 = vmatprep.subr.mxu0 0.0
        %3090 = vmatpush1.msra.mxu0 0.0
        %3091 = vmatprep.subr.mxu0 0.0
        %3092 = vmatpush1.msra.mxu0 0.0
        %3093 = vmatprep.subr.mxu0 0.0
        %3094 = vmatpush1.msra.mxu0 0.0
        %3095 = vmatprep.subr.mxu0 0.0
        %3096 = vmatpush1.msra.mxu0 0.0
        %3097 = vmatprep.subr.mxu0 0.0
        %3098 = vmatpush1.msra.mxu0 0.0
        %3099 = vmatprep.subr.mxu0 0.0
        %3100 = vmatpush1.msra.mxu0 0.0
        %3101 = vmatprep.subr.mxu0 0.0
        %3102 = vmatpush1.msra.mxu0 0.0
        %3103 = vmatprep.subr.mxu0 0.0
        %3104 = vmatpush1.msra.mxu0 0.0
        %3105 = vmatprep.subr.mxu0 0.0
        %3106 = vmatpush1.msra.mxu0 0.0
        %3107 = vmatprep.subr.mxu0 0.0
        %3108 = vmatpush1.msra.mxu0 0.0
        %3109 = vmatprep.subr.mxu0 0.0
        %3110 = vmatpush1.msra.mxu0 0.0
        %3111 = vmatprep.subr.mxu0 0.0
        %3112 = vmatpush1.msra.mxu0 0.0
        %3113 = vmatprep.subr.mxu0 0.0
        %3114 = vmatpush1.msra.mxu0 0.0
        %3115 = vmatprep.subr.mxu0 0.0
        %3116 = vmatpush1.msra.mxu0 0.0
        %3117 = vmatprep.subr.mxu0 0.0
        %3118 = vmatpush1.msra.mxu0 0.0
        %3119 = vmatprep.subr.mxu0 0.0
        %3120 = vmatpush1.msra.mxu0 0.0
        %3121 = vmatprep.subr.mxu0 0.0
        %3122 = vmatpush1.msra.mxu0 0.0
        %3123 = vmatprep.subr.mxu0 0.0
        %3124 = vmatpush1.msra.mxu0 0.0
        %3125 = vmatprep.subr.mxu0 0.0
        %3126 = vmatpush1.msra.mxu0 0.0
        %3127 = vmatprep.mubr.f32.mxu0 0.0
        %3128 = vmatmul.mubr.f32.gmra.mrb[0].mxu0 %v3061
        %v3129 = vpop.f32.mrb[0].mxu0
        %v3130 = vadd.f32 %v3058, %v3129
        %v3131 = vpop.f32.mrb[0].mxu0
        %3132 = vdwg.mxu0
        %v3133 = vmul.f32 %v3130, 0.5
        %v3134 = vmul.f32 %v3130, 0.70710677
        %v3135 = verf.f32.pop %v3134
        %v3136 = vadd.f32 %v3135, 1.0
        %v3137 = vmul.f32 %v3133, %v3136
        %v3138 = vld [vmem:[%s17] sm:$0xff]
        %v3139 = vld [vmem:[%s17 + $0x8] sm:$0xff]
        %v3140 = vld [vmem:[%s17 + $0x10] sm:$0xff]
        %v3141 = vld [vmem:[%s17 + $0x18] sm:$0xff]
        %v3142 = vld [vmem:[%s17 + $0x20] sm:$0xff]
        %v3143 = vld [vmem:[%s17 + $0x28] sm:$0xff]
        %v3144 = vld [vmem:[%s17 + $0x30] sm:$0xff]
        %v3145 = vld [vmem:[%s17 + $0x38] sm:$0xff]
        %v3146 = vld [vmem:[%s18] sm:$0x1]
        %v3148 = vlaneseq
        %v3149 = vshrl.u32 %v3148, 7
        %v3150 = vsub.s32 0, %v3149
        %v3151 = vrot.slane %v3146, %v3150
        %vm3153 = vcmask 523264
        %v3155 = vsel %vm3153, %v3137, 0
        %3157 = vmatprep.subr.mxu0 0.0
        %3158 = vmatpush1.msra.mxu0 %v3138
        %3159 = vmatprep.subr.mxu0 0.0
        %3160 = vmatpush1.msra.mxu0 %v3139
        %3161 = vmatprep.subr.mxu0 0.0
        %3162 = vmatpush1.msra.mxu0 %v3140
        %3163 = vmatprep.subr.mxu0 0.0
        %3164 = vmatpush1.msra.mxu0 %v3141
        %3165 = vmatprep.subr.mxu0 0.0
        %3166 = vmatpush1.msra.mxu0 %v3142
        %3167 = vmatprep.subr.mxu0 0.0
        %3168 = vmatpush1.msra.mxu0 %v3143
        %3169 = vmatprep.subr.mxu0 0.0
        %3170 = vmatpush1.msra.mxu0 %v3144
        %3171 = vmatprep.subr.mxu0 0.0
        %3172 = vmatpush1.msra.mxu0 %v3145
        %3173 = vmatprep.subr.mxu0 0.0
        %3174 = vmatpush1.msra.mxu0 0.0
        %3175 = vmatprep.subr.mxu0 0.0
        %3176 = vmatpush1.msra.mxu0 0.0
        %3177 = vmatprep.subr.mxu0 0.0
        %3178 = vmatpush1.msra.mxu0 0.0
        %3179 = vmatprep.subr.mxu0 0.0
        %3180 = vmatpush1.msra.mxu0 0.0
        %3181 = vmatprep.subr.mxu0 0.0
        %3182 = vmatpush1.msra.mxu0 0.0
        %3183 = vmatprep.subr.mxu0 0.0
        %3184 = vmatpush1.msra.mxu0 0.0
        %3185 = vmatprep.subr.mxu0 0.0
        %3186 = vmatpush1.msra.mxu0 0.0
        %3187 = vmatprep.subr.mxu0 0.0
        %3188 = vmatpush1.msra.mxu0 0.0
        %3189 = vmatprep.subr.mxu0 0.0
        %3190 = vmatpush1.msra.mxu0 0.0
        %3191 = vmatprep.subr.mxu0 0.0
        %3192 = vmatpush1.msra.mxu0 0.0
        %3193 = vmatprep.subr.mxu0 0.0
        %3194 = vmatpush1.msra.mxu0 0.0
        %3195 = vmatprep.subr.mxu0 0.0
        %3196 = vmatpush1.msra.mxu0 0.0
        %3197 = vmatprep.subr.mxu0 0.0
        %3198 = vmatpush1.msra.mxu0 0.0
        %3199 = vmatprep.subr.mxu0 0.0
        %3200 = vmatpush1.msra.mxu0 0.0
        %3201 = vmatprep.subr.mxu0 0.0
        %3202 = vmatpush1.msra.mxu0 0.0
        %3203 = vmatprep.subr.mxu0 0.0
        %3204 = vmatpush1.msra.mxu0 0.0
        %3205 = vmatprep.subr.mxu0 0.0
        %3206 = vmatpush1.msra.mxu0 0.0
        %3207 = vmatprep.subr.mxu0 0.0
        %3208 = vmatpush1.msra.mxu0 0.0
        %3209 = vmatprep.subr.mxu0 0.0
        %3210 = vmatpush1.msra.mxu0 0.0
        %3211 = vmatprep.subr.mxu0 0.0
        %3212 = vmatpush1.msra.mxu0 0.0
        %3213 = vmatprep.subr.mxu0 0.0
        %3214 = vmatpush1.msra.mxu0 0.0
        %3215 = vmatprep.subr.mxu0 0.0
        %3216 = vmatpush1.msra.mxu0 0.0
        %3217 = vmatprep.subr.mxu0 0.0
        %3218 = vmatpush1.msra.mxu0 0.0
        %3219 = vmatprep.subr.mxu0 0.0
        %3220 = vmatpush1.msra.mxu0 0.0
        %3221 = vmatprep.mubr.f32.mxu0 0.0
        %3222 = vmatmul.mubr.f32.gmra.mrb[0].mxu0 %v3155
        %v3223 = vpop.f32.mrb[0].mxu0
        %v3224 = vadd.f32 %v3151, %v3223
        %v3225 = vpop.f32.mrb[0].mxu0
        %3226 = vdwg.mxu0
        %v3227 = vadd.f32 %v3048, %v3224
        %v3228 = vsel %vm688, %v3227, 0.0
        %3229 = vadd.xlane.f32.xlu0 %v3228
        %v3230 = vpop.xlane.xlu0 %3229
        %v3231 = vmul.f32 %v3230, %v1742
        %v3232 = vsub.f32 %v3227, %v3231
        %v3233 = vmul.f32 %v3232, %v3232
        %v3234 = vsel %vm688, %v3233, 0.0
        %3235 = vadd.xlane.f32.xlu0 %v3234
        %v3236 = vpop.xlane.xlu0 %3235
        %v3237 = vmul.f32 %v3236, %v1742
        %v3238 = vadd.f32 %v3237, 1e-12
        %v3239 = vrsqrt.pop %v3238
        %v3240 = vmul.f32 %v3232, %v3239
        %v3241 = vlaneseq
        %v3242 = vshrl.u32 %v3241, 7
        %v3243 = vsub.s32 4, %v3242
        %v3244 = vrot.slane %v676, %v3243
        %v3245 = vmul.f32 %v3240, %v3244
        %v3246 = vlaneseq
        %v3247 = vshrl.u32 %v3246, 7
        %v3248 = vsub.s32 5, %v3247
        %v3249 = vrot.slane %v676, %v3248
        %v3250 = vadd.f32 %v3245, %v3249
        %s3251 = scalar_lea.vmem %s19, 8
        %v3252 = vld [vmem:[%s3251] sm:$0x3f]
        %s3253 = scalar_lea.vmem %s3, 32
        %v3254 = vld [vmem:[%s3253] sm:$0xff]
        %v3255 = vld [vmem:[%s3253 + $0x8] sm:$0xff]
        %v3256 = vld [vmem:[%s3253 + $0x10] sm:$0xff]
        %v3257 = vld [vmem:[%s3253 + $0x18] sm:$0xff]
        %s3258 = scalar_lea.vmem %s4, 1
        %v3259 = vld [vmem:[%s3258] sm:$0x1]
        %v3261 = vlaneseq
        %v3262 = vshrl.u32 %v3261, 7
        %v3263 = vsub.s32 0, %v3262
        %v3264 = vrot.slane %v3259, %v3263
        %v3267 = vsel %vm688, %v3250, 0
        %3269 = vmatprep.subr.mxu0 0.0
        %3270 = vmatpush1.msra.mxu0 %v3254
        %3271 = vmatprep.subr.mxu0 0.0
        %3272 = vmatpush1.msra.mxu0 %v3255
        %3273 = vmatprep.subr.mxu0 0.0
        %3274 = vmatpush1.msra.mxu0 %v3256
        %3275 = vmatprep.subr.mxu0 0.0
        %3276 = vmatpush1.msra.mxu0 %v3257
        %3277 = vmatprep.subr.mxu0 0.0
        %3278 = vmatpush1.msra.mxu0 0.0
        %3279 = vmatprep.subr.mxu0 0.0
        %3280 = vmatpush1.msra.mxu0 0.0
        %3281 = vmatprep.subr.mxu0 0.0
        %3282 = vmatpush1.msra.mxu0 0.0
        %3283 = vmatprep.subr.mxu0 0.0
        %3284 = vmatpush1.msra.mxu0 0.0
        %3285 = vmatprep.subr.mxu0 0.0
        %3286 = vmatpush1.msra.mxu0 0.0
        %3287 = vmatprep.subr.mxu0 0.0
        %3288 = vmatpush1.msra.mxu0 0.0
        %3289 = vmatprep.subr.mxu0 0.0
        %3290 = vmatpush1.msra.mxu0 0.0
        %3291 = vmatprep.subr.mxu0 0.0
        %3292 = vmatpush1.msra.mxu0 0.0
        %3293 = vmatprep.subr.mxu0 0.0
        %3294 = vmatpush1.msra.mxu0 0.0
        %3295 = vmatprep.subr.mxu0 0.0
        %3296 = vmatpush1.msra.mxu0 0.0
        %3297 = vmatprep.subr.mxu0 0.0
        %3298 = vmatpush1.msra.mxu0 0.0
        %3299 = vmatprep.subr.mxu0 0.0
        %3300 = vmatpush1.msra.mxu0 0.0
        %3301 = vmatprep.subr.mxu0 0.0
        %3302 = vmatpush1.msra.mxu0 0.0
        %3303 = vmatprep.subr.mxu0 0.0
        %3304 = vmatpush1.msra.mxu0 0.0
        %3305 = vmatprep.subr.mxu0 0.0
        %3306 = vmatpush1.msra.mxu0 0.0
        %3307 = vmatprep.subr.mxu0 0.0
        %3308 = vmatpush1.msra.mxu0 0.0
        %3309 = vmatprep.subr.mxu0 0.0
        %3310 = vmatpush1.msra.mxu0 0.0
        %3311 = vmatprep.subr.mxu0 0.0
        %3312 = vmatpush1.msra.mxu0 0.0
        %3313 = vmatprep.subr.mxu0 0.0
        %3314 = vmatpush1.msra.mxu0 0.0
        %3315 = vmatprep.subr.mxu0 0.0
        %3316 = vmatpush1.msra.mxu0 0.0
        %3317 = vmatprep.subr.mxu0 0.0
        %3318 = vmatpush1.msra.mxu0 0.0
        %3319 = vmatprep.subr.mxu0 0.0
        %3320 = vmatpush1.msra.mxu0 0.0
        %3321 = vmatprep.subr.mxu0 0.0
        %3322 = vmatpush1.msra.mxu0 0.0
        %3323 = vmatprep.subr.mxu0 0.0
        %3324 = vmatpush1.msra.mxu0 0.0
        %3325 = vmatprep.subr.mxu0 0.0
        %3326 = vmatpush1.msra.mxu0 0.0
        %3327 = vmatprep.subr.mxu0 0.0
        %3328 = vmatpush1.msra.mxu0 0.0
        %3329 = vmatprep.subr.mxu0 0.0
        %3330 = vmatpush1.msra.mxu0 0.0
        %3331 = vmatprep.subr.mxu0 0.0
        %3332 = vmatpush1.msra.mxu0 0.0
        %3333 = vmatprep.mubr.f32.mxu0 0.0
        %3334 = vmatmul.mubr.f32.gmra.mrb[0].mxu0 %v3267
        %v3335 = vpop.f32.mrb[0].mxu0
        %v3336 = vadd.f32 %v3264, %v3335
        %v3337 = vpop.f32.mrb[0].mxu0
        %3338 = vdwg.mxu0
        %s3339 = scalar_lea.vmem %s5, 32
        %v3340 = vld [vmem:[%s3339] sm:$0xff]
        %v3341 = vld [vmem:[%s3339 + $0x8] sm:$0xff]
        %v3342 = vld [vmem:[%s3339 + $0x10] sm:$0xff]
        %v3343 = vld [vmem:[%s3339 + $0x18] sm:$0xff]
        %s3344 = scalar_lea.vmem %s6, 1
        %v3345 = vld [vmem:[%s3344] sm:$0x1]
        %v3347 = vlaneseq
        %v3348 = vshrl.u32 %v3347, 7
        %v3349 = vsub.s32 0, %v3348
        %v3350 = vrot.slane %v3345, %v3349
        %v3352 = vadd.f32 %v3350, 0.0
        %3354 = vrot.lane.b32.xlu0 %v3336, 96
        %v3355 = vpop.permute.xlu0 %3354
        %v3356 = vsel %vm777, %v3336, 0
        %v3358 = vsel %vm777, %v3355, 0
        %3360 = vmatprep.subr.mxu0 0.0
        %3361 = vmatpush1.xpose.msra.mxu0 %v3358
        %3362 = vmatprep.subr.mxu0 0.0
        %3363 = vmatpush1.xpose.msra.mxu0 0.0
        %3364 = vmatprep.subr.mxu0 0.0
        %3365 = vmatpush1.xpose.msra.mxu0 0.0
        %3366 = vmatprep.subr.mxu0 0.0
        %3367 = vmatpush1.xpose.msra.mxu0 0.0
        %3368 = vmatprep.subr.mxu0 0.0
        %3369 = vmatpush1.xpose.msra.mxu0 0.0
        %3370 = vmatprep.subr.mxu0 0.0
        %3371 = vmatpush1.xpose.msra.mxu0 0.0
        %3372 = vmatprep.subr.mxu0 0.0
        %3373 = vmatpush1.xpose.msra.mxu0 0.0
        %3374 = vmatprep.subr.mxu0 0.0
        %3375 = vmatpush1.xpose.msra.mxu0 0.0
        %3376 = vmatprep.subr.mxu0 0.0
        %3377 = vmatpush1.xpose.msra.mxu0 0.0
        %3378 = vmatprep.subr.mxu0 0.0
        %3379 = vmatpush1.xpose.msra.mxu0 0.0
        %3380 = vmatprep.subr.mxu0 0.0
        %3381 = vmatpush1.xpose.msra.mxu0 0.0
        %3382 = vmatprep.subr.mxu0 0.0
        %3383 = vmatpush1.xpose.msra.mxu0 0.0
        %3384 = vmatprep.subr.mxu0 0.0
        %3385 = vmatpush1.xpose.msra.mxu0 0.0
        %3386 = vmatprep.subr.mxu0 0.0
        %3387 = vmatpush1.xpose.msra.mxu0 0.0
        %3388 = vmatprep.subr.mxu0 0.0
        %3389 = vmatpush1.xpose.msra.mxu0 0.0
        %3390 = vmatprep.subr.mxu0 0.0
        %3391 = vmatpush1.xpose.msra.mxu0 0.0
        %3392 = vmatprep.subr.mxu0 0.0
        %3393 = vmatpush1.xpose.msra.mxu0 0.0
        %3394 = vmatprep.subr.mxu0 0.0
        %3395 = vmatpush1.xpose.msra.mxu0 0.0
        %3396 = vmatprep.subr.mxu0 0.0
        %3397 = vmatpush1.xpose.msra.mxu0 0.0
        %3398 = vmatprep.subr.mxu0 0.0
        %3399 = vmatpush1.xpose.msra.mxu0 0.0
        %3400 = vmatprep.subr.mxu0 0.0
        %3401 = vmatpush1.xpose.msra.mxu0 0.0
        %3402 = vmatprep.subr.mxu0 0.0
        %3403 = vmatpush1.xpose.msra.mxu0 0.0
        %3404 = vmatprep.subr.mxu0 0.0
        %3405 = vmatpush1.xpose.msra.mxu0 0.0
        %3406 = vmatprep.subr.mxu0 0.0
        %3407 = vmatpush1.xpose.msra.mxu0 0.0
        %3408 = vmatprep.subr.mxu0 0.0
        %3409 = vmatpush1.xpose.msra.mxu0 0.0
        %3410 = vmatprep.subr.mxu0 0.0
        %3411 = vmatpush1.xpose.msra.mxu0 0.0
        %3412 = vmatprep.subr.mxu0 0.0
        %3413 = vmatpush1.xpose.msra.mxu0 0.0
        %3414 = vmatprep.subr.mxu0 0.0
        %3415 = vmatpush1.xpose.msra.mxu0 0.0
        %3416 = vmatprep.subr.mxu0 0.0
        %3417 = vmatpush1.xpose.msra.mxu0 0.0
        %3418 = vmatprep.subr.mxu0 0.0
        %3419 = vmatpush1.xpose.msra.mxu0 0.0
        %3420 = vmatprep.subr.mxu0 0.0
        %3421 = vmatpush1.xpose.msra.mxu0 0.0
        %3422 = vmatprep.subr.mxu0 0.0
        %3423 = vmatpush1.xpose.msra.mxu0 0.0
        %3424 = vmatprep.mubr.f32.mxu0 0.0
        %3425 = vmatmul.mubr.f32.gmra.mrb[0].mxu0 %v3356
        %v3426 = vpop.f32.mrb[0].mxu0
        %v3427 = vadd.f32 0.0, %v3426
        %v3428 = vpop.f32.mrb[0].mxu0
        %3429 = vdwg.mxu0
        %v3430 = vmul.f32 %v3427, 0.35355338
        %v3431 = vadd.f32 %v3430, %v675
        %v3432 = vsel %vm777, %v3431, -inf
        %3433 = vmax.xlane.f32.xlu0 %v3432
        %v3434 = vpop.xlane.xlu0 %3433
        %v3435 = vsub.f32 %v3431, %v3434
        %v3436 = vmul.f32 %v3435, 1.442695
        %v3437 = vpow.pop %v3436
        %v3438 = vsel %vm777, %v3437, 0.0
        %3439 = vadd.xlane.f32.xlu0 %v3438
        %v3440 = vpop.xlane.xlu0 %3439
        %v3441 = vrcp.pop %v3440
        %v3442 = vmul.f32 %v3437, %v3441
        %3443 = vrot.lane.b32.xlu0 %v3336, 64
        %v3444 = vpop.permute.xlu0 %3443
        %v3447 = vsel %vm777, %v3442, 0
        %3449 = vmatprep.subr.mxu0 0.0
        %3450 = vmatpush1.msra.mxu0 %v3444
        %3451 = vmatprep.subr.mxu0 0.0
        %3452 = vmatpush1.msra.mxu0 0.0
        %3453 = vmatprep.subr.mxu0 0.0
        %3454 = vmatpush1.msra.mxu0 0.0
        %3455 = vmatprep.subr.mxu0 0.0
        %3456 = vmatpush1.msra.mxu0 0.0
        %3457 = vmatprep.subr.mxu0 0.0
        %3458 = vmatpush1.msra.mxu0 0.0
        %3459 = vmatprep.subr.mxu0 0.0
        %3460 = vmatpush1.msra.mxu0 0.0
        %3461 = vmatprep.subr.mxu0 0.0
        %3462 = vmatpush1.msra.mxu0 0.0
        %3463 = vmatprep.subr.mxu0 0.0
        %3464 = vmatpush1.msra.mxu0 0.0
        %3465 = vmatprep.subr.mxu0 0.0
        %3466 = vmatpush1.msra.mxu0 0.0
        %3467 = vmatprep.subr.mxu0 0.0
        %3468 = vmatpush1.msra.mxu0 0.0
        %3469 = vmatprep.subr.mxu0 0.0
        %3470 = vmatpush1.msra.mxu0 0.0
        %3471 = vmatprep.subr.mxu0 0.0
        %3472 = vmatpush1.msra.mxu0 0.0
        %3473 = vmatprep.subr.mxu0 0.0
        %3474 = vmatpush1.msra.mxu0 0.0
        %3475 = vmatprep.subr.mxu0 0.0
        %3476 = vmatpush1.msra.mxu0 0.0
        %3477 = vmatprep.subr.mxu0 0.0
        %3478 = vmatpush1.msra.mxu0 0.0
        %3479 = vmatprep.subr.mxu0 0.0
        %3480 = vmatpush1.msra.mxu0 0.0
        %3481 = vmatprep.subr.mxu0 0.0
        %3482 = vmatpush1.msra.mxu0 0.0
        %3483 = vmatprep.subr.mxu0 0.0
        %3484 = vmatpush1.msra.mxu0 0.0
        %3485 = vmatprep.subr.mxu0 0.0
        %3486 = vmatpush1.msra.mxu0 0.0
        %3487 = vmatprep.subr.mxu0 0.0
        %3488 = vmatpush1.msra.mxu0 0.0
        %3489 = vmatprep.subr.mxu0 0.0
        %3490 = vmatpush1.msra.mxu0 0.0
        %3491 = vmatprep.subr.mxu0 0.0
        %3492 = vmatpush1.msra.mxu0 0.0
        %3493 = vmatprep.subr.mxu0 0.0
        %3494 = vmatpush1.msra.mxu0 0.0
        %3495 = vmatprep.subr.mxu0 0.0
        %3496 = vmatpush1.msra.mxu0 0.0
        %3497 = vmatprep.subr.mxu0 0.0
        %3498 = vmatpush1.msra.mxu0 0.0
        %3499 = vmatprep.subr.mxu0 0.0
        %3500 = vmatpush1.msra.mxu0 0.0
        %3501 = vmatprep.subr.mxu0 0.0
        %3502 = vmatpush1.msra.mxu0 0.0
        %3503 = vmatprep.subr.mxu0 0.0
        %3504 = vmatpush1.msra.mxu0 0.0
        %3505 = vmatprep.subr.mxu0 0.0
        %3506 = vmatpush1.msra.mxu0 0.0
        %3507 = vmatprep.subr.mxu0 0.0
        %3508 = vmatpush1.msra.mxu0 0.0
        %3509 = vmatprep.subr.mxu0 0.0
        %3510 = vmatpush1.msra.mxu0 0.0
        %3511 = vmatprep.subr.mxu0 0.0
        %3512 = vmatpush1.msra.mxu0 0.0
        %3513 = vmatprep.mubr.f32.mxu0 0.0
        %3514 = vmatmul.mubr.f32.gmra.mrb[0].mxu0 %v3447
        %v3515 = vpop.f32.mrb[0].mxu0
        %v3516 = vadd.f32 0.0, %v3515
        %v3517 = vpop.f32.mrb[0].mxu0
        %3518 = vdwg.mxu0
        %v3520 = vsel %vm777, %v3516, 0
        %3522 = vmatprep.subr.mxu0 0.0
        %3523 = vmatpush1.msra.mxu0 %v3340
        %3524 = vmatprep.subr.mxu0 0.0
        %3525 = vmatpush1.msra.mxu0 0.0
        %3526 = vmatprep.subr.mxu0 0.0
        %3527 = vmatpush1.msra.mxu0 0.0
        %3528 = vmatprep.subr.mxu0 0.0
        %3529 = vmatpush1.msra.mxu0 0.0
        %3530 = vmatprep.subr.mxu0 0.0
        %3531 = vmatpush1.msra.mxu0 0.0
        %3532 = vmatprep.subr.mxu0 0.0
        %3533 = vmatpush1.msra.mxu0 0.0
        %3534 = vmatprep.subr.mxu0 0.0
        %3535 = vmatpush1.msra.mxu0 0.0
        %3536 = vmatprep.subr.mxu0 0.0
        %3537 = vmatpush1.msra.mxu0 0.0
        %3538 = vmatprep.subr.mxu0 0.0
        %3539 = vmatpush1.msra.mxu0 0.0
        %3540 = vmatprep.subr.mxu0 0.0
        %3541 = vmatpush1.msra.mxu0 0.0
        %3542 = vmatprep.subr.mxu0 0.0
        %3543 = vmatpush1.msra.mxu0 0.0
        %3544 = vmatprep.subr.mxu0 0.0
        %3545 = vmatpush1.msra.mxu0 0.0
        %3546 = vmatprep.subr.mxu0 0.0
        %3547 = vmatpush1.msra.mxu0 0.0
        %3548 = vmatprep.subr.mxu0 0.0
        %3549 = vmatpush1.msra.mxu0 0.0
        %3550 = vmatprep.subr.mxu0 0.0
        %3551 = vmatpush1.msra.mxu0 0.0
        %3552 = vmatprep.subr.mxu0 0.0
        %3553 = vmatpush1.msra.mxu0 0.0
        %3554 = vmatprep.subr.mxu0 0.0
        %3555 = vmatpush1.msra.mxu0 0.0
        %3556 = vmatprep.subr.mxu0 0.0
        %3557 = vmatpush1.msra.mxu0 0.0
        %3558 = vmatprep.subr.mxu0 0.0
        %3559 = vmatpush1.msra.mxu0 0.0
        %3560 = vmatprep.subr.mxu0 0.0
        %3561 = vmatpush1.msra.mxu0 0.0
        %3562 = vmatprep.subr.mxu0 0.0
        %3563 = vmatpush1.msra.mxu0 0.0
        %3564 = vmatprep.subr.mxu0 0.0
        %3565 = vmatpush1.msra.mxu0 0.0
        %3566 = vmatprep.subr.mxu0 0.0
        %3567 = vmatpush1.msra.mxu0 0.0
        %3568 = vmatprep.subr.mxu0 0.0
        %3569 = vmatpush1.msra.mxu0 0.0
        %3570 = vmatprep.subr.mxu0 0.0
        %3571 = vmatpush1.msra.mxu0 0.0
        %3572 = vmatprep.subr.mxu0 0.0
        %3573 = vmatpush1.msra.mxu0 0.0
        %3574 = vmatprep.subr.mxu0 0.0
        %3575 = vmatpush1.msra.mxu0 0.0
        %3576 = vmatprep.subr.mxu0 0.0
        %3577 = vmatpush1.msra.mxu0 0.0
        %3578 = vmatprep.subr.mxu0 0.0
        %3579 = vmatpush1.msra.mxu0 0.0
        %3580 = vmatprep.subr.mxu0 0.0
        %3581 = vmatpush1.msra.mxu0 0.0
        %3582 = vmatprep.subr.mxu0 0.0
        %3583 = vmatpush1.msra.mxu0 0.0
        %3584 = vmatprep.subr.mxu0 0.0
        %3585 = vmatpush1.msra.mxu0 0.0
        %3586 = vmatprep.mubr.f32.mxu0 0.0
        %3587 = vmatmul.mubr.f32.gmra.mrb[0].mxu0 %v3520
        %v3588 = vpop.f32.mrb[0].mxu0
        %v3589 = vadd.f32 0.0, %v3588
        %v3590 = vpop.f32.mrb[0].mxu0
        %3591 = vdwg.mxu0
        %v3592 = vadd.f32 %v3352, %v3589
        %3593 = vrot.lane.b32.xlu0 %v3336, 120
        %v3594 = vpop.permute.xlu0 %3593
        %3595 = vrot.lane.b32.xlu0 %v3336, 88
        %v3596 = vpop.permute.xlu0 %3595
        %v3597 = vsel %vm777, %v3594, 0
        %v3599 = vsel %vm777, %v3596, 0
        %3601 = vmatprep.subr.mxu0 0.0
        %3602 = vmatpush1.xpose.msra.mxu0 %v3599
        %3603 = vmatprep.subr.mxu0 0.0
        %3604 = vmatpush1.xpose.msra.mxu0 0.0
        %3605 = vmatprep.subr.mxu0 0.0
        %3606 = vmatpush1.xpose.msra.mxu0 0.0
        %3607 = vmatprep.subr.mxu0 0.0
        %3608 = vmatpush1.xpose.msra.mxu0 0.0
        %3609 = vmatprep.subr.mxu0 0.0
        %3610 = vmatpush1.xpose.msra.mxu0 0.0
        %3611 = vmatprep.subr.mxu0 0.0
        %3612 = vmatpush1.xpose.msra.mxu0 0.0
        %3613 = vmatprep.subr.mxu0 0.0
        %3614 = vmatpush1.xpose.msra.mxu0 0.0
        %3615 = vmatprep.subr.mxu0 0.0
        %3616 = vmatpush1.xpose.msra.mxu0 0.0
        %3617 = vmatprep.subr.mxu0 0.0
        %3618 = vmatpush1.xpose.msra.mxu0 0.0
        %3619 = vmatprep.subr.mxu0 0.0
        %3620 = vmatpush1.xpose.msra.mxu0 0.0
        %3621 = vmatprep.subr.mxu0 0.0
        %3622 = vmatpush1.xpose.msra.mxu0 0.0
        %3623 = vmatprep.subr.mxu0 0.0
        %3624 = vmatpush1.xpose.msra.mxu0 0.0
        %3625 = vmatprep.subr.mxu0 0.0
        %3626 = vmatpush1.xpose.msra.mxu0 0.0
        %3627 = vmatprep.subr.mxu0 0.0
        %3628 = vmatpush1.xpose.msra.mxu0 0.0
        %3629 = vmatprep.subr.mxu0 0.0
        %3630 = vmatpush1.xpose.msra.mxu0 0.0
        %3631 = vmatprep.subr.mxu0 0.0
        %3632 = vmatpush1.xpose.msra.mxu0 0.0
        %3633 = vmatprep.subr.mxu0 0.0
        %3634 = vmatpush1.xpose.msra.mxu0 0.0
        %3635 = vmatprep.subr.mxu0 0.0
        %3636 = vmatpush1.xpose.msra.mxu0 0.0
        %3637 = vmatprep.subr.mxu0 0.0
        %3638 = vmatpush1.xpose.msra.mxu0 0.0
        %3639 = vmatprep.subr.mxu0 0.0
        %3640 = vmatpush1.xpose.msra.mxu0 0.0
        %3641 = vmatprep.subr.mxu0 0.0
        %3642 = vmatpush1.xpose.msra.mxu0 0.0
        %3643 = vmatprep.subr.mxu0 0.0
        %3644 = vmatpush1.xpose.msra.mxu0 0.0
        %3645 = vmatprep.subr.mxu0 0.0
        %3646 = vmatpush1.xpose.msra.mxu0 0.0
        %3647 = vmatprep.subr.mxu0 0.0
        %3648 = vmatpush1.xpose.msra.mxu0 0.0
        %3649 = vmatprep.subr.mxu0 0.0
        %3650 = vmatpush1.xpose.msra.mxu0 0.0
        %3651 = vmatprep.subr.mxu0 0.0
        %3652 = vmatpush1.xpose.msra.mxu0 0.0
        %3653 = vmatprep.subr.mxu0 0.0
        %3654 = vmatpush1.xpose.msra.mxu0 0.0
        %3655 = vmatprep.subr.mxu0 0.0
        %3656 = vmatpush1.xpose.msra.mxu0 0.0
        %3657 = vmatprep.subr.mxu0 0.0
        %3658 = vmatpush1.xpose.msra.mxu0 0.0
        %3659 = vmatprep.subr.mxu0 0.0
        %3660 = vmatpush1.xpose.msra.mxu0 0.0
        %3661 = vmatprep.subr.mxu0 0.0
        %3662 = vmatpush1.xpose.msra.mxu0 0.0
        %3663 = vmatprep.subr.mxu0 0.0
        %3664 = vmatpush1.xpose.msra.mxu0 0.0
        %3665 = vmatprep.mubr.f32.mxu0 0.0
        %3666 = vmatmul.mubr.f32.gmra.mrb[0].mxu0 %v3597
        %v3667 = vpop.f32.mrb[0].mxu0
        %v3668 = vadd.f32 0.0, %v3667
        %v3669 = vpop.f32.mrb[0].mxu0
        %3670 = vdwg.mxu0
        %v3671 = vmul.f32 %v3668, 0.35355338
        %v3672 = vadd.f32 %v3671, %v675
        %v3673 = vsel %vm777, %v3672, -inf
        %3674 = vmax.xlane.f32.xlu0 %v3673
        %v3675 = vpop.xlane.xlu0 %3674
        %v3676 = vsub.f32 %v3672, %v3675
        %v3677 = vmul.f32 %v3676, 1.442695
        %v3678 = vpow.pop %v3677
        %v3679 = vsel %vm777, %v3678, 0.0
        %3680 = vadd.xlane.f32.xlu0 %v3679
        %v3681 = vpop.xlane.xlu0 %3680
        %v3682 = vrcp.pop %v3681
        %v3683 = vmul.f32 %v3678, %v3682
        %3684 = vrot.lane.b32.xlu0 %v3336, 56
        %v3685 = vpop.permute.xlu0 %3684
        %v3688 = vsel %vm777, %v3683, 0
        %3690 = vmatprep.subr.mxu0 0.0
        %3691 = vmatpush1.msra.mxu0 %v3685
        %3692 = vmatprep.subr.mxu0 0.0
        %3693 = vmatpush1.msra.mxu0 0.0
        %3694 = vmatprep.subr.mxu0 0.0
        %3695 = vmatpush1.msra.mxu0 0.0
        %3696 = vmatprep.subr.mxu0 0.0
        %3697 = vmatpush1.msra.mxu0 0.0
        %3698 = vmatprep.subr.mxu0 0.0
        %3699 = vmatpush1.msra.mxu0 0.0
        %3700 = vmatprep.subr.mxu0 0.0
        %3701 = vmatpush1.msra.mxu0 0.0
        %3702 = vmatprep.subr.mxu0 0.0
        %3703 = vmatpush1.msra.mxu0 0.0
        %3704 = vmatprep.subr.mxu0 0.0
        %3705 = vmatpush1.msra.mxu0 0.0
        %3706 = vmatprep.subr.mxu0 0.0
        %3707 = vmatpush1.msra.mxu0 0.0
        %3708 = vmatprep.subr.mxu0 0.0
        %3709 = vmatpush1.msra.mxu0 0.0
        %3710 = vmatprep.subr.mxu0 0.0
        %3711 = vmatpush1.msra.mxu0 0.0
        %3712 = vmatprep.subr.mxu0 0.0
        %3713 = vmatpush1.msra.mxu0 0.0
        %3714 = vmatprep.subr.mxu0 0.0
        %3715 = vmatpush1.msra.mxu0 0.0
        %3716 = vmatprep.subr.mxu0 0.0
        %3717 = vmatpush1.msra.mxu0 0.0
        %3718 = vmatprep.subr.mxu0 0.0
        %3719 = vmatpush1.msra.mxu0 0.0
        %3720 = vmatprep.subr.mxu0 0.0
        %3721 = vmatpush1.msra.mxu0 0.0
        %3722 = vmatprep.subr.mxu0 0.0
        %3723 = vmatpush1.msra.mxu0 0.0
        %3724 = vmatprep.subr.mxu0 0.0
        %3725 = vmatpush1.msra.mxu0 0.0
        %3726 = vmatprep.subr.mxu0 0.0
        %3727 = vmatpush1.msra.mxu0 0.0
        %3728 = vmatprep.subr.mxu0 0.0
        %3729 = vmatpush1.msra.mxu0 0.0
        %3730 = vmatprep.subr.mxu0 0.0
        %3731 = vmatpush1.msra.mxu0 0.0
        %3732 = vmatprep.subr.mxu0 0.0
        %3733 = vmatpush1.msra.mxu0 0.0
        %3734 = vmatprep.subr.mxu0 0.0
        %3735 = vmatpush1.msra.mxu0 0.0
        %3736 = vmatprep.subr.mxu0 0.0
        %3737 = vmatpush1.msra.mxu0 0.0
        %3738 = vmatprep.subr.mxu0 0.0
        %3739 = vmatpush1.msra.mxu0 0.0
        %3740 = vmatprep.subr.mxu0 0.0
        %3741 = vmatpush1.msra.mxu0 0.0
        %3742 = vmatprep.subr.mxu0 0.0
        %3743 = vmatpush1.msra.mxu0 0.0
        %3744 = vmatprep.subr.mxu0 0.0
        %3745 = vmatpush1.msra.mxu0 0.0
        %3746 = vmatprep.subr.mxu0 0.0
        %3747 = vmatpush1.msra.mxu0 0.0
        %3748 = vmatprep.subr.mxu0 0.0
        %3749 = vmatpush1.msra.mxu0 0.0
        %3750 = vmatprep.subr.mxu0 0.0
        %3751 = vmatpush1.msra.mxu0 0.0
        %3752 = vmatprep.subr.mxu0 0.0
        %3753 = vmatpush1.msra.mxu0 0.0
        %3754 = vmatprep.mubr.f32.mxu0 0.0
        %3755 = vmatmul.mubr.f32.gmra.mrb[0].mxu0 %v3688
        %v3756 = vpop.f32.mrb[0].mxu0
        %v3757 = vadd.f32 0.0, %v3756
        %v3758 = vpop.f32.mrb[0].mxu0
        %3759 = vdwg.mxu0
        %v3761 = vsel %vm777, %v3757, 0
        %3763 = vmatprep.subr.mxu0 0.0
        %3764 = vmatpush1.msra.mxu0 %v3341
        %3765 = vmatprep.subr.mxu0 0.0
        %3766 = vmatpush1.msra.mxu0 0.0
        %3767 = vmatprep.subr.mxu0 0.0
        %3768 = vmatpush1.msra.mxu0 0.0
        %3769 = vmatprep.subr.mxu0 0.0
        %3770 = vmatpush1.msra.mxu0 0.0
        %3771 = vmatprep.subr.mxu0 0.0
        %3772 = vmatpush1.msra.mxu0 0.0
        %3773 = vmatprep.subr.mxu0 0.0
        %3774 = vmatpush1.msra.mxu0 0.0
        %3775 = vmatprep.subr.mxu0 0.0
        %3776 = vmatpush1.msra.mxu0 0.0
        %3777 = vmatprep.subr.mxu0 0.0
        %3778 = vmatpush1.msra.mxu0 0.0
        %3779 = vmatprep.subr.mxu0 0.0
        %3780 = vmatpush1.msra.mxu0 0.0
        %3781 = vmatprep.subr.mxu0 0.0
        %3782 = vmatpush1.msra.mxu0 0.0
        %3783 = vmatprep.subr.mxu0 0.0
        %3784 = vmatpush1.msra.mxu0 0.0
        %3785 = vmatprep.subr.mxu0 0.0
        %3786 = vmatpush1.msra.mxu0 0.0
        %3787 = vmatprep.subr.mxu0 0.0
        %3788 = vmatpush1.msra.mxu0 0.0
        %3789 = vmatprep.subr.mxu0 0.0
        %3790 = vmatpush1.msra.mxu0 0.0
        %3791 = vmatprep.subr.mxu0 0.0
        %3792 = vmatpush1.msra.mxu0 0.0
        %3793 = vmatprep.subr.mxu0 0.0
        %3794 = vmatpush1.msra.mxu0 0.0
        %3795 = vmatprep.subr.mxu0 0.0
        %3796 = vmatpush1.msra.mxu0 0.0
        %3797 = vmatprep.subr.mxu0 0.0
        %3798 = vmatpush1.msra.mxu0 0.0
        %3799 = vmatprep.subr.mxu0 0.0
        %3800 = vmatpush1.msra.mxu0 0.0
        %3801 = vmatprep.subr.mxu0 0.0
        %3802 = vmatpush1.msra.mxu0 0.0
        %3803 = vmatprep.subr.mxu0 0.0
        %3804 = vmatpush1.msra.mxu0 0.0
        %3805 = vmatprep.subr.mxu0 0.0
        %3806 = vmatpush1.msra.mxu0 0.0
        %3807 = vmatprep.subr.mxu0 0.0
        %3808 = vmatpush1.msra.mxu0 0.0
        %3809 = vmatprep.subr.mxu0 0.0
        %3810 = vmatpush1.msra.mxu0 0.0
        %3811 = vmatprep.subr.mxu0 0.0
        %3812 = vmatpush1.msra.mxu0 0.0
        %3813 = vmatprep.subr.mxu0 0.0
        %3814 = vmatpush1.msra.mxu0 0.0
        %3815 = vmatprep.subr.mxu0 0.0
        %3816 = vmatpush1.msra.mxu0 0.0
        %3817 = vmatprep.subr.mxu0 0.0
        %3818 = vmatpush1.msra.mxu0 0.0
        %3819 = vmatprep.subr.mxu0 0.0
        %3820 = vmatpush1.msra.mxu0 0.0
        %3821 = vmatprep.subr.mxu0 0.0
        %3822 = vmatpush1.msra.mxu0 0.0
        %3823 = vmatprep.subr.mxu0 0.0
        %3824 = vmatpush1.msra.mxu0 0.0
        %3825 = vmatprep.subr.mxu0 0.0
        %3826 = vmatpush1.msra.mxu0 0.0
        %3827 = vmatprep.mubr.f32.mxu0 0.0
        %3828 = vmatmul.mubr.f32.gmra.mrb[0].mxu0 %v3761
        %v3829 = vpop.f32.mrb[0].mxu0
        %v3830 = vadd.f32 0.0, %v3829
        %v3831 = vpop.f32.mrb[0].mxu0
        %3832 = vdwg.mxu0
        %v3833 = vadd.f32 %v3592, %v3830
        %3834 = vrot.lane.b32.xlu0 %v3336, 112
        %v3835 = vpop.permute.xlu0 %3834
        %3836 = vrot.lane.b32.xlu0 %v3336, 80
        %v3837 = vpop.permute.xlu0 %3836
        %v3838 = vsel %vm777, %v3835, 0
        %v3840 = vsel %vm777, %v3837, 0
        %3842 = vmatprep.subr.mxu0 0.0
        %3843 = vmatpush1.xpose.msra.mxu0 %v3840
        %3844 = vmatprep.subr.mxu0 0.0
        %3845 = vmatpush1.xpose.msra.mxu0 0.0
        %3846 = vmatprep.subr.mxu0 0.0
        %3847 = vmatpush1.xpose.msra.mxu0 0.0
        %3848 = vmatprep.subr.mxu0 0.0
        %3849 = vmatpush1.xpose.msra.mxu0 0.0
        %3850 = vmatprep.subr.mxu0 0.0
        %3851 = vmatpush1.xpose.msra.mxu0 0.0
        %3852 = vmatprep.subr.mxu0 0.0
        %3853 = vmatpush1.xpose.msra.mxu0 0.0
        %3854 = vmatprep.subr.mxu0 0.0
        %3855 = vmatpush1.xpose.msra.mxu0 0.0
        %3856 = vmatprep.subr.mxu0 0.0
        %3857 = vmatpush1.xpose.msra.mxu0 0.0
        %3858 = vmatprep.subr.mxu0 0.0
        %3859 = vmatpush1.xpose.msra.mxu0 0.0
        %3860 = vmatprep.subr.mxu0 0.0
        %3861 = vmatpush1.xpose.msra.mxu0 0.0
        %3862 = vmatprep.subr.mxu0 0.0
        %3863 = vmatpush1.xpose.msra.mxu0 0.0
        %3864 = vmatprep.subr.mxu0 0.0
        %3865 = vmatpush1.xpose.msra.mxu0 0.0
        %3866 = vmatprep.subr.mxu0 0.0
        %3867 = vmatpush1.xpose.msra.mxu0 0.0
        %3868 = vmatprep.subr.mxu0 0.0
        %3869 = vmatpush1.xpose.msra.mxu0 0.0
        %3870 = vmatprep.subr.mxu0 0.0
        %3871 = vmatpush1.xpose.msra.mxu0 0.0
        %3872 = vmatprep.subr.mxu0 0.0
        %3873 = vmatpush1.xpose.msra.mxu0 0.0
        %3874 = vmatprep.subr.mxu0 0.0
        %3875 = vmatpush1.xpose.msra.mxu0 0.0
        %3876 = vmatprep.subr.mxu0 0.0
        %3877 = vmatpush1.xpose.msra.mxu0 0.0
        %3878 = vmatprep.subr.mxu0 0.0
        %3879 = vmatpush1.xpose.msra.mxu0 0.0
        %3880 = vmatprep.subr.mxu0 0.0
        %3881 = vmatpush1.xpose.msra.mxu0 0.0
        %3882 = vmatprep.subr.mxu0 0.0
        %3883 = vmatpush1.xpose.msra.mxu0 0.0
        %3884 = vmatprep.subr.mxu0 0.0
        %3885 = vmatpush1.xpose.msra.mxu0 0.0
        %3886 = vmatprep.subr.mxu0 0.0
        %3887 = vmatpush1.xpose.msra.mxu0 0.0
        %3888 = vmatprep.subr.mxu0 0.0
        %3889 = vmatpush1.xpose.msra.mxu0 0.0
        %3890 = vmatprep.subr.mxu0 0.0
        %3891 = vmatpush1.xpose.msra.mxu0 0.0
        %3892 = vmatprep.subr.mxu0 0.0
        %3893 = vmatpush1.xpose.msra.mxu0 0.0
        %3894 = vmatprep.subr.mxu0 0.0
        %3895 = vmatpush1.xpose.msra.mxu0 0.0
        %3896 = vmatprep.subr.mxu0 0.0
        %3897 = vmatpush1.xpose.msra.mxu0 0.0
        %3898 = vmatprep.subr.mxu0 0.0
        %3899 = vmatpush1.xpose.msra.mxu0 0.0
        %3900 = vmatprep.subr.mxu0 0.0
        %3901 = vmatpush1.xpose.msra.mxu0 0.0
        %3902 = vmatprep.subr.mxu0 0.0
        %3903 = vmatpush1.xpose.msra.mxu0 0.0
        %3904 = vmatprep.subr.mxu0 0.0
        %3905 = vmatpush1.xpose.msra.mxu0 0.0
        %3906 = vmatprep.mubr.f32.mxu0 0.0
        %3907 = vmatmul.mubr.f32.gmra.mrb[0].mxu0 %v3838
        %v3908 = vpop.f32.mrb[0].mxu0
        %v3909 = vadd.f32 0.0, %v3908
        %v3910 = vpop.f32.mrb[0].mxu0
        %3911 = vdwg.mxu0
        %v3912 = vmul.f32 %v3909, 0.35355338
        %v3913 = vadd.f32 %v3912, %v675
        %v3914 = vsel %vm777, %v3913, -inf
        %3915 = vmax.xlane.f32.xlu0 %v3914
        %v3916 = vpop.xlane.xlu0 %3915
        %v3917 = vsub.f32 %v3913, %v3916
        %v3918 = vmul.f32 %v3917, 1.442695
        %v3919 = vpow.pop %v3918
        %v3920 = vsel %vm777, %v3919, 0.0
        %3921 = vadd.xlane.f32.xlu0 %v3920
        %v3922 = vpop.xlane.xlu0 %3921
        %v3923 = vrcp.pop %v3922
        %v3924 = vmul.f32 %v3919, %v3923
        %3925 = vrot.lane.b32.xlu0 %v3336, 48
        %v3926 = vpop.permute.xlu0 %3925
        %v3929 = vsel %vm777, %v3924, 0
        %3931 = vmatprep.subr.mxu0 0.0
        %3932 = vmatpush1.msra.mxu0 %v3926
        %3933 = vmatprep.subr.mxu0 0.0
        %3934 = vmatpush1.msra.mxu0 0.0
        %3935 = vmatprep.subr.mxu0 0.0
        %3936 = vmatpush1.msra.mxu0 0.0
        %3937 = vmatprep.subr.mxu0 0.0
        %3938 = vmatpush1.msra.mxu0 0.0
        %3939 = vmatprep.subr.mxu0 0.0
        %3940 = vmatpush1.msra.mxu0 0.0
        %3941 = vmatprep.subr.mxu0 0.0
        %3942 = vmatpush1.msra.mxu0 0.0
        %3943 = vmatprep.subr.mxu0 0.0
        %3944 = vmatpush1.msra.mxu0 0.0
        %3945 = vmatprep.subr.mxu0 0.0
        %3946 = vmatpush1.msra.mxu0 0.0
        %3947 = vmatprep.subr.mxu0 0.0
        %3948 = vmatpush1.msra.mxu0 0.0
        %3949 = vmatprep.subr.mxu0 0.0
        %3950 = vmatpush1.msra.mxu0 0.0
        %3951 = vmatprep.subr.mxu0 0.0
        %3952 = vmatpush1.msra.mxu0 0.0
        %3953 = vmatprep.subr.mxu0 0.0
        %3954 = vmatpush1.msra.mxu0 0.0
        %3955 = vmatprep.subr.mxu0 0.0
        %3956 = vmatpush1.msra.mxu0 0.0
        %3957 = vmatprep.subr.mxu0 0.0
        %3958 = vmatpush1.msra.mxu0 0.0
        %3959 = vmatprep.subr.mxu0 0.0
        %3960 = vmatpush1.msra.mxu0 0.0
        %3961 = vmatprep.subr.mxu0 0.0
        %3962 = vmatpush1.msra.mxu0 0.0
        %3963 = vmatprep.subr.mxu0 0.0
        %3964 = vmatpush1.msra.mxu0 0.0
        %3965 = vmatprep.subr.mxu0 0.0
        %3966 = vmatpush1.msra.mxu0 0.0
        %3967 = vmatprep.subr.mxu0 0.0
        %3968 = vmatpush1.msra.mxu0 0.0
        %3969 = vmatprep.subr.mxu0 0.0
        %3970 = vmatpush1.msra.mxu0 0.0
        %3971 = vmatprep.subr.mxu0 0.0
        %3972 = vmatpush1.msra.mxu0 0.0
        %3973 = vmatprep.subr.mxu0 0.0
        %3974 = vmatpush1.msra.mxu0 0.0
        %3975 = vmatprep.subr.mxu0 0.0
        %3976 = vmatpush1.msra.mxu0 0.0
        %3977 = vmatprep.subr.mxu0 0.0
        %3978 = vmatpush1.msra.mxu0 0.0
        %3979 = vmatprep.subr.mxu0 0.0
        %3980 = vmatpush1.msra.mxu0 0.0
        %3981 = vmatprep.subr.mxu0 0.0
        %3982 = vmatpush1.msra.mxu0 0.0
        %3983 = vmatprep.subr.mxu0 0.0
        %3984 = vmatpush1.msra.mxu0 0.0
        %3985 = vmatprep.subr.mxu0 0.0
        %3986 = vmatpush1.msra.mxu0 0.0
        %3987 = vmatprep.subr.mxu0 0.0
        %3988 = vmatpush1.msra.mxu0 0.0
        %3989 = vmatprep.subr.mxu0 0.0
        %3990 = vmatpush1.msra.mxu0 0.0
        %3991 = vmatprep.subr.mxu0 0.0
        %3992 = vmatpush1.msra.mxu0 0.0
        %3993 = vmatprep.subr.mxu0 0.0
        %3994 = vmatpush1.msra.mxu0 0.0
        %3995 = vmatprep.mubr.f32.mxu0 0.0
        %3996 = vmatmul.mubr.f32.gmra.mrb[0].mxu0 %v3929
        %v3997 = vpop.f32.mrb[0].mxu0
        %v3998 = vadd.f32 0.0, %v3997
        %v3999 = vpop.f32.mrb[0].mxu0
        %4000 = vdwg.mxu0
        %v4002 = vsel %vm777, %v3998, 0
        %4004 = vmatprep.subr.mxu0 0.0
        %4005 = vmatpush1.msra.mxu0 %v3342
        %4006 = vmatprep.subr.mxu0 0.0
        %4007 = vmatpush1.msra.mxu0 0.0
        %4008 = vmatprep.subr.mxu0 0.0
        %4009 = vmatpush1.msra.mxu0 0.0
        %4010 = vmatprep.subr.mxu0 0.0
        %4011 = vmatpush1.msra.mxu0 0.0
        %4012 = vmatprep.subr.mxu0 0.0
        %4013 = vmatpush1.msra.mxu0 0.0
        %4014 = vmatprep.subr.mxu0 0.0
        %4015 = vmatpush1.msra.mxu0 0.0
        %4016 = vmatprep.subr.mxu0 0.0
        %4017 = vmatpush1.msra.mxu0 0.0
        %4018 = vmatprep.subr.mxu0 0.0
        %4019 = vmatpush1.msra.mxu0 0.0
        %4020 = vmatprep.subr.mxu0 0.0
        %4021 = vmatpush1.msra.mxu0 0.0
        %4022 = vmatprep.subr.mxu0 0.0
        %4023 = vmatpush1.msra.mxu0 0.0
        %4024 = vmatprep.subr.mxu0 0.0
        %4025 = vmatpush1.msra.mxu0 0.0
        %4026 = vmatprep.subr.mxu0 0.0
        %4027 = vmatpush1.msra.mxu0 0.0
        %4028 = vmatprep.subr.mxu0 0.0
        %4029 = vmatpush1.msra.mxu0 0.0
        %4030 = vmatprep.subr.mxu0 0.0
        %4031 = vmatpush1.msra.mxu0 0.0
        %4032 = vmatprep.subr.mxu0 0.0
        %4033 = vmatpush1.msra.mxu0 0.0
        %4034 = vmatprep.subr.mxu0 0.0
        %4035 = vmatpush1.msra.mxu0 0.0
        %4036 = vmatprep.subr.mxu0 0.0
        %4037 = vmatpush1.msra.mxu0 0.0
        %4038 = vmatprep.subr.mxu0 0.0
        %4039 = vmatpush1.msra.mxu0 0.0
        %4040 = vmatprep.subr.mxu0 0.0
        %4041 = vmatpush1.msra.mxu0 0.0
        %4042 = vmatprep.subr.mxu0 0.0
        %4043 = vmatpush1.msra.mxu0 0.0
        %4044 = vmatprep.subr.mxu0 0.0
        %4045 = vmatpush1.msra.mxu0 0.0
        %4046 = vmatprep.subr.mxu0 0.0
        %4047 = vmatpush1.msra.mxu0 0.0
        %4048 = vmatprep.subr.mxu0 0.0
        %4049 = vmatpush1.msra.mxu0 0.0
        %4050 = vmatprep.subr.mxu0 0.0
        %4051 = vmatpush1.msra.mxu0 0.0
        %4052 = vmatprep.subr.mxu0 0.0
        %4053 = vmatpush1.msra.mxu0 0.0
        %4054 = vmatprep.subr.mxu0 0.0
        %4055 = vmatpush1.msra.mxu0 0.0
        %4056 = vmatprep.subr.mxu0 0.0
        %4057 = vmatpush1.msra.mxu0 0.0
        %4058 = vmatprep.subr.mxu0 0.0
        %4059 = vmatpush1.msra.mxu0 0.0
        %4060 = vmatprep.subr.mxu0 0.0
        %4061 = vmatpush1.msra.mxu0 0.0
        %4062 = vmatprep.subr.mxu0 0.0
        %4063 = vmatpush1.msra.mxu0 0.0
        %4064 = vmatprep.subr.mxu0 0.0
        %4065 = vmatpush1.msra.mxu0 0.0
        %4066 = vmatprep.subr.mxu0 0.0
        %4067 = vmatpush1.msra.mxu0 0.0
        %4068 = vmatprep.mubr.f32.mxu0 0.0
        %4069 = vmatmul.mubr.f32.gmra.mrb[0].mxu0 %v4002
        %v4070 = vpop.f32.mrb[0].mxu0
        %v4071 = vadd.f32 0.0, %v4070
        %v4072 = vpop.f32.mrb[0].mxu0
        %4073 = vdwg.mxu0
        %v4074 = vadd.f32 %v3833, %v4071
        %4075 = vrot.lane.b32.xlu0 %v3336, 104
        %v4076 = vpop.permute.xlu0 %4075
        %4077 = vrot.lane.b32.xlu0 %v3336, 72
        %v4078 = vpop.permute.xlu0 %4077
        %v4079 = vsel %vm777, %v4076, 0
        %v4081 = vsel %vm777, %v4078, 0
        %4083 = vmatprep.subr.mxu0 0.0
        %4084 = vmatpush1.xpose.msra.mxu0 %v4081
        %4085 = vmatprep.subr.mxu0 0.0
        %4086 = vmatpush1.xpose.msra.mxu0 0.0
        %4087 = vmatprep.subr.mxu0 0.0
        %4088 = vmatpush1.xpose.msra.mxu0 0.0
        %4089 = vmatprep.subr.mxu0 0.0
        %4090 = vmatpush1.xpose.msra.mxu0 0.0
        %4091 = vmatprep.subr.mxu0 0.0
        %4092 = vmatpush1.xpose.msra.mxu0 0.0
        %4093 = vmatprep.subr.mxu0 0.0
        %4094 = vmatpush1.xpose.msra.mxu0 0.0
        %4095 = vmatprep.subr.mxu0 0.0
        %4096 = vmatpush1.xpose.msra.mxu0 0.0
        %4097 = vmatprep.subr.mxu0 0.0
        %4098 = vmatpush1.xpose.msra.mxu0 0.0
        %4099 = vmatprep.subr.mxu0 0.0
        %4100 = vmatpush1.xpose.msra.mxu0 0.0
        %4101 = vmatprep.subr.mxu0 0.0
        %4102 = vmatpush1.xpose.msra.mxu0 0.0
        %4103 = vmatprep.subr.mxu0 0.0
        %4104 = vmatpush1.xpose.msra.mxu0 0.0
        %4105 = vmatprep.subr.mxu0 0.0
        %4106 = vmatpush1.xpose.msra.mxu0 0.0
        %4107 = vmatprep.subr.mxu0 0.0
        %4108 = vmatpush1.xpose.msra.mxu0 0.0
        %4109 = vmatprep.subr.mxu0 0.0
        %4110 = vmatpush1.xpose.msra.mxu0 0.0
        %4111 = vmatprep.subr.mxu0 0.0
        %4112 = vmatpush1.xpose.msra.mxu0 0.0
        %4113 = vmatprep.subr.mxu0 0.0
        %4114 = vmatpush1.xpose.msra.mxu0 0.0
        %4115 = vmatprep.subr.mxu0 0.0
        %4116 = vmatpush1.xpose.msra.mxu0 0.0
        %4117 = vmatprep.subr.mxu0 0.0
        %4118 = vmatpush1.xpose.msra.mxu0 0.0
        %4119 = vmatprep.subr.mxu0 0.0
        %4120 = vmatpush1.xpose.msra.mxu0 0.0
        %4121 = vmatprep.subr.mxu0 0.0
        %4122 = vmatpush1.xpose.msra.mxu0 0.0
        %4123 = vmatprep.subr.mxu0 0.0
        %4124 = vmatpush1.xpose.msra.mxu0 0.0
        %4125 = vmatprep.subr.mxu0 0.0
        %4126 = vmatpush1.xpose.msra.mxu0 0.0
        %4127 = vmatprep.subr.mxu0 0.0
        %4128 = vmatpush1.xpose.msra.mxu0 0.0
        %4129 = vmatprep.subr.mxu0 0.0
        %4130 = vmatpush1.xpose.msra.mxu0 0.0
        %4131 = vmatprep.subr.mxu0 0.0
        %4132 = vmatpush1.xpose.msra.mxu0 0.0
        %4133 = vmatprep.subr.mxu0 0.0
        %4134 = vmatpush1.xpose.msra.mxu0 0.0
        %4135 = vmatprep.subr.mxu0 0.0
        %4136 = vmatpush1.xpose.msra.mxu0 0.0
        %4137 = vmatprep.subr.mxu0 0.0
        %4138 = vmatpush1.xpose.msra.mxu0 0.0
        %4139 = vmatprep.subr.mxu0 0.0
        %4140 = vmatpush1.xpose.msra.mxu0 0.0
        %4141 = vmatprep.subr.mxu0 0.0
        %4142 = vmatpush1.xpose.msra.mxu0 0.0
        %4143 = vmatprep.subr.mxu0 0.0
        %4144 = vmatpush1.xpose.msra.mxu0 0.0
        %4145 = vmatprep.subr.mxu0 0.0
        %4146 = vmatpush1.xpose.msra.mxu0 0.0
        %4147 = vmatprep.mubr.f32.mxu0 0.0
        %4148 = vmatmul.mubr.f32.gmra.mrb[0].mxu0 %v4079
        %v4149 = vpop.f32.mrb[0].mxu0
        %v4150 = vadd.f32 0.0, %v4149
        %v4151 = vpop.f32.mrb[0].mxu0
        %4152 = vdwg.mxu0
        %v4153 = vmul.f32 %v4150, 0.35355338
        %v4154 = vadd.f32 %v4153, %v675
        %v4155 = vsel %vm777, %v4154, -inf
        %4156 = vmax.xlane.f32.xlu0 %v4155
        %v4157 = vpop.xlane.xlu0 %4156
        %v4158 = vsub.f32 %v4154, %v4157
        %v4159 = vmul.f32 %v4158, 1.442695
        %v4160 = vpow.pop %v4159
        %v4161 = vsel %vm777, %v4160, 0.0
        %4162 = vadd.xlane.f32.xlu0 %v4161
        %v4163 = vpop.xlane.xlu0 %4162
        %v4164 = vrcp.pop %v4163
        %v4165 = vmul.f32 %v4160, %v4164
        %4166 = vrot.lane.b32.xlu0 %v3336, 40
        %v4167 = vpop.permute.xlu0 %4166
        %v4170 = vsel %vm777, %v4165, 0
        %4172 = vmatprep.subr.mxu0 0.0
        %4173 = vmatpush1.msra.mxu0 %v4167
        %4174 = vmatprep.subr.mxu0 0.0
        %4175 = vmatpush1.msra.mxu0 0.0
        %4176 = vmatprep.subr.mxu0 0.0
        %4177 = vmatpush1.msra.mxu0 0.0
        %4178 = vmatprep.subr.mxu0 0.0
        %4179 = vmatpush1.msra.mxu0 0.0
        %4180 = vmatprep.subr.mxu0 0.0
        %4181 = vmatpush1.msra.mxu0 0.0
        %4182 = vmatprep.subr.mxu0 0.0
        %4183 = vmatpush1.msra.mxu0 0.0
        %4184 = vmatprep.subr.mxu0 0.0
        %4185 = vmatpush1.msra.mxu0 0.0
        %4186 = vmatprep.subr.mxu0 0.0
        %4187 = vmatpush1.msra.mxu0 0.0
        %4188 = vmatprep.subr.mxu0 0.0
        %4189 = vmatpush1.msra.mxu0 0.0
        %4190 = vmatprep.subr.mxu0 0.0
        %4191 = vmatpush1.msra.mxu0 0.0
        %4192 = vmatprep.subr.mxu0 0.0
        %4193 = vmatpush1.msra.mxu0 0.0
        %4194 = vmatprep.subr.mxu0 0.0
        %4195 = vmatpush1.msra.mxu0 0.0
        %4196 = vmatprep.subr.mxu0 0.0
        %4197 = vmatpush1.msra.mxu0 0.0
        %4198 = vmatprep.subr.mxu0 0.0
        %4199 = vmatpush1.msra.mxu0 0.0
        %4200 = vmatprep.subr.mxu0 0.0
        %4201 = vmatpush1.msra.mxu0 0.0
        %4202 = vmatprep.subr.mxu0 0.0
        %4203 = vmatpush1.msra.mxu0 0.0
        %4204 = vmatprep.subr.mxu0 0.0
        %4205 = vmatpush1.msra.mxu0 0.0
        %4206 = vmatprep.subr.mxu0 0.0
        %4207 = vmatpush1.msra.mxu0 0.0
        %4208 = vmatprep.subr.mxu0 0.0
        %4209 = vmatpush1.msra.mxu0 0.0
        %4210 = vmatprep.subr.mxu0 0.0
        %4211 = vmatpush1.msra.mxu0 0.0
        %4212 = vmatprep.subr.mxu0 0.0
        %4213 = vmatpush1.msra.mxu0 0.0
        %4214 = vmatprep.subr.mxu0 0.0
        %4215 = vmatpush1.msra.mxu0 0.0
        %4216 = vmatprep.subr.mxu0 0.0
        %4217 = vmatpush1.msra.mxu0 0.0
        %4218 = vmatprep.subr.mxu0 0.0
        %4219 = vmatpush1.msra.mxu0 0.0
        %4220 = vmatprep.subr.mxu0 0.0
        %4221 = vmatpush1.msra.mxu0 0.0
        %4222 = vmatprep.subr.mxu0 0.0
        %4223 = vmatpush1.msra.mxu0 0.0
        %4224 = vmatprep.subr.mxu0 0.0
        %4225 = vmatpush1.msra.mxu0 0.0
        %4226 = vmatprep.subr.mxu0 0.0
        %4227 = vmatpush1.msra.mxu0 0.0
        %4228 = vmatprep.subr.mxu0 0.0
        %4229 = vmatpush1.msra.mxu0 0.0
        %4230 = vmatprep.subr.mxu0 0.0
        %4231 = vmatpush1.msra.mxu0 0.0
        %4232 = vmatprep.subr.mxu0 0.0
        %4233 = vmatpush1.msra.mxu0 0.0
        %4234 = vmatprep.subr.mxu0 0.0
        %4235 = vmatpush1.msra.mxu0 0.0
        %4236 = vmatprep.mubr.f32.mxu0 0.0
        %4237 = vmatmul.mubr.f32.gmra.mrb[0].mxu0 %v4170
        %v4238 = vpop.f32.mrb[0].mxu0
        %v4239 = vadd.f32 0.0, %v4238
        %v4240 = vpop.f32.mrb[0].mxu0
        %4241 = vdwg.mxu0
        %v4243 = vsel %vm777, %v4239, 0
        %4245 = vmatprep.subr.mxu0 0.0
        %4246 = vmatpush1.msra.mxu0 %v3343
        %4247 = vmatprep.subr.mxu0 0.0
        %4248 = vmatpush1.msra.mxu0 0.0
        %4249 = vmatprep.subr.mxu0 0.0
        %4250 = vmatpush1.msra.mxu0 0.0
        %4251 = vmatprep.subr.mxu0 0.0
        %4252 = vmatpush1.msra.mxu0 0.0
        %4253 = vmatprep.subr.mxu0 0.0
        %4254 = vmatpush1.msra.mxu0 0.0
        %4255 = vmatprep.subr.mxu0 0.0
        %4256 = vmatpush1.msra.mxu0 0.0
        %4257 = vmatprep.subr.mxu0 0.0
        %4258 = vmatpush1.msra.mxu0 0.0
        %4259 = vmatprep.subr.mxu0 0.0
        %4260 = vmatpush1.msra.mxu0 0.0
        %4261 = vmatprep.subr.mxu0 0.0
        %4262 = vmatpush1.msra.mxu0 0.0
        %4263 = vmatprep.subr.mxu0 0.0
        %4264 = vmatpush1.msra.mxu0 0.0
        %4265 = vmatprep.subr.mxu0 0.0
        %4266 = vmatpush1.msra.mxu0 0.0
        %4267 = vmatprep.subr.mxu0 0.0
        %4268 = vmatpush1.msra.mxu0 0.0
        %4269 = vmatprep.subr.mxu0 0.0
        %4270 = vmatpush1.msra.mxu0 0.0
        %4271 = vmatprep.subr.mxu0 0.0
        %4272 = vmatpush1.msra.mxu0 0.0
        %4273 = vmatprep.subr.mxu0 0.0
        %4274 = vmatpush1.msra.mxu0 0.0
        %4275 = vmatprep.subr.mxu0 0.0
        %4276 = vmatpush1.msra.mxu0 0.0
        %4277 = vmatprep.subr.mxu0 0.0
        %4278 = vmatpush1.msra.mxu0 0.0
        %4279 = vmatprep.subr.mxu0 0.0
        %4280 = vmatpush1.msra.mxu0 0.0
        %4281 = vmatprep.subr.mxu0 0.0
        %4282 = vmatpush1.msra.mxu0 0.0
        %4283 = vmatprep.subr.mxu0 0.0
        %4284 = vmatpush1.msra.mxu0 0.0
        %4285 = vmatprep.subr.mxu0 0.0
        %4286 = vmatpush1.msra.mxu0 0.0
        %4287 = vmatprep.subr.mxu0 0.0
        %4288 = vmatpush1.msra.mxu0 0.0
        %4289 = vmatprep.subr.mxu0 0.0
        %4290 = vmatpush1.msra.mxu0 0.0
        %4291 = vmatprep.subr.mxu0 0.0
        %4292 = vmatpush1.msra.mxu0 0.0
        %4293 = vmatprep.subr.mxu0 0.0
        %4294 = vmatpush1.msra.mxu0 0.0
        %4295 = vmatprep.subr.mxu0 0.0
        %4296 = vmatpush1.msra.mxu0 0.0
        %4297 = vmatprep.subr.mxu0 0.0
        %4298 = vmatpush1.msra.mxu0 0.0
        %4299 = vmatprep.subr.mxu0 0.0
        %4300 = vmatpush1.msra.mxu0 0.0
        %4301 = vmatprep.subr.mxu0 0.0
        %4302 = vmatpush1.msra.mxu0 0.0
        %4303 = vmatprep.subr.mxu0 0.0
        %4304 = vmatpush1.msra.mxu0 0.0
        %4305 = vmatprep.subr.mxu0 0.0
        %4306 = vmatpush1.msra.mxu0 0.0
        %4307 = vmatprep.subr.mxu0 0.0
        %4308 = vmatpush1.msra.mxu0 0.0
        %4309 = vmatprep.mubr.f32.mxu0 0.0
        %4310 = vmatmul.mubr.f32.gmra.mrb[0].mxu0 %v4243
        %v4311 = vpop.f32.mrb[0].mxu0
        %v4312 = vadd.f32 0.0, %v4311
        %v4313 = vpop.f32.mrb[0].mxu0
        %4314 = vdwg.mxu0
        %v4315 = vadd.f32 %v4074, %v4312
        %v4316 = vadd.f32 %v3250, %v4315
        %v4317 = vsel %vm688, %v4316, 0.0
        %4318 = vadd.xlane.f32.xlu0 %v4317
        %v4319 = vpop.xlane.xlu0 %4318
        %v4320 = vmul.f32 %v4319, %v1742
        %v4321 = vsub.f32 %v4316, %v4320
        %v4322 = vmul.f32 %v4321, %v4321
        %v4323 = vsel %vm688, %v4322, 0.0
        %4324 = vadd.xlane.f32.xlu0 %v4323
        %v4325 = vpop.xlane.xlu0 %4324
        %v4326 = vmul.f32 %v4325, %v1742
        %v4327 = vadd.f32 %v4326, 1e-12
        %v4328 = vrsqrt.pop %v4327
        %v4329 = vmul.f32 %v4321, %v4328
        %v4330 = vlaneseq
        %v4331 = vshrl.u32 %v4330, 7
        %v4332 = vsub.s32 0, %v4331
        %v4333 = vrot.slane %v3252, %v4332
        %v4334 = vmul.f32 %v4329, %v4333
        %v4335 = vlaneseq
        %v4336 = vshrl.u32 %v4335, 7
        %v4337 = vsub.s32 1, %v4336
        %v4338 = vrot.slane %v3252, %v4337
        %v4339 = vadd.f32 %v4334, %v4338
        %s4340 = scalar_lea.vmem %s7, 32
        %v4341 = vld [vmem:[%s4340] sm:$0xff]
        %v4342 = vld [vmem:[%s4340 + $0x8] sm:$0xff]
        %v4343 = vld [vmem:[%s4340 + $0x10] sm:$0xff]
        %v4344 = vld [vmem:[%s4340 + $0x18] sm:$0xff]
        %s4345 = scalar_lea.vmem %s8, 1
        %v4346 = vld [vmem:[%s4345] sm:$0x1]
        %v4348 = vlaneseq
        %v4349 = vshrl.u32 %v4348, 7
        %v4350 = vsub.s32 0, %v4349
        %v4351 = vrot.slane %v4346, %v4350
        %v4354 = vsel %vm688, %v4339, 0
        %4356 = vmatprep.subr.mxu0 0.0
        %4357 = vmatpush1.msra.mxu0 %v4341
        %4358 = vmatprep.subr.mxu0 0.0
        %4359 = vmatpush1.msra.mxu0 %v4342
        %4360 = vmatprep.subr.mxu0 0.0
        %4361 = vmatpush1.msra.mxu0 %v4343
        %4362 = vmatprep.subr.mxu0 0.0
        %4363 = vmatpush1.msra.mxu0 %v4344
        %4364 = vmatprep.subr.mxu0 0.0
        %4365 = vmatpush1.msra.mxu0 0.0
        %4366 = vmatprep.subr.mxu0 0.0
        %4367 = vmatpush1.msra.mxu0 0.0
        %4368 = vmatprep.subr.mxu0 0.0
        %4369 = vmatpush1.msra.mxu0 0.0
        %4370 = vmatprep.subr.mxu0 0.0
        %4371 = vmatpush1.msra.mxu0 0.0
        %4372 = vmatprep.subr.mxu0 0.0
        %4373 = vmatpush1.msra.mxu0 0.0
        %4374 = vmatprep.subr.mxu0 0.0
        %4375 = vmatpush1.msra.mxu0 0.0
        %4376 = vmatprep.subr.mxu0 0.0
        %4377 = vmatpush1.msra.mxu0 0.0
        %4378 = vmatprep.subr.mxu0 0.0
        %4379 = vmatpush1.msra.mxu0 0.0
        %4380 = vmatprep.subr.mxu0 0.0
        %4381 = vmatpush1.msra.mxu0 0.0
        %4382 = vmatprep.subr.mxu0 0.0
        %4383 = vmatpush1.msra.mxu0 0.0
        %4384 = vmatprep.subr.mxu0 0.0
        %4385 = vmatpush1.msra.mxu0 0.0
        %4386 = vmatprep.subr.mxu0 0.0
        %4387 = vmatpush1.msra.mxu0 0.0
        %4388 = vmatprep.subr.mxu0 0.0
        %4389 = vmatpush1.msra.mxu0 0.0
        %4390 = vmatprep.subr.mxu0 0.0
        %4391 = vmatpush1.msra.mxu0 0.0
        %4392 = vmatprep.subr.mxu0 0.0
        %4393 = vmatpush1.msra.mxu0 0.0
        %4394 = vmatprep.subr.mxu0 0.0
        %4395 = vmatpush1.msra.mxu0 0.0
        %4396 = vmatprep.subr.mxu0 0.0
        %4397 = vmatpush1.msra.mxu0 0.0
        %4398 = vmatprep.subr.mxu0 0.0
        %4399 = vmatpush1.msra.mxu0 0.0
        %4400 = vmatprep.subr.mxu0 0.0
        %4401 = vmatpush1.msra.mxu0 0.0
        %4402 = vmatprep.subr.mxu0 0.0
        %4403 = vmatpush1.msra.mxu0 0.0
        %4404 = vmatprep.subr.mxu0 0.0
        %4405 = vmatpush1.msra.mxu0 0.0
        %4406 = vmatprep.subr.mxu0 0.0
        %4407 = vmatpush1.msra.mxu0 0.0
        %4408 = vmatprep.subr.mxu0 0.0
        %4409 = vmatpush1.msra.mxu0 0.0
        %4410 = vmatprep.subr.mxu0 0.0
        %4411 = vmatpush1.msra.mxu0 0.0
        %4412 = vmatprep.subr.mxu0 0.0
        %4413 = vmatpush1.msra.mxu0 0.0
        %4414 = vmatprep.subr.mxu0 0.0
        %4415 = vmatpush1.msra.mxu0 0.0
        %4416 = vmatprep.subr.mxu0 0.0
        %4417 = vmatpush1.msra.mxu0 0.0
        %4418 = vmatprep.subr.mxu0 0.0
        %4419 = vmatpush1.msra.mxu0 0.0
        %4420 = vmatprep.mubr.f32.mxu0 0.0
        %4421 = vmatmul.mubr.f32.gmra.mrb[0].mxu0 %v4354
        %v4422 = vpop.f32.mrb[0].mxu0
        %v4423 = vadd.f32 %v4351, %v4422
        %v4424 = vpop.f32.mrb[0].mxu0
        %4425 = vdwg.mxu0
        %s4426 = scalar_lea.vmem %s9, 32
        %v4427 = vld [vmem:[%s4426] sm:$0xff]
        %v4428 = vld [vmem:[%s4426 + $0x8] sm:$0xff]
        %v4429 = vld [vmem:[%s4426 + $0x10] sm:$0xff]
        %v4430 = vld [vmem:[%s4426 + $0x18] sm:$0xff]
        %s4431 = scalar_lea.vmem %s10, 1
        %v4432 = vld [vmem:[%s4431] sm:$0x1]
        %v4434 = vlaneseq
        %v4435 = vshrl.u32 %v4434, 7
        %v4436 = vsub.s32 0, %v4435
        %v4437 = vrot.slane %v4432, %v4436
        %4439 = vmatprep.subr.mxu0 0.0
        %4440 = vmatpush1.msra.mxu0 %v4427
        %4441 = vmatprep.subr.mxu0 0.0
        %4442 = vmatpush1.msra.mxu0 %v4428
        %4443 = vmatprep.subr.mxu0 0.0
        %4444 = vmatpush1.msra.mxu0 %v4429
        %4445 = vmatprep.subr.mxu0 0.0
        %4446 = vmatpush1.msra.mxu0 %v4430
        %4447 = vmatprep.subr.mxu0 0.0
        %4448 = vmatpush1.msra.mxu0 0.0
        %4449 = vmatprep.subr.mxu0 0.0
        %4450 = vmatpush1.msra.mxu0 0.0
        %4451 = vmatprep.subr.mxu0 0.0
        %4452 = vmatpush1.msra.mxu0 0.0
        %4453 = vmatprep.subr.mxu0 0.0
        %4454 = vmatpush1.msra.mxu0 0.0
        %4455 = vmatprep.subr.mxu0 0.0
        %4456 = vmatpush1.msra.mxu0 0.0
        %4457 = vmatprep.subr.mxu0 0.0
        %4458 = vmatpush1.msra.mxu0 0.0
        %4459 = vmatprep.subr.mxu0 0.0
        %4460 = vmatpush1.msra.mxu0 0.0
        %4461 = vmatprep.subr.mxu0 0.0
        %4462 = vmatpush1.msra.mxu0 0.0
        %4463 = vmatprep.subr.mxu0 0.0
        %4464 = vmatpush1.msra.mxu0 0.0
        %4465 = vmatprep.subr.mxu0 0.0
        %4466 = vmatpush1.msra.mxu0 0.0
        %4467 = vmatprep.subr.mxu0 0.0
        %4468 = vmatpush1.msra.mxu0 0.0
        %4469 = vmatprep.subr.mxu0 0.0
        %4470 = vmatpush1.msra.mxu0 0.0
        %4471 = vmatprep.subr.mxu0 0.0
        %4472 = vmatpush1.msra.mxu0 0.0
        %4473 = vmatprep.subr.mxu0 0.0
        %4474 = vmatpush1.msra.mxu0 0.0
        %4475 = vmatprep.subr.mxu0 0.0
        %4476 = vmatpush1.msra.mxu0 0.0
        %4477 = vmatprep.subr.mxu0 0.0
        %4478 = vmatpush1.msra.mxu0 0.0
        %4479 = vmatprep.subr.mxu0 0.0
        %4480 = vmatpush1.msra.mxu0 0.0
        %4481 = vmatprep.subr.mxu0 0.0
        %4482 = vmatpush1.msra.mxu0 0.0
        %4483 = vmatprep.subr.mxu0 0.0
        %4484 = vmatpush1.msra.mxu0 0.0
        %4485 = vmatprep.subr.mxu0 0.0
        %4486 = vmatpush1.msra.mxu0 0.0
        %4487 = vmatprep.subr.mxu0 0.0
        %4488 = vmatpush1.msra.mxu0 0.0
        %4489 = vmatprep.subr.mxu0 0.0
        %4490 = vmatpush1.msra.mxu0 0.0
        %4491 = vmatprep.subr.mxu0 0.0
        %4492 = vmatpush1.msra.mxu0 0.0
        %4493 = vmatprep.subr.mxu0 0.0
        %4494 = vmatpush1.msra.mxu0 0.0
        %4495 = vmatprep.subr.mxu0 0.0
        %4496 = vmatpush1.msra.mxu0 0.0
        %4497 = vmatprep.subr.mxu0 0.0
        %4498 = vmatpush1.msra.mxu0 0.0
        %4499 = vmatprep.subr.mxu0 0.0
        %4500 = vmatpush1.msra.mxu0 0.0
        %4501 = vmatprep.subr.mxu0 0.0
        %4502 = vmatpush1.msra.mxu0 0.0
        %4503 = vmatprep.mubr.f32.mxu0 0.0
        %4504 = vmatmul.mubr.f32.gmra.mrb[0].mxu0 %v1859
        %v4505 = vpop.f32.mrb[0].mxu0
        %v4506 = vadd.f32 %v4437, %v4505
        %v4507 = vpop.f32.mrb[0].mxu0
        %4508 = vmatprep.mubr.f32.mxu0 0.0
        %4509 = vmatmul.mubr.f32.gmra.mrb[0].mxu0 %v1862
        %v4510 = vpop.f32.mrb[0].mxu0
        %v4511 = vadd.f32 %v4437, %v4510
        %v4512 = vpop.f32.mrb[0].mxu0
        %4513 = vdwg.mxu0
        %s4514 = scalar_lea.vmem %s11, 32
        %v4515 = vld [vmem:[%s4514] sm:$0xff]
        %v4516 = vld [vmem:[%s4514 + $0x8] sm:$0xff]
        %v4517 = vld [vmem:[%s4514 + $0x10] sm:$0xff]
        %v4518 = vld [vmem:[%s4514 + $0x18] sm:$0xff]
        %s4519 = scalar_lea.vmem %s12, 1
        %v4520 = vld [vmem:[%s4519] sm:$0x1]
        %v4522 = vlaneseq
        %v4523 = vshrl.u32 %v4522, 7
        %v4524 = vsub.s32 0, %v4523
        %v4525 = vrot.slane %v4520, %v4524
        %4527 = vmatprep.subr.mxu0 0.0
        %4528 = vmatpush1.msra.mxu0 %v4515
        %4529 = vmatprep.subr.mxu0 0.0
        %4530 = vmatpush1.msra.mxu0 %v4516
        %4531 = vmatprep.subr.mxu0 0.0
        %4532 = vmatpush1.msra.mxu0 %v4517
        %4533 = vmatprep.subr.mxu0 0.0
        %4534 = vmatpush1.msra.mxu0 %v4518
        %4535 = vmatprep.subr.mxu0 0.0
        %4536 = vmatpush1.msra.mxu0 0.0
        %4537 = vmatprep.subr.mxu0 0.0
        %4538 = vmatpush1.msra.mxu0 0.0
        %4539 = vmatprep.subr.mxu0 0.0
        %4540 = vmatpush1.msra.mxu0 0.0
        %4541 = vmatprep.subr.mxu0 0.0
        %4542 = vmatpush1.msra.mxu0 0.0
        %4543 = vmatprep.subr.mxu0 0.0
        %4544 = vmatpush1.msra.mxu0 0.0
        %4545 = vmatprep.subr.mxu0 0.0
        %4546 = vmatpush1.msra.mxu0 0.0
        %4547 = vmatprep.subr.mxu0 0.0
        %4548 = vmatpush1.msra.mxu0 0.0
        %4549 = vmatprep.subr.mxu0 0.0
        %4550 = vmatpush1.msra.mxu0 0.0
        %4551 = vmatprep.subr.mxu0 0.0
        %4552 = vmatpush1.msra.mxu0 0.0
        %4553 = vmatprep.subr.mxu0 0.0
        %4554 = vmatpush1.msra.mxu0 0.0
        %4555 = vmatprep.subr.mxu0 0.0
        %4556 = vmatpush1.msra.mxu0 0.0
        %4557 = vmatprep.subr.mxu0 0.0
        %4558 = vmatpush1.msra.mxu0 0.0
        %4559 = vmatprep.subr.mxu0 0.0
        %4560 = vmatpush1.msra.mxu0 0.0
        %4561 = vmatprep.subr.mxu0 0.0
        %4562 = vmatpush1.msra.mxu0 0.0
        %4563 = vmatprep.subr.mxu0 0.0
        %4564 = vmatpush1.msra.mxu0 0.0
        %4565 = vmatprep.subr.mxu0 0.0
        %4566 = vmatpush1.msra.mxu0 0.0
        %4567 = vmatprep.subr.mxu0 0.0
        %4568 = vmatpush1.msra.mxu0 0.0
        %4569 = vmatprep.subr.mxu0 0.0
        %4570 = vmatpush1.msra.mxu0 0.0
        %4571 = vmatprep.subr.mxu0 0.0
        %4572 = vmatpush1.msra.mxu0 0.0
        %4573 = vmatprep.subr.mxu0 0.0
        %4574 = vmatpush1.msra.mxu0 0.0
        %4575 = vmatprep.subr.mxu0 0.0
        %4576 = vmatpush1.msra.mxu0 0.0
        %4577 = vmatprep.subr.mxu0 0.0
        %4578 = vmatpush1.msra.mxu0 0.0
        %4579 = vmatprep.subr.mxu0 0.0
        %4580 = vmatpush1.msra.mxu0 0.0
        %4581 = vmatprep.subr.mxu0 0.0
        %4582 = vmatpush1.msra.mxu0 0.0
        %4583 = vmatprep.subr.mxu0 0.0
        %4584 = vmatpush1.msra.mxu0 0.0
        %4585 = vmatprep.subr.mxu0 0.0
        %4586 = vmatpush1.msra.mxu0 0.0
        %4587 = vmatprep.subr.mxu0 0.0
        %4588 = vmatpush1.msra.mxu0 0.0
        %4589 = vmatprep.subr.mxu0 0.0
        %4590 = vmatpush1.msra.mxu0 0.0
        %4591 = vmatprep.mubr.f32.mxu0 0.0
        %4592 = vmatmul.mubr.f32.gmra.mrb[0].mxu0 %v1951
        %v4593 = vpop.f32.mrb[0].mxu0
        %v4594 = vadd.f32 %v4525, %v4593
        %v4595 = vpop.f32.mrb[0].mxu0
        %4596 = vmatprep.mubr.f32.mxu0 0.0
        %4597 = vmatmul.mubr.f32.gmra.mrb[0].mxu0 %v1954
        %v4598 = vpop.f32.mrb[0].mxu0
        %v4599 = vadd.f32 %v4525, %v4598
        %v4600 = vpop.f32.mrb[0].mxu0
        %4601 = vdwg.mxu0
        %s4602 = scalar_lea.vmem %s13, 32
        %v4603 = vld [vmem:[%s4602] sm:$0xff]
        %v4604 = vld [vmem:[%s4602 + $0x8] sm:$0xff]
        %v4605 = vld [vmem:[%s4602 + $0x10] sm:$0xff]
        %v4606 = vld [vmem:[%s4602 + $0x18] sm:$0xff]
        %s4607 = scalar_lea.vmem %s14, 1
        %v4608 = vld [vmem:[%s4607] sm:$0x1]
        %v4610 = vlaneseq
        %v4611 = vshrl.u32 %v4610, 7
        %v4612 = vsub.s32 0, %v4611
        %v4613 = vrot.slane %v4608, %v4612
        %v4615 = vadd.f32 %v4613, 0.0
        %v4617 = vsel %vm777, %v4423, 0
        %v4620 = vsel %vm777, %v4506, 0
        %v4623 = vsel %vm777, %v4511, 0
        %4625 = vmatprep.subr.mxu0 0.0
        %4626 = vmatpush1.xpose.msra.mxu0 %v4620
        %4627 = vmatprep.subr.mxu0 0.0
        %4628 = vmatpush1.xpose.msra.mxu0 %v4623
        %4629 = vmatprep.subr.mxu0 0.0
        %4630 = vmatpush1.xpose.msra.mxu0 0.0
        %4631 = vmatprep.subr.mxu0 0.0
        %4632 = vmatpush1.xpose.msra.mxu0 0.0
        %4633 = vmatprep.subr.mxu0 0.0
        %4634 = vmatpush1.xpose.msra.mxu0 0.0
        %4635 = vmatprep.subr.mxu0 0.0
        %4636 = vmatpush1.xpose.msra.mxu0 0.0
        %4637 = vmatprep.subr.mxu0 0.0
        %4638 = vmatpush1.xpose.msra.mxu0 0.0
        %4639 = vmatprep.subr.mxu0 0.0
        %4640 = vmatpush1.xpose.msra.mxu0 0.0
        %4641 = vmatprep.subr.mxu0 0.0
        %4642 = vmatpush1.xpose.msra.mxu0 0.0
        %4643 = vmatprep.subr.mxu0 0.0
        %4644 = vmatpush1.xpose.msra.mxu0 0.0
        %4645 = vmatprep.subr.mxu0 0.0
        %4646 = vmatpush1.xpose.msra.mxu0 0.0
        %4647 = vmatprep.subr.mxu0 0.0
        %4648 = vmatpush1.xpose.msra.mxu0 0.0
        %4649 = vmatprep.subr.mxu0 0.0
        %4650 = vmatpush1.xpose.msra.mxu0 0.0
        %4651 = vmatprep.subr.mxu0 0.0
        %4652 = vmatpush1.xpose.msra.mxu0 0.0
        %4653 = vmatprep.subr.mxu0 0.0
        %4654 = vmatpush1.xpose.msra.mxu0 0.0
        %4655 = vmatprep.subr.mxu0 0.0
        %4656 = vmatpush1.xpose.msra.mxu0 0.0
        %4657 = vmatprep.subr.mxu0 0.0
        %4658 = vmatpush1.xpose.msra.mxu0 0.0
        %4659 = vmatprep.subr.mxu0 0.0
        %4660 = vmatpush1.xpose.msra.mxu0 0.0
        %4661 = vmatprep.subr.mxu0 0.0
        %4662 = vmatpush1.xpose.msra.mxu0 0.0
        %4663 = vmatprep.subr.mxu0 0.0
        %4664 = vmatpush1.xpose.msra.mxu0 0.0
        %4665 = vmatprep.subr.mxu0 0.0
        %4666 = vmatpush1.xpose.msra.mxu0 0.0
        %4667 = vmatprep.subr.mxu0 0.0
        %4668 = vmatpush1.xpose.msra.mxu0 0.0
        %4669 = vmatprep.subr.mxu0 0.0
        %4670 = vmatpush1.xpose.msra.mxu0 0.0
        %4671 = vmatprep.subr.mxu0 0.0
        %4672 = vmatpush1.xpose.msra.mxu0 0.0
        %4673 = vmatprep.subr.mxu0 0.0
        %4674 = vmatpush1.xpose.msra.mxu0 0.0
        %4675 = vmatprep.subr.mxu0 0.0
        %4676 = vmatpush1.xpose.msra.mxu0 0.0
        %4677 = vmatprep.subr.mxu0 0.0
        %4678 = vmatpush1.xpose.msra.mxu0 0.0
        %4679 = vmatprep.subr.mxu0 0.0
        %4680 = vmatpush1.xpose.msra.mxu0 0.0
        %4681 = vmatprep.subr.mxu0 0.0
        %4682 = vmatpush1.xpose.msra.mxu0 0.0
        %4683 = vmatprep.subr.mxu0 0.0
        %4684 = vmatpush1.xpose.msra.mxu0 0.0
        %4685 = vmatprep.subr.mxu0 0.0
        %4686 = vmatpush1.xpose.msra.mxu0 0.0
        %4687 = vmatprep.subr.mxu0 0.0
        %4688 = vmatpush1.xpose.msra.mxu0 0.0
        %4689 = vmatprep.mubr.f32.mxu0 0.0
        %4690 = vmatmul.mubr.f32.gmra.mrb[0].mxu0 %v4617
        %v4691 = vpop.f32.mrb[0].mxu0
        %v4692 = vadd.f32 0.0, %v4691
        %v4693 = vpop.f32.mrb[0].mxu0
        %4694 = vdwg.mxu0
        %v4695 = vmul.f32 %v4692, 0.35355338
        %v4696 = vsel %vm2123, %v4695, -inf
        %4697 = vmax.xlane.f32.xlu0 %v4696
        %v4698 = vpop.xlane.xlu0 %4697
        %v4699 = vsub.f32 %v4695, %v4698
        %v4700 = vmul.f32 %v4699, 1.442695
        %v4701 = vpow.pop %v4700
        %v4702 = vsel %vm2123, %v4701, 0.0
        %4703 = vadd.xlane.f32.xlu0 %v4702
        %v4704 = vpop.xlane.xlu0 %4703
        %v4705 = vrcp.pop %v4704
        %v4706 = vmul.f32 %v4701, %v4705
        %v4708 = vsel %vm2123, %v4706, 0
        %4710 = vmatprep.subr.mxu0 0.0
        %4711 = vmatpush1.msra.mxu0 %v4594
        %4712 = vmatprep.subr.mxu0 0.0
        %4713 = vmatpush1.msra.mxu0 %v4599
        %4714 = vmatprep.subr.mxu0 0.0
        %4715 = vmatpush1.msra.mxu0 0.0
        %4716 = vmatprep.subr.mxu0 0.0
        %4717 = vmatpush1.msra.mxu0 0.0
        %4718 = vmatprep.subr.mxu0 0.0
        %4719 = vmatpush1.msra.mxu0 0.0
        %4720 = vmatprep.subr.mxu0 0.0
        %4721 = vmatpush1.msra.mxu0 0.0
        %4722 = vmatprep.subr.mxu0 0.0
        %4723 = vmatpush1.msra.mxu0 0.0
        %4724 = vmatprep.subr.mxu0 0.0
        %4725 = vmatpush1.msra.mxu0 0.0
        %4726 = vmatprep.subr.mxu0 0.0
        %4727 = vmatpush1.msra.mxu0 0.0
        %4728 = vmatprep.subr.mxu0 0.0
        %4729 = vmatpush1.msra.mxu0 0.0
        %4730 = vmatprep.subr.mxu0 0.0
        %4731 = vmatpush1.msra.mxu0 0.0
        %4732 = vmatprep.subr.mxu0 0.0
        %4733 = vmatpush1.msra.mxu0 0.0
        %4734 = vmatprep.subr.mxu0 0.0
        %4735 = vmatpush1.msra.mxu0 0.0
        %4736 = vmatprep.subr.mxu0 0.0
        %4737 = vmatpush1.msra.mxu0 0.0
        %4738 = vmatprep.subr.mxu0 0.0
        %4739 = vmatpush1.msra.mxu0 0.0
        %4740 = vmatprep.subr.mxu0 0.0
        %4741 = vmatpush1.msra.mxu0 0.0
        %4742 = vmatprep.subr.mxu0 0.0
        %4743 = vmatpush1.msra.mxu0 0.0
        %4744 = vmatprep.subr.mxu0 0.0
        %4745 = vmatpush1.msra.mxu0 0.0
        %4746 = vmatprep.subr.mxu0 0.0
        %4747 = vmatpush1.msra.mxu0 0.0
        %4748 = vmatprep.subr.mxu0 0.0
        %4749 = vmatpush1.msra.mxu0 0.0
        %4750 = vmatprep.subr.mxu0 0.0
        %4751 = vmatpush1.msra.mxu0 0.0
        %4752 = vmatprep.subr.mxu0 0.0
        %4753 = vmatpush1.msra.mxu0 0.0
        %4754 = vmatprep.subr.mxu0 0.0
        %4755 = vmatpush1.msra.mxu0 0.0
        %4756 = vmatprep.subr.mxu0 0.0
        %4757 = vmatpush1.msra.mxu0 0.0
        %4758 = vmatprep.subr.mxu0 0.0
        %4759 = vmatpush1.msra.mxu0 0.0
        %4760 = vmatprep.subr.mxu0 0.0
        %4761 = vmatpush1.msra.mxu0 0.0
        %4762 = vmatprep.subr.mxu0 0.0
        %4763 = vmatpush1.msra.mxu0 0.0
        %4764 = vmatprep.subr.mxu0 0.0
        %4765 = vmatpush1.msra.mxu0 0.0
        %4766 = vmatprep.subr.mxu0 0.0
        %4767 = vmatpush1.msra.mxu0 0.0
        %4768 = vmatprep.subr.mxu0 0.0
        %4769 = vmatpush1.msra.mxu0 0.0
        %4770 = vmatprep.subr.mxu0 0.0
        %4771 = vmatpush1.msra.mxu0 0.0
        %4772 = vmatprep.subr.mxu0 0.0
        %4773 = vmatpush1.msra.mxu0 0.0
        %4774 = vmatprep.mubr.f32.mxu0 0.0
        %4775 = vmatmul.mubr.f32.gmra.mrb[0].mxu0 %v4708
        %v4776 = vpop.f32.mrb[0].mxu0
        %v4777 = vadd.f32 0.0, %v4776
        %v4778 = vpop.f32.mrb[0].mxu0
        %4779 = vdwg.mxu0
        %v4781 = vsel %vm777, %v4777, 0
        %4783 = vmatprep.subr.mxu0 0.0
        %4784 = vmatpush1.msra.mxu0 %v4603
        %4785 = vmatprep.subr.mxu0 0.0
        %4786 = vmatpush1.msra.mxu0 0.0
        %4787 = vmatprep.subr.mxu0 0.0
        %4788 = vmatpush1.msra.mxu0 0.0
        %4789 = vmatprep.subr.mxu0 0.0
        %4790 = vmatpush1.msra.mxu0 0.0
        %4791 = vmatprep.subr.mxu0 0.0
        %4792 = vmatpush1.msra.mxu0 0.0
        %4793 = vmatprep.subr.mxu0 0.0
        %4794 = vmatpush1.msra.mxu0 0.0
        %4795 = vmatprep.subr.mxu0 0.0
        %4796 = vmatpush1.msra.mxu0 0.0
        %4797 = vmatprep.subr.mxu0 0.0
        %4798 = vmatpush1.msra.mxu0 0.0
        %4799 = vmatprep.subr.mxu0 0.0
        %4800 = vmatpush1.msra.mxu0 0.0
        %4801 = vmatprep.subr.mxu0 0.0
        %4802 = vmatpush1.msra.mxu0 0.0
        %4803 = vmatprep.subr.mxu0 0.0
        %4804 = vmatpush1.msra.mxu0 0.0
        %4805 = vmatprep.subr.mxu0 0.0
        %4806 = vmatpush1.msra.mxu0 0.0
        %4807 = vmatprep.subr.mxu0 0.0
        %4808 = vmatpush1.msra.mxu0 0.0
        %4809 = vmatprep.subr.mxu0 0.0
        %4810 = vmatpush1.msra.mxu0 0.0
        %4811 = vmatprep.subr.mxu0 0.0
        %4812 = vmatpush1.msra.mxu0 0.0
        %4813 = vmatprep.subr.mxu0 0.0
        %4814 = vmatpush1.msra.mxu0 0.0
        %4815 = vmatprep.subr.mxu0 0.0
        %4816 = vmatpush1.msra.mxu0 0.0
        %4817 = vmatprep.subr.mxu0 0.0
        %4818 = vmatpush1.msra.mxu0 0.0
        %4819 = vmatprep.subr.mxu0 0.0
        %4820 = vmatpush1.msra.mxu0 0.0
        %4821 = vmatprep.subr.mxu0 0.0
        %4822 = vmatpush1.msra.mxu0 0.0
        %4823 = vmatprep.subr.mxu0 0.0
        %4824 = vmatpush1.msra.mxu0 0.0
        %4825 = vmatprep.subr.mxu0 0.0
        %4826 = vmatpush1.msra.mxu0 0.0
        %4827 = vmatprep.subr.mxu0 0.0
        %4828 = vmatpush1.msra.mxu0 0.0
        %4829 = vmatprep.subr.mxu0 0.0
        %4830 = vmatpush1.msra.mxu0 0.0
        %4831 = vmatprep.subr.mxu0 0.0
        %4832 = vmatpush1.msra.mxu0 0.0
        %4833 = vmatprep.subr.mxu0 0.0
        %4834 = vmatpush1.msra.mxu0 0.0
        %4835 = vmatprep.subr.mxu0 0.0
        %4836 = vmatpush1.msra.mxu0 0.0
        %4837 = vmatprep.subr.mxu0 0.0
        %4838 = vmatpush1.msra.mxu0 0.0
        %4839 = vmatprep.subr.mxu0 0.0
        %4840 = vmatpush1.msra.mxu0 0.0
        %4841 = vmatprep.subr.mxu0 0.0
        %4842 = vmatpush1.msra.mxu0 0.0
        %4843 = vmatprep.subr.mxu0 0.0
        %4844 = vmatpush1.msra.mxu0 0.0
        %4845 = vmatprep.subr.mxu0 0.0
        %4846 = vmatpush1.msra.mxu0 0.0
        %4847 = vmatprep.mubr.f32.mxu0 0.0
        %4848 = vmatmul.mubr.f32.gmra.mrb[0].mxu0 %v4781
        %v4849 = vpop.f32.mrb[0].mxu0
        %v4850 = vadd.f32 0.0, %v4849
        %v4851 = vpop.f32.mrb[0].mxu0
        %4852 = vdwg.mxu0
        %v4853 = vadd.f32 %v4615, %v4850
        %4854 = vrot.lane.b32.xlu0 %v4423, 120
        %v4855 = vpop.permute.xlu0 %4854
        %4856 = vrot.lane.b32.xlu0 %v4506, 120
        %v4857 = vpop.permute.xlu0 %4856
        %4858 = vrot.lane.b32.xlu0 %v4511, 120
        %v4859 = vpop.permute.xlu0 %4858
        %v4860 = vsel %vm777, %v4855, 0
        %v4862 = vsel %vm777, %v4857, 0
        %v4864 = vsel %vm777, %v4859, 0
        %4866 = vmatprep.subr.mxu0 0.0
        %4867 = vmatpush1.xpose.msra.mxu0 %v4862
        %4868 = vmatprep.subr.mxu0 0.0
        %4869 = vmatpush1.xpose.msra.mxu0 %v4864
        %4870 = vmatprep.subr.mxu0 0.0
        %4871 = vmatpush1.xpose.msra.mxu0 0.0
        %4872 = vmatprep.subr.mxu0 0.0
        %4873 = vmatpush1.xpose.msra.mxu0 0.0
        %4874 = vmatprep.subr.mxu0 0.0
        %4875 = vmatpush1.xpose.msra.mxu0 0.0
        %4876 = vmatprep.subr.mxu0 0.0
        %4877 = vmatpush1.xpose.msra.mxu0 0.0
        %4878 = vmatprep.subr.mxu0 0.0
        %4879 = vmatpush1.xpose.msra.mxu0 0.0
        %4880 = vmatprep.subr.mxu0 0.0
        %4881 = vmatpush1.xpose.msra.mxu0 0.0
        %4882 = vmatprep.subr.mxu0 0.0
        %4883 = vmatpush1.xpose.msra.mxu0 0.0
        %4884 = vmatprep.subr.mxu0 0.0
        %4885 = vmatpush1.xpose.msra.mxu0 0.0
        %4886 = vmatprep.subr.mxu0 0.0
        %4887 = vmatpush1.xpose.msra.mxu0 0.0
        %4888 = vmatprep.subr.mxu0 0.0
        %4889 = vmatpush1.xpose.msra.mxu0 0.0
        %4890 = vmatprep.subr.mxu0 0.0
        %4891 = vmatpush1.xpose.msra.mxu0 0.0
        %4892 = vmatprep.subr.mxu0 0.0
        %4893 = vmatpush1.xpose.msra.mxu0 0.0
        %4894 = vmatprep.subr.mxu0 0.0
        %4895 = vmatpush1.xpose.msra.mxu0 0.0
        %4896 = vmatprep.subr.mxu0 0.0
        %4897 = vmatpush1.xpose.msra.mxu0 0.0
        %4898 = vmatprep.subr.mxu0 0.0
        %4899 = vmatpush1.xpose.msra.mxu0 0.0
        %4900 = vmatprep.subr.mxu0 0.0
        %4901 = vmatpush1.xpose.msra.mxu0 0.0
        %4902 = vmatprep.subr.mxu0 0.0
        %4903 = vmatpush1.xpose.msra.mxu0 0.0
        %4904 = vmatprep.subr.mxu0 0.0
        %4905 = vmatpush1.xpose.msra.mxu0 0.0
        %4906 = vmatprep.subr.mxu0 0.0
        %4907 = vmatpush1.xpose.msra.mxu0 0.0
        %4908 = vmatprep.subr.mxu0 0.0
        %4909 = vmatpush1.xpose.msra.mxu0 0.0
        %4910 = vmatprep.subr.mxu0 0.0
        %4911 = vmatpush1.xpose.msra.mxu0 0.0
        %4912 = vmatprep.subr.mxu0 0.0
        %4913 = vmatpush1.xpose.msra.mxu0 0.0
        %4914 = vmatprep.subr.mxu0 0.0
        %4915 = vmatpush1.xpose.msra.mxu0 0.0
        %4916 = vmatprep.subr.mxu0 0.0
        %4917 = vmatpush1.xpose.msra.mxu0 0.0
        %4918 = vmatprep.subr.mxu0 0.0
        %4919 = vmatpush1.xpose.msra.mxu0 0.0
        %4920 = vmatprep.subr.mxu0 0.0
        %4921 = vmatpush1.xpose.msra.mxu0 0.0
        %4922 = vmatprep.subr.mxu0 0.0
        %4923 = vmatpush1.xpose.msra.mxu0 0.0
        %4924 = vmatprep.subr.mxu0 0.0
        %4925 = vmatpush1.xpose.msra.mxu0 0.0
        %4926 = vmatprep.subr.mxu0 0.0
        %4927 = vmatpush1.xpose.msra.mxu0 0.0
        %4928 = vmatprep.subr.mxu0 0.0
        %4929 = vmatpush1.xpose.msra.mxu0 0.0
        %4930 = vmatprep.mubr.f32.mxu0 0.0
        %4931 = vmatmul.mubr.f32.gmra.mrb[0].mxu0 %v4860
        %v4932 = vpop.f32.mrb[0].mxu0
        %v4933 = vadd.f32 0.0, %v4932
        %v4934 = vpop.f32.mrb[0].mxu0
        %4935 = vdwg.mxu0
        %v4936 = vmul.f32 %v4933, 0.35355338
        %v4937 = vsel %vm2123, %v4936, -inf
        %4938 = vmax.xlane.f32.xlu0 %v4937
        %v4939 = vpop.xlane.xlu0 %4938
        %v4940 = vsub.f32 %v4936, %v4939
        %v4941 = vmul.f32 %v4940, 1.442695
        %v4942 = vpow.pop %v4941
        %v4943 = vsel %vm2123, %v4942, 0.0
        %4944 = vadd.xlane.f32.xlu0 %v4943
        %v4945 = vpop.xlane.xlu0 %4944
        %v4946 = vrcp.pop %v4945
        %v4947 = vmul.f32 %v4942, %v4946
        %4950 = vrot.lane.b32.xlu0 %v4594, 120
        %v4951 = vpop.permute.xlu0 %4950
        %4952 = vrot.lane.b32.xlu0 %v4599, 120
        %v4953 = vpop.permute.xlu0 %4952
        %v4957 = vsel %vm2123, %v4947, 0
        %4959 = vmatprep.subr.mxu0 0.0
        %4960 = vmatpush1.msra.mxu0 %v4951
        %4961 = vmatprep.subr.mxu0 0.0
        %4962 = vmatpush1.msra.mxu0 %v4953
        %4963 = vmatprep.subr.mxu0 0.0
        %4964 = vmatpush1.msra.mxu0 0.0
        %4965 = vmatprep.subr.mxu0 0.0
        %4966 = vmatpush1.msra.mxu0 0.0
        %4967 = vmatprep.subr.mxu0 0.0
        %4968 = vmatpush1.msra.mxu0 0.0
        %4969 = vmatprep.subr.mxu0 0.0
        %4970 = vmatpush1.msra.mxu0 0.0
        %4971 = vmatprep.subr.mxu0 0.0
        %4972 = vmatpush1.msra.mxu0 0.0
        %4973 = vmatprep.subr.mxu0 0.0
        %4974 = vmatpush1.msra.mxu0 0.0
        %4975 = vmatprep.subr.mxu0 0.0
        %4976 = vmatpush1.msra.mxu0 0.0
        %4977 = vmatprep.subr.mxu0 0.0
        %4978 = vmatpush1.msra.mxu0 0.0
        %4979 = vmatprep.subr.mxu0 0.0
        %4980 = vmatpush1.msra.mxu0 0.0
        %4981 = vmatprep.subr.mxu0 0.0
        %4982 = vmatpush1.msra.mxu0 0.0
        %4983 = vmatprep.subr.mxu0 0.0
        %4984 = vmatpush1.msra.mxu0 0.0
        %4985 = vmatprep.subr.mxu0 0.0
        %4986 = vmatpush1.msra.mxu0 0.0
        %4987 = vmatprep.subr.mxu0 0.0
        %4988 = vmatpush1.msra.mxu0 0.0
        %4989 = vmatprep.subr.mxu0 0.0
        %4990 = vmatpush1.msra.mxu0 0.0
        %4991 = vmatprep.subr.mxu0 0.0
        %4992 = vmatpush1.msra.mxu0 0.0
        %4993 = vmatprep.subr.mxu0 0.0
        %4994 = vmatpush1.msra.mxu0 0.0
        %4995 = vmatprep.subr.mxu0 0.0
        %4996 = vmatpush1.msra.mxu0 0.0
        %4997 = vmatprep.subr.mxu0 0.0
        %4998 = vmatpush1.msra.mxu0 0.0
        %4999 = vmatprep.subr.mxu0 0.0
        %5000 = vmatpush1.msra.mxu0 0.0
        %5001 = vmatprep.subr.mxu0 0.0
        %5002 = vmatpush1.msra.mxu0 0.0
        %5003 = vmatprep.subr.mxu0 0.0
        %5004 = vmatpush1.msra.mxu0 0.0
        %5005 = vmatprep.subr.mxu0 0.0
        %5006 = vmatpush1.msra.mxu0 0.0
        %5007 = vmatprep.subr.mxu0 0.0
        %5008 = vmatpush1.msra.mxu0 0.0
        %5009 = vmatprep.subr.mxu0 0.0
        %5010 = vmatpush1.msra.mxu0 0.0
        %5011 = vmatprep.subr.mxu0 0.0
        %5012 = vmatpush1.msra.mxu0 0.0
        %5013 = vmatprep.subr.mxu0 0.0
        %5014 = vmatpush1.msra.mxu0 0.0
        %5015 = vmatprep.subr.mxu0 0.0
        %5016 = vmatpush1.msra.mxu0 0.0
        %5017 = vmatprep.subr.mxu0 0.0
        %5018 = vmatpush1.msra.mxu0 0.0
        %5019 = vmatprep.subr.mxu0 0.0
        %5020 = vmatpush1.msra.mxu0 0.0
        %5021 = vmatprep.subr.mxu0 0.0
        %5022 = vmatpush1.msra.mxu0 0.0
        %5023 = vmatprep.mubr.f32.mxu0 0.0
        %5024 = vmatmul.mubr.f32.gmra.mrb[0].mxu0 %v4957
        %v5025 = vpop.f32.mrb[0].mxu0
        %v5026 = vadd.f32 0.0, %v5025
        %v5027 = vpop.f32.mrb[0].mxu0
        %5028 = vdwg.mxu0
        %v5030 = vsel %vm777, %v5026, 0
        %5032 = vmatprep.subr.mxu0 0.0
        %5033 = vmatpush1.msra.mxu0 %v4604
        %5034 = vmatprep.subr.mxu0 0.0
        %5035 = vmatpush1.msra.mxu0 0.0
        %5036 = vmatprep.subr.mxu0 0.0
        %5037 = vmatpush1.msra.mxu0 0.0
        %5038 = vmatprep.subr.mxu0 0.0
        %5039 = vmatpush1.msra.mxu0 0.0
        %5040 = vmatprep.subr.mxu0 0.0
        %5041 = vmatpush1.msra.mxu0 0.0
        %5042 = vmatprep.subr.mxu0 0.0
        %5043 = vmatpush1.msra.mxu0 0.0
        %5044 = vmatprep.subr.mxu0 0.0
        %5045 = vmatpush1.msra.mxu0 0.0
        %5046 = vmatprep.subr.mxu0 0.0
        %5047 = vmatpush1.msra.mxu0 0.0
        %5048 = vmatprep.subr.mxu0 0.0
        %5049 = vmatpush1.msra.mxu0 0.0
        %5050 = vmatprep.subr.mxu0 0.0
        %5051 = vmatpush1.msra.mxu0 0.0
        %5052 = vmatprep.subr.mxu0 0.0
        %5053 = vmatpush1.msra.mxu0 0.0
        %5054 = vmatprep.subr.mxu0 0.0
        %5055 = vmatpush1.msra.mxu0 0.0
        %5056 = vmatprep.subr.mxu0 0.0
        %5057 = vmatpush1.msra.mxu0 0.0
        %5058 = vmatprep.subr.mxu0 0.0
        %5059 = vmatpush1.msra.mxu0 0.0
        %5060 = vmatprep.subr.mxu0 0.0
        %5061 = vmatpush1.msra.mxu0 0.0
        %5062 = vmatprep.subr.mxu0 0.0
        %5063 = vmatpush1.msra.mxu0 0.0
        %5064 = vmatprep.subr.mxu0 0.0
        %5065 = vmatpush1.msra.mxu0 0.0
        %5066 = vmatprep.subr.mxu0 0.0
        %5067 = vmatpush1.msra.mxu0 0.0
        %5068 = vmatprep.subr.mxu0 0.0
        %5069 = vmatpush1.msra.mxu0 0.0
        %5070 = vmatprep.subr.mxu0 0.0
        %5071 = vmatpush1.msra.mxu0 0.0
        %5072 = vmatprep.subr.mxu0 0.0
        %5073 = vmatpush1.msra.mxu0 0.0
        %5074 = vmatprep.subr.mxu0 0.0
        %5075 = vmatpush1.msra.mxu0 0.0
        %5076 = vmatprep.subr.mxu0 0.0
        %5077 = vmatpush1.msra.mxu0 0.0
        %5078 = vmatprep.subr.mxu0 0.0
        %5079 = vmatpush1.msra.mxu0 0.0
        %5080 = vmatprep.subr.mxu0 0.0
        %5081 = vmatpush1.msra.mxu0 0.0
        %5082 = vmatprep.subr.mxu0 0.0
        %5083 = vmatpush1.msra.mxu0 0.0
        %5084 = vmatprep.subr.mxu0 0.0
        %5085 = vmatpush1.msra.mxu0 0.0
        %5086 = vmatprep.subr.mxu0 0.0
        %5087 = vmatpush1.msra.mxu0 0.0
        %5088 = vmatprep.subr.mxu0 0.0
        %5089 = vmatpush1.msra.mxu0 0.0
        %5090 = vmatprep.subr.mxu0 0.0
        %5091 = vmatpush1.msra.mxu0 0.0
        %5092 = vmatprep.subr.mxu0 0.0
        %5093 = vmatpush1.msra.mxu0 0.0
        %5094 = vmatprep.subr.mxu0 0.0
        %5095 = vmatpush1.msra.mxu0 0.0
        %5096 = vmatprep.mubr.f32.mxu0 0.0
        %5097 = vmatmul.mubr.f32.gmra.mrb[0].mxu0 %v5030
        %v5098 = vpop.f32.mrb[0].mxu0
        %v5099 = vadd.f32 0.0, %v5098
        %v5100 = vpop.f32.mrb[0].mxu0
        %5101 = vdwg.mxu0
        %v5102 = vadd.f32 %v4853, %v5099
        %5103 = vrot.lane.b32.xlu0 %v4423, 112
        %v5104 = vpop.permute.xlu0 %5103
        %5105 = vrot.lane.b32.xlu0 %v4506, 112
        %v5106 = vpop.permute.xlu0 %5105
        %5107 = vrot.lane.b32.xlu0 %v4511, 112
        %v5108 = vpop.permute.xlu0 %5107
        %v5109 = vsel %vm777, %v5104, 0
        %v5111 = vsel %vm777, %v5106, 0
        %v5113 = vsel %vm777, %v5108, 0
        %5115 = vmatprep.subr.mxu0 0.0
        %5116 = vmatpush1.xpose.msra.mxu0 %v5111
        %5117 = vmatprep.subr.mxu0 0.0
        %5118 = vmatpush1.xpose.msra.mxu0 %v5113
        %5119 = vmatprep.subr.mxu0 0.0
        %5120 = vmatpush1.xpose.msra.mxu0 0.0
        %5121 = vmatprep.subr.mxu0 0.0
        %5122 = vmatpush1.xpose.msra.mxu0 0.0
        %5123 = vmatprep.subr.mxu0 0.0
        %5124 = vmatpush1.xpose.msra.mxu0 0.0
        %5125 = vmatprep.subr.mxu0 0.0
        %5126 = vmatpush1.xpose.msra.mxu0 0.0
        %5127 = vmatprep.subr.mxu0 0.0
        %5128 = vmatpush1.xpose.msra.mxu0 0.0
        %5129 = vmatprep.subr.mxu0 0.0
        %5130 = vmatpush1.xpose.msra.mxu0 0.0
        %5131 = vmatprep.subr.mxu0 0.0
        %5132 = vmatpush1.xpose.msra.mxu0 0.0
        %5133 = vmatprep.subr.mxu0 0.0
        %5134 = vmatpush1.xpose.msra.mxu0 0.0
        %5135 = vmatprep.subr.mxu0 0.0
        %5136 = vmatpush1.xpose.msra.mxu0 0.0
        %5137 = vmatprep.subr.mxu0 0.0
        %5138 = vmatpush1.xpose.msra.mxu0 0.0
        %5139 = vmatprep.subr.mxu0 0.0
        %5140 = vmatpush1.xpose.msra.mxu0 0.0
        %5141 = vmatprep.subr.mxu0 0.0
        %5142 = vmatpush1.xpose.msra.mxu0 0.0
        %5143 = vmatprep.subr.mxu0 0.0
        %5144 = vmatpush1.xpose.msra.mxu0 0.0
        %5145 = vmatprep.subr.mxu0 0.0
        %5146 = vmatpush1.xpose.msra.mxu0 0.0
        %5147 = vmatprep.subr.mxu0 0.0
        %5148 = vmatpush1.xpose.msra.mxu0 0.0
        %5149 = vmatprep.subr.mxu0 0.0
        %5150 = vmatpush1.xpose.msra.mxu0 0.0
        %5151 = vmatprep.subr.mxu0 0.0
        %5152 = vmatpush1.xpose.msra.mxu0 0.0
        %5153 = vmatprep.subr.mxu0 0.0
        %5154 = vmatpush1.xpose.msra.mxu0 0.0
        %5155 = vmatprep.subr.mxu0 0.0
        %5156 = vmatpush1.xpose.msra.mxu0 0.0
        %5157 = vmatprep.subr.mxu0 0.0
        %5158 = vmatpush1.xpose.msra.mxu0 0.0
        %5159 = vmatprep.subr.mxu0 0.0
        %5160 = vmatpush1.xpose.msra.mxu0 0.0
        %5161 = vmatprep.subr.mxu0 0.0
        %5162 = vmatpush1.xpose.msra.mxu0 0.0
        %5163 = vmatprep.subr.mxu0 0.0
        %5164 = vmatpush1.xpose.msra.mxu0 0.0
        %5165 = vmatprep.subr.mxu0 0.0
        %5166 = vmatpush1.xpose.msra.mxu0 0.0
        %5167 = vmatprep.subr.mxu0 0.0
        %5168 = vmatpush1.xpose.msra.mxu0 0.0
        %5169 = vmatprep.subr.mxu0 0.0
        %5170 = vmatpush1.xpose.msra.mxu0 0.0
        %5171 = vmatprep.subr.mxu0 0.0
        %5172 = vmatpush1.xpose.msra.mxu0 0.0
        %5173 = vmatprep.subr.mxu0 0.0
        %5174 = vmatpush1.xpose.msra.mxu0 0.0
        %5175 = vmatprep.subr.mxu0 0.0
        %5176 = vmatpush1.xpose.msra.mxu0 0.0
        %5177 = vmatprep.subr.mxu0 0.0
        %5178 = vmatpush1.xpose.msra.mxu0 0.0
        %5179 = vmatprep.mubr.f32.mxu0 0.0
        %5180 = vmatmul.mubr.f32.gmra.mrb[0].mxu0 %v5109
        %v5181 = vpop.f32.mrb[0].mxu0
        %v5182 = vadd.f32 0.0, %v5181
        %v5183 = vpop.f32.mrb[0].mxu0
        %5184 = vdwg.mxu0
        %v5185 = vmul.f32 %v5182, 0.35355338
        %v5186 = vsel %vm2123, %v5185, -inf
        %5187 = vmax.xlane.f32.xlu0 %v5186
        %v5188 = vpop.xlane.xlu0 %5187
        %v5189 = vsub.f32 %v5185, %v5188
        %v5190 = vmul.f32 %v5189, 1.442695
        %v5191 = vpow.pop %v5190
        %v5192 = vsel %vm2123, %v5191, 0.0
        %5193 = vadd.xlane.f32.xlu0 %v5192
        %v5194 = vpop.xlane.xlu0 %5193
        %v5195 = vrcp.pop %v5194
        %v5196 = vmul.f32 %v5191, %v5195
        %5197 = vrot.lane.b32.xlu0 %v4594, 112
        %v5198 = vpop.permute.xlu0 %5197
        %5199 = vrot.lane.b32.xlu0 %v4599, 112
        %v5200 = vpop.permute.xlu0 %5199
        %v5204 = vsel %vm2123, %v5196, 0
        %5206 = vmatprep.subr.mxu0 0.0
        %5207 = vmatpush1.msra.mxu0 %v5198
        %5208 = vmatprep.subr.mxu0 0.0
        %5209 = vmatpush1.msra.mxu0 %v5200
        %5210 = vmatprep.subr.mxu0 0.0
        %5211 = vmatpush1.msra.mxu0 0.0
        %5212 = vmatprep.subr.mxu0 0.0
        %5213 = vmatpush1.msra.mxu0 0.0
        %5214 = vmatprep.subr.mxu0 0.0
        %5215 = vmatpush1.msra.mxu0 0.0
        %5216 = vmatprep.subr.mxu0 0.0
        %5217 = vmatpush1.msra.mxu0 0.0
        %5218 = vmatprep.subr.mxu0 0.0
        %5219 = vmatpush1.msra.mxu0 0.0
        %5220 = vmatprep.subr.mxu0 0.0
        %5221 = vmatpush1.msra.mxu0 0.0
        %5222 = vmatprep.subr.mxu0 0.0
        %5223 = vmatpush1.msra.mxu0 0.0
        %5224 = vmatprep.subr.mxu0 0.0
        %5225 = vmatpush1.msra.mxu0 0.0
        %5226 = vmatprep.subr.mxu0 0.0
        %5227 = vmatpush1.msra.mxu0 0.0
        %5228 = vmatprep.subr.mxu0 0.0
        %5229 = vmatpush1.msra.mxu0 0.0
        %5230 = vmatprep.subr.mxu0 0.0
        %5231 = vmatpush1.msra.mxu0 0.0
        %5232 = vmatprep.subr.mxu0 0.0
        %5233 = vmatpush1.msra.mxu0 0.0
        %5234 = vmatprep.subr.mxu0 0.0
        %5235 = vmatpush1.msra.mxu0 0.0
        %5236 = vmatprep.subr.mxu0 0.0
        %5237 = vmatpush1.msra.mxu0 0.0
        %5238 = vmatprep.subr.mxu0 0.0
        %5239 = vmatpush1.msra.mxu0 0.0
        %5240 = vmatprep.subr.mxu0 0.0
        %5241 = vmatpush1.msra.mxu0 0.0
        %5242 = vmatprep.subr.mxu0 0.0
        %5243 = vmatpush1.msra.mxu0 0.0
        %5244 = vmatprep.subr.mxu0 0.0
        %5245 = vmatpush1.msra.mxu0 0.0
        %5246 = vmatprep.subr.mxu0 0.0
        %5247 = vmatpush1.msra.mxu0 0.0
        %5248 = vmatprep.subr.mxu0 0.0
        %5249 = vmatpush1.msra.mxu0 0.0
        %5250 = vmatprep.subr.mxu0 0.0
        %5251 = vmatpush1.msra.mxu0 0.0
        %5252 = vmatprep.subr.mxu0 0.0
        %5253 = vmatpush1.msra.mxu0 0.0
        %5254 = vmatprep.subr.mxu0 0.0
        %5255 = vmatpush1.msra.mxu0 0.0
        %5256 = vmatprep.subr.mxu0 0.0
        %5257 = vmatpush1.msra.mxu0 0.0
        %5258 = vmatprep.subr.mxu0 0.0
        %5259 = vmatpush1.msra.mxu0 0.0
        %5260 = vmatprep.subr.mxu0 0.0
        %5261 = vmatpush1.msra.mxu0 0.0
        %5262 = vmatprep.subr.mxu0 0.0
        %5263 = vmatpush1.msra.mxu0 0.0
        %5264 = vmatprep.subr.mxu0 0.0
        %5265 = vmatpush1.msra.mxu0 0.0
        %5266 = vmatprep.subr.mxu0 0.0
        %5267 = vmatpush1.msra.mxu0 0.0
        %5268 = vmatprep.subr.mxu0 0.0
        %5269 = vmatpush1.msra.mxu0 0.0
        %5270 = vmatprep.mubr.f32.mxu0 0.0
        %5271 = vmatmul.mubr.f32.gmra.mrb[0].mxu0 %v5204
        %v5272 = vpop.f32.mrb[0].mxu0
        %v5273 = vadd.f32 0.0, %v5272
        %v5274 = vpop.f32.mrb[0].mxu0
        %5275 = vdwg.mxu0
        %v5277 = vsel %vm777, %v5273, 0
        %5279 = vmatprep.subr.mxu0 0.0
        %5280 = vmatpush1.msra.mxu0 %v4605
        %5281 = vmatprep.subr.mxu0 0.0
        %5282 = vmatpush1.msra.mxu0 0.0
        %5283 = vmatprep.subr.mxu0 0.0
        %5284 = vmatpush1.msra.mxu0 0.0
        %5285 = vmatprep.subr.mxu0 0.0
        %5286 = vmatpush1.msra.mxu0 0.0
        %5287 = vmatprep.subr.mxu0 0.0
        %5288 = vmatpush1.msra.mxu0 0.0
        %5289 = vmatprep.subr.mxu0 0.0
        %5290 = vmatpush1.msra.mxu0 0.0
        %5291 = vmatprep.subr.mxu0 0.0
        %5292 = vmatpush1.msra.mxu0 0.0
        %5293 = vmatprep.subr.mxu0 0.0
        %5294 = vmatpush1.msra.mxu0 0.0
        %5295 = vmatprep.subr.mxu0 0.0
        %5296 = vmatpush1.msra.mxu0 0.0
        %5297 = vmatprep.subr.mxu0 0.0
        %5298 = vmatpush1.msra.mxu0 0.0
        %5299 = vmatprep.subr.mxu0 0.0
        %5300 = vmatpush1.msra.mxu0 0.0
        %5301 = vmatprep.subr.mxu0 0.0
        %5302 = vmatpush1.msra.mxu0 0.0
        %5303 = vmatprep.subr.mxu0 0.0
        %5304 = vmatpush1.msra.mxu0 0.0
        %5305 = vmatprep.subr.mxu0 0.0
        %5306 = vmatpush1.msra.mxu0 0.0
        %5307 = vmatprep.subr.mxu0 0.0
        %5308 = vmatpush1.msra.mxu0 0.0
        %5309 = vmatprep.subr.mxu0 0.0
        %5310 = vmatpush1.msra.mxu0 0.0
        %5311 = vmatprep.subr.mxu0 0.0
        %5312 = vmatpush1.msra.mxu0 0.0
        %5313 = vmatprep.subr.mxu0 0.0
        %5314 = vmatpush1.msra.mxu0 0.0
        %5315 = vmatprep.subr.mxu0 0.0
        %5316 = vmatpush1.msra.mxu0 0.0
        %5317 = vmatprep.subr.mxu0 0.0
        %5318 = vmatpush1.msra.mxu0 0.0
        %5319 = vmatprep.subr.mxu0 0.0
        %5320 = vmatpush1.msra.mxu0 0.0
        %5321 = vmatprep.subr.mxu0 0.0
        %5322 = vmatpush1.msra.mxu0 0.0
        %5323 = vmatprep.subr.mxu0 0.0
        %5324 = vmatpush1.msra.mxu0 0.0
        %5325 = vmatprep.subr.mxu0 0.0
        %5326 = vmatpush1.msra.mxu0 0.0
        %5327 = vmatprep.subr.mxu0 0.0
        %5328 = vmatpush1.msra.mxu0 0.0
        %5329 = vmatprep.subr.mxu0 0.0
        %5330 = vmatpush1.msra.mxu0 0.0
        %5331 = vmatprep.subr.mxu0 0.0
        %5332 = vmatpush1.msra.mxu0 0.0
        %5333 = vmatprep.subr.mxu0 0.0
        %5334 = vmatpush1.msra.mxu0 0.0
        %5335 = vmatprep.subr.mxu0 0.0
        %5336 = vmatpush1.msra.mxu0 0.0
        %5337 = vmatprep.subr.mxu0 0.0
        %5338 = vmatpush1.msra.mxu0 0.0
        %5339 = vmatprep.subr.mxu0 0.0
        %5340 = vmatpush1.msra.mxu0 0.0
        %5341 = vmatprep.subr.mxu0 0.0
        %5342 = vmatpush1.msra.mxu0 0.0
        %5343 = vmatprep.mubr.f32.mxu0 0.0
        %5344 = vmatmul.mubr.f32.gmra.mrb[0].mxu0 %v5277
        %v5345 = vpop.f32.mrb[0].mxu0
        %v5346 = vadd.f32 0.0, %v5345
        %v5347 = vpop.f32.mrb[0].mxu0
        %5348 = vdwg.mxu0
        %v5349 = vadd.f32 %v5102, %v5346
        %5350 = vrot.lane.b32.xlu0 %v4423, 104
        %v5351 = vpop.permute.xlu0 %5350
        %5352 = vrot.lane.b32.xlu0 %v4506, 104
        %v5353 = vpop.permute.xlu0 %5352
        %5354 = vrot.lane.b32.xlu0 %v4511, 104
        %v5355 = vpop.permute.xlu0 %5354
        %v5356 = vsel %vm777, %v5351, 0
        %v5358 = vsel %vm777, %v5353, 0
        %v5360 = vsel %vm777, %v5355, 0
        %5362 = vmatprep.subr.mxu0 0.0
        %5363 = vmatpush1.xpose.msra.mxu0 %v5358
        %5364 = vmatprep.subr.mxu0 0.0
        %5365 = vmatpush1.xpose.msra.mxu0 %v5360
        %5366 = vmatprep.subr.mxu0 0.0
        %5367 = vmatpush1.xpose.msra.mxu0 0.0
        %5368 = vmatprep.subr.mxu0 0.0
        %5369 = vmatpush1.xpose.msra.mxu0 0.0
        %5370 = vmatprep.subr.mxu0 0.0
        %5371 = vmatpush1.xpose.msra.mxu0 0.0
        %5372 = vmatprep.subr.mxu0 0.0
        %5373 = vmatpush1.xpose.msra.mxu0 0.0
        %5374 = vmatprep.subr.mxu0 0.0
        %5375 = vmatpush1.xpose.msra.mxu0 0.0
        %5376 = vmatprep.subr.mxu0 0.0
        %5377 = vmatpush1.xpose.msra.mxu0 0.0
        %5378 = vmatprep.subr.mxu0 0.0
        %5379 = vmatpush1.xpose.msra.mxu0 0.0
        %5380 = vmatprep.subr.mxu0 0.0
        %5381 = vmatpush1.xpose.msra.mxu0 0.0
        %5382 = vmatprep.subr.mxu0 0.0
        %5383 = vmatpush1.xpose.msra.mxu0 0.0
        %5384 = vmatprep.subr.mxu0 0.0
        %5385 = vmatpush1.xpose.msra.mxu0 0.0
        %5386 = vmatprep.subr.mxu0 0.0
        %5387 = vmatpush1.xpose.msra.mxu0 0.0
        %5388 = vmatprep.subr.mxu0 0.0
        %5389 = vmatpush1.xpose.msra.mxu0 0.0
        %5390 = vmatprep.subr.mxu0 0.0
        %5391 = vmatpush1.xpose.msra.mxu0 0.0
        %5392 = vmatprep.subr.mxu0 0.0
        %5393 = vmatpush1.xpose.msra.mxu0 0.0
        %5394 = vmatprep.subr.mxu0 0.0
        %5395 = vmatpush1.xpose.msra.mxu0 0.0
        %5396 = vmatprep.subr.mxu0 0.0
        %5397 = vmatpush1.xpose.msra.mxu0 0.0
        %5398 = vmatprep.subr.mxu0 0.0
        %5399 = vmatpush1.xpose.msra.mxu0 0.0
        %5400 = vmatprep.subr.mxu0 0.0
        %5401 = vmatpush1.xpose.msra.mxu0 0.0
        %5402 = vmatprep.subr.mxu0 0.0
        %5403 = vmatpush1.xpose.msra.mxu0 0.0
        %5404 = vmatprep.subr.mxu0 0.0
        %5405 = vmatpush1.xpose.msra.mxu0 0.0
        %5406 = vmatprep.subr.mxu0 0.0
        %5407 = vmatpush1.xpose.msra.mxu0 0.0
        %5408 = vmatprep.subr.mxu0 0.0
        %5409 = vmatpush1.xpose.msra.mxu0 0.0
        %5410 = vmatprep.subr.mxu0 0.0
        %5411 = vmatpush1.xpose.msra.mxu0 0.0
        %5412 = vmatprep.subr.mxu0 0.0
        %5413 = vmatpush1.xpose.msra.mxu0 0.0
        %5414 = vmatprep.subr.mxu0 0.0
        %5415 = vmatpush1.xpose.msra.mxu0 0.0
        %5416 = vmatprep.subr.mxu0 0.0
        %5417 = vmatpush1.xpose.msra.mxu0 0.0
        %5418 = vmatprep.subr.mxu0 0.0
        %5419 = vmatpush1.xpose.msra.mxu0 0.0
        %5420 = vmatprep.subr.mxu0 0.0
        %5421 = vmatpush1.xpose.msra.mxu0 0.0
        %5422 = vmatprep.subr.mxu0 0.0
        %5423 = vmatpush1.xpose.msra.mxu0 0.0
        %5424 = vmatprep.subr.mxu0 0.0
        %5425 = vmatpush1.xpose.msra.mxu0 0.0
        %5426 = vmatprep.mubr.f32.mxu0 0.0
        %5427 = vmatmul.mubr.f32.gmra.mrb[0].mxu0 %v5356
        %v5428 = vpop.f32.mrb[0].mxu0
        %v5429 = vadd.f32 0.0, %v5428
        %v5430 = vpop.f32.mrb[0].mxu0
        %5431 = vdwg.mxu0
        %v5432 = vmul.f32 %v5429, 0.35355338
        %v5433 = vsel %vm2123, %v5432, -inf
        %5434 = vmax.xlane.f32.xlu0 %v5433
        %v5435 = vpop.xlane.xlu0 %5434
        %v5436 = vsub.f32 %v5432, %v5435
        %v5437 = vmul.f32 %v5436, 1.442695
        %v5438 = vpow.pop %v5437
        %v5439 = vsel %vm2123, %v5438, 0.0
        %5440 = vadd.xlane.f32.xlu0 %v5439
        %v5441 = vpop.xlane.xlu0 %5440
        %v5442 = vrcp.pop %v5441
        %v5443 = vmul.f32 %v5438, %v5442
        %5444 = vrot.lane.b32.xlu0 %v4594, 104
        %v5445 = vpop.permute.xlu0 %5444
        %5446 = vrot.lane.b32.xlu0 %v4599, 104
        %v5447 = vpop.permute.xlu0 %5446
        %v5451 = vsel %vm2123, %v5443, 0
        %5453 = vmatprep.subr.mxu0 0.0
        %5454 = vmatpush1.msra.mxu0 %v5445
        %5455 = vmatprep.subr.mxu0 0.0
        %5456 = vmatpush1.msra.mxu0 %v5447
        %5457 = vmatprep.subr.mxu0 0.0
        %5458 = vmatpush1.msra.mxu0 0.0
        %5459 = vmatprep.subr.mxu0 0.0
        %5460 = vmatpush1.msra.mxu0 0.0
        %5461 = vmatprep.subr.mxu0 0.0
        %5462 = vmatpush1.msra.mxu0 0.0
        %5463 = vmatprep.subr.mxu0 0.0
        %5464 = vmatpush1.msra.mxu0 0.0
        %5465 = vmatprep.subr.mxu0 0.0
        %5466 = vmatpush1.msra.mxu0 0.0
        %5467 = vmatprep.subr.mxu0 0.0
        %5468 = vmatpush1.msra.mxu0 0.0
        %5469 = vmatprep.subr.mxu0 0.0
        %5470 = vmatpush1.msra.mxu0 0.0
        %5471 = vmatprep.subr.mxu0 0.0
        %5472 = vmatpush1.msra.mxu0 0.0
        %5473 = vmatprep.subr.mxu0 0.0
        %5474 = vmatpush1.msra.mxu0 0.0
        %5475 = vmatprep.subr.mxu0 0.0
        %5476 = vmatpush1.msra.mxu0 0.0
        %5477 = vmatprep.subr.mxu0 0.0
        %5478 = vmatpush1.msra.mxu0 0.0
        %5479 = vmatprep.subr.mxu0 0.0
        %5480 = vmatpush1.msra.mxu0 0.0
        %5481 = vmatprep.subr.mxu0 0.0
        %5482 = vmatpush1.msra.mxu0 0.0
        %5483 = vmatprep.subr.mxu0 0.0
        %5484 = vmatpush1.msra.mxu0 0.0
        %5485 = vmatprep.subr.mxu0 0.0
        %5486 = vmatpush1.msra.mxu0 0.0
        %5487 = vmatprep.subr.mxu0 0.0
        %5488 = vmatpush1.msra.mxu0 0.0
        %5489 = vmatprep.subr.mxu0 0.0
        %5490 = vmatpush1.msra.mxu0 0.0
        %5491 = vmatprep.subr.mxu0 0.0
        %5492 = vmatpush1.msra.mxu0 0.0
        %5493 = vmatprep.subr.mxu0 0.0
        %5494 = vmatpush1.msra.mxu0 0.0
        %5495 = vmatprep.subr.mxu0 0.0
        %5496 = vmatpush1.msra.mxu0 0.0
        %5497 = vmatprep.subr.mxu0 0.0
        %5498 = vmatpush1.msra.mxu0 0.0
        %5499 = vmatprep.subr.mxu0 0.0
        %5500 = vmatpush1.msra.mxu0 0.0
        %5501 = vmatprep.subr.mxu0 0.0
        %5502 = vmatpush1.msra.mxu0 0.0
        %5503 = vmatprep.subr.mxu0 0.0
        %5504 = vmatpush1.msra.mxu0 0.0
        %5505 = vmatprep.subr.mxu0 0.0
        %5506 = vmatpush1.msra.mxu0 0.0
        %5507 = vmatprep.subr.mxu0 0.0
        %5508 = vmatpush1.msra.mxu0 0.0
        %5509 = vmatprep.subr.mxu0 0.0
        %5510 = vmatpush1.msra.mxu0 0.0
        %5511 = vmatprep.subr.mxu0 0.0
        %5512 = vmatpush1.msra.mxu0 0.0
        %5513 = vmatprep.subr.mxu0 0.0
        %5514 = vmatpush1.msra.mxu0 0.0
        %5515 = vmatprep.subr.mxu0 0.0
        %5516 = vmatpush1.msra.mxu0 0.0
        %5517 = vmatprep.mubr.f32.mxu0 0.0
        %5518 = vmatmul.mubr.f32.gmra.mrb[0].mxu0 %v5451
        %v5519 = vpop.f32.mrb[0].mxu0
        %v5520 = vadd.f32 0.0, %v5519
        %v5521 = vpop.f32.mrb[0].mxu0
        %5522 = vdwg.mxu0
        %v5524 = vsel %vm777, %v5520, 0
        %5526 = vmatprep.subr.mxu0 0.0
        %5527 = vmatpush1.msra.mxu0 %v4606
        %5528 = vmatprep.subr.mxu0 0.0
        %5529 = vmatpush1.msra.mxu0 0.0
        %5530 = vmatprep.subr.mxu0 0.0
        %5531 = vmatpush1.msra.mxu0 0.0
        %5532 = vmatprep.subr.mxu0 0.0
        %5533 = vmatpush1.msra.mxu0 0.0
        %5534 = vmatprep.subr.mxu0 0.0
        %5535 = vmatpush1.msra.mxu0 0.0
        %5536 = vmatprep.subr.mxu0 0.0
        %5537 = vmatpush1.msra.mxu0 0.0
        %5538 = vmatprep.subr.mxu0 0.0
        %5539 = vmatpush1.msra.mxu0 0.0
        %5540 = vmatprep.subr.mxu0 0.0
        %5541 = vmatpush1.msra.mxu0 0.0
        %5542 = vmatprep.subr.mxu0 0.0
        %5543 = vmatpush1.msra.mxu0 0.0
        %5544 = vmatprep.subr.mxu0 0.0
        %5545 = vmatpush1.msra.mxu0 0.0
        %5546 = vmatprep.subr.mxu0 0.0
        %5547 = vmatpush1.msra.mxu0 0.0
        %5548 = vmatprep.subr.mxu0 0.0
        %5549 = vmatpush1.msra.mxu0 0.0
        %5550 = vmatprep.subr.mxu0 0.0
        %5551 = vmatpush1.msra.mxu0 0.0
        %5552 = vmatprep.subr.mxu0 0.0
        %5553 = vmatpush1.msra.mxu0 0.0
        %5554 = vmatprep.subr.mxu0 0.0
        %5555 = vmatpush1.msra.mxu0 0.0
        %5556 = vmatprep.subr.mxu0 0.0
        %5557 = vmatpush1.msra.mxu0 0.0
        %5558 = vmatprep.subr.mxu0 0.0
        %5559 = vmatpush1.msra.mxu0 0.0
        %5560 = vmatprep.subr.mxu0 0.0
        %5561 = vmatpush1.msra.mxu0 0.0
        %5562 = vmatprep.subr.mxu0 0.0
        %5563 = vmatpush1.msra.mxu0 0.0
        %5564 = vmatprep.subr.mxu0 0.0
        %5565 = vmatpush1.msra.mxu0 0.0
        %5566 = vmatprep.subr.mxu0 0.0
        %5567 = vmatpush1.msra.mxu0 0.0
        %5568 = vmatprep.subr.mxu0 0.0
        %5569 = vmatpush1.msra.mxu0 0.0
        %5570 = vmatprep.subr.mxu0 0.0
        %5571 = vmatpush1.msra.mxu0 0.0
        %5572 = vmatprep.subr.mxu0 0.0
        %5573 = vmatpush1.msra.mxu0 0.0
        %5574 = vmatprep.subr.mxu0 0.0
        %5575 = vmatpush1.msra.mxu0 0.0
        %5576 = vmatprep.subr.mxu0 0.0
        %5577 = vmatpush1.msra.mxu0 0.0
        %5578 = vmatprep.subr.mxu0 0.0
        %5579 = vmatpush1.msra.mxu0 0.0
        %5580 = vmatprep.subr.mxu0 0.0
        %5581 = vmatpush1.msra.mxu0 0.0
        %5582 = vmatprep.subr.mxu0 0.0
        %5583 = vmatpush1.msra.mxu0 0.0
        %5584 = vmatprep.subr.mxu0 0.0
        %5585 = vmatpush1.msra.mxu0 0.0
        %5586 = vmatprep.subr.mxu0 0.0
        %5587 = vmatpush1.msra.mxu0 0.0
        %5588 = vmatprep.subr.mxu0 0.0
        %5589 = vmatpush1.msra.mxu0 0.0
        %5590 = vmatprep.mubr.f32.mxu0 0.0
        %5591 = vmatmul.mubr.f32.gmra.mrb[0].mxu0 %v5524
        %v5592 = vpop.f32.mrb[0].mxu0
        %v5593 = vadd.f32 0.0, %v5592
        %v5594 = vpop.f32.mrb[0].mxu0
        %5595 = vdwg.mxu0
        %v5596 = vadd.f32 %v5349, %v5593
        %v5597 = vadd.f32 %v4339, %v5596
        %v5598 = vsel %vm688, %v5597, 0.0
        %5599 = vadd.xlane.f32.xlu0 %v5598
        %v5600 = vpop.xlane.xlu0 %5599
        %v5601 = vmul.f32 %v5600, %v1742
        %v5602 = vsub.f32 %v5597, %v5601
        %v5603 = vmul.f32 %v5602, %v5602
        %v5604 = vsel %vm688, %v5603, 0.0
        %5605 = vadd.xlane.f32.xlu0 %v5604
        %v5606 = vpop.xlane.xlu0 %5605
        %v5607 = vmul.f32 %v5606, %v1742
        %v5608 = vadd.f32 %v5607, 1e-12
        %v5609 = vrsqrt.pop %v5608
        %v5610 = vmul.f32 %v5602, %v5609
        %v5611 = vlaneseq
        %v5612 = vshrl.u32 %v5611, 7
        %v5613 = vsub.s32 2, %v5612
        %v5614 = vrot.slane %v3252, %v5613
        %v5615 = vmul.f32 %v5610, %v5614
        %v5616 = vlaneseq
        %v5617 = vshrl.u32 %v5616, 7
        %v5618 = vsub.s32 3, %v5617
        %v5619 = vrot.slane %v3252, %v5618
        %v5620 = vadd.f32 %v5615, %v5619
        %s5621 = scalar_lea.vmem %s15, 32
        %v5622 = vld [vmem:[%s5621] sm:$0xff]
        %v5623 = vld [vmem:[%s5621 + $0x8] sm:$0xff]
        %v5624 = vld [vmem:[%s5621 + $0x10] sm:$0xff]
        %v5625 = vld [vmem:[%s5621 + $0x18] sm:$0xff]
        %s5626 = scalar_lea.vmem %s16, 1
        %v5627 = vld [vmem:[%s5626] sm:$0x1]
        %v5629 = vlaneseq
        %v5630 = vshrl.u32 %v5629, 7
        %v5631 = vsub.s32 0, %v5630
        %v5632 = vrot.slane %v5627, %v5631
        %v5635 = vsel %vm688, %v5620, 0
        %5637 = vmatprep.subr.mxu0 0.0
        %5638 = vmatpush1.msra.mxu0 %v5622
        %5639 = vmatprep.subr.mxu0 0.0
        %5640 = vmatpush1.msra.mxu0 %v5623
        %5641 = vmatprep.subr.mxu0 0.0
        %5642 = vmatpush1.msra.mxu0 %v5624
        %5643 = vmatprep.subr.mxu0 0.0
        %5644 = vmatpush1.msra.mxu0 %v5625
        %5645 = vmatprep.subr.mxu0 0.0
        %5646 = vmatpush1.msra.mxu0 0.0
        %5647 = vmatprep.subr.mxu0 0.0
        %5648 = vmatpush1.msra.mxu0 0.0
        %5649 = vmatprep.subr.mxu0 0.0
        %5650 = vmatpush1.msra.mxu0 0.0
        %5651 = vmatprep.subr.mxu0 0.0
        %5652 = vmatpush1.msra.mxu0 0.0
        %5653 = vmatprep.subr.mxu0 0.0
        %5654 = vmatpush1.msra.mxu0 0.0
        %5655 = vmatprep.subr.mxu0 0.0
        %5656 = vmatpush1.msra.mxu0 0.0
        %5657 = vmatprep.subr.mxu0 0.0
        %5658 = vmatpush1.msra.mxu0 0.0
        %5659 = vmatprep.subr.mxu0 0.0
        %5660 = vmatpush1.msra.mxu0 0.0
        %5661 = vmatprep.subr.mxu0 0.0
        %5662 = vmatpush1.msra.mxu0 0.0
        %5663 = vmatprep.subr.mxu0 0.0
        %5664 = vmatpush1.msra.mxu0 0.0
        %5665 = vmatprep.subr.mxu0 0.0
        %5666 = vmatpush1.msra.mxu0 0.0
        %5667 = vmatprep.subr.mxu0 0.0
        %5668 = vmatpush1.msra.mxu0 0.0
        %5669 = vmatprep.subr.mxu0 0.0
        %5670 = vmatpush1.msra.mxu0 0.0
        %5671 = vmatprep.subr.mxu0 0.0
        %5672 = vmatpush1.msra.mxu0 0.0
        %5673 = vmatprep.subr.mxu0 0.0
        %5674 = vmatpush1.msra.mxu0 0.0
        %5675 = vmatprep.subr.mxu0 0.0
        %5676 = vmatpush1.msra.mxu0 0.0
        %5677 = vmatprep.subr.mxu0 0.0
        %5678 = vmatpush1.msra.mxu0 0.0
        %5679 = vmatprep.subr.mxu0 0.0
        %5680 = vmatpush1.msra.mxu0 0.0
        %5681 = vmatprep.subr.mxu0 0.0
        %5682 = vmatpush1.msra.mxu0 0.0
        %5683 = vmatprep.subr.mxu0 0.0
        %5684 = vmatpush1.msra.mxu0 0.0
        %5685 = vmatprep.subr.mxu0 0.0
        %5686 = vmatpush1.msra.mxu0 0.0
        %5687 = vmatprep.subr.mxu0 0.0
        %5688 = vmatpush1.msra.mxu0 0.0
        %5689 = vmatprep.subr.mxu0 0.0
        %5690 = vmatpush1.msra.mxu0 0.0
        %5691 = vmatprep.subr.mxu0 0.0
        %5692 = vmatpush1.msra.mxu0 0.0
        %5693 = vmatprep.subr.mxu0 0.0
        %5694 = vmatpush1.msra.mxu0 0.0
        %5695 = vmatprep.subr.mxu0 0.0
        %5696 = vmatpush1.msra.mxu0 0.0
        %5697 = vmatprep.subr.mxu0 0.0
        %5698 = vmatpush1.msra.mxu0 0.0
        %5699 = vmatprep.subr.mxu0 0.0
        %5700 = vmatpush1.msra.mxu0 0.0
        %5701 = vmatprep.mubr.f32.mxu0 0.0
        %5702 = vmatmul.mubr.f32.gmra.mrb[0].mxu0 %v5635
        %v5703 = vpop.f32.mrb[0].mxu0
        %v5704 = vadd.f32 %v5632, %v5703
        %v5705 = vpop.f32.mrb[0].mxu0
        %5706 = vdwg.mxu0
        %v5707 = vmul.f32 %v5704, 0.5
        %v5708 = vmul.f32 %v5704, 0.70710677
        %v5709 = verf.f32.pop %v5708
        %v5710 = vadd.f32 %v5709, 1.0
        %v5711 = vmul.f32 %v5707, %v5710
        %s5712 = scalar_lea.vmem %s17, 64
        %v5713 = vld [vmem:[%s5712] sm:$0xff]
        %v5714 = vld [vmem:[%s5712 + $0x8] sm:$0xff]
        %v5715 = vld [vmem:[%s5712 + $0x10] sm:$0xff]
        %v5716 = vld [vmem:[%s5712 + $0x18] sm:$0xff]
        %v5717 = vld [vmem:[%s5712 + $0x20] sm:$0xff]
        %v5718 = vld [vmem:[%s5712 + $0x28] sm:$0xff]
        %v5719 = vld [vmem:[%s5712 + $0x30] sm:$0xff]
        %v5720 = vld [vmem:[%s5712 + $0x38] sm:$0xff]
        %s5721 = scalar_lea.vmem %s18, 1
        %v5722 = vld [vmem:[%s5721] sm:$0x1]
        %v5724 = vlaneseq
        %v5725 = vshrl.u32 %v5724, 7
        %v5726 = vsub.s32 0, %v5725
        %v5727 = vrot.slane %v5722, %v5726
        %v5730 = vsel %vm3153, %v5711, 0
        %5732 = vmatprep.subr.mxu0 0.0
        %5733 = vmatpush1.msra.mxu0 %v5713
        %5734 = vmatprep.subr.mxu0 0.0
        %5735 = vmatpush1.msra.mxu0 %v5714
        %5736 = vmatprep.subr.mxu0 0.0
        %5737 = vmatpush1.msra.mxu0 %v5715
        %5738 = vmatprep.subr.mxu0 0.0
        %5739 = vmatpush1.msra.mxu0 %v5716
        %5740 = vmatprep.subr.mxu0 0.0
        %5741 = vmatpush1.msra.mxu0 %v5717
        %5742 = vmatprep.subr.mxu0 0.0
        %5743 = vmatpush1.msra.mxu0 %v5718
        %5744 = vmatprep.subr.mxu0 0.0
        %5745 = vmatpush1.msra.mxu0 %v5719
        %5746 = vmatprep.subr.mxu0 0.0
        %5747 = vmatpush1.msra.mxu0 %v5720
        %5748 = vmatprep.subr.mxu0 0.0
        %5749 = vmatpush1.msra.mxu0 0.0
        %5750 = vmatprep.subr.mxu0 0.0
        %5751 = vmatpush1.msra.mxu0 0.0
        %5752 = vmatprep.subr.mxu0 0.0
        %5753 = vmatpush1.msra.mxu0 0.0
        %5754 = vmatprep.subr.mxu0 0.0
        %5755 = vmatpush1.msra.mxu0 0.0
        %5756 = vmatprep.subr.mxu0 0.0
        %5757 = vmatpush1.msra.mxu0 0.0
        %5758 = vmatprep.subr.mxu0 0.0
        %5759 = vmatpush1.msra.mxu0 0.0
        %5760 = vmatprep.subr.mxu0 0.0
        %5761 = vmatpush1.msra.mxu0 0.0
        %5762 = vmatprep.subr.mxu0 0.0
        %5763 = vmatpush1.msra.mxu0 0.0
        %5764 = vmatprep.subr.mxu0 0.0
        %5765 = vmatpush1.msra.mxu0 0.0
        %5766 = vmatprep.subr.mxu0 0.0
        %5767 = vmatpush1.msra.mxu0 0.0
        %5768 = vmatprep.subr.mxu0 0.0
        %5769 = vmatpush1.msra.mxu0 0.0
        %5770 = vmatprep.subr.mxu0 0.0
        %5771 = vmatpush1.msra.mxu0 0.0
        %5772 = vmatprep.subr.mxu0 0.0
        %5773 = vmatpush1.msra.mxu0 0.0
        %5774 = vmatprep.subr.mxu0 0.0
        %5775 = vmatpush1.msra.mxu0 0.0
        %5776 = vmatprep.subr.mxu0 0.0
        %5777 = vmatpush1.msra.mxu0 0.0
        %5778 = vmatprep.subr.mxu0 0.0
        %5779 = vmatpush1.msra.mxu0 0.0
        %5780 = vmatprep.subr.mxu0 0.0
        %5781 = vmatpush1.msra.mxu0 0.0
        %5782 = vmatprep.subr.mxu0 0.0
        %5783 = vmatpush1.msra.mxu0 0.0
        %5784 = vmatprep.subr.mxu0 0.0
        %5785 = vmatpush1.msra.mxu0 0.0
        %5786 = vmatprep.subr.mxu0 0.0
        %5787 = vmatpush1.msra.mxu0 0.0
        %5788 = vmatprep.subr.mxu0 0.0
        %5789 = vmatpush1.msra.mxu0 0.0
        %5790 = vmatprep.subr.mxu0 0.0
        %5791 = vmatpush1.msra.mxu0 0.0
        %5792 = vmatprep.subr.mxu0 0.0
        %5793 = vmatpush1.msra.mxu0 0.0
        %5794 = vmatprep.subr.mxu0 0.0
        %5795 = vmatpush1.msra.mxu0 0.0
        %5796 = vmatprep.mubr.f32.mxu0 0.0
        %5797 = vmatmul.mubr.f32.gmra.mrb[0].mxu0 %v5730
        %v5798 = vpop.f32.mrb[0].mxu0
        %v5799 = vadd.f32 %v5727, %v5798
        %v5800 = vpop.f32.mrb[0].mxu0
        %5801 = vdwg.mxu0
        %v5802 = vadd.f32 %v5620, %v5799
        %v5803 = vsel %vm688, %v5802, 0.0
        %5804 = vadd.xlane.f32.xlu0 %v5803
        %v5805 = vpop.xlane.xlu0 %5804
        %v5806 = vmul.f32 %v5805, %v1742
        %v5807 = vsub.f32 %v5802, %v5806
        %v5808 = vmul.f32 %v5807, %v5807
        %v5809 = vsel %vm688, %v5808, 0.0
        %5810 = vadd.xlane.f32.xlu0 %v5809
        %v5811 = vpop.xlane.xlu0 %5810
        %v5812 = vmul.f32 %v5811, %v1742
        %v5813 = vadd.f32 %v5812, 1e-12
        %v5814 = vrsqrt.pop %v5813
        %v5815 = vmul.f32 %v5807, %v5814
        %v5816 = vlaneseq
        %v5817 = vshrl.u32 %v5816, 7
        %v5818 = vsub.s32 4, %v5817
        %v5819 = vrot.slane %v3252, %v5818
        %v5820 = vmul.f32 %v5815, %v5819
        %v5821 = vlaneseq
        %v5822 = vshrl.u32 %v5821, 7
        %v5823 = vsub.s32 5, %v5822
        %v5824 = vrot.slane %v3252, %v5823
        %v5825 = vadd.f32 %v5820, %v5824
        %5826 = vst.msk [vmem:[%s650] sm:$0xff] %vm688, %v5825
        %s5827 = sand.u32 %s477, 1
        %s5828 = scalar_lea.sflag [#allocation3], %s5827
        %s5829 = sand.u32 %s477, 1
        %s5830 = smul.addr %s5829, 8
        %s5831 = scalar_lea.vmem [#allocation2], %s5830
        // Predicated region
        $region101: #{transformer_decoder_forward.1} parent=99 // pred_check
          %p5832 = pneg %p487
        $region102: #{transformer_decoder_forward.1} parent=99 // pred_check_branch
          %5834 = sbr.rel (%p5832) target = $region104
        $region103: #{transformer_decoder_forward.1} parent=99 // pred_region
          %s5836 = ssub.s32 128, 128
          %5837 = vsyncadd %s5828, %s5836
          %s5838 = smul.addr %s34, 128
          %s5839 = scalar_lea.hbm %s20, %s5838
          %s5841 = sshll.u32 %s5831, 4
          %s5842 = int_to_ptr.vmem [resolvable:$true] %s5841
          %5844 = dma.vmem_to_hbm [thread:$0]  %s5842, 128, %s5839, %s5828
        $region104: #{transformer_decoder_forward.1} parent=99 // pred_fallthru
          _
      $region100: #{transformer_decoder_forward.1} parent=5 // pred_fallthru
        _
      %p5845 = scmp.le.s32.totalorder 2, %s29
      // Predicated region
      $region105: #{transformer_decoder_forward.1} parent=5 // pred_check
        %p5846 = pneg %p5845
      $region106: #{transformer_decoder_forward.1} parent=5 // pred_check_branch
        %5848 = sbr.rel (%p5846) target = $region108
      $region107: #{transformer_decoder_forward.1} parent=5 // pred_region
        %s5849 = ssub.s32 %s29, 2
        // Predicated region
        $region109: #{transformer_decoder_forward.1} parent=107 // pred_check
          %p5850 = pneg %p493
        $region110: #{transformer_decoder_forward.1} parent=107 // pred_check_branch
          %5852 = sbr.rel (%p5850) target = $region112
        $region111: #{transformer_decoder_forward.1} parent=107 // pred_region
          %s5853 = sand.u32 %s478, 1
          %s5854 = scalar_lea.sflag [#allocation3], %s5853
          %s5855 = sand.u32 %s478, 1
          %s5856 = smul.addr %s5855, 8
          %s5857 = scalar_lea.vmem [#allocation2], %s5856
          %5858 = dma.done %s5854, 128
        $region112: #{transformer_decoder_forward.1} parent=107 // pred_fallthru
          _
      $region108: #{transformer_decoder_forward.1} parent=5 // pred_fallthru
        _
    $region6: #{transformer_decoder_forward.1} parent=1 // loop_footer
      %s33 = sadd.s32 1, %s29
    $region7: #{transformer_decoder_forward.1} parent=1 // loop_footer_branch
      %28 = sbr.rel target = $region3
    $region8: #{transformer_decoder_forward.1} parent=1 // loop_exit
      _
    %5859 = vsyncpa [#allocation3], 1
    %s5860 = scalar_lea.sflag [#allocation3], 1
    %5861 = vsyncpa %s5860, 1

</llo_original>
